<compile_context>
chip_gen: v7x
topology: tpu7x:2x2x1
jax: 0.10.0
libtpu: 0.0.40
codegen_flags: <defaults>
</compile_context>

<pallas_src>
import functools

import jax
import jax.numpy as jnp
from jax.experimental import pallas as pl
from jax.experimental.pallas import tpu as pltpu

BN_EPS = 1e-5


# ----------------------------------------------------------------------------
# Pallas kernel: banded matmul + bias (+ residual) (+ relu)
#   x_ref : (rows_in, K)   bf16   (rows_in = rows_out + taps - 1)
#   w_ref : (taps, K, N)   bf16   (BN scale already folded into columns)
#   b_ref : (1, N)         f32
#   r_ref : (rows_out, N)  (optional residual)
#   o_ref : (rows_out, N)
# ----------------------------------------------------------------------------
def _band_kernel(x_ref, w_ref, b_ref, o_ref, *, taps, relu):
    rows = o_ref.shape[0]
    acc = jnp.zeros(o_ref.shape, jnp.float32)
    for t in range(taps):                       # static unroll (taps <= 3)
        acc = acc + jnp.dot(x_ref[t:t + rows, :], w_ref[t],
                            preferred_element_type=jnp.float32)
    y = acc + b_ref[...]
    if relu:
        y = jnp.maximum(y, 0.0)
    o_ref[...] = y.astype(o_ref.dtype)


def _band_kernel_res(x_ref, w_ref, b_ref, r_ref, o_ref, *, taps, relu):
    rows = o_ref.shape[0]
    acc = jnp.zeros(o_ref.shape, jnp.float32)
    for t in range(taps):
        acc = acc + jnp.dot(x_ref[t:t + rows, :], w_ref[t],
                            preferred_element_type=jnp.float32)
    y = acc + b_ref[...] + r_ref[...].astype(jnp.float32)
    if relu:
        y = jnp.maximum(y, 0.0)
    o_ref[...] = y.astype(o_ref.dtype)


def band_matmul(x, wstack, bias, *, rows_out, residual=None, relu=False,
                out_dtype=jnp.bfloat16):
    """out[b] = act(sum_t x[b, t:t+rows_out, :] @ wstack[t] + bias [+ residual[b]])."""
    B, rows_in, K = x.shape
    T, K2, N = wstack.shape
    assert K2 == K and rows_in == rows_out + T - 1

    bias2 = bias.reshape(1, N).astype(jnp.float32)

    in_specs = [
        pl.BlockSpec((None, rows_in, K), lambda b: (b, 0, 0)),
        pl.BlockSpec((T, K, N), lambda b: (0, 0, 0)),
        pl.BlockSpec((1, N), lambda b: (0, 0)),
    ]
    args = [x, wstack, bias2]
    if residual is not None:
        in_specs.append(pl.BlockSpec((None, rows_out, N), lambda b: (b, 0, 0)))
        args.append(residual)
        kernel = functools.partial(_band_kernel_res, taps=T, relu=relu)
    else:
        kernel = functools.partial(_band_kernel, taps=T, relu=relu)

    out_bytes = B * rows_out * N * jnp.dtype(out_dtype).itemsize
    bytes_accessed = (x.size * x.dtype.itemsize + wstack.size * wstack.dtype.itemsize
                      + 4 * N + out_bytes
                      + (residual.size * residual.dtype.itemsize if residual is not None else 0))
    cost = pl.CostEstimate(flops=2 * B * rows_out * K * N * T,
                           transcendentals=0, bytes_accessed=bytes_accessed)

    return pl.pallas_call(
        kernel,
        out_shape=jax.ShapeDtypeStruct((B, rows_out, N), out_dtype),
        grid=(B,),
        in_specs=in_specs,
        out_specs=pl.BlockSpec((None, rows_out, N), lambda b: (b, 0, 0)),
        compiler_params=pltpu.CompilerParams(dimension_semantics=("parallel",)),
        cost_estimate=cost,
    )(*args)


# ----------------------------------------------------------------------------
# Banded-weight construction (tiny, static weights; BN scale folded in here)
# ----------------------------------------------------------------------------
def bn_fold(bn):
    s = bn["gamma"] / jnp.sqrt(bn["var"] + BN_EPS)
    b = bn["beta"] - bn["mean"] * s
    return s, b


def band_weights_k3(w, scale, H, W):
    """3x3x3 'same' conv -> 3 depth-tap banded matmuls.
    w: [3,3,3,Cin,Cout] -> [3, (H+2)*(W+2)*Cin, H*W*Cout] bf16."""
    kD, kH, kW, Cin, Cout = w.shape
    wf = w.astype(jnp.float32) * scale.astype(jnp.float32)
    SH = jnp.stack([jnp.eye(H + 2, H, k=-dh, dtype=jnp.float32) for dh in range(kH)])
    SW = jnp.stack([jnp.eye(W + 2, W, k=-dw, dtype=jnp.float32) for dw in range(kW)])
    # Wb[dd, h_in, w_in, c, h_out, w_out, co]
    Wb = jnp.einsum('dabco,aph,bqw->dpqchwo', wf, SH, SW)
    return Wb.reshape(kD, (H + 2) * (W + 2) * Cin, H * W * Cout).astype(jnp.bfloat16)


def band_weights_down2(w, scale, H, W):
    """2x2x2 stride-2 conv -> single matmul over depth-pair lanes.
    w: [2,2,2,Cin,Cout] -> [1, 2*H*W*Cin, (H//2)*(W//2)*Cout] bf16."""
    kD, kH, kW, Cin, Cout = w.shape
    Ho, Wo = H // 2, W // 2
    wf = w.astype(jnp.float32) * scale.astype(jnp.float32)
    SH = jnp.stack([(jnp.arange(H)[:, None] == 2 * jnp.arange(Ho)[None, :] + dh)
                    .astype(jnp.float32) for dh in range(kH)])
    SW = jnp.stack([(jnp.arange(W)[:, None] == 2 * jnp.arange(Wo)[None, :] + dw)
                    .astype(jnp.float32) for dw in range(kW)])
    # Wb[dd, h_in, w_in, c, h', w', co]
    Wb = jnp.einsum('dabco,ahp,bwq->dhwcpqo', wf, SH, SW)
    return Wb.reshape(1, kD * H * W * Cin, Ho * Wo * Cout).astype(jnp.bfloat16)


def band_weights_up2(w, scale, H, W):
    """2x2x2 stride-2 transposed conv -> single matmul; output lanes carry the
    (dd,h,w,co) interleave so the following reshape to NDHWC is free.
    w: [2,2,2,Cin,Cout] (H, W are OUTPUT sizes) -> [1, (H//2)*(W//2)*Cin, 2*H*W*Cout]."""
    kD, kH, kW, Cin, Cout = w.shape
    Hi, Wi = H // 2, W // 2
    wf = w.astype(jnp.float32) * scale.astype(jnp.float32)
    TH = jnp.stack([(2 * jnp.arange(Hi)[:, None] + dh == jnp.arange(H)[None, :])
                    .astype(jnp.float32) for dh in range(kH)])
    TW = jnp.stack([(2 * jnp.arange(Wi)[:, None] + dw == jnp.arange(W)[None, :])
                    .astype(jnp.float32) for dw in range(kW)])
    # Wb[h', w', ci, dd, h, w, co]
    Wb = jnp.einsum('dabio,aph,bqw->pqidhwo', wf, TH, TW)
    return Wb.reshape(1, Hi * Wi * Cin, kD * H * W * Cout).astype(jnp.bfloat16)


def band_weights_1x1(w, scale, H, W):
    """1x1x1 conv -> block-diagonal matmul over (h,w) lane groups.
    w: [Cin, Cout] -> [1, H*W*Cin, H*W*Cout] bf16."""
    Cin, Cout = w.shape
    wf = w.astype(jnp.float32) * scale.astype(jnp.float32)
    eye = jnp.eye(H * W, dtype=jnp.float32)
    Wb = jnp.einsum('pq,co->pcqo', eye, wf)
    return Wb.reshape(1, H * W * Cin, H * W * Cout).astype(jnp.bfloat16)


# ----------------------------------------------------------------------------
# Conv wrappers (all glue is pads / free reshapes; compute is in band_matmul)
# ----------------------------------------------------------------------------
def pad_flatten_k3(x5):
    """[B, D, H, W, C] -> [B, D+2, (H+2)*(W+2)*C] (single 'same' pad, free reshape)."""
    B, D, H, W, C = x5.shape
    xp = jnp.pad(x5, ((0, 0), (1, 1), (1, 1), (1, 1), (0, 0)))
    return xp.reshape(B, D + 2, (H + 2) * (W + 2) * C)


def conv3_bn(x5, w, bn, *, relu, residual=None, out_dtype=jnp.bfloat16):
    """3x3x3 'same' conv + folded BN (+ residual) (+ relu). Returns [B, D, H*W*Cout]."""
    B, D, H, W, Cin = x5.shape
    s, b = bn_fold(bn)
    wb = band_weights_k3(w, s, H, W)
    bias = jnp.tile(b, H * W)
    xin = pad_flatten_k3(x5.astype(jnp.bfloat16))
    return band_matmul(xin, wb, bias, rows_out=D, residual=residual,
                       relu=relu, out_dtype=out_dtype)


def basic_block(x5, p, downsample_res=None, *, out_dtype=jnp.bfloat16):
    """conv3->bn->relu->conv3->bn->(+res)->relu.  Returns [B, D, H*W*Cout]."""
    B, D, H, W, Cin = x5.shape
    Cout = p["conv1"].shape[-1]
    h1 = conv3_bn(x5, p["conv1"], p["bn1"], relu=True)
    h1_5 = h1.reshape(B, D, H, W, Cout)
    if downsample_res is None:
        assert Cin == Cout, "identity residual requires inplanes == outplanes"
        residual = x5.astype(jnp.bfloat16).reshape(B, D, H * W * Cin)
    else:
        residual = downsample_res                      # already [B, D, H*W*Cout]
    return conv3_bn(h1_5, p["conv2"], p["bn2"], relu=True,
                    residual=residual, out_dtype=out_dtype)


# ----------------------------------------------------------------------------
# UBlock forward
# ----------------------------------------------------------------------------
def ublock_forward(x, params):
    # x: [B, D, H, W, inplanes] (NDHWC)
    B, D, H, W, Cin = x.shape
    assert D % 2 == 0 and H % 2 == 0 and W % 2 == 0
    x_bf = x.astype(jnp.bfloat16)

    # self.block(x)
    out_blk = basic_block(x_bf, params["block"])                    # [B, D, H*W*Cin]

    # self.down (k=2, s=2) + self.down_norm
    Ci = params["down_w"].shape[-1]
    sd, bd = bn_fold(params["down_bn"])
    wdb = band_weights_down2(params["down_w"], sd, H, W)
    x_down = out_blk.reshape(B, D // 2, 2 * H * W * Cin)            # free reshape
    down = band_matmul(x_down, wdb, jnp.tile(bd, (H // 2) * (W // 2)),
                       rows_out=D // 2, relu=False)                 # [B, D/2, (H/2)(W/2)*Ci]

    # self.intermediate
    # TODO(synk): intermediate_module is a caller-supplied nn.Module; identity is
    # used (valid since intermediate_inplanes == intermediate_outplanes here).

    # self.up (transposed k=2, s=2) + self.up_norm
    Co = params["up_w"].shape[-1]
    su, bu = bn_fold(params["up_bn"])
    wub = band_weights_up2(params["up_w"], su, H, W)
    up = band_matmul(down, wub, jnp.tile(bu, 2 * H * W),
                     rows_out=D // 2, relu=False)                   # [B, D/2, 2*H*W*Co]
    up5 = up.reshape(B, D, H, W, Co)                                # free reshape

    # MinkowskiOps.cat((out, x)) : channel concat, up first then x
    cat5 = jnp.concatenate([up5, x_bf], axis=-1)                    # [B, D, H, W, Co+Cin]
    Cc = Co + Cin

    # end_blocks0 downsample path: 1x1 conv + norm on the concat
    sds, bds = bn_fold(params["end0_ds"]["bn"])
    wds = band_weights_1x1(params["end0_ds"]["w"], sds, H, W)
    ds_res = band_matmul(cat5.reshape(B, D, H * W * Cc), wds,
                         jnp.tile(bds, H * W), rows_out=D, relu=False)

    # end_blocks0 (reps = 1)
    out = basic_block(cat5, params["end0"], downsample_res=ds_res,
                      out_dtype=jnp.float32)
    return out.reshape(B, D, H, W, Co)


# ----------------------------------------------------------------------------
# Deterministic parameter construction (shapes from UBlock.__init__)
# ----------------------------------------------------------------------------
def make_params(key, inplanes=4, inter_in=8, inter_out=8, outplanes=4):
    assert inter_in == inter_out  # identity intermediate module
    keys = iter(jax.random.split(key, 64))

    def w(shape):
        return 0.1 * jax.random.normal(next(keys), shape, jnp.float32)

    def bn(c):
        return dict(
            gamma=1.0 + 0.1 * jax.random.normal(next(keys), (c,), jnp.float32),
            beta=0.1 * jax.random.normal(next(keys), (c,), jnp.float32),
            mean=0.1 * jax.random.normal(next(keys), (c,), jnp.float32),
            var=1.0 + 0.1 * jnp.abs(jax.random.normal(next(keys), (c,), jnp.float32)),
        )

    return {
        "block": dict(conv1=w((3, 3, 3, inplanes, inplanes)), bn1=bn(inplanes),
                      conv2=w((3, 3, 3, inplanes, inplanes)), bn2=bn(inplanes)),
        "down_w": w((2, 2, 2, inplanes, inter_in)), "down_bn": bn(inter_in),
        "up_w": w((2, 2, 2, inter_out, outplanes)), "up_bn": bn(outplanes),
        "end0": dict(conv1=w((3, 3, 3, inplanes + outplanes, outplanes)), bn1=bn(outplanes),
                     conv2=w((3, 3, 3, outplanes, outplanes)), bn2=bn(outplanes)),
        "end0_ds": dict(w=w((inplanes + outplanes, outplanes)), bn=bn(outplanes)),
    }


if __name__ == "__main__":
    key = jax.random.PRNGKey(0)
    kx, kp = jax.random.split(key)

    B, Cin, S = 2, 4, 8
    x_ncdhw = jax.random.normal(kx, (B, Cin, S, S, S), jnp.float32)  # PyTorch NCDHW
    x = jnp.transpose(x_ncdhw, (0, 2, 3, 4, 1))                      # kernel layout NDHWC

    params = make_params(kp, inplanes=4, inter_in=8, inter_out=8, outplanes=4)

    fwd = jax.jit(ublock_forward)
    out = jax.block_until_ready(fwd(x, params))

    assert out.shape == (B, S, S, S, 4), out.shape
    assert bool(jnp.all(jnp.isfinite(out)))
    print("KERNEL_OK")
</pallas_src>

<mosaic_0001>
module attributes {stable_mosaic.version = 11 : i64} {
  func.func @_band_kernel(%arg0: i32, %arg1: memref<1x10x400xbf16, #tpu.memory_space<vmem>>, %arg2: memref<3x400x256xbf16, #tpu.memory_space<vmem>>, %arg3: memref<1x256xf32, #tpu.memory_space<vmem>>, %arg4: memref<1x8x256xbf16, #tpu.memory_space<vmem>>) attributes {dimension_semantics = [#tpu.dimension_semantics<parallel>], iteration_bounds = array<i64: 2>, scalar_prefetch = 0 : i64, scratch_operands = 0 : i64, tpu.core_type = #tpu.core_type<tc>, window_params = [{transform_indices = @transform_0, window_bounds = array<i64: 1, 10, 400>}, {pipeline_mode = #tpu.pipeline_mode<synchronous>, transform_indices = @transform_1, window_bounds = array<i64: 3, 400, 256>}, {pipeline_mode = #tpu.pipeline_mode<synchronous>, transform_indices = @transform_2, window_bounds = array<i64: 1, 256>}, {transform_indices = @transform_3, window_bounds = array<i64: 1, 8, 256>}]} {
    %cst = arith.constant 0.000000e+00 : f32
    %0 = vector.broadcast %cst : f32 to vector<8x256xf32>
    %c0 = arith.constant 0 : index
    %c0_0 = arith.constant 0 : index
    %c0_1 = arith.constant 0 : index
    %1 = vector.load %arg1[%c0, %c0_0, %c0_1] : memref<1x10x400xbf16, #tpu.memory_space<vmem>>, vector<1x8x400xbf16>
    %2 = vector.shape_cast %1 : vector<1x8x400xbf16> to vector<8x400xbf16>
    %c0_2 = arith.constant 0 : index
    %c0_3 = arith.constant 0 : index
    %c0_4 = arith.constant 0 : index
    %3 = vector.load %arg2[%c0_2, %c0_3, %c0_4] : memref<3x400x256xbf16, #tpu.memory_space<vmem>>, vector<1x400x256xbf16>
    %4 = vector.shape_cast %3 : vector<1x400x256xbf16> to vector<400x256xbf16>
    %cst_5 = arith.constant dense<0.000000e+00> : vector<8x256xf32>
    %5 = tpu.matmul %2, %4, %cst_5 {dimension_numbers = #tpu.dot_dimension_numbers<[1], [0], [0], [1], [0, 0, 1, 1], [], []>} : vector<8x400xbf16>, vector<400x256xbf16>, vector<8x256xf32> -> vector<8x256xf32>
    %6 = arith.addf %0, %5 : vector<8x256xf32>
    %c0_6 = arith.constant 0 : index
    %c1 = arith.constant 1 : index
    %c0_7 = arith.constant 0 : index
    %7 = vector.load %arg1[%c0_6, %c1, %c0_7] : memref<1x10x400xbf16, #tpu.memory_space<vmem>>, vector<1x8x400xbf16>
    %8 = vector.shape_cast %7 : vector<1x8x400xbf16> to vector<8x400xbf16>
    %c1_8 = arith.constant 1 : index
    %c0_9 = arith.constant 0 : index
    %c0_10 = arith.constant 0 : index
    %9 = vector.load %arg2[%c1_8, %c0_9, %c0_10] : memref<3x400x256xbf16, #tpu.memory_space<vmem>>, vector<1x400x256xbf16>
    %10 = vector.shape_cast %9 : vector<1x400x256xbf16> to vector<400x256xbf16>
    %cst_11 = arith.constant dense<0.000000e+00> : vector<8x256xf32>
    %11 = tpu.matmul %8, %10, %cst_11 {dimension_numbers = #tpu.dot_dimension_numbers<[1], [0], [0], [1], [0, 0, 1, 1], [], []>} : vector<8x400xbf16>, vector<400x256xbf16>, vector<8x256xf32> -> vector<8x256xf32>
    %12 = arith.addf %6, %11 : vector<8x256xf32>
    %c0_12 = arith.constant 0 : index
    %c2 = arith.constant 2 : index
    %c0_13 = arith.constant 0 : index
    %13 = vector.load %arg1[%c0_12, %c2, %c0_13] : memref<1x10x400xbf16, #tpu.memory_space<vmem>>, vector<1x8x400xbf16>
    %14 = vector.shape_cast %13 : vector<1x8x400xbf16> to vector<8x400xbf16>
    %c2_14 = arith.constant 2 : index
    %c0_15 = arith.constant 0 : index
    %c0_16 = arith.constant 0 : index
    %15 = vector.load %arg2[%c2_14, %c0_15, %c0_16] : memref<3x400x256xbf16, #tpu.memory_space<vmem>>, vector<1x400x256xbf16>
    %16 = vector.shape_cast %15 : vector<1x400x256xbf16> to vector<400x256xbf16>
    %cst_17 = arith.constant dense<0.000000e+00> : vector<8x256xf32>
    %17 = tpu.matmul %14, %16, %cst_17 {dimension_numbers = #tpu.dot_dimension_numbers<[1], [0], [0], [1], [0, 0, 1, 1], [], []>} : vector<8x400xbf16>, vector<400x256xbf16>, vector<8x256xf32> -> vector<8x256xf32>
    %18 = arith.addf %12, %17 : vector<8x256xf32>
    %c0_18 = arith.constant 0 : index
    %c0_19 = arith.constant 0 : index
    %19 = vector.load %arg3[%c0_18, %c0_19] : memref<1x256xf32, #tpu.memory_space<vmem>>, vector<1x256xf32>
    %20 = vector.broadcast %19 : vector<1x256xf32> to vector<8x256xf32>
    %21 = arith.addf %18, %20 : vector<8x256xf32>
    %cst_20 = arith.constant 0.000000e+00 : f32
    %22 = vector.broadcast %cst_20 : f32 to vector<8x256xf32>
    %23 = arith.maximumf %21, %22 : vector<8x256xf32>
    %24 = arith.truncf %23 : vector<8x256xf32> to vector<8x256xbf16>
    %c0_21 = arith.constant 0 : index
    %c0_22 = arith.constant 0 : index
    %c0_23 = arith.constant 0 : index
    %25 = vector.load %arg4[%c0_21, %c0_22, %c0_23] : memref<1x8x256xbf16, #tpu.memory_space<vmem>>, vector<1x8x256xbf16>
    %26 = vector.shape_cast %25 : vector<1x8x256xbf16> to vector<8x256xbf16>
    %27 = vector.shape_cast %24 : vector<8x256xbf16> to vector<1x8x256xbf16>
    tpu.vector_store %arg4[%c0_21, %c0_22, %c0_23], %27 {strides = array<i32>} : memref<1x8x256xbf16, #tpu.memory_space<vmem>>, vector<1x8x256xbf16>,
    return
  }
  func.func @transform_0(%arg0: i32) -> (i32, i32, i32) {
    %c0_i32 = arith.constant 0 : i32
    %c0_i32_0 = arith.constant 0 : i32
    %c0_i32_1 = arith.constant 0 : i32
    return %arg0, %c0_i32, %c0_i32_0 : i32, i32, i32
  }
  func.func @transform_1(%arg0: i32) -> (i32, i32, i32) {
    %c0_i32 = arith.constant 0 : i32
    %c0_i32_0 = arith.constant 0 : i32
    %c0_i32_1 = arith.constant 0 : i32
    %c0_i32_2 = arith.constant 0 : i32
    return %c0_i32, %c0_i32_0, %c0_i32_1 : i32, i32, i32
  }
  func.func @transform_2(%arg0: i32) -> (i32, i32) {
    %c0_i32 = arith.constant 0 : i32
    %c0_i32_0 = arith.constant 0 : i32
    %c0_i32_1 = arith.constant 0 : i32
    return %c0_i32, %c0_i32_0 : i32, i32
  }
  func.func @transform_3(%arg0: i32) -> (i32, i32, i32) {
    %c0_i32 = arith.constant 0 : i32
    %c0_i32_0 = arith.constant 0 : i32
    %c0_i32_1 = arith.constant 0 : i32
    return %arg0, %c0_i32, %c0_i32_0 : i32, i32, i32
  }
}

module attributes {stable_mosaic.version = 11 : i64} {
  func.func @_band_kernel_res(%arg0: i32, %arg1: memref<1x10x400xbf16, #tpu.memory_space<vmem>>, %arg2: memref<3x400x256xbf16, #tpu.memory_space<vmem>>, %arg3: memref<1x256xf32, #tpu.memory_space<vmem>>, %arg4: memref<1x8x256xbf16, #tpu.memory_space<vmem>>, %arg5: memref<1x8x256xbf16, #tpu.memory_space<vmem>>) attributes {dimension_semantics = [#tpu.dimension_semantics<parallel>], iteration_bounds = array<i64: 2>, scalar_prefetch = 0 : i64, scratch_operands = 0 : i64, tpu.core_type = #tpu.core_type<tc>, window_params = [{transform_indices = @transform_0, window_bounds = array<i64: 1, 10, 400>}, {pipeline_mode = #tpu.pipeline_mode<synchronous>, transform_indices = @transform_1, window_bounds = array<i64: 3, 400, 256>}, {pipeline_mode = #tpu.pipeline_mode<synchronous>, transform_indices = @transform_2, window_bounds = array<i64: 1, 256>}, {transform_indices = @transform_3, window_bounds = array<i64: 1, 8, 256>}, {transform_indices = @transform_4, window_bounds = array<i64: 1, 8, 256>}]} {
    %cst = arith.constant 0.000000e+00 : f32
    %0 = vector.broadcast %cst : f32 to vector<8x256xf32>
    %c0 = arith.constant 0 : index
    %c0_0 = arith.constant 0 : index
    %c0_1 = arith.constant 0 : index
    %1 = vector.load %arg1[%c0, %c0_0, %c0_1] : memref<1x10x400xbf16, #tpu.memory_space<vmem>>, vector<1x8x400xbf16>
    %2 = vector.shape_cast %1 : vector<1x8x400xbf16> to vector<8x400xbf16>
    %c0_2 = arith.constant 0 : index
    %c0_3 = arith.constant 0 : index
    %c0_4 = arith.constant 0 : index
    %3 = vector.load %arg2[%c0_2, %c0_3, %c0_4] : memref<3x400x256xbf16, #tpu.memory_space<vmem>>, vector<1x400x256xbf16>
    %4 = vector.shape_cast %3 : vector<1x400x256xbf16> to vector<400x256xbf16>
    %cst_5 = arith.constant dense<0.000000e+00> : vector<8x256xf32>
    %5 = tpu.matmul %2, %4, %cst_5 {dimension_numbers = #tpu.dot_dimension_numbers<[1], [0], [0], [1], [0, 0, 1, 1], [], []>} : vector<8x400xbf16>, vector<400x256xbf16>, vector<8x256xf32> -> vector<8x256xf32>
    %6 = arith.addf %0, %5 : vector<8x256xf32>
    %c0_6 = arith.constant 0 : index
    %c1 = arith.constant 1 : index
    %c0_7 = arith.constant 0 : index
    %7 = vector.load %arg1[%c0_6, %c1, %c0_7] : memref<1x10x400xbf16, #tpu.memory_space<vmem>>, vector<1x8x400xbf16>
    %8 = vector.shape_cast %7 : vector<1x8x400xbf16> to vector<8x400xbf16>
    %c1_8 = arith.constant 1 : index
    %c0_9 = arith.constant 0 : index
    %c0_10 = arith.constant 0 : index
    %9 = vector.load %arg2[%c1_8, %c0_9, %c0_10] : memref<3x400x256xbf16, #tpu.memory_space<vmem>>, vector<1x400x256xbf16>
    %10 = vector.shape_cast %9 : vector<1x400x256xbf16> to vector<400x256xbf16>
    %cst_11 = arith.constant dense<0.000000e+00> : vector<8x256xf32>
    %11 = tpu.matmul %8, %10, %cst_11 {dimension_numbers = #tpu.dot_dimension_numbers<[1], [0], [0], [1], [0, 0, 1, 1], [], []>} : vector<8x400xbf16>, vector<400x256xbf16>, vector<8x256xf32> -> vector<8x256xf32>
    %12 = arith.addf %6, %11 : vector<8x256xf32>
    %c0_12 = arith.constant 0 : index
    %c2 = arith.constant 2 : index
    %c0_13 = arith.constant 0 : index
    %13 = vector.load %arg1[%c0_12, %c2, %c0_13] : memref<1x10x400xbf16, #tpu.memory_space<vmem>>, vector<1x8x400xbf16>
    %14 = vector.shape_cast %13 : vector<1x8x400xbf16> to vector<8x400xbf16>
    %c2_14 = arith.constant 2 : index
    %c0_15 = arith.constant 0 : index
    %c0_16 = arith.constant 0 : index
    %15 = vector.load %arg2[%c2_14, %c0_15, %c0_16] : memref<3x400x256xbf16, #tpu.memory_space<vmem>>, vector<1x400x256xbf16>
    %16 = vector.shape_cast %15 : vector<1x400x256xbf16> to vector<400x256xbf16>
    %cst_17 = arith.constant dense<0.000000e+00> : vector<8x256xf32>
    %17 = tpu.matmul %14, %16, %cst_17 {dimension_numbers = #tpu.dot_dimension_numbers<[1], [0], [0], [1], [0, 0, 1, 1], [], []>} : vector<8x400xbf16>, vector<400x256xbf16>, vector<8x256xf32> -> vector<8x256xf32>
    %18 = arith.addf %12, %17 : vector<8x256xf32>
    %c0_18 = arith.constant 0 : index
    %c0_19 = arith.constant 0 : index
    %19 = vector.load %arg3[%c0_18, %c0_19] : memref<1x256xf32, #tpu.memory_space<vmem>>, vector<1x256xf32>
    %20 = vector.broadcast %19 : vector<1x256xf32> to vector<8x256xf32>
    %21 = arith.addf %18, %20 : vector<8x256xf32>
    %c0_20 = arith.constant 0 : index
    %c0_21 = arith.constant 0 : index
    %c0_22 = arith.constant 0 : index
    %22 = vector.load %arg4[%c0_20, %c0_21, %c0_22] : memref<1x8x256xbf16, #tpu.memory_space<vmem>>, vector<1x8x256xbf16>
    %23 = vector.shape_cast %22 : vector<1x8x256xbf16> to vector<8x256xbf16>
    %24 = arith.extf %23 : vector<8x256xbf16> to vector<8x256xf32>
    %25 = arith.addf %21, %24 : vector<8x256xf32>
    %cst_23 = arith.constant 0.000000e+00 : f32
    %26 = vector.broadcast %cst_23 : f32 to vector<8x256xf32>
    %27 = arith.maximumf %25, %26 : vector<8x256xf32>
    %28 = arith.truncf %27 : vector<8x256xf32> to vector<8x256xbf16>
    %c0_24 = arith.constant 0 : index
    %c0_25 = arith.constant 0 : index
    %c0_26 = arith.constant 0 : index
    %29 = vector.load %arg5[%c0_24, %c0_25, %c0_26] : memref<1x8x256xbf16, #tpu.memory_space<vmem>>, vector<1x8x256xbf16>
    %30 = vector.shape_cast %29 : vector<1x8x256xbf16> to vector<8x256xbf16>
    %31 = vector.shape_cast %28 : vector<8x256xbf16> to vector<1x8x256xbf16>
    tpu.vector_store %arg5[%c0_24, %c0_25, %c0_26], %31 {strides = array<i32>} : memref<1x8x256xbf16, #tpu.memory_space<vmem>>, vector<1x8x256xbf16>,
    return
  }
  func.func @transform_0(%arg0: i32) -> (i32, i32, i32) {
    %c0_i32 = arith.constant 0 : i32
    %c0_i32_0 = arith.constant 0 : i32
    %c0_i32_1 = arith.constant 0 : i32
    return %arg0, %c0_i32, %c0_i32_0 : i32, i32, i32
  }
  func.func @transform_1(%arg0: i32) -> (i32, i32, i32) {
    %c0_i32 = arith.constant 0 : i32
    %c0_i32_0 = arith.constant 0 : i32
    %c0_i32_1 = arith.constant 0 : i32
    %c0_i32_2 = arith.constant 0 : i32
    return %c0_i32, %c0_i32_0, %c0_i32_1 : i32, i32, i32
  }
  func.func @transform_2(%arg0: i32) -> (i32, i32) {
    %c0_i32 = arith.constant 0 : i32
    %c0_i32_0 = arith.constant 0 : i32
    %c0_i32_1 = arith.constant 0 : i32
    return %c0_i32, %c0_i32_0 : i32, i32
  }
  func.func @transform_3(%arg0: i32) -> (i32, i32, i32) {
    %c0_i32 = arith.constant 0 : i32
    %c0_i32_0 = arith.constant 0 : i32
    %c0_i32_1 = arith.constant 0 : i32
    return %arg0, %c0_i32, %c0_i32_0 : i32, i32, i32
  }
  func.func @transform_4(%arg0: i32) -> (i32, i32, i32) {
    %c0_i32 = arith.constant 0 : i32
    %c0_i32_0 = arith.constant 0 : i32
    %c0_i32_1 = arith.constant 0 : i32
    return %arg0, %c0_i32, %c0_i32_0 : i32, i32, i32
  }
}

module attributes {stable_mosaic.version = 11 : i64} {
  func.func @_band_kernel(%arg0: i32, %arg1: memref<1x4x512xbf16, #tpu.memory_space<vmem>>, %arg2: memref<1x512x128xbf16, #tpu.memory_space<vmem>>, %arg3: memref<1x128xf32, #tpu.memory_space<vmem>>, %arg4: memref<1x4x128xbf16, #tpu.memory_space<vmem>>) attributes {dimension_semantics = [#tpu.dimension_semantics<parallel>], iteration_bounds = array<i64: 2>, scalar_prefetch = 0 : i64, scratch_operands = 0 : i64, tpu.core_type = #tpu.core_type<tc>, window_params = [{transform_indices = @transform_0, window_bounds = array<i64: 1, 4, 512>}, {pipeline_mode = #tpu.pipeline_mode<synchronous>, transform_indices = @transform_1, window_bounds = array<i64: 1, 512, 128>}, {pipeline_mode = #tpu.pipeline_mode<synchronous>, transform_indices = @transform_2, window_bounds = array<i64: 1, 128>}, {transform_indices = @transform_3, window_bounds = array<i64: 1, 4, 128>}]} {
    %cst = arith.constant 0.000000e+00 : f32
    %0 = vector.broadcast %cst : f32 to vector<4x128xf32>
    %c0 = arith.constant 0 : index
    %c0_0 = arith.constant 0 : index
    %c0_1 = arith.constant 0 : index
    %1 = vector.load %arg1[%c0, %c0_0, %c0_1] : memref<1x4x512xbf16, #tpu.memory_space<vmem>>, vector<1x4x512xbf16>
    %2 = vector.shape_cast %1 : vector<1x4x512xbf16> to vector<4x512xbf16>
    %c0_2 = arith.constant 0 : index
    %c0_3 = arith.constant 0 : index
    %c0_4 = arith.constant 0 : index
    %3 = vector.load %arg2[%c0_2, %c0_3, %c0_4] : memref<1x512x128xbf16, #tpu.memory_space<vmem>>, vector<1x512x128xbf16>
    %4 = vector.shape_cast %3 : vector<1x512x128xbf16> to vector<512x128xbf16>
    %cst_5 = arith.constant dense<0.000000e+00> : vector<4x128xf32>
    %5 = tpu.matmul %2, %4, %cst_5 {dimension_numbers = #tpu.dot_dimension_numbers<[1], [0], [0], [1], [0, 0, 1, 1], [], []>} : vector<4x512xbf16>, vector<512x128xbf16>, vector<4x128xf32> -> vector<4x128xf32>
    %6 = arith.addf %0, %5 : vector<4x128xf32>
    %c0_6 = arith.constant 0 : index
    %c0_7 = arith.constant 0 : index
    %7 = vector.load %arg3[%c0_6, %c0_7] : memref<1x128xf32, #tpu.memory_space<vmem>>, vector<1x128xf32>
    %8 = vector.broadcast %7 : vector<1x128xf32> to vector<4x128xf32>
    %9 = arith.addf %6, %8 : vector<4x128xf32>
    %10 = arith.truncf %9 : vector<4x128xf32> to vector<4x128xbf16>
    %c0_8 = arith.constant 0 : index
    %c0_9 = arith.constant 0 : index
    %c0_10 = arith.constant 0 : index
    %11 = vector.load %arg4[%c0_8, %c0_9, %c0_10] : memref<1x4x128xbf16, #tpu.memory_space<vmem>>, vector<1x4x128xbf16>
    %12 = vector.shape_cast %11 : vector<1x4x128xbf16> to vector<4x128xbf16>
    %13 = vector.shape_cast %10 : vector<4x128xbf16> to vector<1x4x128xbf16>
    tpu.vector_store %arg4[%c0_8, %c0_9, %c0_10], %13 {strides = array<i32>} : memref<1x4x128xbf16, #tpu.memory_space<vmem>>, vector<1x4x128xbf16>,
    return
  }
  func.func @transform_0(%arg0: i32) -> (i32, i32, i32) {
    %c0_i32 = arith.constant 0 : i32
    %c0_i32_0 = arith.constant 0 : i32
    %c0_i32_1 = arith.constant 0 : i32
    return %arg0, %c0_i32, %c0_i32_0 : i32, i32, i32
  }
  func.func @transform_1(%arg0: i32) -> (i32, i32, i32) {
    %c0_i32 = arith.constant 0 : i32
    %c0_i32_0 = arith.constant 0 : i32
    %c0_i32_1 = arith.constant 0 : i32
    %c0_i32_2 = arith.constant 0 : i32
    return %c0_i32, %c0_i32_0, %c0_i32_1 : i32, i32, i32
  }
  func.func @transform_2(%arg0: i32) -> (i32, i32) {
    %c0_i32 = arith.constant 0 : i32
    %c0_i32_0 = arith.constant 0 : i32
    %c0_i32_1 = arith.constant 0 : i32
    return %c0_i32, %c0_i32_0 : i32, i32
  }
  func.func @transform_3(%arg0: i32) -> (i32, i32, i32) {
    %c0_i32 = arith.constant 0 : i32
    %c0_i32_0 = arith.constant 0 : i32
    %c0_i32_1 = arith.constant 0 : i32
    return %arg0, %c0_i32, %c0_i32_0 : i32, i32, i32
  }
}

module attributes {stable_mosaic.version = 11 : i64} {
  func.func @_band_kernel(%arg0: i32, %arg1: memref<1x4x128xbf16, #tpu.memory_space<vmem>>, %arg2: memref<1x128x512xbf16, #tpu.memory_space<vmem>>, %arg3: memref<1x512xf32, #tpu.memory_space<vmem>>, %arg4: memref<1x4x512xbf16, #tpu.memory_space<vmem>>) attributes {dimension_semantics = [#tpu.dimension_semantics<parallel>], iteration_bounds = array<i64: 2>, scalar_prefetch = 0 : i64, scratch_operands = 0 : i64, tpu.core_type = #tpu.core_type<tc>, window_params = [{transform_indices = @transform_0, window_bounds = array<i64: 1, 4, 128>}, {pipeline_mode = #tpu.pipeline_mode<synchronous>, transform_indices = @transform_1, window_bounds = array<i64: 1, 128, 512>}, {pipeline_mode = #tpu.pipeline_mode<synchronous>, transform_indices = @transform_2, window_bounds = array<i64: 1, 512>}, {transform_indices = @transform_3, window_bounds = array<i64: 1, 4, 512>}]} {
    %cst = arith.constant 0.000000e+00 : f32
    %0 = vector.broadcast %cst : f32 to vector<4x512xf32>
    %c0 = arith.constant 0 : index
    %c0_0 = arith.constant 0 : index
    %c0_1 = arith.constant 0 : index
    %1 = vector.load %arg1[%c0, %c0_0, %c0_1] : memref<1x4x128xbf16, #tpu.memory_space<vmem>>, vector<1x4x128xbf16>
    %2 = vector.shape_cast %1 : vector<1x4x128xbf16> to vector<4x128xbf16>
    %c0_2 = arith.constant 0 : index
    %c0_3 = arith.constant 0 : index
    %c0_4 = arith.constant 0 : index
    %3 = vector.load %arg2[%c0_2, %c0_3, %c0_4] : memref<1x128x512xbf16, #tpu.memory_space<vmem>>, vector<1x128x512xbf16>
    %4 = vector.shape_cast %3 : vector<1x128x512xbf16> to vector<128x512xbf16>
    %cst_5 = arith.constant dense<0.000000e+00> : vector<4x512xf32>
    %5 = tpu.matmul %2, %4, %cst_5 {dimension_numbers = #tpu.dot_dimension_numbers<[1], [0], [0], [1], [0, 0, 1, 1], [], []>} : vector<4x128xbf16>, vector<128x512xbf16>, vector<4x512xf32> -> vector<4x512xf32>
    %6 = arith.addf %0, %5 : vector<4x512xf32>
    %c0_6 = arith.constant 0 : index
    %c0_7 = arith.constant 0 : index
    %7 = vector.load %arg3[%c0_6, %c0_7] : memref<1x512xf32, #tpu.memory_space<vmem>>, vector<1x512xf32>
    %8 = vector.broadcast %7 : vector<1x512xf32> to vector<4x512xf32>
    %9 = arith.addf %6, %8 : vector<4x512xf32>
    %10 = arith.truncf %9 : vector<4x512xf32> to vector<4x512xbf16>
    %c0_8 = arith.constant 0 : index
    %c0_9 = arith.constant 0 : index
    %c0_10 = arith.constant 0 : index
    %11 = vector.load %arg4[%c0_8, %c0_9, %c0_10] : memref<1x4x512xbf16, #tpu.memory_space<vmem>>, vector<1x4x512xbf16>
    %12 = vector.shape_cast %11 : vector<1x4x512xbf16> to vector<4x512xbf16>
    %13 = vector.shape_cast %10 : vector<4x512xbf16> to vector<1x4x512xbf16>
    tpu.vector_store %arg4[%c0_8, %c0_9, %c0_10], %13 {strides = array<i32>} : memref<1x4x512xbf16, #tpu.memory_space<vmem>>, vector<1x4x512xbf16>,
    return
  }
  func.func @transform_0(%arg0: i32) -> (i32, i32, i32) {
    %c0_i32 = arith.constant 0 : i32
    %c0_i32_0 = arith.constant 0 : i32
    %c0_i32_1 = arith.constant 0 : i32
    return %arg0, %c0_i32, %c0_i32_0 : i32, i32, i32
  }
  func.func @transform_1(%arg0: i32) -> (i32, i32, i32) {
    %c0_i32 = arith.constant 0 : i32
    %c0_i32_0 = arith.constant 0 : i32
    %c0_i32_1 = arith.constant 0 : i32
    %c0_i32_2 = arith.constant 0 : i32
    return %c0_i32, %c0_i32_0, %c0_i32_1 : i32, i32, i32
  }
  func.func @transform_2(%arg0: i32) -> (i32, i32) {
    %c0_i32 = arith.constant 0 : i32
    %c0_i32_0 = arith.constant 0 : i32
    %c0_i32_1 = arith.constant 0 : i32
    return %c0_i32, %c0_i32_0 : i32, i32
  }
  func.func @transform_3(%arg0: i32) -> (i32, i32, i32) {
    %c0_i32 = arith.constant 0 : i32
    %c0_i32_0 = arith.constant 0 : i32
    %c0_i32_1 = arith.constant 0 : i32
    return %arg0, %c0_i32, %c0_i32_0 : i32, i32, i32
  }
}

module attributes {stable_mosaic.version = 11 : i64} {
  func.func @_band_kernel(%arg0: i32, %arg1: memref<1x10x800xbf16, #tpu.memory_space<vmem>>, %arg2: memref<3x800x256xbf16, #tpu.memory_space<vmem>>, %arg3: memref<1x256xf32, #tpu.memory_space<vmem>>, %arg4: memref<1x8x256xbf16, #tpu.memory_space<vmem>>) attributes {dimension_semantics = [#tpu.dimension_semantics<parallel>], iteration_bounds = array<i64: 2>, scalar_prefetch = 0 : i64, scratch_operands = 0 : i64, tpu.core_type = #tpu.core_type<tc>, window_params = [{transform_indices = @transform_0, window_bounds = array<i64: 1, 10, 800>}, {pipeline_mode = #tpu.pipeline_mode<synchronous>, transform_indices = @transform_1, window_bounds = array<i64: 3, 800, 256>}, {pipeline_mode = #tpu.pipeline_mode<synchronous>, transform_indices = @transform_2, window_bounds = array<i64: 1, 256>}, {transform_indices = @transform_3, window_bounds = array<i64: 1, 8, 256>}]} {
    %cst = arith.constant 0.000000e+00 : f32
    %0 = vector.broadcast %cst : f32 to vector<8x256xf32>
    %c0 = arith.constant 0 : index
    %c0_0 = arith.constant 0 : index
    %c0_1 = arith.constant 0 : index
    %1 = vector.load %arg1[%c0, %c0_0, %c0_1] : memref<1x10x800xbf16, #tpu.memory_space<vmem>>, vector<1x8x800xbf16>
    %2 = vector.shape_cast %1 : vector<1x8x800xbf16> to vector<8x800xbf16>
    %c0_2 = arith.constant 0 : index
    %c0_3 = arith.constant 0 : index
    %c0_4 = arith.constant 0 : index
    %3 = vector.load %arg2[%c0_2, %c0_3, %c0_4] : memref<3x800x256xbf16, #tpu.memory_space<vmem>>, vector<1x800x256xbf16>
    %4 = vector.shape_cast %3 : vector<1x800x256xbf16> to vector<800x256xbf16>
    %cst_5 = arith.constant dense<0.000000e+00> : vector<8x256xf32>
    %5 = tpu.matmul %2, %4, %cst_5 {dimension_numbers = #tpu.dot_dimension_numbers<[1], [0], [0], [1], [0, 0, 1, 1], [], []>} : vector<8x800xbf16>, vector<800x256xbf16>, vector<8x256xf32> -> vector<8x256xf32>
    %6 = arith.addf %0, %5 : vector<8x256xf32>
    %c0_6 = arith.constant 0 : index
    %c1 = arith.constant 1 : index
    %c0_7 = arith.constant 0 : index
    %7 = vector.load %arg1[%c0_6, %c1, %c0_7] : memref<1x10x800xbf16, #tpu.memory_space<vmem>>, vector<1x8x800xbf16>
    %8 = vector.shape_cast %7 : vector<1x8x800xbf16> to vector<8x800xbf16>
    %c1_8 = arith.constant 1 : index
    %c0_9 = arith.constant 0 : index
    %c0_10 = arith.constant 0 : index
    %9 = vector.load %arg2[%c1_8, %c0_9, %c0_10] : memref<3x800x256xbf16, #tpu.memory_space<vmem>>, vector<1x800x256xbf16>
    %10 = vector.shape_cast %9 : vector<1x800x256xbf16> to vector<800x256xbf16>
    %cst_11 = arith.constant dense<0.000000e+00> : vector<8x256xf32>
    %11 = tpu.matmul %8, %10, %cst_11 {dimension_numbers = #tpu.dot_dimension_numbers<[1], [0], [0], [1], [0, 0, 1, 1], [], []>} : vector<8x800xbf16>, vector<800x256xbf16>, vector<8x256xf32> -> vector<8x256xf32>
    %12 = arith.addf %6, %11 : vector<8x256xf32>
    %c0_12 = arith.constant 0 : index
    %c2 = arith.constant 2 : index
    %c0_13 = arith.constant 0 : index
    %13 = vector.load %arg1[%c0_12, %c2, %c0_13] : memref<1x10x800xbf16, #tpu.memory_space<vmem>>, vector<1x8x800xbf16>
    %14 = vector.shape_cast %13 : vector<1x8x800xbf16> to vector<8x800xbf16>
    %c2_14 = arith.constant 2 : index
    %c0_15 = arith.constant 0 : index
    %c0_16 = arith.constant 0 : index
    %15 = vector.load %arg2[%c2_14, %c0_15, %c0_16] : memref<3x800x256xbf16, #tpu.memory_space<vmem>>, vector<1x800x256xbf16>
    %16 = vector.shape_cast %15 : vector<1x800x256xbf16> to vector<800x256xbf16>
    %cst_17 = arith.constant dense<0.000000e+00> : vector<8x256xf32>
    %17 = tpu.matmul %14, %16, %cst_17 {dimension_numbers = #tpu.dot_dimension_numbers<[1], [0], [0], [1], [0, 0, 1, 1], [], []>} : vector<8x800xbf16>, vector<800x256xbf16>, vector<8x256xf32> -> vector<8x256xf32>
    %18 = arith.addf %12, %17 : vector<8x256xf32>
    %c0_18 = arith.constant 0 : index
    %c0_19 = arith.constant 0 : index
    %19 = vector.load %arg3[%c0_18, %c0_19] : memref<1x256xf32, #tpu.memory_space<vmem>>, vector<1x256xf32>
    %20 = vector.broadcast %19 : vector<1x256xf32> to vector<8x256xf32>
    %21 = arith.addf %18, %20 : vector<8x256xf32>
    %cst_20 = arith.constant 0.000000e+00 : f32
    %22 = vector.broadcast %cst_20 : f32 to vector<8x256xf32>
    %23 = arith.maximumf %21, %22 : vector<8x256xf32>
    %24 = arith.truncf %23 : vector<8x256xf32> to vector<8x256xbf16>
    %c0_21 = arith.constant 0 : index
    %c0_22 = arith.constant 0 : index
    %c0_23 = arith.constant 0 : index
    %25 = vector.load %arg4[%c0_21, %c0_22, %c0_23] : memref<1x8x256xbf16, #tpu.memory_space<vmem>>, vector<1x8x256xbf16>
    %26 = vector.shape_cast %25 : vector<1x8x256xbf16> to vector<8x256xbf16>
    %27 = vector.shape_cast %24 : vector<8x256xbf16> to vector<1x8x256xbf16>
    tpu.vector_store %arg4[%c0_21, %c0_22, %c0_23], %27 {strides = array<i32>} : memref<1x8x256xbf16, #tpu.memory_space<vmem>>, vector<1x8x256xbf16>,
    return
  }
  func.func @transform_0(%arg0: i32) -> (i32, i32, i32) {
    %c0_i32 = arith.constant 0 : i32
    %c0_i32_0 = arith.constant 0 : i32
    %c0_i32_1 = arith.constant 0 : i32
    return %arg0, %c0_i32, %c0_i32_0 : i32, i32, i32
  }
  func.func @transform_1(%arg0: i32) -> (i32, i32, i32) {
    %c0_i32 = arith.constant 0 : i32
    %c0_i32_0 = arith.constant 0 : i32
    %c0_i32_1 = arith.constant 0 : i32
    %c0_i32_2 = arith.constant 0 : i32
    return %c0_i32, %c0_i32_0, %c0_i32_1 : i32, i32, i32
  }
  func.func @transform_2(%arg0: i32) -> (i32, i32) {
    %c0_i32 = arith.constant 0 : i32
    %c0_i32_0 = arith.constant 0 : i32
    %c0_i32_1 = arith.constant 0 : i32
    return %c0_i32, %c0_i32_0 : i32, i32
  }
  func.func @transform_3(%arg0: i32) -> (i32, i32, i32) {
    %c0_i32 = arith.constant 0 : i32
    %c0_i32_0 = arith.constant 0 : i32
    %c0_i32_1 = arith.constant 0 : i32
    return %arg0, %c0_i32, %c0_i32_0 : i32, i32, i32
  }
}

module attributes {stable_mosaic.version = 11 : i64} {
  func.func @_band_kernel(%arg0: i32, %arg1: memref<1x8x512xbf16, #tpu.memory_space<vmem>>, %arg2: memref<1x512x256xbf16, #tpu.memory_space<vmem>>, %arg3: memref<1x256xf32, #tpu.memory_space<vmem>>, %arg4: memref<1x8x256xbf16, #tpu.memory_space<vmem>>) attributes {dimension_semantics = [#tpu.dimension_semantics<parallel>], iteration_bounds = array<i64: 2>, scalar_prefetch = 0 : i64, scratch_operands = 0 : i64, tpu.core_type = #tpu.core_type<tc>, window_params = [{transform_indices = @transform_0, window_bounds = array<i64: 1, 8, 512>}, {pipeline_mode = #tpu.pipeline_mode<synchronous>, transform_indices = @transform_1, window_bounds = array<i64: 1, 512, 256>}, {pipeline_mode = #tpu.pipeline_mode<synchronous>, transform_indices = @transform_2, window_bounds = array<i64: 1, 256>}, {transform_indices = @transform_3, window_bounds = array<i64: 1, 8, 256>}]} {
    %cst = arith.constant 0.000000e+00 : f32
    %0 = vector.broadcast %cst : f32 to vector<8x256xf32>
    %c0 = arith.constant 0 : index
    %c0_0 = arith.constant 0 : index
    %c0_1 = arith.constant 0 : index
    %1 = vector.load %arg1[%c0, %c0_0, %c0_1] : memref<1x8x512xbf16, #tpu.memory_space<vmem>>, vector<1x8x512xbf16>
    %2 = vector.shape_cast %1 : vector<1x8x512xbf16> to vector<8x512xbf16>
    %c0_2 = arith.constant 0 : index
    %c0_3 = arith.constant 0 : index
    %c0_4 = arith.constant 0 : index
    %3 = vector.load %arg2[%c0_2, %c0_3, %c0_4] : memref<1x512x256xbf16, #tpu.memory_space<vmem>>, vector<1x512x256xbf16>
    %4 = vector.shape_cast %3 : vector<1x512x256xbf16> to vector<512x256xbf16>
    %cst_5 = arith.constant dense<0.000000e+00> : vector<8x256xf32>
    %5 = tpu.matmul %2, %4, %cst_5 {dimension_numbers = #tpu.dot_dimension_numbers<[1], [0], [0], [1], [0, 0, 1, 1], [], []>} : vector<8x512xbf16>, vector<512x256xbf16>, vector<8x256xf32> -> vector<8x256xf32>
    %6 = arith.addf %0, %5 : vector<8x256xf32>
    %c0_6 = arith.constant 0 : index
    %c0_7 = arith.constant 0 : index
    %7 = vector.load %arg3[%c0_6, %c0_7] : memref<1x256xf32, #tpu.memory_space<vmem>>, vector<1x256xf32>
    %8 = vector.broadcast %7 : vector<1x256xf32> to vector<8x256xf32>
    %9 = arith.addf %6, %8 : vector<8x256xf32>
    %10 = arith.truncf %9 : vector<8x256xf32> to vector<8x256xbf16>
    %c0_8 = arith.constant 0 : index
    %c0_9 = arith.constant 0 : index
    %c0_10 = arith.constant 0 : index
    %11 = vector.load %arg4[%c0_8, %c0_9, %c0_10] : memref<1x8x256xbf16, #tpu.memory_space<vmem>>, vector<1x8x256xbf16>
    %12 = vector.shape_cast %11 : vector<1x8x256xbf16> to vector<8x256xbf16>
    %13 = vector.shape_cast %10 : vector<8x256xbf16> to vector<1x8x256xbf16>
    tpu.vector_store %arg4[%c0_8, %c0_9, %c0_10], %13 {strides = array<i32>} : memref<1x8x256xbf16, #tpu.memory_space<vmem>>, vector<1x8x256xbf16>,
    return
  }
  func.func @transform_0(%arg0: i32) -> (i32, i32, i32) {
    %c0_i32 = arith.constant 0 : i32
    %c0_i32_0 = arith.constant 0 : i32
    %c0_i32_1 = arith.constant 0 : i32
    return %arg0, %c0_i32, %c0_i32_0 : i32, i32, i32
  }
  func.func @transform_1(%arg0: i32) -> (i32, i32, i32) {
    %c0_i32 = arith.constant 0 : i32
    %c0_i32_0 = arith.constant 0 : i32
    %c0_i32_1 = arith.constant 0 : i32
    %c0_i32_2 = arith.constant 0 : i32
    return %c0_i32, %c0_i32_0, %c0_i32_1 : i32, i32, i32
  }
  func.func @transform_2(%arg0: i32) -> (i32, i32) {
    %c0_i32 = arith.constant 0 : i32
    %c0_i32_0 = arith.constant 0 : i32
    %c0_i32_1 = arith.constant 0 : i32
    return %c0_i32, %c0_i32_0 : i32, i32
  }
  func.func @transform_3(%arg0: i32) -> (i32, i32, i32) {
    %c0_i32 = arith.constant 0 : i32
    %c0_i32_0 = arith.constant 0 : i32
    %c0_i32_1 = arith.constant 0 : i32
    return %arg0, %c0_i32, %c0_i32_0 : i32, i32, i32
  }
}

module attributes {stable_mosaic.version = 11 : i64} {
  func.func @_band_kernel_res(%arg0: i32, %arg1: memref<1x10x400xbf16, #tpu.memory_space<vmem>>, %arg2: memref<3x400x256xbf16, #tpu.memory_space<vmem>>, %arg3: memref<1x256xf32, #tpu.memory_space<vmem>>, %arg4: memref<1x8x256xbf16, #tpu.memory_space<vmem>>, %arg5: memref<1x8x256xf32, #tpu.memory_space<vmem>>) attributes {dimension_semantics = [#tpu.dimension_semantics<parallel>], iteration_bounds = array<i64: 2>, scalar_prefetch = 0 : i64, scratch_operands = 0 : i64, tpu.core_type = #tpu.core_type<tc>, window_params = [{transform_indices = @transform_0, window_bounds = array<i64: 1, 10, 400>}, {pipeline_mode = #tpu.pipeline_mode<synchronous>, transform_indices = @transform_1, window_bounds = array<i64: 3, 400, 256>}, {pipeline_mode = #tpu.pipeline_mode<synchronous>, transform_indices = @transform_2, window_bounds = array<i64: 1, 256>}, {transform_indices = @transform_3, window_bounds = array<i64: 1, 8, 256>}, {transform_indices = @transform_4, window_bounds = array<i64: 1, 8, 256>}]} {
    %cst = arith.constant 0.000000e+00 : f32
    %0 = vector.broadcast %cst : f32 to vector<8x256xf32>
    %c0 = arith.constant 0 : index
    %c0_0 = arith.constant 0 : index
    %c0_1 = arith.constant 0 : index
    %1 = vector.load %arg1[%c0, %c0_0, %c0_1] : memref<1x10x400xbf16, #tpu.memory_space<vmem>>, vector<1x8x400xbf16>
    %2 = vector.shape_cast %1 : vector<1x8x400xbf16> to vector<8x400xbf16>
    %c0_2 = arith.constant 0 : index
    %c0_3 = arith.constant 0 : index
    %c0_4 = arith.constant 0 : index
    %3 = vector.load %arg2[%c0_2, %c0_3, %c0_4] : memref<3x400x256xbf16, #tpu.memory_space<vmem>>, vector<1x400x256xbf16>
    %4 = vector.shape_cast %3 : vector<1x400x256xbf16> to vector<400x256xbf16>
    %cst_5 = arith.constant dense<0.000000e+00> : vector<8x256xf32>
    %5 = tpu.matmul %2, %4, %cst_5 {dimension_numbers = #tpu.dot_dimension_numbers<[1], [0], [0], [1], [0, 0, 1, 1], [], []>} : vector<8x400xbf16>, vector<400x256xbf16>, vector<8x256xf32> -> vector<8x256xf32>
    %6 = arith.addf %0, %5 : vector<8x256xf32>
    %c0_6 = arith.constant 0 : index
    %c1 = arith.constant 1 : index
    %c0_7 = arith.constant 0 : index
    %7 = vector.load %arg1[%c0_6, %c1, %c0_7] : memref<1x10x400xbf16, #tpu.memory_space<vmem>>, vector<1x8x400xbf16>
    %8 = vector.shape_cast %7 : vector<1x8x400xbf16> to vector<8x400xbf16>
    %c1_8 = arith.constant 1 : index
    %c0_9 = arith.constant 0 : index
    %c0_10 = arith.constant 0 : index
    %9 = vector.load %arg2[%c1_8, %c0_9, %c0_10] : memref<3x400x256xbf16, #tpu.memory_space<vmem>>, vector<1x400x256xbf16>
    %10 = vector.shape_cast %9 : vector<1x400x256xbf16> to vector<400x256xbf16>
    %cst_11 = arith.constant dense<0.000000e+00> : vector<8x256xf32>
    %11 = tpu.matmul %8, %10, %cst_11 {dimension_numbers = #tpu.dot_dimension_numbers<[1], [0], [0], [1], [0, 0, 1, 1], [], []>} : vector<8x400xbf16>, vector<400x256xbf16>, vector<8x256xf32> -> vector<8x256xf32>
    %12 = arith.addf %6, %11 : vector<8x256xf32>
    %c0_12 = arith.constant 0 : index
    %c2 = arith.constant 2 : index
    %c0_13 = arith.constant 0 : index
    %13 = vector.load %arg1[%c0_12, %c2, %c0_13] : memref<1x10x400xbf16, #tpu.memory_space<vmem>>, vector<1x8x400xbf16>
    %14 = vector.shape_cast %13 : vector<1x8x400xbf16> to vector<8x400xbf16>
    %c2_14 = arith.constant 2 : index
    %c0_15 = arith.constant 0 : index
    %c0_16 = arith.constant 0 : index
    %15 = vector.load %arg2[%c2_14, %c0_15, %c0_16] : memref<3x400x256xbf16, #tpu.memory_space<vmem>>, vector<1x400x256xbf16>
    %16 = vector.shape_cast %15 : vector<1x400x256xbf16> to vector<400x256xbf16>
    %cst_17 = arith.constant dense<0.000000e+00> : vector<8x256xf32>
    %17 = tpu.matmul %14, %16, %cst_17 {dimension_numbers = #tpu.dot_dimension_numbers<[1], [0], [0], [1], [0, 0, 1, 1], [], []>} : vector<8x400xbf16>, vector<400x256xbf16>, vector<8x256xf32> -> vector<8x256xf32>
    %18 = arith.addf %12, %17 : vector<8x256xf32>
    %c0_18 = arith.constant 0 : index
    %c0_19 = arith.constant 0 : index
    %19 = vector.load %arg3[%c0_18, %c0_19] : memref<1x256xf32, #tpu.memory_space<vmem>>, vector<1x256xf32>
    %20 = vector.broadcast %19 : vector<1x256xf32> to vector<8x256xf32>
    %21 = arith.addf %18, %20 : vector<8x256xf32>
    %c0_20 = arith.constant 0 : index
    %c0_21 = arith.constant 0 : index
    %c0_22 = arith.constant 0 : index
    %22 = vector.load %arg4[%c0_20, %c0_21, %c0_22] : memref<1x8x256xbf16, #tpu.memory_space<vmem>>, vector<1x8x256xbf16>
    %23 = vector.shape_cast %22 : vector<1x8x256xbf16> to vector<8x256xbf16>
    %24 = arith.extf %23 : vector<8x256xbf16> to vector<8x256xf32>
    %25 = arith.addf %21, %24 : vector<8x256xf32>
    %cst_23 = arith.constant 0.000000e+00 : f32
    %26 = vector.broadcast %cst_23 : f32 to vector<8x256xf32>
    %27 = arith.maximumf %25, %26 : vector<8x256xf32>
    %c0_24 = arith.constant 0 : index
    %c0_25 = arith.constant 0 : index
    %c0_26 = arith.constant 0 : index
    %28 = vector.load %arg5[%c0_24, %c0_25, %c0_26] : memref<1x8x256xf32, #tpu.memory_space<vmem>>, vector<1x8x256xf32>
    %29 = vector.shape_cast %28 : vector<1x8x256xf32> to vector<8x256xf32>
    %30 = vector.shape_cast %27 : vector<8x256xf32> to vector<1x8x256xf32>
    tpu.vector_store %arg5[%c0_24, %c0_25, %c0_26], %30 {strides = array<i32>} : memref<1x8x256xf32, #tpu.memory_space<vmem>>, vector<1x8x256xf32>,
    return
  }
  func.func @transform_0(%arg0: i32) -> (i32, i32, i32) {
    %c0_i32 = arith.constant 0 : i32
    %c0_i32_0 = arith.constant 0 : i32
    %c0_i32_1 = arith.constant 0 : i32
    return %arg0, %c0_i32, %c0_i32_0 : i32, i32, i32
  }
  func.func @transform_1(%arg0: i32) -> (i32, i32, i32) {
    %c0_i32 = arith.constant 0 : i32
    %c0_i32_0 = arith.constant 0 : i32
    %c0_i32_1 = arith.constant 0 : i32
    %c0_i32_2 = arith.constant 0 : i32
    return %c0_i32, %c0_i32_0, %c0_i32_1 : i32, i32, i32
  }
  func.func @transform_2(%arg0: i32) -> (i32, i32) {
    %c0_i32 = arith.constant 0 : i32
    %c0_i32_0 = arith.constant 0 : i32
    %c0_i32_1 = arith.constant 0 : i32
    return %c0_i32, %c0_i32_0 : i32, i32
  }
  func.func @transform_3(%arg0: i32) -> (i32, i32, i32) {
    %c0_i32 = arith.constant 0 : i32
    %c0_i32_0 = arith.constant 0 : i32
    %c0_i32_1 = arith.constant 0 : i32
    return %arg0, %c0_i32, %c0_i32_0 : i32, i32, i32
  }
  func.func @transform_4(%arg0: i32) -> (i32, i32, i32) {
    %c0_i32 = arith.constant 0 : i32
    %c0_i32_0 = arith.constant 0 : i32
    %c0_i32_1 = arith.constant 0 : i32
    return %arg0, %c0_i32, %c0_i32_0 : i32, i32, i32
  }
}

</mosaic_0001>

<llo_original>
// kernel: tile.38
$region0: #{tile.38}
  #allocation0 [shape = 's32[1]{0}', space=sflag, size = 0x4, scoped, tag = 'scoped memory for tile.38']
  %s0 = inlined_call_operand.vmem [shape: f32[4], index: 0, kind: input, shape index: {}]
  %s1 = inlined_call_operand.vmem [shape: f32[64,4], index: 1, kind: output, shape index: {}]
  // Predicated region
  $region2: #{tile.38} parent=0 // pred_check
    _
  $region3: #{tile.38} parent=0 // pred_check_branch
    %3 = sbr.rel (0) target = $region5
  $region4: #{tile.38} parent=0 // pred_region
    _
  $region5: #{tile.38} parent=0 // pred_fallthru
    _
  %v4 = vld [vmem:[%s0] ss:$0 sm:$0xff]
  %5 = vst [vmem:[%s1] sm:$0xff] %v4
  %s6 = scalar_lea.vmem %s1, 8
  %7 = vst [vmem:[%s6] sm:$0xff] %v4
  %s8 = scalar_lea.vmem %s1, 16
  %9 = vst [vmem:[%s8] sm:$0xff] %v4
  %s10 = scalar_lea.vmem %s1, 24
  %11 = vst [vmem:[%s10] sm:$0xff] %v4
  %s12 = scalar_lea.vmem %s1, 32
  %13 = vst [vmem:[%s12] sm:$0xff] %v4
  %s14 = scalar_lea.vmem %s1, 40
  %15 = vst [vmem:[%s14] sm:$0xff] %v4
  %s16 = scalar_lea.vmem %s1, 48
  %17 = vst [vmem:[%s16] sm:$0xff] %v4
  %s18 = scalar_lea.vmem %s1, 56
  %19 = vst [vmem:[%s18] sm:$0xff] %v4

// kernel: tile.39
$region0: #{tile.39}
  %s0 = inlined_call_operand.vmem [shape: f32[64,4], index: 0, kind: input, shape index: {}]
  %s1 = inlined_call_operand.vmem [shape: f32[1,256], index: 1, kind: output, shape index: {}]
  $region1: #{tile.39} parent=0
    #allocation0 [shape = 'u8[8192]{0}', space=vmem, size = 0x2000, scoped, tag = 'scoped mem for output reshape']
    %v2 = vld [vmem:[%s0] sm:$0x1]
    %s3 = scalar_lea.vmem %s0, 31
    %v4 = vld [vmem:[%s3] sm:$0x2]
    %vm5 = vcmask 1041409
    %v6 = vsel %vm5, %v4, %v2
    %vm7 = vcmask 31744
    %8 = vst.msk [vmem:[#allocation0] ss:$8 sm:$0x3] %vm7, %v6
    %s9 = scalar_lea.vmem %s0, 31
    %v10 = vld [vmem:[%s9] sm:$0x1]
    %s11 = scalar_lea.vmem %s0, 62
    %v12 = vld [vmem:[%s11] sm:$0x2]
    %vm13 = vcmask 1041409
    %v14 = vsel %vm13, %v12, %v10
    %15 = vrot.lane.b32.xlu0 %v14, 124
    %v16 = vpop.permute.xlu0 %15
    %vm17 = vcmask 1048544
    %18 = vst.msk [vmem:[#allocation0] ss:$8 sm:$0x3] %vm17, %v16
    %s19 = scalar_lea.vmem %s0, 30
    %v20 = vld [vmem:[%s19] sm:$0x1]
    %s21 = scalar_lea.vmem %s0, 61
    %v22 = vld [vmem:[%s21] sm:$0x2]
    %vm23 = vcmask 1041409
    %v24 = vsel %vm23, %v22, %v20
    %25 = vrot.lane.b32.xlu0 %v24, 120
    %v26 = vpop.permute.xlu0 %25
    %vm27 = vcmask 1015744
    %28 = vst.msk [vmem:[#allocation0] ss:$8 sm:$0x3] %vm27, %v26
    %s29 = scalar_lea.vmem %s0, 29
    %v30 = vld [vmem:[%s29] sm:$0x1]
    %s31 = scalar_lea.vmem %s0, 60
    %v32 = vld [vmem:[%s31] sm:$0x2]
    %vm33 = vcmask 1041409
    %v34 = vsel %vm33, %v32, %v30
    %35 = vrot.lane.b32.xlu0 %v34, 116
    %v36 = vpop.permute.xlu0 %35
    %vm37 = vcmask 982944
    %38 = vst.msk [vmem:[#allocation0] ss:$8 sm:$0x3] %vm37, %v36
    %s39 = scalar_lea.vmem %s0, 28
    %v40 = vld [vmem:[%s39] sm:$0x1]
    %s41 = scalar_lea.vmem %s0, 59
    %v42 = vld [vmem:[%s41] sm:$0x2]
    %vm43 = vcmask 1041409
    %v44 = vsel %vm43, %v42, %v40
    %45 = vrot.lane.b32.xlu0 %v44, 112
    %v46 = vpop.permute.xlu0 %45
    %vm47 = vcmask 950144
    %48 = vst.msk [vmem:[#allocation0] ss:$8 sm:$0x3] %vm47, %v46
    %s49 = scalar_lea.vmem %s0, 27
    %v50 = vld [vmem:[%s49] sm:$0x1]
    %s51 = scalar_lea.vmem %s0, 58
    %v52 = vld [vmem:[%s51] sm:$0x2]
    %vm53 = vcmask 1041409
    %v54 = vsel %vm53, %v52, %v50
    %55 = vrot.lane.b32.xlu0 %v54, 108
    %v56 = vpop.permute.xlu0 %55
    %vm57 = vcmask 917344
    %58 = vst.msk [vmem:[#allocation0] ss:$8 sm:$0x3] %vm57, %v56
    %s59 = scalar_lea.vmem %s0, 26
    %v60 = vld [vmem:[%s59] sm:$0x1]
    %s61 = scalar_lea.vmem %s0, 57
    %v62 = vld [vmem:[%s61] sm:$0x2]
    %vm63 = vcmask 1041409
    %v64 = vsel %vm63, %v62, %v60
    %65 = vrot.lane.b32.xlu0 %v64, 104
    %v66 = vpop.permute.xlu0 %65
    %vm67 = vcmask 884544
    %68 = vst.msk [vmem:[#allocation0] ss:$8 sm:$0x3] %vm67, %v66
    %s69 = scalar_lea.vmem %s0, 25
    %v70 = vld [vmem:[%s69] sm:$0x1]
    %s71 = scalar_lea.vmem %s0, 56
    %v72 = vld [vmem:[%s71] sm:$0x2]
    %vm73 = vcmask 1041409
    %v74 = vsel %vm73, %v72, %v70
    %75 = vrot.lane.b32.xlu0 %v74, 100
    %v76 = vpop.permute.xlu0 %75
    %vm77 = vcmask 851744
    %78 = vst.msk [vmem:[#allocation0] ss:$8 sm:$0x3] %vm77, %v76
    %s79 = scalar_lea.vmem %s0, 24
    %v80 = vld [vmem:[%s79] sm:$0x1]
    %s81 = scalar_lea.vmem %s0, 55
    %v82 = vld [vmem:[%s81] sm:$0x2]
    %vm83 = vcmask 1041409
    %v84 = vsel %vm83, %v82, %v80
    %85 = vrot.lane.b32.xlu0 %v84, 96
    %v86 = vpop.permute.xlu0 %85
    %vm87 = vcmask 818944
    %88 = vst.msk [vmem:[#allocation0] ss:$8 sm:$0x3] %vm87, %v86
    %s89 = scalar_lea.vmem %s0, 23
    %v90 = vld [vmem:[%s89] sm:$0x1]
    %s91 = scalar_lea.vmem %s0, 54
    %v92 = vld [vmem:[%s91] sm:$0x2]
    %vm93 = vcmask 1041409
    %v94 = vsel %vm93, %v92, %v90
    %95 = vrot.lane.b32.xlu0 %v94, 92
    %v96 = vpop.permute.xlu0 %95
    %vm97 = vcmask 786144
    %98 = vst.msk [vmem:[#allocation0] ss:$8 sm:$0x3] %vm97, %v96
    %s99 = scalar_lea.vmem %s0, 22
    %v100 = vld [vmem:[%s99] sm:$0x1]
    %s101 = scalar_lea.vmem %s0, 53
    %v102 = vld [vmem:[%s101] sm:$0x2]
    %vm103 = vcmask 1041409
    %v104 = vsel %vm103, %v102, %v100
    %105 = vrot.lane.b32.xlu0 %v104, 88
    %v106 = vpop.permute.xlu0 %105
    %vm107 = vcmask 753344
    %108 = vst.msk [vmem:[#allocation0] ss:$8 sm:$0x3] %vm107, %v106
    %s109 = scalar_lea.vmem %s0, 21
    %v110 = vld [vmem:[%s109] sm:$0x1]
    %s111 = scalar_lea.vmem %s0, 52
    %v112 = vld [vmem:[%s111] sm:$0x2]
    %vm113 = vcmask 1041409
    %v114 = vsel %vm113, %v112, %v110
    %115 = vrot.lane.b32.xlu0 %v114, 84
    %v116 = vpop.permute.xlu0 %115
    %vm117 = vcmask 720544
    %118 = vst.msk [vmem:[#allocation0] ss:$8 sm:$0x3] %vm117, %v116
    %s119 = scalar_lea.vmem %s0, 20
    %v120 = vld [vmem:[%s119] sm:$0x1]
    %s121 = scalar_lea.vmem %s0, 51
    %v122 = vld [vmem:[%s121] sm:$0x2]
    %vm123 = vcmask 1041409
    %v124 = vsel %vm123, %v122, %v120
    %125 = vrot.lane.b32.xlu0 %v124, 80
    %v126 = vpop.permute.xlu0 %125
    %vm127 = vcmask 687744
    %128 = vst.msk [vmem:[#allocation0] ss:$8 sm:$0x3] %vm127, %v126
    %s129 = scalar_lea.vmem %s0, 19
    %v130 = vld [vmem:[%s129] sm:$0x1]
    %s131 = scalar_lea.vmem %s0, 50
    %v132 = vld [vmem:[%s131] sm:$0x2]
    %vm133 = vcmask 1041409
    %v134 = vsel %vm133, %v132, %v130
    %135 = vrot.lane.b32.xlu0 %v134, 76
    %v136 = vpop.permute.xlu0 %135
    %vm137 = vcmask 654944
    %138 = vst.msk [vmem:[#allocation0] ss:$8 sm:$0x3] %vm137, %v136
    %s139 = scalar_lea.vmem %s0, 18
    %v140 = vld [vmem:[%s139] sm:$0x1]
    %s141 = scalar_lea.vmem %s0, 49
    %v142 = vld [vmem:[%s141] sm:$0x2]
    %vm143 = vcmask 1041409
    %v144 = vsel %vm143, %v142, %v140
    %145 = vrot.lane.b32.xlu0 %v144, 72
    %v146 = vpop.permute.xlu0 %145
    %vm147 = vcmask 622144
    %148 = vst.msk [vmem:[#allocation0] ss:$8 sm:$0x3] %vm147, %v146
    %s149 = scalar_lea.vmem %s0, 17
    %v150 = vld [vmem:[%s149] sm:$0x1]
    %s151 = scalar_lea.vmem %s0, 48
    %v152 = vld [vmem:[%s151] sm:$0x2]
    %vm153 = vcmask 1041409
    %v154 = vsel %vm153, %v152, %v150
    %155 = vrot.lane.b32.xlu0 %v154, 68
    %v156 = vpop.permute.xlu0 %155
    %vm157 = vcmask 589344
    %158 = vst.msk [vmem:[#allocation0] ss:$8 sm:$0x3] %vm157, %v156
    %s159 = scalar_lea.vmem %s0, 16
    %v160 = vld [vmem:[%s159] sm:$0x1]
    %s161 = scalar_lea.vmem %s0, 47
    %v162 = vld [vmem:[%s161] sm:$0x2]
    %vm163 = vcmask 1041409
    %v164 = vsel %vm163, %v162, %v160
    %165 = vrot.lane.b32.xlu0 %v164, 64
    %v166 = vpop.permute.xlu0 %165
    %vm167 = vcmask 556544
    %168 = vst.msk [vmem:[#allocation0] ss:$8 sm:$0x3] %vm167, %v166
    %s169 = scalar_lea.vmem %s0, 15
    %v170 = vld [vmem:[%s169] sm:$0x1]
    %s171 = scalar_lea.vmem %s0, 46
    %v172 = vld [vmem:[%s171] sm:$0x2]
    %vm173 = vcmask 1041409
    %v174 = vsel %vm173, %v172, %v170
    %175 = vrot.lane.b32.xlu0 %v174, 60
    %v176 = vpop.permute.xlu0 %175
    %vm177 = vcmask 523744
    %178 = vst.msk [vmem:[#allocation0] ss:$8 sm:$0x3] %vm177, %v176
    %s179 = scalar_lea.vmem %s0, 14
    %v180 = vld [vmem:[%s179] sm:$0x1]
    %s181 = scalar_lea.vmem %s0, 45
    %v182 = vld [vmem:[%s181] sm:$0x2]
    %vm183 = vcmask 1041409
    %v184 = vsel %vm183, %v182, %v180
    %185 = vrot.lane.b32.xlu0 %v184, 56
    %v186 = vpop.permute.xlu0 %185
    %vm187 = vcmask 490944
    %188 = vst.msk [vmem:[#allocation0] ss:$8 sm:$0x3] %vm187, %v186
    %s189 = scalar_lea.vmem %s0, 13
    %v190 = vld [vmem:[%s189] sm:$0x1]
    %s191 = scalar_lea.vmem %s0, 44
    %v192 = vld [vmem:[%s191] sm:$0x2]
    %vm193 = vcmask 1041409
    %v194 = vsel %vm193, %v192, %v190
    %195 = vrot.lane.b32.xlu0 %v194, 52
    %v196 = vpop.permute.xlu0 %195
    %vm197 = vcmask 458144
    %198 = vst.msk [vmem:[#allocation0] ss:$8 sm:$0x3] %vm197, %v196
    %s199 = scalar_lea.vmem %s0, 12
    %v200 = vld [vmem:[%s199] sm:$0x1]
    %s201 = scalar_lea.vmem %s0, 43
    %v202 = vld [vmem:[%s201] sm:$0x2]
    %vm203 = vcmask 1041409
    %v204 = vsel %vm203, %v202, %v200
    %205 = vrot.lane.b32.xlu0 %v204, 48
    %v206 = vpop.permute.xlu0 %205
    %vm207 = vcmask 425344
    %208 = vst.msk [vmem:[#allocation0] ss:$8 sm:$0x3] %vm207, %v206
    %s209 = scalar_lea.vmem %s0, 11
    %v210 = vld [vmem:[%s209] sm:$0x1]
    %s211 = scalar_lea.vmem %s0, 42
    %v212 = vld [vmem:[%s211] sm:$0x2]
    %vm213 = vcmask 1041409
    %v214 = vsel %vm213, %v212, %v210
    %215 = vrot.lane.b32.xlu0 %v214, 44
    %v216 = vpop.permute.xlu0 %215
    %vm217 = vcmask 392544
    %218 = vst.msk [vmem:[#allocation0] ss:$8 sm:$0x3] %vm217, %v216
    %s219 = scalar_lea.vmem %s0, 10
    %v220 = vld [vmem:[%s219] sm:$0x1]
    %s221 = scalar_lea.vmem %s0, 41
    %v222 = vld [vmem:[%s221] sm:$0x2]
    %vm223 = vcmask 1041409
    %v224 = vsel %vm223, %v222, %v220
    %225 = vrot.lane.b32.xlu0 %v224, 40
    %v226 = vpop.permute.xlu0 %225
    %vm227 = vcmask 359744
    %228 = vst.msk [vmem:[#allocation0] ss:$8 sm:$0x3] %vm227, %v226
    %s229 = scalar_lea.vmem %s0, 9
    %v230 = vld [vmem:[%s229] sm:$0x1]
    %s231 = scalar_lea.vmem %s0, 40
    %v232 = vld [vmem:[%s231] sm:$0x2]
    %vm233 = vcmask 1041409
    %v234 = vsel %vm233, %v232, %v230
    %235 = vrot.lane.b32.xlu0 %v234, 36
    %v236 = vpop.permute.xlu0 %235
    %vm237 = vcmask 326944
    %238 = vst.msk [vmem:[#allocation0] ss:$8 sm:$0x3] %vm237, %v236
    %s239 = scalar_lea.vmem %s0, 8
    %v240 = vld [vmem:[%s239] sm:$0x1]
    %s241 = scalar_lea.vmem %s0, 39
    %v242 = vld [vmem:[%s241] sm:$0x2]
    %vm243 = vcmask 1041409
    %v244 = vsel %vm243, %v242, %v240
    %245 = vrot.lane.b32.xlu0 %v244, 32
    %v246 = vpop.permute.xlu0 %245
    %vm247 = vcmask 294144
    %248 = vst.msk [vmem:[#allocation0] ss:$8 sm:$0x3] %vm247, %v246
    %s249 = scalar_lea.vmem %s0, 7
    %v250 = vld [vmem:[%s249] sm:$0x1]
    %s251 = scalar_lea.vmem %s0, 38
    %v252 = vld [vmem:[%s251] sm:$0x2]
    %vm253 = vcmask 1041409
    %v254 = vsel %vm253, %v252, %v250
    %255 = vrot.lane.b32.xlu0 %v254, 28
    %v256 = vpop.permute.xlu0 %255
    %vm257 = vcmask 261344
    %258 = vst.msk [vmem:[#allocation0] ss:$8 sm:$0x3] %vm257, %v256
    %s259 = scalar_lea.vmem %s0, 6
    %v260 = vld [vmem:[%s259] sm:$0x1]
    %s261 = scalar_lea.vmem %s0, 37
    %v262 = vld [vmem:[%s261] sm:$0x2]
    %vm263 = vcmask 1041409
    %v264 = vsel %vm263, %v262, %v260
    %265 = vrot.lane.b32.xlu0 %v264, 24
    %v266 = vpop.permute.xlu0 %265
    %vm267 = vcmask 228544
    %268 = vst.msk [vmem:[#allocation0] ss:$8 sm:$0x3] %vm267, %v266
    %s269 = scalar_lea.vmem %s0, 5
    %v270 = vld [vmem:[%s269] sm:$0x1]
    %s271 = scalar_lea.vmem %s0, 36
    %v272 = vld [vmem:[%s271] sm:$0x2]
    %vm273 = vcmask 1041409
    %v274 = vsel %vm273, %v272, %v270
    %275 = vrot.lane.b32.xlu0 %v274, 20
    %v276 = vpop.permute.xlu0 %275
    %vm277 = vcmask 195744
    %278 = vst.msk [vmem:[#allocation0] ss:$8 sm:$0x3] %vm277, %v276
    %s279 = scalar_lea.vmem %s0, 4
    %v280 = vld [vmem:[%s279] sm:$0x1]
    %s281 = scalar_lea.vmem %s0, 35
    %v282 = vld [vmem:[%s281] sm:$0x2]
    %vm283 = vcmask 1041409
    %v284 = vsel %vm283, %v282, %v280
    %285 = vrot.lane.b32.xlu0 %v284, 16
    %v286 = vpop.permute.xlu0 %285
    %vm287 = vcmask 162944
    %288 = vst.msk [vmem:[#allocation0] ss:$8 sm:$0x3] %vm287, %v286
    %s289 = scalar_lea.vmem %s0, 3
    %v290 = vld [vmem:[%s289] sm:$0x1]
    %s291 = scalar_lea.vmem %s0, 34
    %v292 = vld [vmem:[%s291] sm:$0x2]
    %vm293 = vcmask 1041409
    %v294 = vsel %vm293, %v292, %v290
    %295 = vrot.lane.b32.xlu0 %v294, 12
    %v296 = vpop.permute.xlu0 %295
    %vm297 = vcmask 130144
    %298 = vst.msk [vmem:[#allocation0] ss:$8 sm:$0x3] %vm297, %v296
    %s299 = scalar_lea.vmem %s0, 2
    %v300 = vld [vmem:[%s299] sm:$0x1]
    %s301 = scalar_lea.vmem %s0, 33
    %v302 = vld [vmem:[%s301] sm:$0x2]
    %vm303 = vcmask 1041409
    %v304 = vsel %vm303, %v302, %v300
    %305 = vrot.lane.b32.xlu0 %v304, 8
    %v306 = vpop.permute.xlu0 %305
    %vm307 = vcmask 97344
    %308 = vst.msk [vmem:[#allocation0] ss:$8 sm:$0x3] %vm307, %v306
    %s309 = scalar_lea.vmem %s0, 1
    %v310 = vld [vmem:[%s309] sm:$0x1]
    %s311 = scalar_lea.vmem %s0, 32
    %v312 = vld [vmem:[%s311] sm:$0x2]
    %vm313 = vcmask 1041409
    %v314 = vsel %vm313, %v312, %v310
    %315 = vrot.lane.b32.xlu0 %v314, 4
    %v316 = vpop.permute.xlu0 %315
    %vm317 = vcmask 64544
    %318 = vst.msk [vmem:[#allocation0] ss:$8 sm:$0x3] %vm317, %v316
    %s320 = sshllo.u32 0, 1
    %v322 = vld [vmem:[#allocation0] sm:%s320]
    %s323 = sshllo.u32 0, 1
    %324 = vst [vmem:[%s1] sm:%s323] %v322
    %s325 = scalar_lea.vmem [#allocation0], 8
    %v326 = vld [vmem:[%s325] sm:%s320]
    %s327 = sshllo.u32 0, 1
    %s328 = scalar_lea.vmem %s1, 1
    %329 = vst [vmem:[%s328] sm:%s327] %v326

// kernel: ublock_forward.7
$region0: #{ublock_forward.7}
  #allocation0 [shape = 'u32[]', space=smem, size = 0x4, offset = 0x4, fixed_abs, tag = 'smem constant byte address 0x4 - core index']
  #allocation1 [shape = 'u32[144,128]{1,0:T(1,128)}', space=vmem, size = 0x12000, scoped, tag = 'internal scratch']
  %s0 = inlined_call_operand.vmem [shape: bf16[2,10,400], index: 0, kind: input, shape index: {}]
  %s1 = inlined_call_operand.vmem [shape: bf16[3,400,256], index: 1, kind: input, shape index: {}]
  %s2 = inlined_call_operand.vmem [shape: f32[1,256], index: 2, kind: input, shape index: {}]
  %s3 = inlined_call_operand.vmem [shape: bf16[2,8,256], index: 3, kind: output, shape index: {}]
  %s4 = sld [smem:[#allocation0]]
  $region45: #{ublock_forward.7} parent=0
    _
  %s6 = ssub.s32 1, %s4
  %s7 = scalar_select 0, %s6, %s4
  loop: start=0, step=1, limit=4
  $region2: #{ublock_forward.7} parent=0 // loop_pre_header
    _
  $region3: #{ublock_forward.7} parent=0 // loop_header
    %s9 = sphi 0, %s13
    %p10 = scmp.ge.s32.totalorder %s9, 4
    %s19 = sphi 0, %s21
    %s22 = sphi 0, %s19
    %s23 = sphi 0, %s22
    %s39 = sphi 0, %s23
    %s43 = sphi 0, %s43
    %s45 = sphi 0, %s43
    %s46 = sphi 0, %s45
    %s60 = sphi 0, %s46
    %s64 = sphi 0, %s64
    %s66 = sphi 0, %s64
    %s67 = sphi 0, %s66
    %s81 = sphi 0, %s67
    %s87 = sphi 0, %s89
    %s90 = sphi 0, %s87
    %s91 = sphi 0, %s90
    %s107 = sphi 0, %s91
  $region4: #{ublock_forward.7} parent=0 // loop_header_branch
    %12 = sbr.rel (%p10) target = $region8
  $region5: #{ublock_forward.7} parent=0 // loop_body
    %s14 = ssub.s32 %s9, 1
    %s15 = ssub.s32 %s9, 2
    %s16 = sadd.s32 %s9, 1
    %s17 = ssub.s32 %s9, %s16
    %p18 = scmp.eq.s32.totalorder %s17, 0
    %s20 = sadd.s32 %s19, 1
    %s21 = scalar_select %p18, %s19, %s20
    %p24 = pneg %p18
    %p25 = scmp.eq.s32.totalorder %s9, 1
    %p26 = por %p24, %p25
    %p27 = scmp.ne.s32.totalorder %s19, %s22
    %p28 = scmp.eq.s32.totalorder %s9, 0
    %p29 = por %p27, %p28
    %p30 = scmp.ne.s32.totalorder %s19, %s22
    %p31 = scmp.eq.s32.totalorder %s14, 1
    %p32 = por %p30, %p31
    %p33 = scmp.ne.s32.totalorder %s22, %s23
    %p34 = scmp.eq.s32.totalorder %s14, 0
    %p35 = por %p33, %p34
    %p36 = scmp.ne.s32.totalorder %s22, %s23
    %p37 = scmp.eq.s32.totalorder %s15, 1
    %p38 = por %p36, %p37
    %p40 = scmp.ne.s32.totalorder %s23, %s39
    %p41 = scmp.eq.s32.totalorder %s15, 0
    %p42 = por %p40, %p41
    %s44 = sadd.s32 %s43, 1
    %p47 = scmp.eq.s32.totalorder %s9, 1
    %p48 = scmp.ne.s32.totalorder %s43, %s45
    %p49 = scmp.eq.s32.totalorder %s9, 0
    %p50 = por %p48, %p49
    %p51 = scmp.ne.s32.totalorder %s43, %s45
    %p52 = scmp.eq.s32.totalorder %s14, 1
    %p53 = por %p51, %p52
    %p54 = scmp.ne.s32.totalorder %s45, %s46
    %p55 = scmp.eq.s32.totalorder %s14, 0
    %p56 = por %p54, %p55
    %p57 = scmp.ne.s32.totalorder %s45, %s46
    %p58 = scmp.eq.s32.totalorder %s15, 1
    %p59 = por %p57, %p58
    %p61 = scmp.ne.s32.totalorder %s46, %s60
    %p62 = scmp.eq.s32.totalorder %s15, 0
    %p63 = por %p61, %p62
    %s65 = sadd.s32 %s64, 1
    %p68 = scmp.eq.s32.totalorder %s9, 1
    %p69 = scmp.ne.s32.totalorder %s64, %s66
    %p70 = scmp.eq.s32.totalorder %s9, 0
    %p71 = por %p69, %p70
    %p72 = scmp.ne.s32.totalorder %s64, %s66
    %p73 = scmp.eq.s32.totalorder %s14, 1
    %p74 = por %p72, %p73
    %p75 = scmp.ne.s32.totalorder %s66, %s67
    %p76 = scmp.eq.s32.totalorder %s14, 0
    %p77 = por %p75, %p76
    %p78 = scmp.ne.s32.totalorder %s66, %s67
    %p79 = scmp.eq.s32.totalorder %s15, 1
    %p80 = por %p78, %p79
    %p82 = scmp.ne.s32.totalorder %s67, %s81
    %p83 = scmp.eq.s32.totalorder %s15, 0
    %p84 = por %p82, %p83
    %s85 = ssub.s32 %s9, %s16
    %p86 = scmp.eq.s32.totalorder %s85, 0
    %s88 = sadd.s32 %s87, 1
    %s89 = scalar_select %p86, %s87, %s88
    %p92 = pneg %p86
    %p93 = scmp.eq.s32.totalorder %s9, 1
    %p94 = por %p92, %p93
    %p95 = scmp.ne.s32.totalorder %s87, %s90
    %p96 = scmp.eq.s32.totalorder %s9, 0
    %p97 = por %p95, %p96
    %p98 = scmp.ne.s32.totalorder %s87, %s90
    %p99 = scmp.eq.s32.totalorder %s14, 1
    %p100 = por %p98, %p99
    %p101 = scmp.ne.s32.totalorder %s90, %s91
    %p102 = scmp.eq.s32.totalorder %s14, 0
    %p103 = por %p101, %p102
    %p104 = scmp.ne.s32.totalorder %s90, %s91
    %p105 = scmp.eq.s32.totalorder %s15, 1
    %p106 = por %p104, %p105
    %p108 = scmp.ne.s32.totalorder %s91, %s107
    %p109 = scmp.eq.s32.totalorder %s15, 0
    %p110 = por %p108, %p109
    %p111 = scmp.le.s32.totalorder 1, %s9
    %p112 = scmp.lt.s32.totalorder %s9, 3
    %p113 = pnand %p111, %p112
    %p114 = pneg %p113
    // Predicated region
    $region9: #{ublock_forward.7} parent=5 // pred_check
      _
    $region10: #{ublock_forward.7} parent=5 // pred_check_branch
      %116 = sbr.rel (%p113) target = $region12
    $region11: #{ublock_forward.7} parent=5 // pred_region
      %s117 = ssub.s32 %s9, 1
      // Predicated region
      $region13: #{ublock_forward.7} parent=11 // pred_check
        %p118 = pneg %p56
      $region14: #{ublock_forward.7} parent=11 // pred_check_branch
        %120 = sbr.rel (%p118) target = $region16
      $region15: #{ublock_forward.7} parent=11 // pred_region
        _
      $region16: #{ublock_forward.7} parent=11 // pred_fallthru
        _
      // Predicated region
      $region17: #{ublock_forward.7} parent=11 // pred_check
        %p121 = pneg %p77
      $region18: #{ublock_forward.7} parent=11 // pred_check_branch
        %123 = sbr.rel (%p121) target = $region20
      $region19: #{ublock_forward.7} parent=11 // pred_region
        _
      $region20: #{ublock_forward.7} parent=11 // pred_fallthru
        _
    $region12: #{ublock_forward.7} parent=5 // pred_fallthru
      _
    %p124 = scmp.lt.s32.totalorder %s9, 2
    // Predicated region
    $region21: #{ublock_forward.7} parent=5 // pred_check
      %p125 = pneg %p124
    $region22: #{ublock_forward.7} parent=5 // pred_check_branch
      %127 = sbr.rel (%p125) target = $region24
    $region23: #{ublock_forward.7} parent=5 // pred_region
      // Predicated region
      $region25: #{ublock_forward.7} parent=23 // pred_check
        %p128 = pneg %p29
      $region26: #{ublock_forward.7} parent=23 // pred_check_branch
        %130 = sbr.rel (%p128) target = $region28
      $region27: #{ublock_forward.7} parent=23 // pred_region
        %p131 = scmp.lt.s32.totalorder %s9, 1
        %s132 = scalar_select %p131, %s9, 1
        %s133 = smul.addr %s132, 8
        %s134 = smul.addr %s133, 4
        %s135 = scalar_lea.vmem %s0, %s134
      $region28: #{ublock_forward.7} parent=23 // pred_fallthru
        _
    $region24: #{ublock_forward.7} parent=5 // pred_fallthru
      _
    %p136 = scmp.le.s32.totalorder 1, %s9
    %p137 = scmp.lt.s32.totalorder %s9, 3
    %p138 = pnand %p136, %p137
    %p139 = pneg %p138
    // Predicated region
    $region29: #{ublock_forward.7} parent=5 // pred_check
      _
    $region30: #{ublock_forward.7} parent=5 // pred_check_branch
      %141 = sbr.rel (%p138) target = $region32
    $region31: #{ublock_forward.7} parent=5 // pred_region
      %s142 = ssub.s32 %s9, 1
      %p143 = scmp.lt.s32.totalorder %s14, 1
      %s144 = scalar_select %p143, %s14, 1
      %s145 = smul.addr %s144, 8
      %s146 = smul.addr %s145, 4
      %s147 = scalar_lea.vmem %s0, %s146
      %p148 = pneg %p35
      %p149 = pneg %p32
      %p150 = pneg %p56
      %p151 = pneg %p53
      %p152 = pneg %p77
      %p153 = pneg %p74
      %p154 = pneg %p103
      %p155 = pneg %p100
      %p156 = scmp.lt.s32.totalorder %s14, 1
      %s157 = scalar_select %p156, %s14, 1
      %s158 = smul.addr %s157, 2
      %s159 = smul.addr %s158, 4
      %s160 = scalar_lea.vmem %s3, %s159
      %p161 = scmp.lt.s32.totalorder %s14, 1
      %s162 = scalar_select %p161, %s14, 1
      %s163 = smul.addr %s162, 8
      %s164 = smul.addr %s163, 4
      %s165 = scalar_lea.vmem %s0, %s164
      %p166 = scmp.lt.s32.totalorder %s14, 1
      %s167 = scalar_select %p166, %s14, 1
      %s168 = smul.addr %s167, 2
      %s169 = smul.addr %s168, 4
      %s170 = scalar_lea.vmem %s3, %s169
      %v172 = vld [vmem:[%s165] sm:$0xff]
      %v173 = vld [vmem:[%s165 + $0x8] sm:$0xff]
      %v174 = vld [vmem:[%s1] sm:$0xff]
      %v175 = vld [vmem:[%s1 + $0x8] sm:$0xff]
      %v176 = vld [vmem:[%s1 + $0x10] sm:$0xff]
      %v177 = vld [vmem:[%s1 + $0x18] sm:$0xff]
      %v178 = vld [vmem:[%s1 + $0x20] sm:$0xff]
      %v179 = vld [vmem:[%s1 + $0x28] sm:$0xff]
      %v180 = vld [vmem:[%s1 + $0x30] sm:$0xff]
      %v181 = vld [vmem:[%s1 + $0x38] sm:$0xff]
      %v182 = vld [vmem:[%s1 + $0x40] sm:$0xff]
      %v183 = vld [vmem:[%s1 + $0x48] sm:$0xff]
      %v184 = vld [vmem:[%s1 + $0x50] sm:$0xff]
      %v185 = vld [vmem:[%s1 + $0x58] sm:$0xff]
      %v186 = vld [vmem:[%s1 + $0x60] sm:$0xff]
      %v187 = vld [vmem:[%s1 + $0x68] sm:$0xff]
      %v188 = vld [vmem:[%s1 + $0x70] sm:$0xff]
      %v189 = vld [vmem:[%s1 + $0x78] sm:$0xff]
      %v190 = vld [vmem:[%s1 + $0x80] sm:$0xff]
      %v191 = vld [vmem:[%s1 + $0x88] sm:$0xff]
      %v192 = vld [vmem:[%s1 + $0x90] sm:$0xff]
      %v193 = vld [vmem:[%s1 + $0x98] sm:$0xff]
      %v194 = vld [vmem:[%s1 + $0xa0] sm:$0xff]
      %v195 = vld [vmem:[%s1 + $0xa8] sm:$0xff]
      %v196 = vld [vmem:[%s1 + $0xb0] sm:$0xff]
      %v197 = vld [vmem:[%s1 + $0xb8] sm:$0xff]
      %v198 = vld [vmem:[%s1 + $0xc0] sm:$0xff]
      %v199 = vld [vmem:[%s1 + $0xc8] sm:$0xff]
      %v200 = vld [vmem:[%s1 + $0xd0] sm:$0xff]
      %v201 = vld [vmem:[%s1 + $0xd8] sm:$0xff]
      %v202 = vld [vmem:[%s1 + $0xe0] sm:$0xff]
      %v203 = vld [vmem:[%s1 + $0xe8] sm:$0xff]
      %v204 = vld [vmem:[%s1 + $0xf0] sm:$0xff]
      %v205 = vld [vmem:[%s1 + $0xf8] sm:$0xff]
      %v206 = vld [vmem:[%s1 + $0x100] sm:$0xff]
      %v207 = vld [vmem:[%s1 + $0x108] sm:$0xff]
      %v208 = vld [vmem:[%s1 + $0x110] sm:$0xff]
      %v209 = vld [vmem:[%s1 + $0x118] sm:$0xff]
      %v210 = vld [vmem:[%s1 + $0x120] sm:$0xff]
      %v211 = vld [vmem:[%s1 + $0x128] sm:$0xff]
      %v212 = vld [vmem:[%s1 + $0x130] sm:$0xff]
      %v213 = vld [vmem:[%s1 + $0x138] sm:$0xff]
      %v214 = vld [vmem:[%s1 + $0x140] sm:$0xff]
      %v215 = vld [vmem:[%s1 + $0x148] sm:$0xff]
      %v216 = vld [vmem:[%s1 + $0x150] sm:$0xff]
      %v217 = vld [vmem:[%s1 + $0x158] sm:$0xff]
      %v218 = vld [vmem:[%s1 + $0x160] sm:$0xff]
      %v219 = vld [vmem:[%s1 + $0x168] sm:$0xff]
      %v220 = vld [vmem:[%s1 + $0x170] sm:$0xff]
      %v221 = vld [vmem:[%s1 + $0x178] sm:$0xff]
      %v222 = vld [vmem:[%s1 + $0x180] sm:$0xff]
      %v223 = vld [vmem:[%s1 + $0x188] sm:$0xff]
      %v224 = vld [vmem:[%s165 + $0x10] sm:$0x11]
      %v225 = vld [vmem:[%s165 + $0x18] sm:$0x11]
      %s226 = scalar_lea.vmem %s1, 400
      %v227 = vld [vmem:[%s226] sm:$0xff]
      %v228 = vld [vmem:[%s226 + $0x8] sm:$0xff]
      %v229 = vld [vmem:[%s226 + $0x10] sm:$0xff]
      %v230 = vld [vmem:[%s226 + $0x18] sm:$0xff]
      %v231 = vld [vmem:[%s226 + $0x20] sm:$0xff]
      %v232 = vld [vmem:[%s226 + $0x28] sm:$0xff]
      %v233 = vld [vmem:[%s226 + $0x30] sm:$0xff]
      %v234 = vld [vmem:[%s226 + $0x38] sm:$0xff]
      %v235 = vld [vmem:[%s226 + $0x40] sm:$0xff]
      %v236 = vld [vmem:[%s226 + $0x48] sm:$0xff]
      %v237 = vld [vmem:[%s226 + $0x50] sm:$0xff]
      %v238 = vld [vmem:[%s226 + $0x58] sm:$0xff]
      %v239 = vld [vmem:[%s226 + $0x60] sm:$0xff]
      %v240 = vld [vmem:[%s226 + $0x68] sm:$0xff]
      %v241 = vld [vmem:[%s226 + $0x70] sm:$0xff]
      %v242 = vld [vmem:[%s226 + $0x78] sm:$0xff]
      %v243 = vld [vmem:[%s226 + $0x80] sm:$0xff]
      %v244 = vld [vmem:[%s226 + $0x88] sm:$0xff]
      %v245 = vld [vmem:[%s226 + $0x90] sm:$0xff]
      %v246 = vld [vmem:[%s226 + $0x98] sm:$0xff]
      %v247 = vld [vmem:[%s226 + $0xa0] sm:$0xff]
      %v248 = vld [vmem:[%s226 + $0xa8] sm:$0xff]
      %v249 = vld [vmem:[%s226 + $0xb0] sm:$0xff]
      %v250 = vld [vmem:[%s226 + $0xb8] sm:$0xff]
      %v251 = vld [vmem:[%s226 + $0xc0] sm:$0xff]
      %v252 = vld [vmem:[%s226 + $0xc8] sm:$0xff]
      %v253 = vld [vmem:[%s226 + $0xd0] sm:$0xff]
      %v254 = vld [vmem:[%s226 + $0xd8] sm:$0xff]
      %v255 = vld [vmem:[%s226 + $0xe0] sm:$0xff]
      %v256 = vld [vmem:[%s226 + $0xe8] sm:$0xff]
      %v257 = vld [vmem:[%s226 + $0xf0] sm:$0xff]
      %v258 = vld [vmem:[%s226 + $0xf8] sm:$0xff]
      %v259 = vld [vmem:[%s226 + $0x100] sm:$0xff]
      %v260 = vld [vmem:[%s226 + $0x108] sm:$0xff]
      %v261 = vld [vmem:[%s226 + $0x110] sm:$0xff]
      %v262 = vld [vmem:[%s226 + $0x118] sm:$0xff]
      %v263 = vld [vmem:[%s226 + $0x120] sm:$0xff]
      %v264 = vld [vmem:[%s226 + $0x128] sm:$0xff]
      %v265 = vld [vmem:[%s226 + $0x130] sm:$0xff]
      %v266 = vld [vmem:[%s226 + $0x138] sm:$0xff]
      %v267 = vld [vmem:[%s226 + $0x140] sm:$0xff]
      %v268 = vld [vmem:[%s226 + $0x148] sm:$0xff]
      %v269 = vld [vmem:[%s226 + $0x150] sm:$0xff]
      %v270 = vld [vmem:[%s226 + $0x158] sm:$0xff]
      %v271 = vld [vmem:[%s226 + $0x160] sm:$0xff]
      %v272 = vld [vmem:[%s226 + $0x168] sm:$0xff]
      %v273 = vld [vmem:[%s226 + $0x170] sm:$0xff]
      %v274 = vld [vmem:[%s226 + $0x178] sm:$0xff]
      %v275 = vld [vmem:[%s226 + $0x180] sm:$0xff]
      %v276 = vld [vmem:[%s226 + $0x188] sm:$0xff]
      %v281 = vunpack.c.l.b16 %v172
      %v282 = vunpack.c.h.b16 %v172
      %v283 = vunpack.c.l.b16 %v173
      %v284 = vunpack.c.h.b16 %v173
      %v285 = vunpack.c.l.b16 %v224
      %v286 = vunpack.c.h.b16 %v224
      %v287 = vunpack.c.l.b16 %v225
      %v288 = vunpack.c.h.b16 %v225
      %v289 = vpack.c.b16 %v285, %v281
      %v290 = vpack.c.b16 %v286, %v282
      %v291 = vpack.c.b16 %v287, %v283
      %v292 = vpack.c.b16 %v288, %v284
      %v294 = vshrl.u32 %v289, 16
      %v296 = vshll.u32 %v289, 16
      %v298 = vrot.slane %v296, 1
      %v299 = vor.u32 %v294, %v298
      %v301 = vshrl.u32 %v290, 16
      %v303 = vshll.u32 %v290, 16
      %v305 = vrot.slane %v303, 1
      %v306 = vor.u32 %v301, %v305
      %v308 = vshrl.u32 %v291, 16
      %v310 = vshll.u32 %v291, 16
      %v312 = vrot.slane %v310, 1
      %v313 = vor.u32 %v308, %v312
      %v315 = vshrl.u32 %v292, 16
      %v317 = vshll.u32 %v292, 16
      %v319 = vrot.slane %v317, 1
      %v320 = vor.u32 %v315, %v319
      %v374 = vunpack.c.l.b16 %v227
      %v375 = vunpack.c.h.b16 %v227
      %v376 = vunpack.c.l.b16 %v228
      %v377 = vunpack.c.h.b16 %v228
      %v378 = vunpack.c.l.b16 %v229
      %v379 = vunpack.c.h.b16 %v229
      %v380 = vunpack.c.l.b16 %v230
      %v381 = vunpack.c.h.b16 %v230
      %v382 = vunpack.c.l.b16 %v231
      %v383 = vunpack.c.h.b16 %v231
      %v384 = vunpack.c.l.b16 %v232
      %v385 = vunpack.c.h.b16 %v232
      %v386 = vunpack.c.l.b16 %v233
      %v387 = vunpack.c.h.b16 %v233
      %v388 = vunpack.c.l.b16 %v234
      %v389 = vunpack.c.h.b16 %v234
      %v390 = vunpack.c.l.b16 %v235
      %v391 = vunpack.c.h.b16 %v235
      %v392 = vunpack.c.l.b16 %v236
      %v393 = vunpack.c.h.b16 %v236
      %v394 = vunpack.c.l.b16 %v237
      %v395 = vunpack.c.h.b16 %v237
      %v396 = vunpack.c.l.b16 %v238
      %v397 = vunpack.c.h.b16 %v238
      %v398 = vunpack.c.l.b16 %v239
      %v399 = vunpack.c.h.b16 %v239
      %v400 = vunpack.c.l.b16 %v240
      %v401 = vunpack.c.h.b16 %v240
      %v402 = vunpack.c.l.b16 %v241
      %v403 = vunpack.c.h.b16 %v241
      %v404 = vunpack.c.l.b16 %v242
      %v405 = vunpack.c.h.b16 %v242
      %v406 = vunpack.c.l.b16 %v243
      %v407 = vunpack.c.h.b16 %v243
      %v408 = vunpack.c.l.b16 %v244
      %v409 = vunpack.c.h.b16 %v244
      %v410 = vunpack.c.l.b16 %v245
      %v411 = vunpack.c.h.b16 %v245
      %v412 = vunpack.c.l.b16 %v246
      %v413 = vunpack.c.h.b16 %v246
      %v414 = vunpack.c.l.b16 %v247
      %v415 = vunpack.c.h.b16 %v247
      %v416 = vunpack.c.l.b16 %v248
      %v417 = vunpack.c.h.b16 %v248
      %v418 = vunpack.c.l.b16 %v249
      %v419 = vunpack.c.h.b16 %v249
      %v420 = vunpack.c.l.b16 %v250
      %v421 = vunpack.c.h.b16 %v250
      %v422 = vunpack.c.l.b16 %v251
      %v423 = vunpack.c.h.b16 %v251
      %v424 = vunpack.c.l.b16 %v252
      %v425 = vunpack.c.h.b16 %v252
      %v426 = vunpack.c.l.b16 %v253
      %v427 = vunpack.c.h.b16 %v253
      %v428 = vunpack.c.l.b16 %v254
      %v429 = vunpack.c.h.b16 %v254
      %v430 = vunpack.c.l.b16 %v255
      %v431 = vunpack.c.h.b16 %v255
      %v432 = vunpack.c.l.b16 %v256
      %v433 = vunpack.c.h.b16 %v256
      %v434 = vunpack.c.l.b16 %v257
      %v435 = vunpack.c.h.b16 %v257
      %v436 = vunpack.c.l.b16 %v258
      %v437 = vunpack.c.h.b16 %v258
      %v438 = vunpack.c.l.b16 %v259
      %v439 = vunpack.c.h.b16 %v259
      %v440 = vunpack.c.l.b16 %v260
      %v441 = vunpack.c.h.b16 %v260
      %v442 = vunpack.c.l.b16 %v261
      %v443 = vunpack.c.h.b16 %v261
      %v444 = vunpack.c.l.b16 %v262
      %v445 = vunpack.c.h.b16 %v262
      %v446 = vunpack.c.l.b16 %v263
      %v447 = vunpack.c.h.b16 %v263
      %v448 = vunpack.c.l.b16 %v264
      %v449 = vunpack.c.h.b16 %v264
      %v450 = vunpack.c.l.b16 %v265
      %v451 = vunpack.c.h.b16 %v265
      %v452 = vunpack.c.l.b16 %v266
      %v453 = vunpack.c.h.b16 %v266
      %v454 = vunpack.c.l.b16 %v267
      %v455 = vunpack.c.h.b16 %v267
      %v456 = vunpack.c.l.b16 %v268
      %v457 = vunpack.c.h.b16 %v268
      %v458 = vunpack.c.l.b16 %v269
      %v459 = vunpack.c.h.b16 %v269
      %v460 = vunpack.c.l.b16 %v270
      %v461 = vunpack.c.h.b16 %v270
      %v462 = vunpack.c.l.b16 %v271
      %v463 = vunpack.c.h.b16 %v271
      %v464 = vunpack.c.l.b16 %v272
      %v465 = vunpack.c.h.b16 %v272
      %v466 = vunpack.c.l.b16 %v273
      %v467 = vunpack.c.h.b16 %v273
      %v468 = vunpack.c.l.b16 %v274
      %v469 = vunpack.c.h.b16 %v274
      %v470 = vunpack.c.l.b16 %v275
      %v471 = vunpack.c.h.b16 %v275
      %v472 = vunpack.c.l.b16 %v276
      %v473 = vunpack.c.h.b16 %v276
      %v474 = vpack.c.b16 %v376, %v374
      %v475 = vpack.c.b16 %v377, %v375
      %v476 = vpack.c.b16 %v380, %v378
      %v477 = vpack.c.b16 %v381, %v379
      %v478 = vpack.c.b16 %v384, %v382
      %v479 = vpack.c.b16 %v385, %v383
      %v480 = vpack.c.b16 %v388, %v386
      %v481 = vpack.c.b16 %v389, %v387
      %v482 = vpack.c.b16 %v392, %v390
      %v483 = vpack.c.b16 %v393, %v391
      %v484 = vpack.c.b16 %v396, %v394
      %v485 = vpack.c.b16 %v397, %v395
      %v486 = vpack.c.b16 %v400, %v398
      %v487 = vpack.c.b16 %v401, %v399
      %v488 = vpack.c.b16 %v404, %v402
      %v489 = vpack.c.b16 %v405, %v403
      %v490 = vpack.c.b16 %v408, %v406
      %v491 = vpack.c.b16 %v409, %v407
      %v492 = vpack.c.b16 %v412, %v410
      %v493 = vpack.c.b16 %v413, %v411
      %v494 = vpack.c.b16 %v416, %v414
      %v495 = vpack.c.b16 %v417, %v415
      %v496 = vpack.c.b16 %v420, %v418
      %v497 = vpack.c.b16 %v421, %v419
      %v498 = vpack.c.b16 %v424, %v422
      %v499 = vpack.c.b16 %v425, %v423
      %v500 = vpack.c.b16 %v428, %v426
      %v501 = vpack.c.b16 %v429, %v427
      %v502 = vpack.c.b16 %v432, %v430
      %v503 = vpack.c.b16 %v433, %v431
      %v504 = vpack.c.b16 %v436, %v434
      %v505 = vpack.c.b16 %v437, %v435
      %v506 = vpack.c.b16 %v440, %v438
      %v507 = vpack.c.b16 %v441, %v439
      %v508 = vpack.c.b16 %v444, %v442
      %v509 = vpack.c.b16 %v445, %v443
      %v510 = vpack.c.b16 %v448, %v446
      %v511 = vpack.c.b16 %v449, %v447
      %v512 = vpack.c.b16 %v452, %v450
      %v513 = vpack.c.b16 %v453, %v451
      %v514 = vpack.c.b16 %v456, %v454
      %v515 = vpack.c.b16 %v457, %v455
      %v516 = vpack.c.b16 %v460, %v458
      %v517 = vpack.c.b16 %v461, %v459
      %v518 = vpack.c.b16 %v464, %v462
      %v519 = vpack.c.b16 %v465, %v463
      %v520 = vpack.c.b16 %v468, %v466
      %v521 = vpack.c.b16 %v469, %v467
      %v522 = vpack.c.b16 %v472, %v470
      %v523 = vpack.c.b16 %v473, %v471
      %vm574 = vcmask 130048
      %v576 = vsel %vm574, %v320, 0
      %578 = vmatprep.subr.bf16.mxu0 %v475
      %579 = vmatpush1.bf16.msra.mxu0 %v474
      %580 = vmatprep.subr.bf16.mxu0 %v477
      %581 = vmatpush1.bf16.msra.mxu0 %v476
      %582 = vmatprep.subr.bf16.mxu0 %v479
      %583 = vmatpush1.bf16.msra.mxu0 %v478
      %584 = vmatprep.subr.bf16.mxu0 %v481
      %585 = vmatpush1.bf16.msra.mxu0 %v480
      %586 = vmatprep.subr.bf16.mxu0 %v483
      %587 = vmatpush1.bf16.msra.mxu0 %v482
      %588 = vmatprep.subr.bf16.mxu0 %v485
      %589 = vmatpush1.bf16.msra.mxu0 %v484
      %590 = vmatprep.subr.bf16.mxu0 %v487
      %591 = vmatpush1.bf16.msra.mxu0 %v486
      %592 = vmatprep.subr.bf16.mxu0 %v489
      %593 = vmatpush1.bf16.msra.mxu0 %v488
      %594 = vmatprep.subr.bf16.mxu0 %v491
      %595 = vmatpush1.bf16.msra.mxu0 %v490
      %596 = vmatprep.subr.bf16.mxu0 %v493
      %597 = vmatpush1.bf16.msra.mxu0 %v492
      %598 = vmatprep.subr.bf16.mxu0 %v495
      %599 = vmatpush1.bf16.msra.mxu0 %v494
      %600 = vmatprep.subr.bf16.mxu0 %v497
      %601 = vmatpush1.bf16.msra.mxu0 %v496
      %602 = vmatprep.subr.bf16.mxu0 %v499
      %603 = vmatpush1.bf16.msra.mxu0 %v498
      %604 = vmatprep.subr.bf16.mxu0 %v501
      %605 = vmatpush1.bf16.msra.mxu0 %v500
      %606 = vmatprep.subr.bf16.mxu0 %v503
      %607 = vmatpush1.bf16.msra.mxu0 %v502
      %608 = vmatprep.subr.bf16.mxu0 %v505
      %609 = vmatpush1.bf16.msra.mxu0 %v504
      %610 = vmatprep.mubr.bf16.mxu0 %v306
      %611 = vmatmul.mubr.bf16.gmra.mrb[0].mxu0 %v299
      %v612 = vpop.f32.mrb[0].mxu0
      %v613 = vadd.f32 0.0, %v612
      %v614 = vpop.f32.mrb[0].mxu0
      %v615 = vadd.f32 0.0, %v614
      %v616 = vpop.f32.mrb[0].mxu0
      %v617 = vpop.f32.mrb[0].mxu0
      %618 = vdwg.mxu0
      %619 = vmatprep.subr.bf16.mxu0 %v507
      %620 = vmatpush1.bf16.msra.mxu0 %v506
      %621 = vmatprep.subr.bf16.mxu0 %v509
      %622 = vmatpush1.bf16.msra.mxu0 %v508
      %623 = vmatprep.subr.bf16.mxu0 %v511
      %624 = vmatpush1.bf16.msra.mxu0 %v510
      %625 = vmatprep.subr.bf16.mxu0 %v513
      %626 = vmatpush1.bf16.msra.mxu0 %v512
      %627 = vmatprep.subr.bf16.mxu0 %v515
      %628 = vmatpush1.bf16.msra.mxu0 %v514
      %629 = vmatprep.subr.bf16.mxu0 %v517
      %630 = vmatpush1.bf16.msra.mxu0 %v516
      %631 = vmatprep.subr.bf16.mxu0 %v519
      %632 = vmatpush1.bf16.msra.mxu0 %v518
      %633 = vmatprep.subr.bf16.mxu0 %v521
      %634 = vmatpush1.bf16.msra.mxu0 %v520
      %635 = vmatprep.subr.bf16.mxu0 %v523
      %636 = vmatpush1.bf16.msra.mxu0 %v522
      %637 = vmatprep.subr.bf16.mxu0 0
      %638 = vmatpush1.bf16.msra.mxu0 0
      %639 = vmatprep.subr.bf16.mxu0 0
      %640 = vmatpush1.bf16.msra.mxu0 0
      %641 = vmatprep.subr.bf16.mxu0 0
      %642 = vmatpush1.bf16.msra.mxu0 0
      %643 = vmatprep.subr.bf16.mxu0 0
      %644 = vmatpush1.bf16.msra.mxu0 0
      %645 = vmatprep.subr.bf16.mxu0 0
      %646 = vmatpush1.bf16.msra.mxu0 0
      %647 = vmatprep.subr.bf16.mxu0 0
      %648 = vmatpush1.bf16.msra.mxu0 0
      %649 = vmatprep.subr.bf16.mxu0 0
      %650 = vmatpush1.bf16.msra.mxu0 0
      %651 = vmatprep.mubr.bf16.mxu0 %v576
      %652 = vmatmul.mubr.bf16.gmra.mrb[0].mxu0 %v313
      %v653 = vpop.f32.mrb[0].mxu0
      %v654 = vadd.f32 %v613, %v653
      %v655 = vpop.f32.mrb[0].mxu0
      %v656 = vadd.f32 %v615, %v655
      %v657 = vpop.f32.mrb[0].mxu0
      %v658 = vpop.f32.mrb[0].mxu0
      %659 = vdwg.mxu0
      %v660 = vpack.c.b16 %v281, %v281
      %v661 = vpack.c.b16 %v282, %v282
      %v662 = vpack.c.b16 %v283, %v283
      %v663 = vpack.c.b16 %v284, %v284
      %v717 = vunpack.c.l.b16 %v174
      %v718 = vunpack.c.h.b16 %v174
      %v719 = vunpack.c.l.b16 %v175
      %v720 = vunpack.c.h.b16 %v175
      %v721 = vunpack.c.l.b16 %v176
      %v722 = vunpack.c.h.b16 %v176
      %v723 = vunpack.c.l.b16 %v177
      %v724 = vunpack.c.h.b16 %v177
      %v725 = vunpack.c.l.b16 %v178
      %v726 = vunpack.c.h.b16 %v178
      %v727 = vunpack.c.l.b16 %v179
      %v728 = vunpack.c.h.b16 %v179
      %v729 = vunpack.c.l.b16 %v180
      %v730 = vunpack.c.h.b16 %v180
      %v731 = vunpack.c.l.b16 %v181
      %v732 = vunpack.c.h.b16 %v181
      %v733 = vunpack.c.l.b16 %v182
      %v734 = vunpack.c.h.b16 %v182
      %v735 = vunpack.c.l.b16 %v183
      %v736 = vunpack.c.h.b16 %v183
      %v737 = vunpack.c.l.b16 %v184
      %v738 = vunpack.c.h.b16 %v184
      %v739 = vunpack.c.l.b16 %v185
      %v740 = vunpack.c.h.b16 %v185
      %v741 = vunpack.c.l.b16 %v186
      %v742 = vunpack.c.h.b16 %v186
      %v743 = vunpack.c.l.b16 %v187
      %v744 = vunpack.c.h.b16 %v187
      %v745 = vunpack.c.l.b16 %v188
      %v746 = vunpack.c.h.b16 %v188
      %v747 = vunpack.c.l.b16 %v189
      %v748 = vunpack.c.h.b16 %v189
      %v749 = vunpack.c.l.b16 %v190
      %v750 = vunpack.c.h.b16 %v190
      %v751 = vunpack.c.l.b16 %v191
      %v752 = vunpack.c.h.b16 %v191
      %v753 = vunpack.c.l.b16 %v192
      %v754 = vunpack.c.h.b16 %v192
      %v755 = vunpack.c.l.b16 %v193
      %v756 = vunpack.c.h.b16 %v193
      %v757 = vunpack.c.l.b16 %v194
      %v758 = vunpack.c.h.b16 %v194
      %v759 = vunpack.c.l.b16 %v195
      %v760 = vunpack.c.h.b16 %v195
      %v761 = vunpack.c.l.b16 %v196
      %v762 = vunpack.c.h.b16 %v196
      %v763 = vunpack.c.l.b16 %v197
      %v764 = vunpack.c.h.b16 %v197
      %v765 = vunpack.c.l.b16 %v198
      %v766 = vunpack.c.h.b16 %v198
      %v767 = vunpack.c.l.b16 %v199
      %v768 = vunpack.c.h.b16 %v199
      %v769 = vunpack.c.l.b16 %v200
      %v770 = vunpack.c.h.b16 %v200
      %v771 = vunpack.c.l.b16 %v201
      %v772 = vunpack.c.h.b16 %v201
      %v773 = vunpack.c.l.b16 %v202
      %v774 = vunpack.c.h.b16 %v202
      %v775 = vunpack.c.l.b16 %v203
      %v776 = vunpack.c.h.b16 %v203
      %v777 = vunpack.c.l.b16 %v204
      %v778 = vunpack.c.h.b16 %v204
      %v779 = vunpack.c.l.b16 %v205
      %v780 = vunpack.c.h.b16 %v205
      %v781 = vunpack.c.l.b16 %v206
      %v782 = vunpack.c.h.b16 %v206
      %v783 = vunpack.c.l.b16 %v207
      %v784 = vunpack.c.h.b16 %v207
      %v785 = vunpack.c.l.b16 %v208
      %v786 = vunpack.c.h.b16 %v208
      %v787 = vunpack.c.l.b16 %v209
      %v788 = vunpack.c.h.b16 %v209
      %v789 = vunpack.c.l.b16 %v210
      %v790 = vunpack.c.h.b16 %v210
      %v791 = vunpack.c.l.b16 %v211
      %v792 = vunpack.c.h.b16 %v211
      %v793 = vunpack.c.l.b16 %v212
      %v794 = vunpack.c.h.b16 %v212
      %v795 = vunpack.c.l.b16 %v213
      %v796 = vunpack.c.h.b16 %v213
      %v797 = vunpack.c.l.b16 %v214
      %v798 = vunpack.c.h.b16 %v214
      %v799 = vunpack.c.l.b16 %v215
      %v800 = vunpack.c.h.b16 %v215
      %v801 = vunpack.c.l.b16 %v216
      %v802 = vunpack.c.h.b16 %v216
      %v803 = vunpack.c.l.b16 %v217
      %v804 = vunpack.c.h.b16 %v217
      %v805 = vunpack.c.l.b16 %v218
      %v806 = vunpack.c.h.b16 %v218
      %v807 = vunpack.c.l.b16 %v219
      %v808 = vunpack.c.h.b16 %v219
      %v809 = vunpack.c.l.b16 %v220
      %v810 = vunpack.c.h.b16 %v220
      %v811 = vunpack.c.l.b16 %v221
      %v812 = vunpack.c.h.b16 %v221
      %v813 = vunpack.c.l.b16 %v222
      %v814 = vunpack.c.h.b16 %v222
      %v815 = vunpack.c.l.b16 %v223
      %v816 = vunpack.c.h.b16 %v223
      %v817 = vpack.c.b16 %v719, %v717
      %v818 = vpack.c.b16 %v720, %v718
      %v819 = vpack.c.b16 %v723, %v721
      %v820 = vpack.c.b16 %v724, %v722
      %v821 = vpack.c.b16 %v727, %v725
      %v822 = vpack.c.b16 %v728, %v726
      %v823 = vpack.c.b16 %v731, %v729
      %v824 = vpack.c.b16 %v732, %v730
      %v825 = vpack.c.b16 %v735, %v733
      %v826 = vpack.c.b16 %v736, %v734
      %v827 = vpack.c.b16 %v739, %v737
      %v828 = vpack.c.b16 %v740, %v738
      %v829 = vpack.c.b16 %v743, %v741
      %v830 = vpack.c.b16 %v744, %v742
      %v831 = vpack.c.b16 %v747, %v745
      %v832 = vpack.c.b16 %v748, %v746
      %v833 = vpack.c.b16 %v751, %v749
      %v834 = vpack.c.b16 %v752, %v750
      %v835 = vpack.c.b16 %v755, %v753
      %v836 = vpack.c.b16 %v756, %v754
      %v837 = vpack.c.b16 %v759, %v757
      %v838 = vpack.c.b16 %v760, %v758
      %v839 = vpack.c.b16 %v763, %v761
      %v840 = vpack.c.b16 %v764, %v762
      %v841 = vpack.c.b16 %v767, %v765
      %v842 = vpack.c.b16 %v768, %v766
      %v843 = vpack.c.b16 %v771, %v769
      %v844 = vpack.c.b16 %v772, %v770
      %v845 = vpack.c.b16 %v775, %v773
      %v846 = vpack.c.b16 %v776, %v774
      %v847 = vpack.c.b16 %v779, %v777
      %v848 = vpack.c.b16 %v780, %v778
      %v849 = vpack.c.b16 %v783, %v781
      %v850 = vpack.c.b16 %v784, %v782
      %v851 = vpack.c.b16 %v787, %v785
      %v852 = vpack.c.b16 %v788, %v786
      %v853 = vpack.c.b16 %v791, %v789
      %v854 = vpack.c.b16 %v792, %v790
      %v855 = vpack.c.b16 %v795, %v793
      %v856 = vpack.c.b16 %v796, %v794
      %v857 = vpack.c.b16 %v799, %v797
      %v858 = vpack.c.b16 %v800, %v798
      %v859 = vpack.c.b16 %v803, %v801
      %v860 = vpack.c.b16 %v804, %v802
      %v861 = vpack.c.b16 %v807, %v805
      %v862 = vpack.c.b16 %v808, %v806
      %v863 = vpack.c.b16 %v811, %v809
      %v864 = vpack.c.b16 %v812, %v810
      %v865 = vpack.c.b16 %v815, %v813
      %v866 = vpack.c.b16 %v816, %v814
      %v918 = vsel %vm574, %v663, 0
      %920 = vmatprep.subr.bf16.mxu0 %v818
      %921 = vmatpush1.bf16.msra.mxu0 %v817
      %922 = vmatprep.subr.bf16.mxu0 %v820
      %923 = vmatpush1.bf16.msra.mxu0 %v819
      %924 = vmatprep.subr.bf16.mxu0 %v822
      %925 = vmatpush1.bf16.msra.mxu0 %v821
      %926 = vmatprep.subr.bf16.mxu0 %v824
      %927 = vmatpush1.bf16.msra.mxu0 %v823
      %928 = vmatprep.subr.bf16.mxu0 %v826
      %929 = vmatpush1.bf16.msra.mxu0 %v825
      %930 = vmatprep.subr.bf16.mxu0 %v828
      %931 = vmatpush1.bf16.msra.mxu0 %v827
      %932 = vmatprep.subr.bf16.mxu0 %v830
      %933 = vmatpush1.bf16.msra.mxu0 %v829
      %934 = vmatprep.subr.bf16.mxu0 %v832
      %935 = vmatpush1.bf16.msra.mxu0 %v831
      %936 = vmatprep.subr.bf16.mxu0 %v834
      %937 = vmatpush1.bf16.msra.mxu0 %v833
      %938 = vmatprep.subr.bf16.mxu0 %v836
      %939 = vmatpush1.bf16.msra.mxu0 %v835
      %940 = vmatprep.subr.bf16.mxu0 %v838
      %941 = vmatpush1.bf16.msra.mxu0 %v837
      %942 = vmatprep.subr.bf16.mxu0 %v840
      %943 = vmatpush1.bf16.msra.mxu0 %v839
      %944 = vmatprep.subr.bf16.mxu0 %v842
      %945 = vmatpush1.bf16.msra.mxu0 %v841
      %946 = vmatprep.subr.bf16.mxu0 %v844
      %947 = vmatpush1.bf16.msra.mxu0 %v843
      %948 = vmatprep.subr.bf16.mxu0 %v846
      %949 = vmatpush1.bf16.msra.mxu0 %v845
      %950 = vmatprep.subr.bf16.mxu0 %v848
      %951 = vmatpush1.bf16.msra.mxu0 %v847
      %952 = vmatprep.mubr.bf16.mxu0 %v661
      %953 = vmatmul.mubr.bf16.gmra.mrb[0].mxu0 %v660
      %v954 = vpop.f32.mrb[0].mxu0
      %v955 = vadd.f32 %v654, %v954
      %v956 = vpop.f32.mrb[0].mxu0
      %v957 = vadd.f32 %v656, %v956
      %v958 = vpop.f32.mrb[0].mxu0
      %v959 = vpop.f32.mrb[0].mxu0
      %960 = vdwg.mxu0
      %961 = vmatprep.subr.bf16.mxu0 %v850
      %962 = vmatpush1.bf16.msra.mxu0 %v849
      %963 = vmatprep.subr.bf16.mxu0 %v852
      %964 = vmatpush1.bf16.msra.mxu0 %v851
      %965 = vmatprep.subr.bf16.mxu0 %v854
      %966 = vmatpush1.bf16.msra.mxu0 %v853
      %967 = vmatprep.subr.bf16.mxu0 %v856
      %968 = vmatpush1.bf16.msra.mxu0 %v855
      %969 = vmatprep.subr.bf16.mxu0 %v858
      %970 = vmatpush1.bf16.msra.mxu0 %v857
      %971 = vmatprep.subr.bf16.mxu0 %v860
      %972 = vmatpush1.bf16.msra.mxu0 %v859
      %973 = vmatprep.subr.bf16.mxu0 %v862
      %974 = vmatpush1.bf16.msra.mxu0 %v861
      %975 = vmatprep.subr.bf16.mxu0 %v864
      %976 = vmatpush1.bf16.msra.mxu0 %v863
      %977 = vmatprep.subr.bf16.mxu0 %v866
      %978 = vmatpush1.bf16.msra.mxu0 %v865
      %979 = vmatprep.subr.bf16.mxu0 0
      %980 = vmatpush1.bf16.msra.mxu0 0
      %981 = vmatprep.subr.bf16.mxu0 0
      %982 = vmatpush1.bf16.msra.mxu0 0
      %983 = vmatprep.subr.bf16.mxu0 0
      %984 = vmatpush1.bf16.msra.mxu0 0
      %985 = vmatprep.subr.bf16.mxu0 0
      %986 = vmatpush1.bf16.msra.mxu0 0
      %987 = vmatprep.subr.bf16.mxu0 0
      %988 = vmatpush1.bf16.msra.mxu0 0
      %989 = vmatprep.subr.bf16.mxu0 0
      %990 = vmatpush1.bf16.msra.mxu0 0
      %991 = vmatprep.subr.bf16.mxu0 0
      %992 = vmatpush1.bf16.msra.mxu0 0
      %993 = vmatprep.mubr.bf16.mxu0 %v918
      %994 = vmatmul.mubr.bf16.gmra.mrb[0].mxu0 %v662
      %v995 = vpop.f32.mrb[0].mxu0
      %v996 = vadd.f32 %v955, %v995
      %v997 = vpop.f32.mrb[0].mxu0
      %v998 = vadd.f32 %v957, %v997
      %v999 = vpop.f32.mrb[0].mxu0
      %v1000 = vpop.f32.mrb[0].mxu0
      %1001 = vdwg.mxu0
      %v1002 = vld [vmem:[%s165] sm:$0xee]
      %v1003 = vld [vmem:[%s165 + $0x8] sm:$0xee]
      %s1004 = scalar_lea.vmem %s1, 800
      %v1005 = vld [vmem:[%s1004] sm:$0xff]
      %v1006 = vld [vmem:[%s1004 + $0x8] sm:$0xff]
      %v1007 = vld [vmem:[%s1004 + $0x10] sm:$0xff]
      %v1008 = vld [vmem:[%s1004 + $0x18] sm:$0xff]
      %v1009 = vld [vmem:[%s1004 + $0x20] sm:$0xff]
      %v1010 = vld [vmem:[%s1004 + $0x28] sm:$0xff]
      %v1011 = vld [vmem:[%s1004 + $0x30] sm:$0xff]
      %v1012 = vld [vmem:[%s1004 + $0x38] sm:$0xff]
      %v1013 = vld [vmem:[%s1004 + $0x40] sm:$0xff]
      %v1014 = vld [vmem:[%s1004 + $0x48] sm:$0xff]
      %v1015 = vld [vmem:[%s1004 + $0x50] sm:$0xff]
      %v1016 = vld [vmem:[%s1004 + $0x58] sm:$0xff]
      %v1017 = vld [vmem:[%s1004 + $0x60] sm:$0xff]
      %v1018 = vld [vmem:[%s1004 + $0x68] sm:$0xff]
      %v1019 = vld [vmem:[%s1004 + $0x70] sm:$0xff]
      %v1020 = vld [vmem:[%s1004 + $0x78] sm:$0xff]
      %v1021 = vld [vmem:[%s1004 + $0x80] sm:$0xff]
      %v1022 = vld [vmem:[%s1004 + $0x88] sm:$0xff]
      %v1023 = vld [vmem:[%s1004 + $0x90] sm:$0xff]
      %v1024 = vld [vmem:[%s1004 + $0x98] sm:$0xff]
      %v1025 = vld [vmem:[%s1004 + $0xa0] sm:$0xff]
      %v1026 = vld [vmem:[%s1004 + $0xa8] sm:$0xff]
      %v1027 = vld [vmem:[%s1004 + $0xb0] sm:$0xff]
      %v1028 = vld [vmem:[%s1004 + $0xb8] sm:$0xff]
      %v1029 = vld [vmem:[%s1004 + $0xc0] sm:$0xff]
      %v1030 = vld [vmem:[%s1004 + $0xc8] sm:$0xff]
      %v1031 = vld [vmem:[%s1004 + $0xd0] sm:$0xff]
      %v1032 = vld [vmem:[%s1004 + $0xd8] sm:$0xff]
      %v1033 = vld [vmem:[%s1004 + $0xe0] sm:$0xff]
      %v1034 = vld [vmem:[%s1004 + $0xe8] sm:$0xff]
      %v1035 = vld [vmem:[%s1004 + $0xf0] sm:$0xff]
      %v1036 = vld [vmem:[%s1004 + $0xf8] sm:$0xff]
      %v1037 = vld [vmem:[%s1004 + $0x100] sm:$0xff]
      %v1038 = vld [vmem:[%s1004 + $0x108] sm:$0xff]
      %v1039 = vld [vmem:[%s1004 + $0x110] sm:$0xff]
      %v1040 = vld [vmem:[%s1004 + $0x118] sm:$0xff]
      %v1041 = vld [vmem:[%s1004 + $0x120] sm:$0xff]
      %v1042 = vld [vmem:[%s1004 + $0x128] sm:$0xff]
      %v1043 = vld [vmem:[%s1004 + $0x130] sm:$0xff]
      %v1044 = vld [vmem:[%s1004 + $0x138] sm:$0xff]
      %v1045 = vld [vmem:[%s1004 + $0x140] sm:$0xff]
      %v1046 = vld [vmem:[%s1004 + $0x148] sm:$0xff]
      %v1047 = vld [vmem:[%s1004 + $0x150] sm:$0xff]
      %v1048 = vld [vmem:[%s1004 + $0x158] sm:$0xff]
      %v1049 = vld [vmem:[%s1004 + $0x160] sm:$0xff]
      %v1050 = vld [vmem:[%s1004 + $0x168] sm:$0xff]
      %v1051 = vld [vmem:[%s1004 + $0x170] sm:$0xff]
      %v1052 = vld [vmem:[%s1004 + $0x178] sm:$0xff]
      %v1053 = vld [vmem:[%s1004 + $0x180] sm:$0xff]
      %v1054 = vld [vmem:[%s1004 + $0x188] sm:$0xff]
      %v1057 = vunpack.c.l.b16 %v1002
      %v1058 = vunpack.c.h.b16 %v1002
      %v1059 = vunpack.c.l.b16 %v1003
      %v1060 = vunpack.c.h.b16 %v1003
      %v1061 = vpack.c.b16 %v285, %v1057
      %v1062 = vpack.c.b16 %v286, %v1058
      %v1063 = vpack.c.b16 %v287, %v1059
      %v1064 = vpack.c.b16 %v288, %v1060
      %v1065 = vrot.slane %v1061, 1
      %v1066 = vrot.slane %v1062, 1
      %v1067 = vrot.slane %v1063, 1
      %v1068 = vrot.slane %v1064, 1
      %v1122 = vunpack.c.l.b16 %v1005
      %v1123 = vunpack.c.h.b16 %v1005
      %v1124 = vunpack.c.l.b16 %v1006
      %v1125 = vunpack.c.h.b16 %v1006
      %v1126 = vunpack.c.l.b16 %v1007
      %v1127 = vunpack.c.h.b16 %v1007
      %v1128 = vunpack.c.l.b16 %v1008
      %v1129 = vunpack.c.h.b16 %v1008
      %v1130 = vunpack.c.l.b16 %v1009
      %v1131 = vunpack.c.h.b16 %v1009
      %v1132 = vunpack.c.l.b16 %v1010
      %v1133 = vunpack.c.h.b16 %v1010
      %v1134 = vunpack.c.l.b16 %v1011
      %v1135 = vunpack.c.h.b16 %v1011
      %v1136 = vunpack.c.l.b16 %v1012
      %v1137 = vunpack.c.h.b16 %v1012
      %v1138 = vunpack.c.l.b16 %v1013
      %v1139 = vunpack.c.h.b16 %v1013
      %v1140 = vunpack.c.l.b16 %v1014
      %v1141 = vunpack.c.h.b16 %v1014
      %v1142 = vunpack.c.l.b16 %v1015
      %v1143 = vunpack.c.h.b16 %v1015
      %v1144 = vunpack.c.l.b16 %v1016
      %v1145 = vunpack.c.h.b16 %v1016
      %v1146 = vunpack.c.l.b16 %v1017
      %v1147 = vunpack.c.h.b16 %v1017
      %v1148 = vunpack.c.l.b16 %v1018
      %v1149 = vunpack.c.h.b16 %v1018
      %v1150 = vunpack.c.l.b16 %v1019
      %v1151 = vunpack.c.h.b16 %v1019
      %v1152 = vunpack.c.l.b16 %v1020
      %v1153 = vunpack.c.h.b16 %v1020
      %v1154 = vunpack.c.l.b16 %v1021
      %v1155 = vunpack.c.h.b16 %v1021
      %v1156 = vunpack.c.l.b16 %v1022
      %v1157 = vunpack.c.h.b16 %v1022
      %v1158 = vunpack.c.l.b16 %v1023
      %v1159 = vunpack.c.h.b16 %v1023
      %v1160 = vunpack.c.l.b16 %v1024
      %v1161 = vunpack.c.h.b16 %v1024
      %v1162 = vunpack.c.l.b16 %v1025
      %v1163 = vunpack.c.h.b16 %v1025
      %v1164 = vunpack.c.l.b16 %v1026
      %v1165 = vunpack.c.h.b16 %v1026
      %v1166 = vunpack.c.l.b16 %v1027
      %v1167 = vunpack.c.h.b16 %v1027
      %v1168 = vunpack.c.l.b16 %v1028
      %v1169 = vunpack.c.h.b16 %v1028
      %v1170 = vunpack.c.l.b16 %v1029
      %v1171 = vunpack.c.h.b16 %v1029
      %v1172 = vunpack.c.l.b16 %v1030
      %v1173 = vunpack.c.h.b16 %v1030
      %v1174 = vunpack.c.l.b16 %v1031
      %v1175 = vunpack.c.h.b16 %v1031
      %v1176 = vunpack.c.l.b16 %v1032
      %v1177 = vunpack.c.h.b16 %v1032
      %v1178 = vunpack.c.l.b16 %v1033
      %v1179 = vunpack.c.h.b16 %v1033
      %v1180 = vunpack.c.l.b16 %v1034
      %v1181 = vunpack.c.h.b16 %v1034
      %v1182 = vunpack.c.l.b16 %v1035
      %v1183 = vunpack.c.h.b16 %v1035
      %v1184 = vunpack.c.l.b16 %v1036
      %v1185 = vunpack.c.h.b16 %v1036
      %v1186 = vunpack.c.l.b16 %v1037
      %v1187 = vunpack.c.h.b16 %v1037
      %v1188 = vunpack.c.l.b16 %v1038
      %v1189 = vunpack.c.h.b16 %v1038
      %v1190 = vunpack.c.l.b16 %v1039
      %v1191 = vunpack.c.h.b16 %v1039
      %v1192 = vunpack.c.l.b16 %v1040
      %v1193 = vunpack.c.h.b16 %v1040
      %v1194 = vunpack.c.l.b16 %v1041
      %v1195 = vunpack.c.h.b16 %v1041
      %v1196 = vunpack.c.l.b16 %v1042
      %v1197 = vunpack.c.h.b16 %v1042
      %v1198 = vunpack.c.l.b16 %v1043
      %v1199 = vunpack.c.h.b16 %v1043
      %v1200 = vunpack.c.l.b16 %v1044
      %v1201 = vunpack.c.h.b16 %v1044
      %v1202 = vunpack.c.l.b16 %v1045
      %v1203 = vunpack.c.h.b16 %v1045
      %v1204 = vunpack.c.l.b16 %v1046
      %v1205 = vunpack.c.h.b16 %v1046
      %v1206 = vunpack.c.l.b16 %v1047
      %v1207 = vunpack.c.h.b16 %v1047
      %v1208 = vunpack.c.l.b16 %v1048
      %v1209 = vunpack.c.h.b16 %v1048
      %v1210 = vunpack.c.l.b16 %v1049
      %v1211 = vunpack.c.h.b16 %v1049
      %v1212 = vunpack.c.l.b16 %v1050
      %v1213 = vunpack.c.h.b16 %v1050
      %v1214 = vunpack.c.l.b16 %v1051
      %v1215 = vunpack.c.h.b16 %v1051
      %v1216 = vunpack.c.l.b16 %v1052
      %v1217 = vunpack.c.h.b16 %v1052
      %v1218 = vunpack.c.l.b16 %v1053
      %v1219 = vunpack.c.h.b16 %v1053
      %v1220 = vunpack.c.l.b16 %v1054
      %v1221 = vunpack.c.h.b16 %v1054
      %v1222 = vpack.c.b16 %v1124, %v1122
      %v1223 = vpack.c.b16 %v1125, %v1123
      %v1224 = vpack.c.b16 %v1128, %v1126
      %v1225 = vpack.c.b16 %v1129, %v1127
      %v1226 = vpack.c.b16 %v1132, %v1130
      %v1227 = vpack.c.b16 %v1133, %v1131
      %v1228 = vpack.c.b16 %v1136, %v1134
      %v1229 = vpack.c.b16 %v1137, %v1135
      %v1230 = vpack.c.b16 %v1140, %v1138
      %v1231 = vpack.c.b16 %v1141, %v1139
      %v1232 = vpack.c.b16 %v1144, %v1142
      %v1233 = vpack.c.b16 %v1145, %v1143
      %v1234 = vpack.c.b16 %v1148, %v1146
      %v1235 = vpack.c.b16 %v1149, %v1147
      %v1236 = vpack.c.b16 %v1152, %v1150
      %v1237 = vpack.c.b16 %v1153, %v1151
      %v1238 = vpack.c.b16 %v1156, %v1154
      %v1239 = vpack.c.b16 %v1157, %v1155
      %v1240 = vpack.c.b16 %v1160, %v1158
      %v1241 = vpack.c.b16 %v1161, %v1159
      %v1242 = vpack.c.b16 %v1164, %v1162
      %v1243 = vpack.c.b16 %v1165, %v1163
      %v1244 = vpack.c.b16 %v1168, %v1166
      %v1245 = vpack.c.b16 %v1169, %v1167
      %v1246 = vpack.c.b16 %v1172, %v1170
      %v1247 = vpack.c.b16 %v1173, %v1171
      %v1248 = vpack.c.b16 %v1176, %v1174
      %v1249 = vpack.c.b16 %v1177, %v1175
      %v1250 = vpack.c.b16 %v1180, %v1178
      %v1251 = vpack.c.b16 %v1181, %v1179
      %v1252 = vpack.c.b16 %v1184, %v1182
      %v1253 = vpack.c.b16 %v1185, %v1183
      %v1254 = vpack.c.b16 %v1188, %v1186
      %v1255 = vpack.c.b16 %v1189, %v1187
      %v1256 = vpack.c.b16 %v1192, %v1190
      %v1257 = vpack.c.b16 %v1193, %v1191
      %v1258 = vpack.c.b16 %v1196, %v1194
      %v1259 = vpack.c.b16 %v1197, %v1195
      %v1260 = vpack.c.b16 %v1200, %v1198
      %v1261 = vpack.c.b16 %v1201, %v1199
      %v1262 = vpack.c.b16 %v1204, %v1202
      %v1263 = vpack.c.b16 %v1205, %v1203
      %v1264 = vpack.c.b16 %v1208, %v1206
      %v1265 = vpack.c.b16 %v1209, %v1207
      %v1266 = vpack.c.b16 %v1212, %v1210
      %v1267 = vpack.c.b16 %v1213, %v1211
      %v1268 = vpack.c.b16 %v1216, %v1214
      %v1269 = vpack.c.b16 %v1217, %v1215
      %v1270 = vpack.c.b16 %v1220, %v1218
      %v1271 = vpack.c.b16 %v1221, %v1219
      %v1323 = vsel %vm574, %v1068, 0
      %1325 = vmatprep.subr.bf16.mxu0 %v1223
      %1326 = vmatpush1.bf16.msra.mxu0 %v1222
      %1327 = vmatprep.subr.bf16.mxu0 %v1225
      %1328 = vmatpush1.bf16.msra.mxu0 %v1224
      %1329 = vmatprep.subr.bf16.mxu0 %v1227
      %1330 = vmatpush1.bf16.msra.mxu0 %v1226
      %1331 = vmatprep.subr.bf16.mxu0 %v1229
      %1332 = vmatpush1.bf16.msra.mxu0 %v1228
      %1333 = vmatprep.subr.bf16.mxu0 %v1231
      %1334 = vmatpush1.bf16.msra.mxu0 %v1230
      %1335 = vmatprep.subr.bf16.mxu0 %v1233
      %1336 = vmatpush1.bf16.msra.mxu0 %v1232
      %1337 = vmatprep.subr.bf16.mxu0 %v1235
      %1338 = vmatpush1.bf16.msra.mxu0 %v1234
      %1339 = vmatprep.subr.bf16.mxu0 %v1237
      %1340 = vmatpush1.bf16.msra.mxu0 %v1236
      %1341 = vmatprep.subr.bf16.mxu0 %v1239
      %1342 = vmatpush1.bf16.msra.mxu0 %v1238
      %1343 = vmatprep.subr.bf16.mxu0 %v1241
      %1344 = vmatpush1.bf16.msra.mxu0 %v1240
      %1345 = vmatprep.subr.bf16.mxu0 %v1243
      %1346 = vmatpush1.bf16.msra.mxu0 %v1242
      %1347 = vmatprep.subr.bf16.mxu0 %v1245
      %1348 = vmatpush1.bf16.msra.mxu0 %v1244
      %1349 = vmatprep.subr.bf16.mxu0 %v1247
      %1350 = vmatpush1.bf16.msra.mxu0 %v1246
      %1351 = vmatprep.subr.bf16.mxu0 %v1249
      %1352 = vmatpush1.bf16.msra.mxu0 %v1248
      %1353 = vmatprep.subr.bf16.mxu0 %v1251
      %1354 = vmatpush1.bf16.msra.mxu0 %v1250
      %1355 = vmatprep.subr.bf16.mxu0 %v1253
      %1356 = vmatpush1.bf16.msra.mxu0 %v1252
      %1357 = vmatprep.mubr.bf16.mxu0 %v1066
      %1358 = vmatmul.mubr.bf16.gmra.mrb[0].mxu0 %v1065
      %v1359 = vpop.f32.mrb[0].mxu0
      %v1360 = vadd.f32 0.0, %v1359
      %v1361 = vpop.f32.mrb[0].mxu0
      %v1362 = vadd.f32 0.0, %v1361
      %v1363 = vpop.f32.mrb[0].mxu0
      %v1364 = vpop.f32.mrb[0].mxu0
      %1365 = vdwg.mxu0
      %1366 = vmatprep.subr.bf16.mxu0 %v1255
      %1367 = vmatpush1.bf16.msra.mxu0 %v1254
      %1368 = vmatprep.subr.bf16.mxu0 %v1257
      %1369 = vmatpush1.bf16.msra.mxu0 %v1256
      %1370 = vmatprep.subr.bf16.mxu0 %v1259
      %1371 = vmatpush1.bf16.msra.mxu0 %v1258
      %1372 = vmatprep.subr.bf16.mxu0 %v1261
      %1373 = vmatpush1.bf16.msra.mxu0 %v1260
      %1374 = vmatprep.subr.bf16.mxu0 %v1263
      %1375 = vmatpush1.bf16.msra.mxu0 %v1262
      %1376 = vmatprep.subr.bf16.mxu0 %v1265
      %1377 = vmatpush1.bf16.msra.mxu0 %v1264
      %1378 = vmatprep.subr.bf16.mxu0 %v1267
      %1379 = vmatpush1.bf16.msra.mxu0 %v1266
      %1380 = vmatprep.subr.bf16.mxu0 %v1269
      %1381 = vmatpush1.bf16.msra.mxu0 %v1268
      %1382 = vmatprep.subr.bf16.mxu0 %v1271
      %1383 = vmatpush1.bf16.msra.mxu0 %v1270
      %1384 = vmatprep.subr.bf16.mxu0 0
      %1385 = vmatpush1.bf16.msra.mxu0 0
      %1386 = vmatprep.subr.bf16.mxu0 0
      %1387 = vmatpush1.bf16.msra.mxu0 0
      %1388 = vmatprep.subr.bf16.mxu0 0
      %1389 = vmatpush1.bf16.msra.mxu0 0
      %1390 = vmatprep.subr.bf16.mxu0 0
      %1391 = vmatpush1.bf16.msra.mxu0 0
      %1392 = vmatprep.subr.bf16.mxu0 0
      %1393 = vmatpush1.bf16.msra.mxu0 0
      %1394 = vmatprep.subr.bf16.mxu0 0
      %1395 = vmatpush1.bf16.msra.mxu0 0
      %1396 = vmatprep.subr.bf16.mxu0 0
      %1397 = vmatpush1.bf16.msra.mxu0 0
      %1398 = vmatprep.mubr.bf16.mxu0 %v1323
      %1399 = vmatmul.mubr.bf16.gmra.mrb[0].mxu0 %v1067
      %v1400 = vpop.f32.mrb[0].mxu0
      %v1401 = vadd.f32 %v1360, %v1400
      %v1402 = vpop.f32.mrb[0].mxu0
      %v1403 = vadd.f32 %v1362, %v1402
      %v1404 = vpop.f32.mrb[0].mxu0
      %v1405 = vpop.f32.mrb[0].mxu0
      %1406 = vdwg.mxu0
      %v1407 = vadd.f32 %v996, %v1401
      %v1408 = vadd.f32 %v998, %v1403
      %v1409 = vld [vmem:[%s2] sm:$0x3]
      %v1411 = vlaneseq
      %v1412 = vshrl.u32 %v1411, 7
      %v1413 = vsub.s32 0, %v1412
      %v1414 = vrot.slane %v1409, %v1413
      %v1415 = vlaneseq
      %v1416 = vshrl.u32 %v1415, 7
      %v1417 = vsub.s32 1, %v1416
      %v1418 = vrot.slane %v1409, %v1417
      %v1421 = vadd.f32 %v1407, %v1414
      %v1422 = vadd.f32 %v1408, %v1418
      %v1423 = vmax.f32 %v1421, 0.0
      %v1424 = vmax.f32 %v1422, 0.0
      %v1425 = vpack.c.bf16 %v1423, %v1423
      %v1426 = vpack.c.bf16 %v1424, %v1424
      %v1429 = vunpack.c.l.b16 %v1425
      %v1430 = vunpack.c.l.b16 %v1426
      %v1431 = vpack.c.b16 %v1430, %v1429
      %1433 = vst [vmem:[%s170] sm:$0xff] %v1431
      %p1434 = scmp.lt.s32.totalorder %s14, 1
      %s1435 = scalar_select %p1434, %s14, 1
      %s1436 = smul.addr %s1435, 2
      %s1437 = smul.addr %s1436, 4
      %s1438 = scalar_lea.vmem %s3, %s1437
      // Predicated region
      $region33: #{ublock_forward.7} parent=31 // pred_check
        %p1439 = pneg %p100
      $region34: #{ublock_forward.7} parent=31 // pred_check_branch
        %1441 = sbr.rel (%p1439) target = $region36
      $region35: #{ublock_forward.7} parent=31 // pred_region
        _
      $region36: #{ublock_forward.7} parent=31 // pred_fallthru
        _
    $region32: #{ublock_forward.7} parent=5 // pred_fallthru
      _
    %p1442 = scmp.le.s32.totalorder 2, %s9
    // Predicated region
    $region37: #{ublock_forward.7} parent=5 // pred_check
      %p1443 = pneg %p1442
    $region38: #{ublock_forward.7} parent=5 // pred_check_branch
      %1445 = sbr.rel (%p1443) target = $region40
    $region39: #{ublock_forward.7} parent=5 // pred_region
      %s1446 = ssub.s32 %s9, 2
      // Predicated region
      $region41: #{ublock_forward.7} parent=39 // pred_check
        %p1447 = pneg %p106
      $region42: #{ublock_forward.7} parent=39 // pred_check_branch
        %1449 = sbr.rel (%p1447) target = $region44
      $region43: #{ublock_forward.7} parent=39 // pred_region
        %p1450 = scmp.lt.s32.totalorder %s15, 1
        %s1451 = scalar_select %p1450, %s15, 1
        %s1452 = smul.addr %s1451, 2
        %s1453 = smul.addr %s1452, 4
        %s1454 = scalar_lea.vmem %s3, %s1453
      $region44: #{ublock_forward.7} parent=39 // pred_fallthru
        _
    $region40: #{ublock_forward.7} parent=5 // pred_fallthru
      _
  $region6: #{ublock_forward.7} parent=0 // loop_footer
    %s13 = sadd.s32 1, %s9
  $region7: #{ublock_forward.7} parent=0 // loop_footer_branch
    %8 = sbr.rel target = $region3
  $region8: #{ublock_forward.7} parent=0 // loop_exit
    _

// kernel: ublock_forward.8
$region0: #{ublock_forward.8}
  #allocation0 [shape = 'u32[]', space=smem, size = 0x4, offset = 0x4, fixed_abs, tag = 'smem constant byte address 0x4 - core index']
  #allocation1 [shape = 'u32[144,128]{1,0:T(1,128)}', space=vmem, size = 0x12000, scoped, tag = 'internal scratch']
  %s0 = inlined_call_operand.vmem [shape: bf16[2,10,400], index: 0, kind: input, shape index: {}]
  %s1 = inlined_call_operand.vmem [shape: bf16[3,400,256], index: 1, kind: input, shape index: {}]
  %s2 = inlined_call_operand.vmem [shape: f32[1,256], index: 2, kind: input, shape index: {}]
  %s3 = inlined_call_operand.vmem [shape: bf16[2,8,256], index: 3, kind: input, shape index: {}]
  %s4 = inlined_call_operand.vmem [shape: bf16[2,8,256], index: 4, kind: output, shape index: {}]
  %s5 = sld [smem:[#allocation0]]
  $region49: #{ublock_forward.8} parent=0
    _
  %s7 = ssub.s32 1, %s5
  %s8 = scalar_select 0, %s7, %s5
  loop: start=0, step=1, limit=4
  $region2: #{ublock_forward.8} parent=0 // loop_pre_header
    _
  $region3: #{ublock_forward.8} parent=0 // loop_header
    %s10 = sphi 0, %s14
    %p11 = scmp.ge.s32.totalorder %s10, 4
    %s20 = sphi 0, %s22
    %s23 = sphi 0, %s20
    %s24 = sphi 0, %s23
    %s40 = sphi 0, %s24
    %s44 = sphi 0, %s44
    %s46 = sphi 0, %s44
    %s47 = sphi 0, %s46
    %s61 = sphi 0, %s47
    %s65 = sphi 0, %s65
    %s67 = sphi 0, %s65
    %s68 = sphi 0, %s67
    %s82 = sphi 0, %s68
    %s88 = sphi 0, %s90
    %s91 = sphi 0, %s88
    %s92 = sphi 0, %s91
    %s108 = sphi 0, %s92
    %s114 = sphi 0, %s116
    %s117 = sphi 0, %s114
    %s118 = sphi 0, %s117
    %s134 = sphi 0, %s118
  $region4: #{ublock_forward.8} parent=0 // loop_header_branch
    %13 = sbr.rel (%p11) target = $region8
  $region5: #{ublock_forward.8} parent=0 // loop_body
    %s15 = ssub.s32 %s10, 1
    %s16 = ssub.s32 %s10, 2
    %s17 = sadd.s32 %s10, 1
    %s18 = ssub.s32 %s10, %s17
    %p19 = scmp.eq.s32.totalorder %s18, 0
    %s21 = sadd.s32 %s20, 1
    %s22 = scalar_select %p19, %s20, %s21
    %p25 = pneg %p19
    %p26 = scmp.eq.s32.totalorder %s10, 1
    %p27 = por %p25, %p26
    %p28 = scmp.ne.s32.totalorder %s20, %s23
    %p29 = scmp.eq.s32.totalorder %s10, 0
    %p30 = por %p28, %p29
    %p31 = scmp.ne.s32.totalorder %s20, %s23
    %p32 = scmp.eq.s32.totalorder %s15, 1
    %p33 = por %p31, %p32
    %p34 = scmp.ne.s32.totalorder %s23, %s24
    %p35 = scmp.eq.s32.totalorder %s15, 0
    %p36 = por %p34, %p35
    %p37 = scmp.ne.s32.totalorder %s23, %s24
    %p38 = scmp.eq.s32.totalorder %s16, 1
    %p39 = por %p37, %p38
    %p41 = scmp.ne.s32.totalorder %s24, %s40
    %p42 = scmp.eq.s32.totalorder %s16, 0
    %p43 = por %p41, %p42
    %s45 = sadd.s32 %s44, 1
    %p48 = scmp.eq.s32.totalorder %s10, 1
    %p49 = scmp.ne.s32.totalorder %s44, %s46
    %p50 = scmp.eq.s32.totalorder %s10, 0
    %p51 = por %p49, %p50
    %p52 = scmp.ne.s32.totalorder %s44, %s46
    %p53 = scmp.eq.s32.totalorder %s15, 1
    %p54 = por %p52, %p53
    %p55 = scmp.ne.s32.totalorder %s46, %s47
    %p56 = scmp.eq.s32.totalorder %s15, 0
    %p57 = por %p55, %p56
    %p58 = scmp.ne.s32.totalorder %s46, %s47
    %p59 = scmp.eq.s32.totalorder %s16, 1
    %p60 = por %p58, %p59
    %p62 = scmp.ne.s32.totalorder %s47, %s61
    %p63 = scmp.eq.s32.totalorder %s16, 0
    %p64 = por %p62, %p63
    %s66 = sadd.s32 %s65, 1
    %p69 = scmp.eq.s32.totalorder %s10, 1
    %p70 = scmp.ne.s32.totalorder %s65, %s67
    %p71 = scmp.eq.s32.totalorder %s10, 0
    %p72 = por %p70, %p71
    %p73 = scmp.ne.s32.totalorder %s65, %s67
    %p74 = scmp.eq.s32.totalorder %s15, 1
    %p75 = por %p73, %p74
    %p76 = scmp.ne.s32.totalorder %s67, %s68
    %p77 = scmp.eq.s32.totalorder %s15, 0
    %p78 = por %p76, %p77
    %p79 = scmp.ne.s32.totalorder %s67, %s68
    %p80 = scmp.eq.s32.totalorder %s16, 1
    %p81 = por %p79, %p80
    %p83 = scmp.ne.s32.totalorder %s68, %s82
    %p84 = scmp.eq.s32.totalorder %s16, 0
    %p85 = por %p83, %p84
    %s86 = ssub.s32 %s10, %s17
    %p87 = scmp.eq.s32.totalorder %s86, 0
    %s89 = sadd.s32 %s88, 1
    %s90 = scalar_select %p87, %s88, %s89
    %p93 = pneg %p87
    %p94 = scmp.eq.s32.totalorder %s10, 1
    %p95 = por %p93, %p94
    %p96 = scmp.ne.s32.totalorder %s88, %s91
    %p97 = scmp.eq.s32.totalorder %s10, 0
    %p98 = por %p96, %p97
    %p99 = scmp.ne.s32.totalorder %s88, %s91
    %p100 = scmp.eq.s32.totalorder %s15, 1
    %p101 = por %p99, %p100
    %p102 = scmp.ne.s32.totalorder %s91, %s92
    %p103 = scmp.eq.s32.totalorder %s15, 0
    %p104 = por %p102, %p103
    %p105 = scmp.ne.s32.totalorder %s91, %s92
    %p106 = scmp.eq.s32.totalorder %s16, 1
    %p107 = por %p105, %p106
    %p109 = scmp.ne.s32.totalorder %s92, %s108
    %p110 = scmp.eq.s32.totalorder %s16, 0
    %p111 = por %p109, %p110
    %s112 = ssub.s32 %s10, %s17
    %p113 = scmp.eq.s32.totalorder %s112, 0
    %s115 = sadd.s32 %s114, 1
    %s116 = scalar_select %p113, %s114, %s115
    %p119 = pneg %p113
    %p120 = scmp.eq.s32.totalorder %s10, 1
    %p121 = por %p119, %p120
    %p122 = scmp.ne.s32.totalorder %s114, %s117
    %p123 = scmp.eq.s32.totalorder %s10, 0
    %p124 = por %p122, %p123
    %p125 = scmp.ne.s32.totalorder %s114, %s117
    %p126 = scmp.eq.s32.totalorder %s15, 1
    %p127 = por %p125, %p126
    %p128 = scmp.ne.s32.totalorder %s117, %s118
    %p129 = scmp.eq.s32.totalorder %s15, 0
    %p130 = por %p128, %p129
    %p131 = scmp.ne.s32.totalorder %s117, %s118
    %p132 = scmp.eq.s32.totalorder %s16, 1
    %p133 = por %p131, %p132
    %p135 = scmp.ne.s32.totalorder %s118, %s134
    %p136 = scmp.eq.s32.totalorder %s16, 0
    %p137 = por %p135, %p136
    %p138 = scmp.le.s32.totalorder 1, %s10
    %p139 = scmp.lt.s32.totalorder %s10, 3
    %p140 = pnand %p138, %p139
    %p141 = pneg %p140
    // Predicated region
    $region9: #{ublock_forward.8} parent=5 // pred_check
      _
    $region10: #{ublock_forward.8} parent=5 // pred_check_branch
      %143 = sbr.rel (%p140) target = $region12
    $region11: #{ublock_forward.8} parent=5 // pred_region
      %s144 = ssub.s32 %s10, 1
      // Predicated region
      $region13: #{ublock_forward.8} parent=11 // pred_check
        %p145 = pneg %p57
      $region14: #{ublock_forward.8} parent=11 // pred_check_branch
        %147 = sbr.rel (%p145) target = $region16
      $region15: #{ublock_forward.8} parent=11 // pred_region
        _
      $region16: #{ublock_forward.8} parent=11 // pred_fallthru
        _
      // Predicated region
      $region17: #{ublock_forward.8} parent=11 // pred_check
        %p148 = pneg %p78
      $region18: #{ublock_forward.8} parent=11 // pred_check_branch
        %150 = sbr.rel (%p148) target = $region20
      $region19: #{ublock_forward.8} parent=11 // pred_region
        _
      $region20: #{ublock_forward.8} parent=11 // pred_fallthru
        _
    $region12: #{ublock_forward.8} parent=5 // pred_fallthru
      _
    %p151 = scmp.lt.s32.totalorder %s10, 2
    // Predicated region
    $region21: #{ublock_forward.8} parent=5 // pred_check
      %p152 = pneg %p151
    $region22: #{ublock_forward.8} parent=5 // pred_check_branch
      %154 = sbr.rel (%p152) target = $region24
    $region23: #{ublock_forward.8} parent=5 // pred_region
      // Predicated region
      $region25: #{ublock_forward.8} parent=23 // pred_check
        %p155 = pneg %p30
      $region26: #{ublock_forward.8} parent=23 // pred_check_branch
        %157 = sbr.rel (%p155) target = $region28
      $region27: #{ublock_forward.8} parent=23 // pred_region
        %p158 = scmp.lt.s32.totalorder %s10, 1
        %s159 = scalar_select %p158, %s10, 1
        %s160 = smul.addr %s159, 8
        %s161 = smul.addr %s160, 4
        %s162 = scalar_lea.vmem %s0, %s161
      $region28: #{ublock_forward.8} parent=23 // pred_fallthru
        _
      // Predicated region
      $region29: #{ublock_forward.8} parent=23 // pred_check
        %p163 = pneg %p98
      $region30: #{ublock_forward.8} parent=23 // pred_check_branch
        %165 = sbr.rel (%p163) target = $region32
      $region31: #{ublock_forward.8} parent=23 // pred_region
        %p166 = scmp.lt.s32.totalorder %s10, 1
        %s167 = scalar_select %p166, %s10, 1
        %s168 = smul.addr %s167, 2
        %s169 = smul.addr %s168, 4
        %s170 = scalar_lea.vmem %s3, %s169
      $region32: #{ublock_forward.8} parent=23 // pred_fallthru
        _
    $region24: #{ublock_forward.8} parent=5 // pred_fallthru
      _
    %p171 = scmp.le.s32.totalorder 1, %s10
    %p172 = scmp.lt.s32.totalorder %s10, 3
    %p173 = pnand %p171, %p172
    %p174 = pneg %p173
    // Predicated region
    $region33: #{ublock_forward.8} parent=5 // pred_check
      _
    $region34: #{ublock_forward.8} parent=5 // pred_check_branch
      %176 = sbr.rel (%p173) target = $region36
    $region35: #{ublock_forward.8} parent=5 // pred_region
      %s177 = ssub.s32 %s10, 1
      %p178 = scmp.lt.s32.totalorder %s15, 1
      %s179 = scalar_select %p178, %s15, 1
      %s180 = smul.addr %s179, 8
      %s181 = smul.addr %s180, 4
      %s182 = scalar_lea.vmem %s0, %s181
      %p183 = pneg %p36
      %p184 = pneg %p33
      %p185 = pneg %p57
      %p186 = pneg %p54
      %p187 = pneg %p78
      %p188 = pneg %p75
      %p189 = scmp.lt.s32.totalorder %s15, 1
      %s190 = scalar_select %p189, %s15, 1
      %s191 = smul.addr %s190, 2
      %s192 = smul.addr %s191, 4
      %s193 = scalar_lea.vmem %s3, %s192
      %p194 = pneg %p104
      %p195 = pneg %p101
      %p196 = pneg %p130
      %p197 = pneg %p127
      %p198 = scmp.lt.s32.totalorder %s15, 1
      %s199 = scalar_select %p198, %s15, 1
      %s200 = smul.addr %s199, 2
      %s201 = smul.addr %s200, 4
      %s202 = scalar_lea.vmem %s4, %s201
      %p203 = scmp.lt.s32.totalorder %s15, 1
      %s204 = scalar_select %p203, %s15, 1
      %s205 = smul.addr %s204, 8
      %s206 = smul.addr %s205, 4
      %s207 = scalar_lea.vmem %s0, %s206
      %p208 = scmp.lt.s32.totalorder %s15, 1
      %s209 = scalar_select %p208, %s15, 1
      %s210 = smul.addr %s209, 2
      %s211 = smul.addr %s210, 4
      %s212 = scalar_lea.vmem %s3, %s211
      %p213 = scmp.lt.s32.totalorder %s15, 1
      %s214 = scalar_select %p213, %s15, 1
      %s215 = smul.addr %s214, 2
      %s216 = smul.addr %s215, 4
      %s217 = scalar_lea.vmem %s4, %s216
      %v219 = vld [vmem:[%s207] sm:$0xff]
      %v220 = vld [vmem:[%s207 + $0x8] sm:$0xff]
      %v221 = vld [vmem:[%s1] sm:$0xff]
      %v222 = vld [vmem:[%s1 + $0x8] sm:$0xff]
      %v223 = vld [vmem:[%s1 + $0x10] sm:$0xff]
      %v224 = vld [vmem:[%s1 + $0x18] sm:$0xff]
      %v225 = vld [vmem:[%s1 + $0x20] sm:$0xff]
      %v226 = vld [vmem:[%s1 + $0x28] sm:$0xff]
      %v227 = vld [vmem:[%s1 + $0x30] sm:$0xff]
      %v228 = vld [vmem:[%s1 + $0x38] sm:$0xff]
      %v229 = vld [vmem:[%s1 + $0x40] sm:$0xff]
      %v230 = vld [vmem:[%s1 + $0x48] sm:$0xff]
      %v231 = vld [vmem:[%s1 + $0x50] sm:$0xff]
      %v232 = vld [vmem:[%s1 + $0x58] sm:$0xff]
      %v233 = vld [vmem:[%s1 + $0x60] sm:$0xff]
      %v234 = vld [vmem:[%s1 + $0x68] sm:$0xff]
      %v235 = vld [vmem:[%s1 + $0x70] sm:$0xff]
      %v236 = vld [vmem:[%s1 + $0x78] sm:$0xff]
      %v237 = vld [vmem:[%s1 + $0x80] sm:$0xff]
      %v238 = vld [vmem:[%s1 + $0x88] sm:$0xff]
      %v239 = vld [vmem:[%s1 + $0x90] sm:$0xff]
      %v240 = vld [vmem:[%s1 + $0x98] sm:$0xff]
      %v241 = vld [vmem:[%s1 + $0xa0] sm:$0xff]
      %v242 = vld [vmem:[%s1 + $0xa8] sm:$0xff]
      %v243 = vld [vmem:[%s1 + $0xb0] sm:$0xff]
      %v244 = vld [vmem:[%s1 + $0xb8] sm:$0xff]
      %v245 = vld [vmem:[%s1 + $0xc0] sm:$0xff]
      %v246 = vld [vmem:[%s1 + $0xc8] sm:$0xff]
      %v247 = vld [vmem:[%s1 + $0xd0] sm:$0xff]
      %v248 = vld [vmem:[%s1 + $0xd8] sm:$0xff]
      %v249 = vld [vmem:[%s1 + $0xe0] sm:$0xff]
      %v250 = vld [vmem:[%s1 + $0xe8] sm:$0xff]
      %v251 = vld [vmem:[%s1 + $0xf0] sm:$0xff]
      %v252 = vld [vmem:[%s1 + $0xf8] sm:$0xff]
      %v253 = vld [vmem:[%s1 + $0x100] sm:$0xff]
      %v254 = vld [vmem:[%s1 + $0x108] sm:$0xff]
      %v255 = vld [vmem:[%s1 + $0x110] sm:$0xff]
      %v256 = vld [vmem:[%s1 + $0x118] sm:$0xff]
      %v257 = vld [vmem:[%s1 + $0x120] sm:$0xff]
      %v258 = vld [vmem:[%s1 + $0x128] sm:$0xff]
      %v259 = vld [vmem:[%s1 + $0x130] sm:$0xff]
      %v260 = vld [vmem:[%s1 + $0x138] sm:$0xff]
      %v261 = vld [vmem:[%s1 + $0x140] sm:$0xff]
      %v262 = vld [vmem:[%s1 + $0x148] sm:$0xff]
      %v263 = vld [vmem:[%s1 + $0x150] sm:$0xff]
      %v264 = vld [vmem:[%s1 + $0x158] sm:$0xff]
      %v265 = vld [vmem:[%s1 + $0x160] sm:$0xff]
      %v266 = vld [vmem:[%s1 + $0x168] sm:$0xff]
      %v267 = vld [vmem:[%s1 + $0x170] sm:$0xff]
      %v268 = vld [vmem:[%s1 + $0x178] sm:$0xff]
      %v269 = vld [vmem:[%s1 + $0x180] sm:$0xff]
      %v270 = vld [vmem:[%s1 + $0x188] sm:$0xff]
      %v271 = vld [vmem:[%s207 + $0x10] sm:$0x11]
      %v272 = vld [vmem:[%s207 + $0x18] sm:$0x11]
      %s273 = scalar_lea.vmem %s1, 400
      %v274 = vld [vmem:[%s273] sm:$0xff]
      %v275 = vld [vmem:[%s273 + $0x8] sm:$0xff]
      %v276 = vld [vmem:[%s273 + $0x10] sm:$0xff]
      %v277 = vld [vmem:[%s273 + $0x18] sm:$0xff]
      %v278 = vld [vmem:[%s273 + $0x20] sm:$0xff]
      %v279 = vld [vmem:[%s273 + $0x28] sm:$0xff]
      %v280 = vld [vmem:[%s273 + $0x30] sm:$0xff]
      %v281 = vld [vmem:[%s273 + $0x38] sm:$0xff]
      %v282 = vld [vmem:[%s273 + $0x40] sm:$0xff]
      %v283 = vld [vmem:[%s273 + $0x48] sm:$0xff]
      %v284 = vld [vmem:[%s273 + $0x50] sm:$0xff]
      %v285 = vld [vmem:[%s273 + $0x58] sm:$0xff]
      %v286 = vld [vmem:[%s273 + $0x60] sm:$0xff]
      %v287 = vld [vmem:[%s273 + $0x68] sm:$0xff]
      %v288 = vld [vmem:[%s273 + $0x70] sm:$0xff]
      %v289 = vld [vmem:[%s273 + $0x78] sm:$0xff]
      %v290 = vld [vmem:[%s273 + $0x80] sm:$0xff]
      %v291 = vld [vmem:[%s273 + $0x88] sm:$0xff]
      %v292 = vld [vmem:[%s273 + $0x90] sm:$0xff]
      %v293 = vld [vmem:[%s273 + $0x98] sm:$0xff]
      %v294 = vld [vmem:[%s273 + $0xa0] sm:$0xff]
      %v295 = vld [vmem:[%s273 + $0xa8] sm:$0xff]
      %v296 = vld [vmem:[%s273 + $0xb0] sm:$0xff]
      %v297 = vld [vmem:[%s273 + $0xb8] sm:$0xff]
      %v298 = vld [vmem:[%s273 + $0xc0] sm:$0xff]
      %v299 = vld [vmem:[%s273 + $0xc8] sm:$0xff]
      %v300 = vld [vmem:[%s273 + $0xd0] sm:$0xff]
      %v301 = vld [vmem:[%s273 + $0xd8] sm:$0xff]
      %v302 = vld [vmem:[%s273 + $0xe0] sm:$0xff]
      %v303 = vld [vmem:[%s273 + $0xe8] sm:$0xff]
      %v304 = vld [vmem:[%s273 + $0xf0] sm:$0xff]
      %v305 = vld [vmem:[%s273 + $0xf8] sm:$0xff]
      %v306 = vld [vmem:[%s273 + $0x100] sm:$0xff]
      %v307 = vld [vmem:[%s273 + $0x108] sm:$0xff]
      %v308 = vld [vmem:[%s273 + $0x110] sm:$0xff]
      %v309 = vld [vmem:[%s273 + $0x118] sm:$0xff]
      %v310 = vld [vmem:[%s273 + $0x120] sm:$0xff]
      %v311 = vld [vmem:[%s273 + $0x128] sm:$0xff]
      %v312 = vld [vmem:[%s273 + $0x130] sm:$0xff]
      %v313 = vld [vmem:[%s273 + $0x138] sm:$0xff]
      %v314 = vld [vmem:[%s273 + $0x140] sm:$0xff]
      %v315 = vld [vmem:[%s273 + $0x148] sm:$0xff]
      %v316 = vld [vmem:[%s273 + $0x150] sm:$0xff]
      %v317 = vld [vmem:[%s273 + $0x158] sm:$0xff]
      %v318 = vld [vmem:[%s273 + $0x160] sm:$0xff]
      %v319 = vld [vmem:[%s273 + $0x168] sm:$0xff]
      %v320 = vld [vmem:[%s273 + $0x170] sm:$0xff]
      %v321 = vld [vmem:[%s273 + $0x178] sm:$0xff]
      %v322 = vld [vmem:[%s273 + $0x180] sm:$0xff]
      %v323 = vld [vmem:[%s273 + $0x188] sm:$0xff]
      %v328 = vunpack.c.l.b16 %v219
      %v329 = vunpack.c.h.b16 %v219
      %v330 = vunpack.c.l.b16 %v220
      %v331 = vunpack.c.h.b16 %v220
      %v332 = vunpack.c.l.b16 %v271
      %v333 = vunpack.c.h.b16 %v271
      %v334 = vunpack.c.l.b16 %v272
      %v335 = vunpack.c.h.b16 %v272
      %v336 = vpack.c.b16 %v332, %v328
      %v337 = vpack.c.b16 %v333, %v329
      %v338 = vpack.c.b16 %v334, %v330
      %v339 = vpack.c.b16 %v335, %v331
      %v341 = vshrl.u32 %v336, 16
      %v343 = vshll.u32 %v336, 16
      %v345 = vrot.slane %v343, 1
      %v346 = vor.u32 %v341, %v345
      %v348 = vshrl.u32 %v337, 16
      %v350 = vshll.u32 %v337, 16
      %v352 = vrot.slane %v350, 1
      %v353 = vor.u32 %v348, %v352
      %v355 = vshrl.u32 %v338, 16
      %v357 = vshll.u32 %v338, 16
      %v359 = vrot.slane %v357, 1
      %v360 = vor.u32 %v355, %v359
      %v362 = vshrl.u32 %v339, 16
      %v364 = vshll.u32 %v339, 16
      %v366 = vrot.slane %v364, 1
      %v367 = vor.u32 %v362, %v366
      %v421 = vunpack.c.l.b16 %v274
      %v422 = vunpack.c.h.b16 %v274
      %v423 = vunpack.c.l.b16 %v275
      %v424 = vunpack.c.h.b16 %v275
      %v425 = vunpack.c.l.b16 %v276
      %v426 = vunpack.c.h.b16 %v276
      %v427 = vunpack.c.l.b16 %v277
      %v428 = vunpack.c.h.b16 %v277
      %v429 = vunpack.c.l.b16 %v278
      %v430 = vunpack.c.h.b16 %v278
      %v431 = vunpack.c.l.b16 %v279
      %v432 = vunpack.c.h.b16 %v279
      %v433 = vunpack.c.l.b16 %v280
      %v434 = vunpack.c.h.b16 %v280
      %v435 = vunpack.c.l.b16 %v281
      %v436 = vunpack.c.h.b16 %v281
      %v437 = vunpack.c.l.b16 %v282
      %v438 = vunpack.c.h.b16 %v282
      %v439 = vunpack.c.l.b16 %v283
      %v440 = vunpack.c.h.b16 %v283
      %v441 = vunpack.c.l.b16 %v284
      %v442 = vunpack.c.h.b16 %v284
      %v443 = vunpack.c.l.b16 %v285
      %v444 = vunpack.c.h.b16 %v285
      %v445 = vunpack.c.l.b16 %v286
      %v446 = vunpack.c.h.b16 %v286
      %v447 = vunpack.c.l.b16 %v287
      %v448 = vunpack.c.h.b16 %v287
      %v449 = vunpack.c.l.b16 %v288
      %v450 = vunpack.c.h.b16 %v288
      %v451 = vunpack.c.l.b16 %v289
      %v452 = vunpack.c.h.b16 %v289
      %v453 = vunpack.c.l.b16 %v290
      %v454 = vunpack.c.h.b16 %v290
      %v455 = vunpack.c.l.b16 %v291
      %v456 = vunpack.c.h.b16 %v291
      %v457 = vunpack.c.l.b16 %v292
      %v458 = vunpack.c.h.b16 %v292
      %v459 = vunpack.c.l.b16 %v293
      %v460 = vunpack.c.h.b16 %v293
      %v461 = vunpack.c.l.b16 %v294
      %v462 = vunpack.c.h.b16 %v294
      %v463 = vunpack.c.l.b16 %v295
      %v464 = vunpack.c.h.b16 %v295
      %v465 = vunpack.c.l.b16 %v296
      %v466 = vunpack.c.h.b16 %v296
      %v467 = vunpack.c.l.b16 %v297
      %v468 = vunpack.c.h.b16 %v297
      %v469 = vunpack.c.l.b16 %v298
      %v470 = vunpack.c.h.b16 %v298
      %v471 = vunpack.c.l.b16 %v299
      %v472 = vunpack.c.h.b16 %v299
      %v473 = vunpack.c.l.b16 %v300
      %v474 = vunpack.c.h.b16 %v300
      %v475 = vunpack.c.l.b16 %v301
      %v476 = vunpack.c.h.b16 %v301
      %v477 = vunpack.c.l.b16 %v302
      %v478 = vunpack.c.h.b16 %v302
      %v479 = vunpack.c.l.b16 %v303
      %v480 = vunpack.c.h.b16 %v303
      %v481 = vunpack.c.l.b16 %v304
      %v482 = vunpack.c.h.b16 %v304
      %v483 = vunpack.c.l.b16 %v305
      %v484 = vunpack.c.h.b16 %v305
      %v485 = vunpack.c.l.b16 %v306
      %v486 = vunpack.c.h.b16 %v306
      %v487 = vunpack.c.l.b16 %v307
      %v488 = vunpack.c.h.b16 %v307
      %v489 = vunpack.c.l.b16 %v308
      %v490 = vunpack.c.h.b16 %v308
      %v491 = vunpack.c.l.b16 %v309
      %v492 = vunpack.c.h.b16 %v309
      %v493 = vunpack.c.l.b16 %v310
      %v494 = vunpack.c.h.b16 %v310
      %v495 = vunpack.c.l.b16 %v311
      %v496 = vunpack.c.h.b16 %v311
      %v497 = vunpack.c.l.b16 %v312
      %v498 = vunpack.c.h.b16 %v312
      %v499 = vunpack.c.l.b16 %v313
      %v500 = vunpack.c.h.b16 %v313
      %v501 = vunpack.c.l.b16 %v314
      %v502 = vunpack.c.h.b16 %v314
      %v503 = vunpack.c.l.b16 %v315
      %v504 = vunpack.c.h.b16 %v315
      %v505 = vunpack.c.l.b16 %v316
      %v506 = vunpack.c.h.b16 %v316
      %v507 = vunpack.c.l.b16 %v317
      %v508 = vunpack.c.h.b16 %v317
      %v509 = vunpack.c.l.b16 %v318
      %v510 = vunpack.c.h.b16 %v318
      %v511 = vunpack.c.l.b16 %v319
      %v512 = vunpack.c.h.b16 %v319
      %v513 = vunpack.c.l.b16 %v320
      %v514 = vunpack.c.h.b16 %v320
      %v515 = vunpack.c.l.b16 %v321
      %v516 = vunpack.c.h.b16 %v321
      %v517 = vunpack.c.l.b16 %v322
      %v518 = vunpack.c.h.b16 %v322
      %v519 = vunpack.c.l.b16 %v323
      %v520 = vunpack.c.h.b16 %v323
      %v521 = vpack.c.b16 %v423, %v421
      %v522 = vpack.c.b16 %v424, %v422
      %v523 = vpack.c.b16 %v427, %v425
      %v524 = vpack.c.b16 %v428, %v426
      %v525 = vpack.c.b16 %v431, %v429
      %v526 = vpack.c.b16 %v432, %v430
      %v527 = vpack.c.b16 %v435, %v433
      %v528 = vpack.c.b16 %v436, %v434
      %v529 = vpack.c.b16 %v439, %v437
      %v530 = vpack.c.b16 %v440, %v438
      %v531 = vpack.c.b16 %v443, %v441
      %v532 = vpack.c.b16 %v444, %v442
      %v533 = vpack.c.b16 %v447, %v445
      %v534 = vpack.c.b16 %v448, %v446
      %v535 = vpack.c.b16 %v451, %v449
      %v536 = vpack.c.b16 %v452, %v450
      %v537 = vpack.c.b16 %v455, %v453
      %v538 = vpack.c.b16 %v456, %v454
      %v539 = vpack.c.b16 %v459, %v457
      %v540 = vpack.c.b16 %v460, %v458
      %v541 = vpack.c.b16 %v463, %v461
      %v542 = vpack.c.b16 %v464, %v462
      %v543 = vpack.c.b16 %v467, %v465
      %v544 = vpack.c.b16 %v468, %v466
      %v545 = vpack.c.b16 %v471, %v469
      %v546 = vpack.c.b16 %v472, %v470
      %v547 = vpack.c.b16 %v475, %v473
      %v548 = vpack.c.b16 %v476, %v474
      %v549 = vpack.c.b16 %v479, %v477
      %v550 = vpack.c.b16 %v480, %v478
      %v551 = vpack.c.b16 %v483, %v481
      %v552 = vpack.c.b16 %v484, %v482
      %v553 = vpack.c.b16 %v487, %v485
      %v554 = vpack.c.b16 %v488, %v486
      %v555 = vpack.c.b16 %v491, %v489
      %v556 = vpack.c.b16 %v492, %v490
      %v557 = vpack.c.b16 %v495, %v493
      %v558 = vpack.c.b16 %v496, %v494
      %v559 = vpack.c.b16 %v499, %v497
      %v560 = vpack.c.b16 %v500, %v498
      %v561 = vpack.c.b16 %v503, %v501
      %v562 = vpack.c.b16 %v504, %v502
      %v563 = vpack.c.b16 %v507, %v505
      %v564 = vpack.c.b16 %v508, %v506
      %v565 = vpack.c.b16 %v511, %v509
      %v566 = vpack.c.b16 %v512, %v510
      %v567 = vpack.c.b16 %v515, %v513
      %v568 = vpack.c.b16 %v516, %v514
      %v569 = vpack.c.b16 %v519, %v517
      %v570 = vpack.c.b16 %v520, %v518
      %vm621 = vcmask 130048
      %v623 = vsel %vm621, %v367, 0
      %625 = vmatprep.subr.bf16.mxu0 %v522
      %626 = vmatpush1.bf16.msra.mxu0 %v521
      %627 = vmatprep.subr.bf16.mxu0 %v524
      %628 = vmatpush1.bf16.msra.mxu0 %v523
      %629 = vmatprep.subr.bf16.mxu0 %v526
      %630 = vmatpush1.bf16.msra.mxu0 %v525
      %631 = vmatprep.subr.bf16.mxu0 %v528
      %632 = vmatpush1.bf16.msra.mxu0 %v527
      %633 = vmatprep.subr.bf16.mxu0 %v530
      %634 = vmatpush1.bf16.msra.mxu0 %v529
      %635 = vmatprep.subr.bf16.mxu0 %v532
      %636 = vmatpush1.bf16.msra.mxu0 %v531
      %637 = vmatprep.subr.bf16.mxu0 %v534
      %638 = vmatpush1.bf16.msra.mxu0 %v533
      %639 = vmatprep.subr.bf16.mxu0 %v536
      %640 = vmatpush1.bf16.msra.mxu0 %v535
      %641 = vmatprep.subr.bf16.mxu0 %v538
      %642 = vmatpush1.bf16.msra.mxu0 %v537
      %643 = vmatprep.subr.bf16.mxu0 %v540
      %644 = vmatpush1.bf16.msra.mxu0 %v539
      %645 = vmatprep.subr.bf16.mxu0 %v542
      %646 = vmatpush1.bf16.msra.mxu0 %v541
      %647 = vmatprep.subr.bf16.mxu0 %v544
      %648 = vmatpush1.bf16.msra.mxu0 %v543
      %649 = vmatprep.subr.bf16.mxu0 %v546
      %650 = vmatpush1.bf16.msra.mxu0 %v545
      %651 = vmatprep.subr.bf16.mxu0 %v548
      %652 = vmatpush1.bf16.msra.mxu0 %v547
      %653 = vmatprep.subr.bf16.mxu0 %v550
      %654 = vmatpush1.bf16.msra.mxu0 %v549
      %655 = vmatprep.subr.bf16.mxu0 %v552
      %656 = vmatpush1.bf16.msra.mxu0 %v551
      %657 = vmatprep.mubr.bf16.mxu0 %v353
      %658 = vmatmul.mubr.bf16.gmra.mrb[0].mxu0 %v346
      %v659 = vpop.f32.mrb[0].mxu0
      %v660 = vadd.f32 0.0, %v659
      %v661 = vpop.f32.mrb[0].mxu0
      %v662 = vadd.f32 0.0, %v661
      %v663 = vpop.f32.mrb[0].mxu0
      %v664 = vpop.f32.mrb[0].mxu0
      %665 = vdwg.mxu0
      %666 = vmatprep.subr.bf16.mxu0 %v554
      %667 = vmatpush1.bf16.msra.mxu0 %v553
      %668 = vmatprep.subr.bf16.mxu0 %v556
      %669 = vmatpush1.bf16.msra.mxu0 %v555
      %670 = vmatprep.subr.bf16.mxu0 %v558
      %671 = vmatpush1.bf16.msra.mxu0 %v557
      %672 = vmatprep.subr.bf16.mxu0 %v560
      %673 = vmatpush1.bf16.msra.mxu0 %v559
      %674 = vmatprep.subr.bf16.mxu0 %v562
      %675 = vmatpush1.bf16.msra.mxu0 %v561
      %676 = vmatprep.subr.bf16.mxu0 %v564
      %677 = vmatpush1.bf16.msra.mxu0 %v563
      %678 = vmatprep.subr.bf16.mxu0 %v566
      %679 = vmatpush1.bf16.msra.mxu0 %v565
      %680 = vmatprep.subr.bf16.mxu0 %v568
      %681 = vmatpush1.bf16.msra.mxu0 %v567
      %682 = vmatprep.subr.bf16.mxu0 %v570
      %683 = vmatpush1.bf16.msra.mxu0 %v569
      %684 = vmatprep.subr.bf16.mxu0 0
      %685 = vmatpush1.bf16.msra.mxu0 0
      %686 = vmatprep.subr.bf16.mxu0 0
      %687 = vmatpush1.bf16.msra.mxu0 0
      %688 = vmatprep.subr.bf16.mxu0 0
      %689 = vmatpush1.bf16.msra.mxu0 0
      %690 = vmatprep.subr.bf16.mxu0 0
      %691 = vmatpush1.bf16.msra.mxu0 0
      %692 = vmatprep.subr.bf16.mxu0 0
      %693 = vmatpush1.bf16.msra.mxu0 0
      %694 = vmatprep.subr.bf16.mxu0 0
      %695 = vmatpush1.bf16.msra.mxu0 0
      %696 = vmatprep.subr.bf16.mxu0 0
      %697 = vmatpush1.bf16.msra.mxu0 0
      %698 = vmatprep.mubr.bf16.mxu0 %v623
      %699 = vmatmul.mubr.bf16.gmra.mrb[0].mxu0 %v360
      %v700 = vpop.f32.mrb[0].mxu0
      %v701 = vadd.f32 %v660, %v700
      %v702 = vpop.f32.mrb[0].mxu0
      %v703 = vadd.f32 %v662, %v702
      %v704 = vpop.f32.mrb[0].mxu0
      %v705 = vpop.f32.mrb[0].mxu0
      %706 = vdwg.mxu0
      %v707 = vpack.c.b16 %v328, %v328
      %v708 = vpack.c.b16 %v329, %v329
      %v709 = vpack.c.b16 %v330, %v330
      %v710 = vpack.c.b16 %v331, %v331
      %v764 = vunpack.c.l.b16 %v221
      %v765 = vunpack.c.h.b16 %v221
      %v766 = vunpack.c.l.b16 %v222
      %v767 = vunpack.c.h.b16 %v222
      %v768 = vunpack.c.l.b16 %v223
      %v769 = vunpack.c.h.b16 %v223
      %v770 = vunpack.c.l.b16 %v224
      %v771 = vunpack.c.h.b16 %v224
      %v772 = vunpack.c.l.b16 %v225
      %v773 = vunpack.c.h.b16 %v225
      %v774 = vunpack.c.l.b16 %v226
      %v775 = vunpack.c.h.b16 %v226
      %v776 = vunpack.c.l.b16 %v227
      %v777 = vunpack.c.h.b16 %v227
      %v778 = vunpack.c.l.b16 %v228
      %v779 = vunpack.c.h.b16 %v228
      %v780 = vunpack.c.l.b16 %v229
      %v781 = vunpack.c.h.b16 %v229
      %v782 = vunpack.c.l.b16 %v230
      %v783 = vunpack.c.h.b16 %v230
      %v784 = vunpack.c.l.b16 %v231
      %v785 = vunpack.c.h.b16 %v231
      %v786 = vunpack.c.l.b16 %v232
      %v787 = vunpack.c.h.b16 %v232
      %v788 = vunpack.c.l.b16 %v233
      %v789 = vunpack.c.h.b16 %v233
      %v790 = vunpack.c.l.b16 %v234
      %v791 = vunpack.c.h.b16 %v234
      %v792 = vunpack.c.l.b16 %v235
      %v793 = vunpack.c.h.b16 %v235
      %v794 = vunpack.c.l.b16 %v236
      %v795 = vunpack.c.h.b16 %v236
      %v796 = vunpack.c.l.b16 %v237
      %v797 = vunpack.c.h.b16 %v237
      %v798 = vunpack.c.l.b16 %v238
      %v799 = vunpack.c.h.b16 %v238
      %v800 = vunpack.c.l.b16 %v239
      %v801 = vunpack.c.h.b16 %v239
      %v802 = vunpack.c.l.b16 %v240
      %v803 = vunpack.c.h.b16 %v240
      %v804 = vunpack.c.l.b16 %v241
      %v805 = vunpack.c.h.b16 %v241
      %v806 = vunpack.c.l.b16 %v242
      %v807 = vunpack.c.h.b16 %v242
      %v808 = vunpack.c.l.b16 %v243
      %v809 = vunpack.c.h.b16 %v243
      %v810 = vunpack.c.l.b16 %v244
      %v811 = vunpack.c.h.b16 %v244
      %v812 = vunpack.c.l.b16 %v245
      %v813 = vunpack.c.h.b16 %v245
      %v814 = vunpack.c.l.b16 %v246
      %v815 = vunpack.c.h.b16 %v246
      %v816 = vunpack.c.l.b16 %v247
      %v817 = vunpack.c.h.b16 %v247
      %v818 = vunpack.c.l.b16 %v248
      %v819 = vunpack.c.h.b16 %v248
      %v820 = vunpack.c.l.b16 %v249
      %v821 = vunpack.c.h.b16 %v249
      %v822 = vunpack.c.l.b16 %v250
      %v823 = vunpack.c.h.b16 %v250
      %v824 = vunpack.c.l.b16 %v251
      %v825 = vunpack.c.h.b16 %v251
      %v826 = vunpack.c.l.b16 %v252
      %v827 = vunpack.c.h.b16 %v252
      %v828 = vunpack.c.l.b16 %v253
      %v829 = vunpack.c.h.b16 %v253
      %v830 = vunpack.c.l.b16 %v254
      %v831 = vunpack.c.h.b16 %v254
      %v832 = vunpack.c.l.b16 %v255
      %v833 = vunpack.c.h.b16 %v255
      %v834 = vunpack.c.l.b16 %v256
      %v835 = vunpack.c.h.b16 %v256
      %v836 = vunpack.c.l.b16 %v257
      %v837 = vunpack.c.h.b16 %v257
      %v838 = vunpack.c.l.b16 %v258
      %v839 = vunpack.c.h.b16 %v258
      %v840 = vunpack.c.l.b16 %v259
      %v841 = vunpack.c.h.b16 %v259
      %v842 = vunpack.c.l.b16 %v260
      %v843 = vunpack.c.h.b16 %v260
      %v844 = vunpack.c.l.b16 %v261
      %v845 = vunpack.c.h.b16 %v261
      %v846 = vunpack.c.l.b16 %v262
      %v847 = vunpack.c.h.b16 %v262
      %v848 = vunpack.c.l.b16 %v263
      %v849 = vunpack.c.h.b16 %v263
      %v850 = vunpack.c.l.b16 %v264
      %v851 = vunpack.c.h.b16 %v264
      %v852 = vunpack.c.l.b16 %v265
      %v853 = vunpack.c.h.b16 %v265
      %v854 = vunpack.c.l.b16 %v266
      %v855 = vunpack.c.h.b16 %v266
      %v856 = vunpack.c.l.b16 %v267
      %v857 = vunpack.c.h.b16 %v267
      %v858 = vunpack.c.l.b16 %v268
      %v859 = vunpack.c.h.b16 %v268
      %v860 = vunpack.c.l.b16 %v269
      %v861 = vunpack.c.h.b16 %v269
      %v862 = vunpack.c.l.b16 %v270
      %v863 = vunpack.c.h.b16 %v270
      %v864 = vpack.c.b16 %v766, %v764
      %v865 = vpack.c.b16 %v767, %v765
      %v866 = vpack.c.b16 %v770, %v768
      %v867 = vpack.c.b16 %v771, %v769
      %v868 = vpack.c.b16 %v774, %v772
      %v869 = vpack.c.b16 %v775, %v773
      %v870 = vpack.c.b16 %v778, %v776
      %v871 = vpack.c.b16 %v779, %v777
      %v872 = vpack.c.b16 %v782, %v780
      %v873 = vpack.c.b16 %v783, %v781
      %v874 = vpack.c.b16 %v786, %v784
      %v875 = vpack.c.b16 %v787, %v785
      %v876 = vpack.c.b16 %v790, %v788
      %v877 = vpack.c.b16 %v791, %v789
      %v878 = vpack.c.b16 %v794, %v792
      %v879 = vpack.c.b16 %v795, %v793
      %v880 = vpack.c.b16 %v798, %v796
      %v881 = vpack.c.b16 %v799, %v797
      %v882 = vpack.c.b16 %v802, %v800
      %v883 = vpack.c.b16 %v803, %v801
      %v884 = vpack.c.b16 %v806, %v804
      %v885 = vpack.c.b16 %v807, %v805
      %v886 = vpack.c.b16 %v810, %v808
      %v887 = vpack.c.b16 %v811, %v809
      %v888 = vpack.c.b16 %v814, %v812
      %v889 = vpack.c.b16 %v815, %v813
      %v890 = vpack.c.b16 %v818, %v816
      %v891 = vpack.c.b16 %v819, %v817
      %v892 = vpack.c.b16 %v822, %v820
      %v893 = vpack.c.b16 %v823, %v821
      %v894 = vpack.c.b16 %v826, %v824
      %v895 = vpack.c.b16 %v827, %v825
      %v896 = vpack.c.b16 %v830, %v828
      %v897 = vpack.c.b16 %v831, %v829
      %v898 = vpack.c.b16 %v834, %v832
      %v899 = vpack.c.b16 %v835, %v833
      %v900 = vpack.c.b16 %v838, %v836
      %v901 = vpack.c.b16 %v839, %v837
      %v902 = vpack.c.b16 %v842, %v840
      %v903 = vpack.c.b16 %v843, %v841
      %v904 = vpack.c.b16 %v846, %v844
      %v905 = vpack.c.b16 %v847, %v845
      %v906 = vpack.c.b16 %v850, %v848
      %v907 = vpack.c.b16 %v851, %v849
      %v908 = vpack.c.b16 %v854, %v852
      %v909 = vpack.c.b16 %v855, %v853
      %v910 = vpack.c.b16 %v858, %v856
      %v911 = vpack.c.b16 %v859, %v857
      %v912 = vpack.c.b16 %v862, %v860
      %v913 = vpack.c.b16 %v863, %v861
      %v965 = vsel %vm621, %v710, 0
      %967 = vmatprep.subr.bf16.mxu0 %v865
      %968 = vmatpush1.bf16.msra.mxu0 %v864
      %969 = vmatprep.subr.bf16.mxu0 %v867
      %970 = vmatpush1.bf16.msra.mxu0 %v866
      %971 = vmatprep.subr.bf16.mxu0 %v869
      %972 = vmatpush1.bf16.msra.mxu0 %v868
      %973 = vmatprep.subr.bf16.mxu0 %v871
      %974 = vmatpush1.bf16.msra.mxu0 %v870
      %975 = vmatprep.subr.bf16.mxu0 %v873
      %976 = vmatpush1.bf16.msra.mxu0 %v872
      %977 = vmatprep.subr.bf16.mxu0 %v875
      %978 = vmatpush1.bf16.msra.mxu0 %v874
      %979 = vmatprep.subr.bf16.mxu0 %v877
      %980 = vmatpush1.bf16.msra.mxu0 %v876
      %981 = vmatprep.subr.bf16.mxu0 %v879
      %982 = vmatpush1.bf16.msra.mxu0 %v878
      %983 = vmatprep.subr.bf16.mxu0 %v881
      %984 = vmatpush1.bf16.msra.mxu0 %v880
      %985 = vmatprep.subr.bf16.mxu0 %v883
      %986 = vmatpush1.bf16.msra.mxu0 %v882
      %987 = vmatprep.subr.bf16.mxu0 %v885
      %988 = vmatpush1.bf16.msra.mxu0 %v884
      %989 = vmatprep.subr.bf16.mxu0 %v887
      %990 = vmatpush1.bf16.msra.mxu0 %v886
      %991 = vmatprep.subr.bf16.mxu0 %v889
      %992 = vmatpush1.bf16.msra.mxu0 %v888
      %993 = vmatprep.subr.bf16.mxu0 %v891
      %994 = vmatpush1.bf16.msra.mxu0 %v890
      %995 = vmatprep.subr.bf16.mxu0 %v893
      %996 = vmatpush1.bf16.msra.mxu0 %v892
      %997 = vmatprep.subr.bf16.mxu0 %v895
      %998 = vmatpush1.bf16.msra.mxu0 %v894
      %999 = vmatprep.mubr.bf16.mxu0 %v708
      %1000 = vmatmul.mubr.bf16.gmra.mrb[0].mxu0 %v707
      %v1001 = vpop.f32.mrb[0].mxu0
      %v1002 = vadd.f32 %v701, %v1001
      %v1003 = vpop.f32.mrb[0].mxu0
      %v1004 = vadd.f32 %v703, %v1003
      %v1005 = vpop.f32.mrb[0].mxu0
      %v1006 = vpop.f32.mrb[0].mxu0
      %1007 = vdwg.mxu0
      %1008 = vmatprep.subr.bf16.mxu0 %v897
      %1009 = vmatpush1.bf16.msra.mxu0 %v896
      %1010 = vmatprep.subr.bf16.mxu0 %v899
      %1011 = vmatpush1.bf16.msra.mxu0 %v898
      %1012 = vmatprep.subr.bf16.mxu0 %v901
      %1013 = vmatpush1.bf16.msra.mxu0 %v900
      %1014 = vmatprep.subr.bf16.mxu0 %v903
      %1015 = vmatpush1.bf16.msra.mxu0 %v902
      %1016 = vmatprep.subr.bf16.mxu0 %v905
      %1017 = vmatpush1.bf16.msra.mxu0 %v904
      %1018 = vmatprep.subr.bf16.mxu0 %v907
      %1019 = vmatpush1.bf16.msra.mxu0 %v906
      %1020 = vmatprep.subr.bf16.mxu0 %v909
      %1021 = vmatpush1.bf16.msra.mxu0 %v908
      %1022 = vmatprep.subr.bf16.mxu0 %v911
      %1023 = vmatpush1.bf16.msra.mxu0 %v910
      %1024 = vmatprep.subr.bf16.mxu0 %v913
      %1025 = vmatpush1.bf16.msra.mxu0 %v912
      %1026 = vmatprep.subr.bf16.mxu0 0
      %1027 = vmatpush1.bf16.msra.mxu0 0
      %1028 = vmatprep.subr.bf16.mxu0 0
      %1029 = vmatpush1.bf16.msra.mxu0 0
      %1030 = vmatprep.subr.bf16.mxu0 0
      %1031 = vmatpush1.bf16.msra.mxu0 0
      %1032 = vmatprep.subr.bf16.mxu0 0
      %1033 = vmatpush1.bf16.msra.mxu0 0
      %1034 = vmatprep.subr.bf16.mxu0 0
      %1035 = vmatpush1.bf16.msra.mxu0 0
      %1036 = vmatprep.subr.bf16.mxu0 0
      %1037 = vmatpush1.bf16.msra.mxu0 0
      %1038 = vmatprep.subr.bf16.mxu0 0
      %1039 = vmatpush1.bf16.msra.mxu0 0
      %1040 = vmatprep.mubr.bf16.mxu0 %v965
      %1041 = vmatmul.mubr.bf16.gmra.mrb[0].mxu0 %v709
      %v1042 = vpop.f32.mrb[0].mxu0
      %v1043 = vadd.f32 %v1002, %v1042
      %v1044 = vpop.f32.mrb[0].mxu0
      %v1045 = vadd.f32 %v1004, %v1044
      %v1046 = vpop.f32.mrb[0].mxu0
      %v1047 = vpop.f32.mrb[0].mxu0
      %1048 = vdwg.mxu0
      %v1049 = vld [vmem:[%s207] sm:$0xee]
      %v1050 = vld [vmem:[%s207 + $0x8] sm:$0xee]
      %s1051 = scalar_lea.vmem %s1, 800
      %v1052 = vld [vmem:[%s1051] sm:$0xff]
      %v1053 = vld [vmem:[%s1051 + $0x8] sm:$0xff]
      %v1054 = vld [vmem:[%s1051 + $0x10] sm:$0xff]
      %v1055 = vld [vmem:[%s1051 + $0x18] sm:$0xff]
      %v1056 = vld [vmem:[%s1051 + $0x20] sm:$0xff]
      %v1057 = vld [vmem:[%s1051 + $0x28] sm:$0xff]
      %v1058 = vld [vmem:[%s1051 + $0x30] sm:$0xff]
      %v1059 = vld [vmem:[%s1051 + $0x38] sm:$0xff]
      %v1060 = vld [vmem:[%s1051 + $0x40] sm:$0xff]
      %v1061 = vld [vmem:[%s1051 + $0x48] sm:$0xff]
      %v1062 = vld [vmem:[%s1051 + $0x50] sm:$0xff]
      %v1063 = vld [vmem:[%s1051 + $0x58] sm:$0xff]
      %v1064 = vld [vmem:[%s1051 + $0x60] sm:$0xff]
      %v1065 = vld [vmem:[%s1051 + $0x68] sm:$0xff]
      %v1066 = vld [vmem:[%s1051 + $0x70] sm:$0xff]
      %v1067 = vld [vmem:[%s1051 + $0x78] sm:$0xff]
      %v1068 = vld [vmem:[%s1051 + $0x80] sm:$0xff]
      %v1069 = vld [vmem:[%s1051 + $0x88] sm:$0xff]
      %v1070 = vld [vmem:[%s1051 + $0x90] sm:$0xff]
      %v1071 = vld [vmem:[%s1051 + $0x98] sm:$0xff]
      %v1072 = vld [vmem:[%s1051 + $0xa0] sm:$0xff]
      %v1073 = vld [vmem:[%s1051 + $0xa8] sm:$0xff]
      %v1074 = vld [vmem:[%s1051 + $0xb0] sm:$0xff]
      %v1075 = vld [vmem:[%s1051 + $0xb8] sm:$0xff]
      %v1076 = vld [vmem:[%s1051 + $0xc0] sm:$0xff]
      %v1077 = vld [vmem:[%s1051 + $0xc8] sm:$0xff]
      %v1078 = vld [vmem:[%s1051 + $0xd0] sm:$0xff]
      %v1079 = vld [vmem:[%s1051 + $0xd8] sm:$0xff]
      %v1080 = vld [vmem:[%s1051 + $0xe0] sm:$0xff]
      %v1081 = vld [vmem:[%s1051 + $0xe8] sm:$0xff]
      %v1082 = vld [vmem:[%s1051 + $0xf0] sm:$0xff]
      %v1083 = vld [vmem:[%s1051 + $0xf8] sm:$0xff]
      %v1084 = vld [vmem:[%s1051 + $0x100] sm:$0xff]
      %v1085 = vld [vmem:[%s1051 + $0x108] sm:$0xff]
      %v1086 = vld [vmem:[%s1051 + $0x110] sm:$0xff]
      %v1087 = vld [vmem:[%s1051 + $0x118] sm:$0xff]
      %v1088 = vld [vmem:[%s1051 + $0x120] sm:$0xff]
      %v1089 = vld [vmem:[%s1051 + $0x128] sm:$0xff]
      %v1090 = vld [vmem:[%s1051 + $0x130] sm:$0xff]
      %v1091 = vld [vmem:[%s1051 + $0x138] sm:$0xff]
      %v1092 = vld [vmem:[%s1051 + $0x140] sm:$0xff]
      %v1093 = vld [vmem:[%s1051 + $0x148] sm:$0xff]
      %v1094 = vld [vmem:[%s1051 + $0x150] sm:$0xff]
      %v1095 = vld [vmem:[%s1051 + $0x158] sm:$0xff]
      %v1096 = vld [vmem:[%s1051 + $0x160] sm:$0xff]
      %v1097 = vld [vmem:[%s1051 + $0x168] sm:$0xff]
      %v1098 = vld [vmem:[%s1051 + $0x170] sm:$0xff]
      %v1099 = vld [vmem:[%s1051 + $0x178] sm:$0xff]
      %v1100 = vld [vmem:[%s1051 + $0x180] sm:$0xff]
      %v1101 = vld [vmem:[%s1051 + $0x188] sm:$0xff]
      %v1104 = vunpack.c.l.b16 %v1049
      %v1105 = vunpack.c.h.b16 %v1049
      %v1106 = vunpack.c.l.b16 %v1050
      %v1107 = vunpack.c.h.b16 %v1050
      %v1108 = vpack.c.b16 %v332, %v1104
      %v1109 = vpack.c.b16 %v333, %v1105
      %v1110 = vpack.c.b16 %v334, %v1106
      %v1111 = vpack.c.b16 %v335, %v1107
      %v1112 = vrot.slane %v1108, 1
      %v1113 = vrot.slane %v1109, 1
      %v1114 = vrot.slane %v1110, 1
      %v1115 = vrot.slane %v1111, 1
      %v1169 = vunpack.c.l.b16 %v1052
      %v1170 = vunpack.c.h.b16 %v1052
      %v1171 = vunpack.c.l.b16 %v1053
      %v1172 = vunpack.c.h.b16 %v1053
      %v1173 = vunpack.c.l.b16 %v1054
      %v1174 = vunpack.c.h.b16 %v1054
      %v1175 = vunpack.c.l.b16 %v1055
      %v1176 = vunpack.c.h.b16 %v1055
      %v1177 = vunpack.c.l.b16 %v1056
      %v1178 = vunpack.c.h.b16 %v1056
      %v1179 = vunpack.c.l.b16 %v1057
      %v1180 = vunpack.c.h.b16 %v1057
      %v1181 = vunpack.c.l.b16 %v1058
      %v1182 = vunpack.c.h.b16 %v1058
      %v1183 = vunpack.c.l.b16 %v1059
      %v1184 = vunpack.c.h.b16 %v1059
      %v1185 = vunpack.c.l.b16 %v1060
      %v1186 = vunpack.c.h.b16 %v1060
      %v1187 = vunpack.c.l.b16 %v1061
      %v1188 = vunpack.c.h.b16 %v1061
      %v1189 = vunpack.c.l.b16 %v1062
      %v1190 = vunpack.c.h.b16 %v1062
      %v1191 = vunpack.c.l.b16 %v1063
      %v1192 = vunpack.c.h.b16 %v1063
      %v1193 = vunpack.c.l.b16 %v1064
      %v1194 = vunpack.c.h.b16 %v1064
      %v1195 = vunpack.c.l.b16 %v1065
      %v1196 = vunpack.c.h.b16 %v1065
      %v1197 = vunpack.c.l.b16 %v1066
      %v1198 = vunpack.c.h.b16 %v1066
      %v1199 = vunpack.c.l.b16 %v1067
      %v1200 = vunpack.c.h.b16 %v1067
      %v1201 = vunpack.c.l.b16 %v1068
      %v1202 = vunpack.c.h.b16 %v1068
      %v1203 = vunpack.c.l.b16 %v1069
      %v1204 = vunpack.c.h.b16 %v1069
      %v1205 = vunpack.c.l.b16 %v1070
      %v1206 = vunpack.c.h.b16 %v1070
      %v1207 = vunpack.c.l.b16 %v1071
      %v1208 = vunpack.c.h.b16 %v1071
      %v1209 = vunpack.c.l.b16 %v1072
      %v1210 = vunpack.c.h.b16 %v1072
      %v1211 = vunpack.c.l.b16 %v1073
      %v1212 = vunpack.c.h.b16 %v1073
      %v1213 = vunpack.c.l.b16 %v1074
      %v1214 = vunpack.c.h.b16 %v1074
      %v1215 = vunpack.c.l.b16 %v1075
      %v1216 = vunpack.c.h.b16 %v1075
      %v1217 = vunpack.c.l.b16 %v1076
      %v1218 = vunpack.c.h.b16 %v1076
      %v1219 = vunpack.c.l.b16 %v1077
      %v1220 = vunpack.c.h.b16 %v1077
      %v1221 = vunpack.c.l.b16 %v1078
      %v1222 = vunpack.c.h.b16 %v1078
      %v1223 = vunpack.c.l.b16 %v1079
      %v1224 = vunpack.c.h.b16 %v1079
      %v1225 = vunpack.c.l.b16 %v1080
      %v1226 = vunpack.c.h.b16 %v1080
      %v1227 = vunpack.c.l.b16 %v1081
      %v1228 = vunpack.c.h.b16 %v1081
      %v1229 = vunpack.c.l.b16 %v1082
      %v1230 = vunpack.c.h.b16 %v1082
      %v1231 = vunpack.c.l.b16 %v1083
      %v1232 = vunpack.c.h.b16 %v1083
      %v1233 = vunpack.c.l.b16 %v1084
      %v1234 = vunpack.c.h.b16 %v1084
      %v1235 = vunpack.c.l.b16 %v1085
      %v1236 = vunpack.c.h.b16 %v1085
      %v1237 = vunpack.c.l.b16 %v1086
      %v1238 = vunpack.c.h.b16 %v1086
      %v1239 = vunpack.c.l.b16 %v1087
      %v1240 = vunpack.c.h.b16 %v1087
      %v1241 = vunpack.c.l.b16 %v1088
      %v1242 = vunpack.c.h.b16 %v1088
      %v1243 = vunpack.c.l.b16 %v1089
      %v1244 = vunpack.c.h.b16 %v1089
      %v1245 = vunpack.c.l.b16 %v1090
      %v1246 = vunpack.c.h.b16 %v1090
      %v1247 = vunpack.c.l.b16 %v1091
      %v1248 = vunpack.c.h.b16 %v1091
      %v1249 = vunpack.c.l.b16 %v1092
      %v1250 = vunpack.c.h.b16 %v1092
      %v1251 = vunpack.c.l.b16 %v1093
      %v1252 = vunpack.c.h.b16 %v1093
      %v1253 = vunpack.c.l.b16 %v1094
      %v1254 = vunpack.c.h.b16 %v1094
      %v1255 = vunpack.c.l.b16 %v1095
      %v1256 = vunpack.c.h.b16 %v1095
      %v1257 = vunpack.c.l.b16 %v1096
      %v1258 = vunpack.c.h.b16 %v1096
      %v1259 = vunpack.c.l.b16 %v1097
      %v1260 = vunpack.c.h.b16 %v1097
      %v1261 = vunpack.c.l.b16 %v1098
      %v1262 = vunpack.c.h.b16 %v1098
      %v1263 = vunpack.c.l.b16 %v1099
      %v1264 = vunpack.c.h.b16 %v1099
      %v1265 = vunpack.c.l.b16 %v1100
      %v1266 = vunpack.c.h.b16 %v1100
      %v1267 = vunpack.c.l.b16 %v1101
      %v1268 = vunpack.c.h.b16 %v1101
      %v1269 = vpack.c.b16 %v1171, %v1169
      %v1270 = vpack.c.b16 %v1172, %v1170
      %v1271 = vpack.c.b16 %v1175, %v1173
      %v1272 = vpack.c.b16 %v1176, %v1174
      %v1273 = vpack.c.b16 %v1179, %v1177
      %v1274 = vpack.c.b16 %v1180, %v1178
      %v1275 = vpack.c.b16 %v1183, %v1181
      %v1276 = vpack.c.b16 %v1184, %v1182
      %v1277 = vpack.c.b16 %v1187, %v1185
      %v1278 = vpack.c.b16 %v1188, %v1186
      %v1279 = vpack.c.b16 %v1191, %v1189
      %v1280 = vpack.c.b16 %v1192, %v1190
      %v1281 = vpack.c.b16 %v1195, %v1193
      %v1282 = vpack.c.b16 %v1196, %v1194
      %v1283 = vpack.c.b16 %v1199, %v1197
      %v1284 = vpack.c.b16 %v1200, %v1198
      %v1285 = vpack.c.b16 %v1203, %v1201
      %v1286 = vpack.c.b16 %v1204, %v1202
      %v1287 = vpack.c.b16 %v1207, %v1205
      %v1288 = vpack.c.b16 %v1208, %v1206
      %v1289 = vpack.c.b16 %v1211, %v1209
      %v1290 = vpack.c.b16 %v1212, %v1210
      %v1291 = vpack.c.b16 %v1215, %v1213
      %v1292 = vpack.c.b16 %v1216, %v1214
      %v1293 = vpack.c.b16 %v1219, %v1217
      %v1294 = vpack.c.b16 %v1220, %v1218
      %v1295 = vpack.c.b16 %v1223, %v1221
      %v1296 = vpack.c.b16 %v1224, %v1222
      %v1297 = vpack.c.b16 %v1227, %v1225
      %v1298 = vpack.c.b16 %v1228, %v1226
      %v1299 = vpack.c.b16 %v1231, %v1229
      %v1300 = vpack.c.b16 %v1232, %v1230
      %v1301 = vpack.c.b16 %v1235, %v1233
      %v1302 = vpack.c.b16 %v1236, %v1234
      %v1303 = vpack.c.b16 %v1239, %v1237
      %v1304 = vpack.c.b16 %v1240, %v1238
      %v1305 = vpack.c.b16 %v1243, %v1241
      %v1306 = vpack.c.b16 %v1244, %v1242
      %v1307 = vpack.c.b16 %v1247, %v1245
      %v1308 = vpack.c.b16 %v1248, %v1246
      %v1309 = vpack.c.b16 %v1251, %v1249
      %v1310 = vpack.c.b16 %v1252, %v1250
      %v1311 = vpack.c.b16 %v1255, %v1253
      %v1312 = vpack.c.b16 %v1256, %v1254
      %v1313 = vpack.c.b16 %v1259, %v1257
      %v1314 = vpack.c.b16 %v1260, %v1258
      %v1315 = vpack.c.b16 %v1263, %v1261
      %v1316 = vpack.c.b16 %v1264, %v1262
      %v1317 = vpack.c.b16 %v1267, %v1265
      %v1318 = vpack.c.b16 %v1268, %v1266
      %v1370 = vsel %vm621, %v1115, 0
      %1372 = vmatprep.subr.bf16.mxu0 %v1270
      %1373 = vmatpush1.bf16.msra.mxu0 %v1269
      %1374 = vmatprep.subr.bf16.mxu0 %v1272
      %1375 = vmatpush1.bf16.msra.mxu0 %v1271
      %1376 = vmatprep.subr.bf16.mxu0 %v1274
      %1377 = vmatpush1.bf16.msra.mxu0 %v1273
      %1378 = vmatprep.subr.bf16.mxu0 %v1276
      %1379 = vmatpush1.bf16.msra.mxu0 %v1275
      %1380 = vmatprep.subr.bf16.mxu0 %v1278
      %1381 = vmatpush1.bf16.msra.mxu0 %v1277
      %1382 = vmatprep.subr.bf16.mxu0 %v1280
      %1383 = vmatpush1.bf16.msra.mxu0 %v1279
      %1384 = vmatprep.subr.bf16.mxu0 %v1282
      %1385 = vmatpush1.bf16.msra.mxu0 %v1281
      %1386 = vmatprep.subr.bf16.mxu0 %v1284
      %1387 = vmatpush1.bf16.msra.mxu0 %v1283
      %1388 = vmatprep.subr.bf16.mxu0 %v1286
      %1389 = vmatpush1.bf16.msra.mxu0 %v1285
      %1390 = vmatprep.subr.bf16.mxu0 %v1288
      %1391 = vmatpush1.bf16.msra.mxu0 %v1287
      %1392 = vmatprep.subr.bf16.mxu0 %v1290
      %1393 = vmatpush1.bf16.msra.mxu0 %v1289
      %1394 = vmatprep.subr.bf16.mxu0 %v1292
      %1395 = vmatpush1.bf16.msra.mxu0 %v1291
      %1396 = vmatprep.subr.bf16.mxu0 %v1294
      %1397 = vmatpush1.bf16.msra.mxu0 %v1293
      %1398 = vmatprep.subr.bf16.mxu0 %v1296
      %1399 = vmatpush1.bf16.msra.mxu0 %v1295
      %1400 = vmatprep.subr.bf16.mxu0 %v1298
      %1401 = vmatpush1.bf16.msra.mxu0 %v1297
      %1402 = vmatprep.subr.bf16.mxu0 %v1300
      %1403 = vmatpush1.bf16.msra.mxu0 %v1299
      %1404 = vmatprep.mubr.bf16.mxu0 %v1113
      %1405 = vmatmul.mubr.bf16.gmra.mrb[0].mxu0 %v1112
      %v1406 = vpop.f32.mrb[0].mxu0
      %v1407 = vadd.f32 0.0, %v1406
      %v1408 = vpop.f32.mrb[0].mxu0
      %v1409 = vadd.f32 0.0, %v1408
      %v1410 = vpop.f32.mrb[0].mxu0
      %v1411 = vpop.f32.mrb[0].mxu0
      %1412 = vdwg.mxu0
      %1413 = vmatprep.subr.bf16.mxu0 %v1302
      %1414 = vmatpush1.bf16.msra.mxu0 %v1301
      %1415 = vmatprep.subr.bf16.mxu0 %v1304
      %1416 = vmatpush1.bf16.msra.mxu0 %v1303
      %1417 = vmatprep.subr.bf16.mxu0 %v1306
      %1418 = vmatpush1.bf16.msra.mxu0 %v1305
      %1419 = vmatprep.subr.bf16.mxu0 %v1308
      %1420 = vmatpush1.bf16.msra.mxu0 %v1307
      %1421 = vmatprep.subr.bf16.mxu0 %v1310
      %1422 = vmatpush1.bf16.msra.mxu0 %v1309
      %1423 = vmatprep.subr.bf16.mxu0 %v1312
      %1424 = vmatpush1.bf16.msra.mxu0 %v1311
      %1425 = vmatprep.subr.bf16.mxu0 %v1314
      %1426 = vmatpush1.bf16.msra.mxu0 %v1313
      %1427 = vmatprep.subr.bf16.mxu0 %v1316
      %1428 = vmatpush1.bf16.msra.mxu0 %v1315
      %1429 = vmatprep.subr.bf16.mxu0 %v1318
      %1430 = vmatpush1.bf16.msra.mxu0 %v1317
      %1431 = vmatprep.subr.bf16.mxu0 0
      %1432 = vmatpush1.bf16.msra.mxu0 0
      %1433 = vmatprep.subr.bf16.mxu0 0
      %1434 = vmatpush1.bf16.msra.mxu0 0
      %1435 = vmatprep.subr.bf16.mxu0 0
      %1436 = vmatpush1.bf16.msra.mxu0 0
      %1437 = vmatprep.subr.bf16.mxu0 0
      %1438 = vmatpush1.bf16.msra.mxu0 0
      %1439 = vmatprep.subr.bf16.mxu0 0
      %1440 = vmatpush1.bf16.msra.mxu0 0
      %1441 = vmatprep.subr.bf16.mxu0 0
      %1442 = vmatpush1.bf16.msra.mxu0 0
      %1443 = vmatprep.subr.bf16.mxu0 0
      %1444 = vmatpush1.bf16.msra.mxu0 0
      %1445 = vmatprep.mubr.bf16.mxu0 %v1370
      %1446 = vmatmul.mubr.bf16.gmra.mrb[0].mxu0 %v1114
      %v1447 = vpop.f32.mrb[0].mxu0
      %v1448 = vadd.f32 %v1407, %v1447
      %v1449 = vpop.f32.mrb[0].mxu0
      %v1450 = vadd.f32 %v1409, %v1449
      %v1451 = vpop.f32.mrb[0].mxu0
      %v1452 = vpop.f32.mrb[0].mxu0
      %1453 = vdwg.mxu0
      %v1454 = vadd.f32 %v1043, %v1448
      %v1455 = vadd.f32 %v1045, %v1450
      %v1456 = vld [vmem:[%s2] sm:$0x3]
      %v1458 = vlaneseq
      %v1459 = vshrl.u32 %v1458, 7
      %v1460 = vsub.s32 0, %v1459
      %v1461 = vrot.slane %v1456, %v1460
      %v1462 = vlaneseq
      %v1463 = vshrl.u32 %v1462, 7
      %v1464 = vsub.s32 1, %v1463
      %v1465 = vrot.slane %v1456, %v1464
      %v1468 = vadd.f32 %v1454, %v1461
      %v1469 = vadd.f32 %v1455, %v1465
      %v1470 = vld [vmem:[%s212] sm:$0xff]
      %v1471 = vunpack.c.l.bf16 %v1470
      %v1472 = vunpack.c.h.bf16 %v1470
      %v1473 = vadd.f32 %v1468, %v1471
      %v1474 = vadd.f32 %v1469, %v1472
      %v1475 = vmax.f32 %v1473, 0.0
      %v1476 = vmax.f32 %v1474, 0.0
      %v1477 = vpack.c.bf16 %v1475, %v1475
      %v1478 = vpack.c.bf16 %v1476, %v1476
      %v1481 = vunpack.c.l.b16 %v1477
      %v1482 = vunpack.c.l.b16 %v1478
      %v1483 = vpack.c.b16 %v1482, %v1481
      %1485 = vst [vmem:[%s217] sm:$0xff] %v1483
      %p1486 = scmp.lt.s32.totalorder %s15, 1
      %s1487 = scalar_select %p1486, %s15, 1
      %s1488 = smul.addr %s1487, 2
      %s1489 = smul.addr %s1488, 4
      %s1490 = scalar_lea.vmem %s4, %s1489
      // Predicated region
      $region37: #{ublock_forward.8} parent=35 // pred_check
        %p1491 = pneg %p127
      $region38: #{ublock_forward.8} parent=35 // pred_check_branch
        %1493 = sbr.rel (%p1491) target = $region40
      $region39: #{ublock_forward.8} parent=35 // pred_region
        _
      $region40: #{ublock_forward.8} parent=35 // pred_fallthru
        _
    $region36: #{ublock_forward.8} parent=5 // pred_fallthru
      _
    %p1494 = scmp.le.s32.totalorder 2, %s10
    // Predicated region
    $region41: #{ublock_forward.8} parent=5 // pred_check
      %p1495 = pneg %p1494
    $region42: #{ublock_forward.8} parent=5 // pred_check_branch
      %1497 = sbr.rel (%p1495) target = $region44
    $region43: #{ublock_forward.8} parent=5 // pred_region
      %s1498 = ssub.s32 %s10, 2
      // Predicated region
      $region45: #{ublock_forward.8} parent=43 // pred_check
        %p1499 = pneg %p133
      $region46: #{ublock_forward.8} parent=43 // pred_check_branch
        %1501 = sbr.rel (%p1499) target = $region48
      $region47: #{ublock_forward.8} parent=43 // pred_region
        %p1502 = scmp.lt.s32.totalorder %s16, 1
        %s1503 = scalar_select %p1502, %s16, 1
        %s1504 = smul.addr %s1503, 2
        %s1505 = smul.addr %s1504, 4
        %s1506 = scalar_lea.vmem %s4, %s1505
      $region48: #{ublock_forward.8} parent=43 // pred_fallthru
        _
    $region44: #{ublock_forward.8} parent=5 // pred_fallthru
      _
  $region6: #{ublock_forward.8} parent=0 // loop_footer
    %s14 = sadd.s32 1, %s10
  $region7: #{ublock_forward.8} parent=0 // loop_footer_branch
    %9 = sbr.rel target = $region3
  $region8: #{ublock_forward.8} parent=0 // loop_exit
    _

// kernel: tile.48
$region0: #{tile.48}
  #allocation0 [shape = 's32[1]{0}', space=sflag, size = 0x4, scoped, tag = 'scoped memory for tile.48']
  %s0 = inlined_call_operand.vmem [shape: f32[8], index: 0, kind: input, shape index: {}]
  %s1 = inlined_call_operand.vmem [shape: f32[16,8], index: 1, kind: output, shape index: {}]
  // Predicated region
  $region2: #{tile.48} parent=0 // pred_check
    _
  $region3: #{tile.48} parent=0 // pred_check_branch
    %3 = sbr.rel (0) target = $region5
  $region4: #{tile.48} parent=0 // pred_region
    _
  $region5: #{tile.48} parent=0 // pred_fallthru
    _
  %v4 = vld [vmem:[%s0] ss:$0 sm:$0xff]
  %5 = vst [vmem:[%s1] sm:$0xff] %v4
  %s6 = scalar_lea.vmem %s1, 8
  %7 = vst [vmem:[%s6] sm:$0xff] %v4

// kernel: tile.49
$region0: #{tile.49}
  %s0 = inlined_call_operand.vmem [shape: f32[16,8], index: 0, kind: input, shape index: {}]
  %s1 = inlined_call_operand.vmem [shape: f32[1,128], index: 1, kind: output, shape index: {}]
  $region1: #{tile.49} parent=0
    #allocation0 [shape = 'u8[4096]{0}', space=vmem, size = 0x1000, scoped, tag = 'scoped mem for output reshape']
    %v2 = vld [vmem:[%s0] sm:$0x1]
    %vm3 = vcmask 64512
    %4 = vst.msk [vmem:[#allocation0] sm:$0x1] %vm3, %v2
    %s5 = scalar_lea.vmem %s0, 15
    %v6 = vld [vmem:[%s5] sm:$0x1]
    %7 = vrot.lane.b32.xlu0 %v6, 120
    %v8 = vpop.permute.xlu0 %7
    %vm9 = vcmask 1048512
    %10 = vst.msk [vmem:[#allocation0] sm:$0x1] %vm9, %v8
    %s11 = scalar_lea.vmem %s0, 14
    %v12 = vld [vmem:[%s11] sm:$0x1]
    %13 = vrot.lane.b32.xlu0 %v12, 112
    %v14 = vpop.permute.xlu0 %13
    %vm15 = vcmask 982912
    %16 = vst.msk [vmem:[#allocation0] sm:$0x1] %vm15, %v14
    %s17 = scalar_lea.vmem %s0, 13
    %v18 = vld [vmem:[%s17] sm:$0x1]
    %19 = vrot.lane.b32.xlu0 %v18, 104
    %v20 = vpop.permute.xlu0 %19
    %vm21 = vcmask 917312
    %22 = vst.msk [vmem:[#allocation0] sm:$0x1] %vm21, %v20
    %s23 = scalar_lea.vmem %s0, 12
    %v24 = vld [vmem:[%s23] sm:$0x1]
    %25 = vrot.lane.b32.xlu0 %v24, 96
    %v26 = vpop.permute.xlu0 %25
    %vm27 = vcmask 851712
    %28 = vst.msk [vmem:[#allocation0] sm:$0x1] %vm27, %v26
    %s29 = scalar_lea.vmem %s0, 11
    %v30 = vld [vmem:[%s29] sm:$0x1]
    %31 = vrot.lane.b32.xlu0 %v30, 88
    %v32 = vpop.permute.xlu0 %31
    %vm33 = vcmask 786112
    %34 = vst.msk [vmem:[#allocation0] sm:$0x1] %vm33, %v32
    %s35 = scalar_lea.vmem %s0, 10
    %v36 = vld [vmem:[%s35] sm:$0x1]
    %37 = vrot.lane.b32.xlu0 %v36, 80
    %v38 = vpop.permute.xlu0 %37
    %vm39 = vcmask 720512
    %40 = vst.msk [vmem:[#allocation0] sm:$0x1] %vm39, %v38
    %s41 = scalar_lea.vmem %s0, 9
    %v42 = vld [vmem:[%s41] sm:$0x1]
    %43 = vrot.lane.b32.xlu0 %v42, 72
    %v44 = vpop.permute.xlu0 %43
    %vm45 = vcmask 654912
    %46 = vst.msk [vmem:[#allocation0] sm:$0x1] %vm45, %v44
    %s47 = scalar_lea.vmem %s0, 8
    %v48 = vld [vmem:[%s47] sm:$0x1]
    %49 = vrot.lane.b32.xlu0 %v48, 64
    %v50 = vpop.permute.xlu0 %49
    %vm51 = vcmask 589312
    %52 = vst.msk [vmem:[#allocation0] sm:$0x1] %vm51, %v50
    %s53 = scalar_lea.vmem %s0, 7
    %v54 = vld [vmem:[%s53] sm:$0x1]
    %55 = vrot.lane.b32.xlu0 %v54, 56
    %v56 = vpop.permute.xlu0 %55
    %vm57 = vcmask 523712
    %58 = vst.msk [vmem:[#allocation0] sm:$0x1] %vm57, %v56
    %s59 = scalar_lea.vmem %s0, 6
    %v60 = vld [vmem:[%s59] sm:$0x1]
    %61 = vrot.lane.b32.xlu0 %v60, 48
    %v62 = vpop.permute.xlu0 %61
    %vm63 = vcmask 458112
    %64 = vst.msk [vmem:[#allocation0] sm:$0x1] %vm63, %v62
    %s65 = scalar_lea.vmem %s0, 5
    %v66 = vld [vmem:[%s65] sm:$0x1]
    %67 = vrot.lane.b32.xlu0 %v66, 40
    %v68 = vpop.permute.xlu0 %67
    %vm69 = vcmask 392512
    %70 = vst.msk [vmem:[#allocation0] sm:$0x1] %vm69, %v68
    %s71 = scalar_lea.vmem %s0, 4
    %v72 = vld [vmem:[%s71] sm:$0x1]
    %73 = vrot.lane.b32.xlu0 %v72, 32
    %v74 = vpop.permute.xlu0 %73
    %vm75 = vcmask 326912
    %76 = vst.msk [vmem:[#allocation0] sm:$0x1] %vm75, %v74
    %s77 = scalar_lea.vmem %s0, 3
    %v78 = vld [vmem:[%s77] sm:$0x1]
    %79 = vrot.lane.b32.xlu0 %v78, 24
    %v80 = vpop.permute.xlu0 %79
    %vm81 = vcmask 261312
    %82 = vst.msk [vmem:[#allocation0] sm:$0x1] %vm81, %v80
    %s83 = scalar_lea.vmem %s0, 2
    %v84 = vld [vmem:[%s83] sm:$0x1]
    %85 = vrot.lane.b32.xlu0 %v84, 16
    %v86 = vpop.permute.xlu0 %85
    %vm87 = vcmask 195712
    %88 = vst.msk [vmem:[#allocation0] sm:$0x1] %vm87, %v86
    %s89 = scalar_lea.vmem %s0, 1
    %v90 = vld [vmem:[%s89] sm:$0x1]
    %91 = vrot.lane.b32.xlu0 %v90, 8
    %v92 = vpop.permute.xlu0 %91
    %vm93 = vcmask 130112
    %94 = vst.msk [vmem:[#allocation0] sm:$0x1] %vm93, %v92
    %s96 = sshllo.u32 0, 1
    %v98 = vld [vmem:[#allocation0] sm:%s96]
    %s99 = sshllo.u32 0, 1
    %100 = vst [vmem:[%s1] sm:%s99] %v98

// kernel: ublock_forward.9
$region0: #{ublock_forward.9}
  #allocation0 [shape = 'u32[]', space=smem, size = 0x4, offset = 0x4, fixed_abs, tag = 'smem constant byte address 0x4 - core index']
  #allocation1 [shape = 'u32[144,128]{1,0:T(1,128)}', space=vmem, size = 0x12000, scoped, tag = 'internal scratch']
  %s0 = inlined_call_operand.vmem [shape: bf16[2,4,512], index: 0, kind: input, shape index: {}]
  %s1 = inlined_call_operand.vmem [shape: bf16[1,512,128], index: 1, kind: input, shape index: {}]
  %s2 = inlined_call_operand.vmem [shape: f32[1,128], index: 2, kind: input, shape index: {}]
  %s3 = inlined_call_operand.vmem [shape: bf16[2,4,128], index: 3, kind: output, shape index: {}]
  %s4 = sld [smem:[#allocation0]]
  $region45: #{ublock_forward.9} parent=0
    _
  %s6 = ssub.s32 1, %s4
  %s7 = scalar_select 0, %s6, %s4
  loop: start=0, step=1, limit=4
  $region2: #{ublock_forward.9} parent=0 // loop_pre_header
    _
  $region3: #{ublock_forward.9} parent=0 // loop_header
    %s9 = sphi 0, %s13
    %p10 = scmp.ge.s32.totalorder %s9, 4
    %s19 = sphi 0, %s21
    %s22 = sphi 0, %s19
    %s23 = sphi 0, %s22
    %s39 = sphi 0, %s23
    %s43 = sphi 0, %s43
    %s45 = sphi 0, %s43
    %s46 = sphi 0, %s45
    %s60 = sphi 0, %s46
    %s64 = sphi 0, %s64
    %s66 = sphi 0, %s64
    %s67 = sphi 0, %s66
    %s81 = sphi 0, %s67
    %s87 = sphi 0, %s89
    %s90 = sphi 0, %s87
    %s91 = sphi 0, %s90
    %s107 = sphi 0, %s91
  $region4: #{ublock_forward.9} parent=0 // loop_header_branch
    %12 = sbr.rel (%p10) target = $region8
  $region5: #{ublock_forward.9} parent=0 // loop_body
    %s14 = ssub.s32 %s9, 1
    %s15 = ssub.s32 %s9, 2
    %s16 = sadd.s32 %s9, 1
    %s17 = ssub.s32 %s9, %s16
    %p18 = scmp.eq.s32.totalorder %s17, 0
    %s20 = sadd.s32 %s19, 1
    %s21 = scalar_select %p18, %s19, %s20
    %p24 = pneg %p18
    %p25 = scmp.eq.s32.totalorder %s9, 1
    %p26 = por %p24, %p25
    %p27 = scmp.ne.s32.totalorder %s19, %s22
    %p28 = scmp.eq.s32.totalorder %s9, 0
    %p29 = por %p27, %p28
    %p30 = scmp.ne.s32.totalorder %s19, %s22
    %p31 = scmp.eq.s32.totalorder %s14, 1
    %p32 = por %p30, %p31
    %p33 = scmp.ne.s32.totalorder %s22, %s23
    %p34 = scmp.eq.s32.totalorder %s14, 0
    %p35 = por %p33, %p34
    %p36 = scmp.ne.s32.totalorder %s22, %s23
    %p37 = scmp.eq.s32.totalorder %s15, 1
    %p38 = por %p36, %p37
    %p40 = scmp.ne.s32.totalorder %s23, %s39
    %p41 = scmp.eq.s32.totalorder %s15, 0
    %p42 = por %p40, %p41
    %s44 = sadd.s32 %s43, 1
    %p47 = scmp.eq.s32.totalorder %s9, 1
    %p48 = scmp.ne.s32.totalorder %s43, %s45
    %p49 = scmp.eq.s32.totalorder %s9, 0
    %p50 = por %p48, %p49
    %p51 = scmp.ne.s32.totalorder %s43, %s45
    %p52 = scmp.eq.s32.totalorder %s14, 1
    %p53 = por %p51, %p52
    %p54 = scmp.ne.s32.totalorder %s45, %s46
    %p55 = scmp.eq.s32.totalorder %s14, 0
    %p56 = por %p54, %p55
    %p57 = scmp.ne.s32.totalorder %s45, %s46
    %p58 = scmp.eq.s32.totalorder %s15, 1
    %p59 = por %p57, %p58
    %p61 = scmp.ne.s32.totalorder %s46, %s60
    %p62 = scmp.eq.s32.totalorder %s15, 0
    %p63 = por %p61, %p62
    %s65 = sadd.s32 %s64, 1
    %p68 = scmp.eq.s32.totalorder %s9, 1
    %p69 = scmp.ne.s32.totalorder %s64, %s66
    %p70 = scmp.eq.s32.totalorder %s9, 0
    %p71 = por %p69, %p70
    %p72 = scmp.ne.s32.totalorder %s64, %s66
    %p73 = scmp.eq.s32.totalorder %s14, 1
    %p74 = por %p72, %p73
    %p75 = scmp.ne.s32.totalorder %s66, %s67
    %p76 = scmp.eq.s32.totalorder %s14, 0
    %p77 = por %p75, %p76
    %p78 = scmp.ne.s32.totalorder %s66, %s67
    %p79 = scmp.eq.s32.totalorder %s15, 1
    %p80 = por %p78, %p79
    %p82 = scmp.ne.s32.totalorder %s67, %s81
    %p83 = scmp.eq.s32.totalorder %s15, 0
    %p84 = por %p82, %p83
    %s85 = ssub.s32 %s9, %s16
    %p86 = scmp.eq.s32.totalorder %s85, 0
    %s88 = sadd.s32 %s87, 1
    %s89 = scalar_select %p86, %s87, %s88
    %p92 = pneg %p86
    %p93 = scmp.eq.s32.totalorder %s9, 1
    %p94 = por %p92, %p93
    %p95 = scmp.ne.s32.totalorder %s87, %s90
    %p96 = scmp.eq.s32.totalorder %s9, 0
    %p97 = por %p95, %p96
    %p98 = scmp.ne.s32.totalorder %s87, %s90
    %p99 = scmp.eq.s32.totalorder %s14, 1
    %p100 = por %p98, %p99
    %p101 = scmp.ne.s32.totalorder %s90, %s91
    %p102 = scmp.eq.s32.totalorder %s14, 0
    %p103 = por %p101, %p102
    %p104 = scmp.ne.s32.totalorder %s90, %s91
    %p105 = scmp.eq.s32.totalorder %s15, 1
    %p106 = por %p104, %p105
    %p108 = scmp.ne.s32.totalorder %s91, %s107
    %p109 = scmp.eq.s32.totalorder %s15, 0
    %p110 = por %p108, %p109
    %p111 = scmp.le.s32.totalorder 1, %s9
    %p112 = scmp.lt.s32.totalorder %s9, 3
    %p113 = pnand %p111, %p112
    %p114 = pneg %p113
    // Predicated region
    $region9: #{ublock_forward.9} parent=5 // pred_check
      _
    $region10: #{ublock_forward.9} parent=5 // pred_check_branch
      %116 = sbr.rel (%p113) target = $region12
    $region11: #{ublock_forward.9} parent=5 // pred_region
      %s117 = ssub.s32 %s9, 1
      // Predicated region
      $region13: #{ublock_forward.9} parent=11 // pred_check
        %p118 = pneg %p56
      $region14: #{ublock_forward.9} parent=11 // pred_check_branch
        %120 = sbr.rel (%p118) target = $region16
      $region15: #{ublock_forward.9} parent=11 // pred_region
        _
      $region16: #{ublock_forward.9} parent=11 // pred_fallthru
        _
      // Predicated region
      $region17: #{ublock_forward.9} parent=11 // pred_check
        %p121 = pneg %p77
      $region18: #{ublock_forward.9} parent=11 // pred_check_branch
        %123 = sbr.rel (%p121) target = $region20
      $region19: #{ublock_forward.9} parent=11 // pred_region
        _
      $region20: #{ublock_forward.9} parent=11 // pred_fallthru
        _
    $region12: #{ublock_forward.9} parent=5 // pred_fallthru
      _
    %p124 = scmp.lt.s32.totalorder %s9, 2
    // Predicated region
    $region21: #{ublock_forward.9} parent=5 // pred_check
      %p125 = pneg %p124
    $region22: #{ublock_forward.9} parent=5 // pred_check_branch
      %127 = sbr.rel (%p125) target = $region24
    $region23: #{ublock_forward.9} parent=5 // pred_region
      // Predicated region
      $region25: #{ublock_forward.9} parent=23 // pred_check
        %p128 = pneg %p29
      $region26: #{ublock_forward.9} parent=23 // pred_check_branch
        %130 = sbr.rel (%p128) target = $region28
      $region27: #{ublock_forward.9} parent=23 // pred_region
        %p131 = scmp.lt.s32.totalorder %s9, 1
        %s132 = scalar_select %p131, %s9, 1
        %s133 = smul.addr %s132, 4
        %s134 = smul.addr %s133, 2
        %s135 = scalar_lea.vmem %s0, %s134
      $region28: #{ublock_forward.9} parent=23 // pred_fallthru
        _
    $region24: #{ublock_forward.9} parent=5 // pred_fallthru
      _
    %p136 = scmp.le.s32.totalorder 1, %s9
    %p137 = scmp.lt.s32.totalorder %s9, 3
    %p138 = pnand %p136, %p137
    %p139 = pneg %p138
    // Predicated region
    $region29: #{ublock_forward.9} parent=5 // pred_check
      _
    $region30: #{ublock_forward.9} parent=5 // pred_check_branch
      %141 = sbr.rel (%p138) target = $region32
    $region31: #{ublock_forward.9} parent=5 // pred_region
      %s142 = ssub.s32 %s9, 1
      %p143 = scmp.lt.s32.totalorder %s14, 1
      %s144 = scalar_select %p143, %s14, 1
      %s145 = smul.addr %s144, 4
      %s146 = smul.addr %s145, 2
      %s147 = scalar_lea.vmem %s0, %s146
      %p148 = pneg %p35
      %p149 = pneg %p32
      %p150 = pneg %p56
      %p151 = pneg %p53
      %p152 = pneg %p77
      %p153 = pneg %p74
      %p154 = pneg %p103
      %p155 = pneg %p100
      %p156 = scmp.lt.s32.totalorder %s14, 1
      %s157 = scalar_select %p156, %s14, 1
      %s158 = smul.addr %s157, 2
      %s159 = scalar_lea.vmem %s3, %s158
      %p160 = scmp.lt.s32.totalorder %s14, 1
      %s161 = scalar_select %p160, %s14, 1
      %s162 = smul.addr %s161, 4
      %s163 = smul.addr %s162, 2
      %s164 = scalar_lea.vmem %s0, %s163
      %p165 = scmp.lt.s32.totalorder %s14, 1
      %s166 = scalar_select %p165, %s14, 1
      %s167 = smul.addr %s166, 2
      %s168 = scalar_lea.vmem %s3, %s167
      %v170 = vld [vmem:[%s164] sm:$0xff]
      %v171 = vld [vmem:[%s1] sm:$0xf]
      %v172 = vld [vmem:[%s1 + $0x4] sm:$0xf]
      %v173 = vld [vmem:[%s1 + $0x8] sm:$0xf]
      %v174 = vld [vmem:[%s1 + $0xc] sm:$0xf]
      %v175 = vld [vmem:[%s1 + $0x10] sm:$0xf]
      %v176 = vld [vmem:[%s1 + $0x14] sm:$0xf]
      %v177 = vld [vmem:[%s1 + $0x18] sm:$0xf]
      %v178 = vld [vmem:[%s1 + $0x1c] sm:$0xf]
      %v179 = vld [vmem:[%s1 + $0x20] sm:$0xf]
      %v180 = vld [vmem:[%s1 + $0x24] sm:$0xf]
      %v181 = vld [vmem:[%s1 + $0x28] sm:$0xf]
      %v182 = vld [vmem:[%s1 + $0x2c] sm:$0xf]
      %v183 = vld [vmem:[%s1 + $0x30] sm:$0xf]
      %v184 = vld [vmem:[%s1 + $0x34] sm:$0xf]
      %v185 = vld [vmem:[%s1 + $0x38] sm:$0xf]
      %v186 = vld [vmem:[%s1 + $0x3c] sm:$0xf]
      %v187 = vld [vmem:[%s1 + $0x40] sm:$0xf]
      %v188 = vld [vmem:[%s1 + $0x44] sm:$0xf]
      %v189 = vld [vmem:[%s1 + $0x48] sm:$0xf]
      %v190 = vld [vmem:[%s1 + $0x4c] sm:$0xf]
      %v191 = vld [vmem:[%s1 + $0x50] sm:$0xf]
      %v192 = vld [vmem:[%s1 + $0x54] sm:$0xf]
      %v193 = vld [vmem:[%s1 + $0x58] sm:$0xf]
      %v194 = vld [vmem:[%s1 + $0x5c] sm:$0xf]
      %v195 = vld [vmem:[%s1 + $0x60] sm:$0xf]
      %v196 = vld [vmem:[%s1 + $0x64] sm:$0xf]
      %v197 = vld [vmem:[%s1 + $0x68] sm:$0xf]
      %v198 = vld [vmem:[%s1 + $0x6c] sm:$0xf]
      %v199 = vld [vmem:[%s1 + $0x70] sm:$0xf]
      %v200 = vld [vmem:[%s1 + $0x74] sm:$0xf]
      %v201 = vld [vmem:[%s1 + $0x78] sm:$0xf]
      %v202 = vld [vmem:[%s1 + $0x7c] sm:$0xf]
      %v203 = vld [vmem:[%s1 + $0x80] sm:$0xf]
      %v204 = vld [vmem:[%s1 + $0x84] sm:$0xf]
      %v205 = vld [vmem:[%s1 + $0x88] sm:$0xf]
      %v206 = vld [vmem:[%s1 + $0x8c] sm:$0xf]
      %v207 = vld [vmem:[%s1 + $0x90] sm:$0xf]
      %v208 = vld [vmem:[%s1 + $0x94] sm:$0xf]
      %v209 = vld [vmem:[%s1 + $0x98] sm:$0xf]
      %v210 = vld [vmem:[%s1 + $0x9c] sm:$0xf]
      %v211 = vld [vmem:[%s1 + $0xa0] sm:$0xf]
      %v212 = vld [vmem:[%s1 + $0xa4] sm:$0xf]
      %v213 = vld [vmem:[%s1 + $0xa8] sm:$0xf]
      %v214 = vld [vmem:[%s1 + $0xac] sm:$0xf]
      %v215 = vld [vmem:[%s1 + $0xb0] sm:$0xf]
      %v216 = vld [vmem:[%s1 + $0xb4] sm:$0xf]
      %v217 = vld [vmem:[%s1 + $0xb8] sm:$0xf]
      %v218 = vld [vmem:[%s1 + $0xbc] sm:$0xf]
      %v219 = vld [vmem:[%s1 + $0xc0] sm:$0xf]
      %v220 = vld [vmem:[%s1 + $0xc4] sm:$0xf]
      %v221 = vld [vmem:[%s1 + $0xc8] sm:$0xf]
      %v222 = vld [vmem:[%s1 + $0xcc] sm:$0xf]
      %v223 = vld [vmem:[%s1 + $0xd0] sm:$0xf]
      %v224 = vld [vmem:[%s1 + $0xd4] sm:$0xf]
      %v225 = vld [vmem:[%s1 + $0xd8] sm:$0xf]
      %v226 = vld [vmem:[%s1 + $0xdc] sm:$0xf]
      %v227 = vld [vmem:[%s1 + $0xe0] sm:$0xf]
      %v228 = vld [vmem:[%s1 + $0xe4] sm:$0xf]
      %v229 = vld [vmem:[%s1 + $0xe8] sm:$0xf]
      %v230 = vld [vmem:[%s1 + $0xec] sm:$0xf]
      %v231 = vld [vmem:[%s1 + $0xf0] sm:$0xf]
      %v232 = vld [vmem:[%s1 + $0xf4] sm:$0xf]
      %v233 = vld [vmem:[%s1 + $0xf8] sm:$0xf]
      %v234 = vld [vmem:[%s1 + $0xfc] sm:$0xf]
      %v235 = vld [vmem:[%s2] sm:$0x1]
      %v237 = vlaneseq
      %v238 = vshrl.u32 %v237, 7
      %v239 = vsub.s32 0, %v238
      %v240 = vrot.slane %v235, %v239
      %v243 = vcombine.high %v170, %v170
      %v245 = vunpack.c.l.s4 1983009808
      %v246 = vunpack.c.0.s8 %v245
      %v247 = vlaneseq
      %v248 = vshrl.u32 %v247, 7
      %v249 = vsub.s32 %v246, %v248
      %v250 = vrot.slane %v170, %v249
      %v252 = vunpack.c.l.s4 1983009808
      %v253 = vunpack.c.0.s8 %v252
      %v254 = vlaneseq
      %v255 = vshrl.u32 %v254, 7
      %v256 = vsub.s32 %v253, %v255
      %v257 = vrot.slane %v243, %v256
      %v258 = vcombine.high %v250, %v250
      %v259 = vcombine.high %v257, %v257
      %v328 = vunpack.c.l.b16 %v171
      %v329 = vunpack.c.l.b16 %v172
      %v330 = vunpack.c.l.b16 %v173
      %v331 = vunpack.c.l.b16 %v174
      %v332 = vunpack.c.l.b16 %v175
      %v333 = vunpack.c.l.b16 %v176
      %v334 = vunpack.c.l.b16 %v177
      %v335 = vunpack.c.l.b16 %v178
      %v336 = vunpack.c.l.b16 %v179
      %v337 = vunpack.c.l.b16 %v180
      %v338 = vunpack.c.l.b16 %v181
      %v339 = vunpack.c.l.b16 %v182
      %v340 = vunpack.c.l.b16 %v183
      %v341 = vunpack.c.l.b16 %v184
      %v342 = vunpack.c.l.b16 %v185
      %v343 = vunpack.c.l.b16 %v186
      %v344 = vunpack.c.l.b16 %v187
      %v345 = vunpack.c.l.b16 %v188
      %v346 = vunpack.c.l.b16 %v189
      %v347 = vunpack.c.l.b16 %v190
      %v348 = vunpack.c.l.b16 %v191
      %v349 = vunpack.c.l.b16 %v192
      %v350 = vunpack.c.l.b16 %v193
      %v351 = vunpack.c.l.b16 %v194
      %v352 = vunpack.c.l.b16 %v195
      %v353 = vunpack.c.l.b16 %v196
      %v354 = vunpack.c.l.b16 %v197
      %v355 = vunpack.c.l.b16 %v198
      %v356 = vunpack.c.l.b16 %v199
      %v357 = vunpack.c.l.b16 %v200
      %v358 = vunpack.c.l.b16 %v201
      %v359 = vunpack.c.l.b16 %v202
      %v360 = vunpack.c.l.b16 %v203
      %v361 = vunpack.c.l.b16 %v204
      %v362 = vunpack.c.l.b16 %v205
      %v363 = vunpack.c.l.b16 %v206
      %v364 = vunpack.c.l.b16 %v207
      %v365 = vunpack.c.l.b16 %v208
      %v366 = vunpack.c.l.b16 %v209
      %v367 = vunpack.c.l.b16 %v210
      %v368 = vunpack.c.l.b16 %v211
      %v369 = vunpack.c.l.b16 %v212
      %v370 = vunpack.c.l.b16 %v213
      %v371 = vunpack.c.l.b16 %v214
      %v372 = vunpack.c.l.b16 %v215
      %v373 = vunpack.c.l.b16 %v216
      %v374 = vunpack.c.l.b16 %v217
      %v375 = vunpack.c.l.b16 %v218
      %v376 = vunpack.c.l.b16 %v219
      %v377 = vunpack.c.l.b16 %v220
      %v378 = vunpack.c.l.b16 %v221
      %v379 = vunpack.c.l.b16 %v222
      %v380 = vunpack.c.l.b16 %v223
      %v381 = vunpack.c.l.b16 %v224
      %v382 = vunpack.c.l.b16 %v225
      %v383 = vunpack.c.l.b16 %v226
      %v384 = vunpack.c.l.b16 %v227
      %v385 = vunpack.c.l.b16 %v228
      %v386 = vunpack.c.l.b16 %v229
      %v387 = vunpack.c.l.b16 %v230
      %v388 = vunpack.c.l.b16 %v231
      %v389 = vunpack.c.l.b16 %v232
      %v390 = vunpack.c.l.b16 %v233
      %v391 = vunpack.c.l.b16 %v234
      %v392 = vpack.c.b16 %v329, %v328
      %v393 = vpack.c.b16 %v331, %v330
      %v394 = vpack.c.b16 %v333, %v332
      %v395 = vpack.c.b16 %v335, %v334
      %v396 = vpack.c.b16 %v337, %v336
      %v397 = vpack.c.b16 %v339, %v338
      %v398 = vpack.c.b16 %v341, %v340
      %v399 = vpack.c.b16 %v343, %v342
      %v400 = vpack.c.b16 %v345, %v344
      %v401 = vpack.c.b16 %v347, %v346
      %v402 = vpack.c.b16 %v349, %v348
      %v403 = vpack.c.b16 %v351, %v350
      %v404 = vpack.c.b16 %v353, %v352
      %v405 = vpack.c.b16 %v355, %v354
      %v406 = vpack.c.b16 %v357, %v356
      %v407 = vpack.c.b16 %v359, %v358
      %v408 = vpack.c.b16 %v361, %v360
      %v409 = vpack.c.b16 %v363, %v362
      %v410 = vpack.c.b16 %v365, %v364
      %v411 = vpack.c.b16 %v367, %v366
      %v412 = vpack.c.b16 %v369, %v368
      %v413 = vpack.c.b16 %v371, %v370
      %v414 = vpack.c.b16 %v373, %v372
      %v415 = vpack.c.b16 %v375, %v374
      %v416 = vpack.c.b16 %v377, %v376
      %v417 = vpack.c.b16 %v379, %v378
      %v418 = vpack.c.b16 %v381, %v380
      %v419 = vpack.c.b16 %v383, %v382
      %v420 = vpack.c.b16 %v385, %v384
      %v421 = vpack.c.b16 %v387, %v386
      %v422 = vpack.c.b16 %v389, %v388
      %v423 = vpack.c.b16 %v391, %v390
      %456 = vmatprep.subr.bf16.mxu0 0
      %457 = vmatpush1.bf16.msra.mxu0 %v392
      %458 = vmatprep.subr.bf16.mxu0 0
      %459 = vmatpush1.bf16.msra.mxu0 %v393
      %460 = vmatprep.subr.bf16.mxu0 0
      %461 = vmatpush1.bf16.msra.mxu0 %v394
      %462 = vmatprep.subr.bf16.mxu0 0
      %463 = vmatpush1.bf16.msra.mxu0 %v395
      %464 = vmatprep.subr.bf16.mxu0 0
      %465 = vmatpush1.bf16.msra.mxu0 %v396
      %466 = vmatprep.subr.bf16.mxu0 0
      %467 = vmatpush1.bf16.msra.mxu0 %v397
      %468 = vmatprep.subr.bf16.mxu0 0
      %469 = vmatpush1.bf16.msra.mxu0 %v398
      %470 = vmatprep.subr.bf16.mxu0 0
      %471 = vmatpush1.bf16.msra.mxu0 %v399
      %472 = vmatprep.subr.bf16.mxu0 0
      %473 = vmatpush1.bf16.msra.mxu0 %v400
      %474 = vmatprep.subr.bf16.mxu0 0
      %475 = vmatpush1.bf16.msra.mxu0 %v401
      %476 = vmatprep.subr.bf16.mxu0 0
      %477 = vmatpush1.bf16.msra.mxu0 %v402
      %478 = vmatprep.subr.bf16.mxu0 0
      %479 = vmatpush1.bf16.msra.mxu0 %v403
      %480 = vmatprep.subr.bf16.mxu0 0
      %481 = vmatpush1.bf16.msra.mxu0 %v404
      %482 = vmatprep.subr.bf16.mxu0 0
      %483 = vmatpush1.bf16.msra.mxu0 %v405
      %484 = vmatprep.subr.bf16.mxu0 0
      %485 = vmatpush1.bf16.msra.mxu0 %v406
      %486 = vmatprep.subr.bf16.mxu0 0
      %487 = vmatpush1.bf16.msra.mxu0 %v407
      %488 = vmatprep.mubr.bf16.mxu0 %v258
      %489 = vmatmul.mubr.bf16.gmra.mrb[0].mxu0 %v250
      %v490 = vpop.f32.mrb[0].mxu0
      %v491 = vadd.f32 %v240, %v490
      %v492 = vpop.f32.mrb[0].mxu0
      %v493 = vpop.f32.mrb[0].mxu0
      %v494 = vpop.f32.mrb[0].mxu0
      %495 = vdwg.mxu0
      %496 = vmatprep.subr.bf16.mxu0 0
      %497 = vmatpush1.bf16.msra.mxu0 %v408
      %498 = vmatprep.subr.bf16.mxu0 0
      %499 = vmatpush1.bf16.msra.mxu0 %v409
      %500 = vmatprep.subr.bf16.mxu0 0
      %501 = vmatpush1.bf16.msra.mxu0 %v410
      %502 = vmatprep.subr.bf16.mxu0 0
      %503 = vmatpush1.bf16.msra.mxu0 %v411
      %504 = vmatprep.subr.bf16.mxu0 0
      %505 = vmatpush1.bf16.msra.mxu0 %v412
      %506 = vmatprep.subr.bf16.mxu0 0
      %507 = vmatpush1.bf16.msra.mxu0 %v413
      %508 = vmatprep.subr.bf16.mxu0 0
      %509 = vmatpush1.bf16.msra.mxu0 %v414
      %510 = vmatprep.subr.bf16.mxu0 0
      %511 = vmatpush1.bf16.msra.mxu0 %v415
      %512 = vmatprep.subr.bf16.mxu0 0
      %513 = vmatpush1.bf16.msra.mxu0 %v416
      %514 = vmatprep.subr.bf16.mxu0 0
      %515 = vmatpush1.bf16.msra.mxu0 %v417
      %516 = vmatprep.subr.bf16.mxu0 0
      %517 = vmatpush1.bf16.msra.mxu0 %v418
      %518 = vmatprep.subr.bf16.mxu0 0
      %519 = vmatpush1.bf16.msra.mxu0 %v419
      %520 = vmatprep.subr.bf16.mxu0 0
      %521 = vmatpush1.bf16.msra.mxu0 %v420
      %522 = vmatprep.subr.bf16.mxu0 0
      %523 = vmatpush1.bf16.msra.mxu0 %v421
      %524 = vmatprep.subr.bf16.mxu0 0
      %525 = vmatpush1.bf16.msra.mxu0 %v422
      %526 = vmatprep.subr.bf16.mxu0 0
      %527 = vmatpush1.bf16.msra.mxu0 %v423
      %528 = vmatprep.mubr.bf16.mxu0 %v259
      %529 = vmatmul.mubr.bf16.gmra.mrb[0].mxu0 %v257
      %v530 = vpop.f32.mrb[0].mxu0
      %v531 = vadd.f32 %v491, %v530
      %v532 = vpop.f32.mrb[0].mxu0
      %v533 = vpop.f32.mrb[0].mxu0
      %v534 = vpop.f32.mrb[0].mxu0
      %535 = vdwg.mxu0
      %v536 = vpack.c.bf16 %v531, %v531
      %537 = vst [vmem:[%s168] sm:$0x3] %v536
      %p538 = scmp.lt.s32.totalorder %s14, 1
      %s539 = scalar_select %p538, %s14, 1
      %s540 = smul.addr %s539, 2
      %s541 = scalar_lea.vmem %s3, %s540
      // Predicated region
      $region33: #{ublock_forward.9} parent=31 // pred_check
        %p542 = pneg %p100
      $region34: #{ublock_forward.9} parent=31 // pred_check_branch
        %544 = sbr.rel (%p542) target = $region36
      $region35: #{ublock_forward.9} parent=31 // pred_region
        _
      $region36: #{ublock_forward.9} parent=31 // pred_fallthru
        _
    $region32: #{ublock_forward.9} parent=5 // pred_fallthru
      _
    %p545 = scmp.le.s32.totalorder 2, %s9
    // Predicated region
    $region37: #{ublock_forward.9} parent=5 // pred_check
      %p546 = pneg %p545
    $region38: #{ublock_forward.9} parent=5 // pred_check_branch
      %548 = sbr.rel (%p546) target = $region40
    $region39: #{ublock_forward.9} parent=5 // pred_region
      %s549 = ssub.s32 %s9, 2
      // Predicated region
      $region41: #{ublock_forward.9} parent=39 // pred_check
        %p550 = pneg %p106
      $region42: #{ublock_forward.9} parent=39 // pred_check_branch
        %552 = sbr.rel (%p550) target = $region44
      $region43: #{ublock_forward.9} parent=39 // pred_region
        %p553 = scmp.lt.s32.totalorder %s15, 1
        %s554 = scalar_select %p553, %s15, 1
        %s555 = smul.addr %s554, 2
        %s556 = scalar_lea.vmem %s3, %s555
      $region44: #{ublock_forward.9} parent=39 // pred_fallthru
        _
    $region40: #{ublock_forward.9} parent=5 // pred_fallthru
      _
  $region6: #{ublock_forward.9} parent=0 // loop_footer
    %s13 = sadd.s32 1, %s9
  $region7: #{ublock_forward.9} parent=0 // loop_footer_branch
    %8 = sbr.rel target = $region3
  $region8: #{ublock_forward.9} parent=0 // loop_exit
    _

// kernel: tile.53
$region0: #{tile.53}
  #allocation0 [shape = 's32[1]{0}', space=sflag, size = 0x4, scoped, tag = 'scoped memory for tile.53']
  %s0 = inlined_call_operand.vmem [shape: f32[4], index: 0, kind: input, shape index: {}]
  %s1 = inlined_call_operand.vmem [shape: f32[128,4], index: 1, kind: output, shape index: {}]
  // Predicated region
  $region2: #{tile.53} parent=0 // pred_check
    _
  $region3: #{tile.53} parent=0 // pred_check_branch
    %3 = sbr.rel (0) target = $region5
  $region4: #{tile.53} parent=0 // pred_region
    _
  $region5: #{tile.53} parent=0 // pred_fallthru
    _
  %v4 = vld [vmem:[%s0] ss:$0 sm:$0xff]
  %5 = vst [vmem:[%s1] sm:$0xff] %v4
  %s6 = scalar_lea.vmem %s1, 8
  %7 = vst [vmem:[%s6] sm:$0xff] %v4
  %s8 = scalar_lea.vmem %s1, 16
  %9 = vst [vmem:[%s8] sm:$0xff] %v4
  %s10 = scalar_lea.vmem %s1, 24
  %11 = vst [vmem:[%s10] sm:$0xff] %v4
  %s12 = scalar_lea.vmem %s1, 32
  %13 = vst [vmem:[%s12] sm:$0xff] %v4
  %s14 = scalar_lea.vmem %s1, 40
  %15 = vst [vmem:[%s14] sm:$0xff] %v4
  %s16 = scalar_lea.vmem %s1, 48
  %17 = vst [vmem:[%s16] sm:$0xff] %v4
  %s18 = scalar_lea.vmem %s1, 56
  %19 = vst [vmem:[%s18] sm:$0xff] %v4
  %s20 = scalar_lea.vmem %s1, 64
  %21 = vst [vmem:[%s20] sm:$0xff] %v4
  %s22 = scalar_lea.vmem %s1, 72
  %23 = vst [vmem:[%s22] sm:$0xff] %v4
  %s24 = scalar_lea.vmem %s1, 80
  %25 = vst [vmem:[%s24] sm:$0xff] %v4
  %s26 = scalar_lea.vmem %s1, 88
  %27 = vst [vmem:[%s26] sm:$0xff] %v4
  %s28 = scalar_lea.vmem %s1, 96
  %29 = vst [vmem:[%s28] sm:$0xff] %v4
  %s30 = scalar_lea.vmem %s1, 104
  %31 = vst [vmem:[%s30] sm:$0xff] %v4
  %s32 = scalar_lea.vmem %s1, 112
  %33 = vst [vmem:[%s32] sm:$0xff] %v4
  %s34 = scalar_lea.vmem %s1, 120
  %35 = vst [vmem:[%s34] sm:$0xff] %v4

// kernel: tile.54
$region0: #{tile.54}
  %s0 = inlined_call_operand.vmem [shape: f32[128,4], index: 0, kind: input, shape index: {}]
  %s1 = inlined_call_operand.vmem [shape: f32[1,512], index: 1, kind: output, shape index: {}]
  $region1: #{tile.54} parent=0
    #allocation0 [shape = 'u8[16384]{0}', space=vmem, size = 0x4000, scoped, tag = 'scoped mem for output reshape']
    %v2 = vld [vmem:[%s0] sm:$0x1]
    %s3 = scalar_lea.vmem %s0, 31
    %v4 = vld [vmem:[%s3] sm:$0x2]
    %vm5 = vcmask 1041409
    %v6 = vsel %vm5, %v4, %v2
    %s7 = scalar_lea.vmem %s0, 62
    %v8 = vld [vmem:[%s7] sm:$0x4]
    %vm9 = vcmask 1042434
    %v10 = vsel %vm9, %v8, %v6
    %s11 = scalar_lea.vmem %s0, 93
    %v12 = vld [vmem:[%s11] sm:$0x8]
    %vm13 = vcmask 1043459
    %v14 = vsel %vm13, %v12, %v10
    %vm15 = vcmask 31744
    %16 = vst.msk [vmem:[#allocation0] ss:$8 sm:$0xf] %vm15, %v14
    %s17 = scalar_lea.vmem %s0, 31
    %v18 = vld [vmem:[%s17] sm:$0x1]
    %s19 = scalar_lea.vmem %s0, 62
    %v20 = vld [vmem:[%s19] sm:$0x2]
    %vm21 = vcmask 1041409
    %v22 = vsel %vm21, %v20, %v18
    %s23 = scalar_lea.vmem %s0, 93
    %v24 = vld [vmem:[%s23] sm:$0x4]
    %vm25 = vcmask 1042434
    %v26 = vsel %vm25, %v24, %v22
    %s27 = scalar_lea.vmem %s0, 124
    %v28 = vld [vmem:[%s27] sm:$0x8]
    %vm29 = vcmask 1043459
    %v30 = vsel %vm29, %v28, %v26
    %31 = vrot.lane.b32.xlu0 %v30, 124
    %v32 = vpop.permute.xlu0 %31
    %vm33 = vcmask 1048544
    %34 = vst.msk [vmem:[#allocation0] ss:$8 sm:$0xf] %vm33, %v32
    %s35 = scalar_lea.vmem %s0, 30
    %v36 = vld [vmem:[%s35] sm:$0x1]
    %s37 = scalar_lea.vmem %s0, 61
    %v38 = vld [vmem:[%s37] sm:$0x2]
    %vm39 = vcmask 1041409
    %v40 = vsel %vm39, %v38, %v36
    %s41 = scalar_lea.vmem %s0, 92
    %v42 = vld [vmem:[%s41] sm:$0x4]
    %vm43 = vcmask 1042434
    %v44 = vsel %vm43, %v42, %v40
    %s45 = scalar_lea.vmem %s0, 123
    %v46 = vld [vmem:[%s45] sm:$0x8]
    %vm47 = vcmask 1043459
    %v48 = vsel %vm47, %v46, %v44
    %49 = vrot.lane.b32.xlu0 %v48, 120
    %v50 = vpop.permute.xlu0 %49
    %vm51 = vcmask 1015744
    %52 = vst.msk [vmem:[#allocation0] ss:$8 sm:$0xf] %vm51, %v50
    %s53 = scalar_lea.vmem %s0, 29
    %v54 = vld [vmem:[%s53] sm:$0x1]
    %s55 = scalar_lea.vmem %s0, 60
    %v56 = vld [vmem:[%s55] sm:$0x2]
    %vm57 = vcmask 1041409
    %v58 = vsel %vm57, %v56, %v54
    %s59 = scalar_lea.vmem %s0, 91
    %v60 = vld [vmem:[%s59] sm:$0x4]
    %vm61 = vcmask 1042434
    %v62 = vsel %vm61, %v60, %v58
    %s63 = scalar_lea.vmem %s0, 122
    %v64 = vld [vmem:[%s63] sm:$0x8]
    %vm65 = vcmask 1043459
    %v66 = vsel %vm65, %v64, %v62
    %67 = vrot.lane.b32.xlu0 %v66, 116
    %v68 = vpop.permute.xlu0 %67
    %vm69 = vcmask 982944
    %70 = vst.msk [vmem:[#allocation0] ss:$8 sm:$0xf] %vm69, %v68
    %s71 = scalar_lea.vmem %s0, 28
    %v72 = vld [vmem:[%s71] sm:$0x1]
    %s73 = scalar_lea.vmem %s0, 59
    %v74 = vld [vmem:[%s73] sm:$0x2]
    %vm75 = vcmask 1041409
    %v76 = vsel %vm75, %v74, %v72
    %s77 = scalar_lea.vmem %s0, 90
    %v78 = vld [vmem:[%s77] sm:$0x4]
    %vm79 = vcmask 1042434
    %v80 = vsel %vm79, %v78, %v76
    %s81 = scalar_lea.vmem %s0, 121
    %v82 = vld [vmem:[%s81] sm:$0x8]
    %vm83 = vcmask 1043459
    %v84 = vsel %vm83, %v82, %v80
    %85 = vrot.lane.b32.xlu0 %v84, 112
    %v86 = vpop.permute.xlu0 %85
    %vm87 = vcmask 950144
    %88 = vst.msk [vmem:[#allocation0] ss:$8 sm:$0xf] %vm87, %v86
    %s89 = scalar_lea.vmem %s0, 27
    %v90 = vld [vmem:[%s89] sm:$0x1]
    %s91 = scalar_lea.vmem %s0, 58
    %v92 = vld [vmem:[%s91] sm:$0x2]
    %vm93 = vcmask 1041409
    %v94 = vsel %vm93, %v92, %v90
    %s95 = scalar_lea.vmem %s0, 89
    %v96 = vld [vmem:[%s95] sm:$0x4]
    %vm97 = vcmask 1042434
    %v98 = vsel %vm97, %v96, %v94
    %s99 = scalar_lea.vmem %s0, 120
    %v100 = vld [vmem:[%s99] sm:$0x8]
    %vm101 = vcmask 1043459
    %v102 = vsel %vm101, %v100, %v98
    %103 = vrot.lane.b32.xlu0 %v102, 108
    %v104 = vpop.permute.xlu0 %103
    %vm105 = vcmask 917344
    %106 = vst.msk [vmem:[#allocation0] ss:$8 sm:$0xf] %vm105, %v104
    %s107 = scalar_lea.vmem %s0, 26
    %v108 = vld [vmem:[%s107] sm:$0x1]
    %s109 = scalar_lea.vmem %s0, 57
    %v110 = vld [vmem:[%s109] sm:$0x2]
    %vm111 = vcmask 1041409
    %v112 = vsel %vm111, %v110, %v108
    %s113 = scalar_lea.vmem %s0, 88
    %v114 = vld [vmem:[%s113] sm:$0x4]
    %vm115 = vcmask 1042434
    %v116 = vsel %vm115, %v114, %v112
    %s117 = scalar_lea.vmem %s0, 119
    %v118 = vld [vmem:[%s117] sm:$0x8]
    %vm119 = vcmask 1043459
    %v120 = vsel %vm119, %v118, %v116
    %121 = vrot.lane.b32.xlu0 %v120, 104
    %v122 = vpop.permute.xlu0 %121
    %vm123 = vcmask 884544
    %124 = vst.msk [vmem:[#allocation0] ss:$8 sm:$0xf] %vm123, %v122
    %s125 = scalar_lea.vmem %s0, 25
    %v126 = vld [vmem:[%s125] sm:$0x1]
    %s127 = scalar_lea.vmem %s0, 56
    %v128 = vld [vmem:[%s127] sm:$0x2]
    %vm129 = vcmask 1041409
    %v130 = vsel %vm129, %v128, %v126
    %s131 = scalar_lea.vmem %s0, 87
    %v132 = vld [vmem:[%s131] sm:$0x4]
    %vm133 = vcmask 1042434
    %v134 = vsel %vm133, %v132, %v130
    %s135 = scalar_lea.vmem %s0, 118
    %v136 = vld [vmem:[%s135] sm:$0x8]
    %vm137 = vcmask 1043459
    %v138 = vsel %vm137, %v136, %v134
    %139 = vrot.lane.b32.xlu0 %v138, 100
    %v140 = vpop.permute.xlu0 %139
    %vm141 = vcmask 851744
    %142 = vst.msk [vmem:[#allocation0] ss:$8 sm:$0xf] %vm141, %v140
    %s143 = scalar_lea.vmem %s0, 24
    %v144 = vld [vmem:[%s143] sm:$0x1]
    %s145 = scalar_lea.vmem %s0, 55
    %v146 = vld [vmem:[%s145] sm:$0x2]
    %vm147 = vcmask 1041409
    %v148 = vsel %vm147, %v146, %v144
    %s149 = scalar_lea.vmem %s0, 86
    %v150 = vld [vmem:[%s149] sm:$0x4]
    %vm151 = vcmask 1042434
    %v152 = vsel %vm151, %v150, %v148
    %s153 = scalar_lea.vmem %s0, 117
    %v154 = vld [vmem:[%s153] sm:$0x8]
    %vm155 = vcmask 1043459
    %v156 = vsel %vm155, %v154, %v152
    %157 = vrot.lane.b32.xlu0 %v156, 96
    %v158 = vpop.permute.xlu0 %157
    %vm159 = vcmask 818944
    %160 = vst.msk [vmem:[#allocation0] ss:$8 sm:$0xf] %vm159, %v158
    %s161 = scalar_lea.vmem %s0, 23
    %v162 = vld [vmem:[%s161] sm:$0x1]
    %s163 = scalar_lea.vmem %s0, 54
    %v164 = vld [vmem:[%s163] sm:$0x2]
    %vm165 = vcmask 1041409
    %v166 = vsel %vm165, %v164, %v162
    %s167 = scalar_lea.vmem %s0, 85
    %v168 = vld [vmem:[%s167] sm:$0x4]
    %vm169 = vcmask 1042434
    %v170 = vsel %vm169, %v168, %v166
    %s171 = scalar_lea.vmem %s0, 116
    %v172 = vld [vmem:[%s171] sm:$0x8]
    %vm173 = vcmask 1043459
    %v174 = vsel %vm173, %v172, %v170
    %175 = vrot.lane.b32.xlu0 %v174, 92
    %v176 = vpop.permute.xlu0 %175
    %vm177 = vcmask 786144
    %178 = vst.msk [vmem:[#allocation0] ss:$8 sm:$0xf] %vm177, %v176
    %s179 = scalar_lea.vmem %s0, 22
    %v180 = vld [vmem:[%s179] sm:$0x1]
    %s181 = scalar_lea.vmem %s0, 53
    %v182 = vld [vmem:[%s181] sm:$0x2]
    %vm183 = vcmask 1041409
    %v184 = vsel %vm183, %v182, %v180
    %s185 = scalar_lea.vmem %s0, 84
    %v186 = vld [vmem:[%s185] sm:$0x4]
    %vm187 = vcmask 1042434
    %v188 = vsel %vm187, %v186, %v184
    %s189 = scalar_lea.vmem %s0, 115
    %v190 = vld [vmem:[%s189] sm:$0x8]
    %vm191 = vcmask 1043459
    %v192 = vsel %vm191, %v190, %v188
    %193 = vrot.lane.b32.xlu0 %v192, 88
    %v194 = vpop.permute.xlu0 %193
    %vm195 = vcmask 753344
    %196 = vst.msk [vmem:[#allocation0] ss:$8 sm:$0xf] %vm195, %v194
    %s197 = scalar_lea.vmem %s0, 21
    %v198 = vld [vmem:[%s197] sm:$0x1]
    %s199 = scalar_lea.vmem %s0, 52
    %v200 = vld [vmem:[%s199] sm:$0x2]
    %vm201 = vcmask 1041409
    %v202 = vsel %vm201, %v200, %v198
    %s203 = scalar_lea.vmem %s0, 83
    %v204 = vld [vmem:[%s203] sm:$0x4]
    %vm205 = vcmask 1042434
    %v206 = vsel %vm205, %v204, %v202
    %s207 = scalar_lea.vmem %s0, 114
    %v208 = vld [vmem:[%s207] sm:$0x8]
    %vm209 = vcmask 1043459
    %v210 = vsel %vm209, %v208, %v206
    %211 = vrot.lane.b32.xlu0 %v210, 84
    %v212 = vpop.permute.xlu0 %211
    %vm213 = vcmask 720544
    %214 = vst.msk [vmem:[#allocation0] ss:$8 sm:$0xf] %vm213, %v212
    %s215 = scalar_lea.vmem %s0, 20
    %v216 = vld [vmem:[%s215] sm:$0x1]
    %s217 = scalar_lea.vmem %s0, 51
    %v218 = vld [vmem:[%s217] sm:$0x2]
    %vm219 = vcmask 1041409
    %v220 = vsel %vm219, %v218, %v216
    %s221 = scalar_lea.vmem %s0, 82
    %v222 = vld [vmem:[%s221] sm:$0x4]
    %vm223 = vcmask 1042434
    %v224 = vsel %vm223, %v222, %v220
    %s225 = scalar_lea.vmem %s0, 113
    %v226 = vld [vmem:[%s225] sm:$0x8]
    %vm227 = vcmask 1043459
    %v228 = vsel %vm227, %v226, %v224
    %229 = vrot.lane.b32.xlu0 %v228, 80
    %v230 = vpop.permute.xlu0 %229
    %vm231 = vcmask 687744
    %232 = vst.msk [vmem:[#allocation0] ss:$8 sm:$0xf] %vm231, %v230
    %s233 = scalar_lea.vmem %s0, 19
    %v234 = vld [vmem:[%s233] sm:$0x1]
    %s235 = scalar_lea.vmem %s0, 50
    %v236 = vld [vmem:[%s235] sm:$0x2]
    %vm237 = vcmask 1041409
    %v238 = vsel %vm237, %v236, %v234
    %s239 = scalar_lea.vmem %s0, 81
    %v240 = vld [vmem:[%s239] sm:$0x4]
    %vm241 = vcmask 1042434
    %v242 = vsel %vm241, %v240, %v238
    %s243 = scalar_lea.vmem %s0, 112
    %v244 = vld [vmem:[%s243] sm:$0x8]
    %vm245 = vcmask 1043459
    %v246 = vsel %vm245, %v244, %v242
    %247 = vrot.lane.b32.xlu0 %v246, 76
    %v248 = vpop.permute.xlu0 %247
    %vm249 = vcmask 654944
    %250 = vst.msk [vmem:[#allocation0] ss:$8 sm:$0xf] %vm249, %v248
    %s251 = scalar_lea.vmem %s0, 18
    %v252 = vld [vmem:[%s251] sm:$0x1]
    %s253 = scalar_lea.vmem %s0, 49
    %v254 = vld [vmem:[%s253] sm:$0x2]
    %vm255 = vcmask 1041409
    %v256 = vsel %vm255, %v254, %v252
    %s257 = scalar_lea.vmem %s0, 80
    %v258 = vld [vmem:[%s257] sm:$0x4]
    %vm259 = vcmask 1042434
    %v260 = vsel %vm259, %v258, %v256
    %s261 = scalar_lea.vmem %s0, 111
    %v262 = vld [vmem:[%s261] sm:$0x8]
    %vm263 = vcmask 1043459
    %v264 = vsel %vm263, %v262, %v260
    %265 = vrot.lane.b32.xlu0 %v264, 72
    %v266 = vpop.permute.xlu0 %265
    %vm267 = vcmask 622144
    %268 = vst.msk [vmem:[#allocation0] ss:$8 sm:$0xf] %vm267, %v266
    %s269 = scalar_lea.vmem %s0, 17
    %v270 = vld [vmem:[%s269] sm:$0x1]
    %s271 = scalar_lea.vmem %s0, 48
    %v272 = vld [vmem:[%s271] sm:$0x2]
    %vm273 = vcmask 1041409
    %v274 = vsel %vm273, %v272, %v270
    %s275 = scalar_lea.vmem %s0, 79
    %v276 = vld [vmem:[%s275] sm:$0x4]
    %vm277 = vcmask 1042434
    %v278 = vsel %vm277, %v276, %v274
    %s279 = scalar_lea.vmem %s0, 110
    %v280 = vld [vmem:[%s279] sm:$0x8]
    %vm281 = vcmask 1043459
    %v282 = vsel %vm281, %v280, %v278
    %283 = vrot.lane.b32.xlu0 %v282, 68
    %v284 = vpop.permute.xlu0 %283
    %vm285 = vcmask 589344
    %286 = vst.msk [vmem:[#allocation0] ss:$8 sm:$0xf] %vm285, %v284
    %s287 = scalar_lea.vmem %s0, 16
    %v288 = vld [vmem:[%s287] sm:$0x1]
    %s289 = scalar_lea.vmem %s0, 47
    %v290 = vld [vmem:[%s289] sm:$0x2]
    %vm291 = vcmask 1041409
    %v292 = vsel %vm291, %v290, %v288
    %s293 = scalar_lea.vmem %s0, 78
    %v294 = vld [vmem:[%s293] sm:$0x4]
    %vm295 = vcmask 1042434
    %v296 = vsel %vm295, %v294, %v292
    %s297 = scalar_lea.vmem %s0, 109
    %v298 = vld [vmem:[%s297] sm:$0x8]
    %vm299 = vcmask 1043459
    %v300 = vsel %vm299, %v298, %v296
    %301 = vrot.lane.b32.xlu0 %v300, 64
    %v302 = vpop.permute.xlu0 %301
    %vm303 = vcmask 556544
    %304 = vst.msk [vmem:[#allocation0] ss:$8 sm:$0xf] %vm303, %v302
    %s305 = scalar_lea.vmem %s0, 15
    %v306 = vld [vmem:[%s305] sm:$0x1]
    %s307 = scalar_lea.vmem %s0, 46
    %v308 = vld [vmem:[%s307] sm:$0x2]
    %vm309 = vcmask 1041409
    %v310 = vsel %vm309, %v308, %v306
    %s311 = scalar_lea.vmem %s0, 77
    %v312 = vld [vmem:[%s311] sm:$0x4]
    %vm313 = vcmask 1042434
    %v314 = vsel %vm313, %v312, %v310
    %s315 = scalar_lea.vmem %s0, 108
    %v316 = vld [vmem:[%s315] sm:$0x8]
    %vm317 = vcmask 1043459
    %v318 = vsel %vm317, %v316, %v314
    %319 = vrot.lane.b32.xlu0 %v318, 60
    %v320 = vpop.permute.xlu0 %319
    %vm321 = vcmask 523744
    %322 = vst.msk [vmem:[#allocation0] ss:$8 sm:$0xf] %vm321, %v320
    %s323 = scalar_lea.vmem %s0, 14
    %v324 = vld [vmem:[%s323] sm:$0x1]
    %s325 = scalar_lea.vmem %s0, 45
    %v326 = vld [vmem:[%s325] sm:$0x2]
    %vm327 = vcmask 1041409
    %v328 = vsel %vm327, %v326, %v324
    %s329 = scalar_lea.vmem %s0, 76
    %v330 = vld [vmem:[%s329] sm:$0x4]
    %vm331 = vcmask 1042434
    %v332 = vsel %vm331, %v330, %v328
    %s333 = scalar_lea.vmem %s0, 107
    %v334 = vld [vmem:[%s333] sm:$0x8]
    %vm335 = vcmask 1043459
    %v336 = vsel %vm335, %v334, %v332
    %337 = vrot.lane.b32.xlu0 %v336, 56
    %v338 = vpop.permute.xlu0 %337
    %vm339 = vcmask 490944
    %340 = vst.msk [vmem:[#allocation0] ss:$8 sm:$0xf] %vm339, %v338
    %s341 = scalar_lea.vmem %s0, 13
    %v342 = vld [vmem:[%s341] sm:$0x1]
    %s343 = scalar_lea.vmem %s0, 44
    %v344 = vld [vmem:[%s343] sm:$0x2]
    %vm345 = vcmask 1041409
    %v346 = vsel %vm345, %v344, %v342
    %s347 = scalar_lea.vmem %s0, 75
    %v348 = vld [vmem:[%s347] sm:$0x4]
    %vm349 = vcmask 1042434
    %v350 = vsel %vm349, %v348, %v346
    %s351 = scalar_lea.vmem %s0, 106
    %v352 = vld [vmem:[%s351] sm:$0x8]
    %vm353 = vcmask 1043459
    %v354 = vsel %vm353, %v352, %v350
    %355 = vrot.lane.b32.xlu0 %v354, 52
    %v356 = vpop.permute.xlu0 %355
    %vm357 = vcmask 458144
    %358 = vst.msk [vmem:[#allocation0] ss:$8 sm:$0xf] %vm357, %v356
    %s359 = scalar_lea.vmem %s0, 12
    %v360 = vld [vmem:[%s359] sm:$0x1]
    %s361 = scalar_lea.vmem %s0, 43
    %v362 = vld [vmem:[%s361] sm:$0x2]
    %vm363 = vcmask 1041409
    %v364 = vsel %vm363, %v362, %v360
    %s365 = scalar_lea.vmem %s0, 74
    %v366 = vld [vmem:[%s365] sm:$0x4]
    %vm367 = vcmask 1042434
    %v368 = vsel %vm367, %v366, %v364
    %s369 = scalar_lea.vmem %s0, 105
    %v370 = vld [vmem:[%s369] sm:$0x8]
    %vm371 = vcmask 1043459
    %v372 = vsel %vm371, %v370, %v368
    %373 = vrot.lane.b32.xlu0 %v372, 48
    %v374 = vpop.permute.xlu0 %373
    %vm375 = vcmask 425344
    %376 = vst.msk [vmem:[#allocation0] ss:$8 sm:$0xf] %vm375, %v374
    %s377 = scalar_lea.vmem %s0, 11
    %v378 = vld [vmem:[%s377] sm:$0x1]
    %s379 = scalar_lea.vmem %s0, 42
    %v380 = vld [vmem:[%s379] sm:$0x2]
    %vm381 = vcmask 1041409
    %v382 = vsel %vm381, %v380, %v378
    %s383 = scalar_lea.vmem %s0, 73
    %v384 = vld [vmem:[%s383] sm:$0x4]
    %vm385 = vcmask 1042434
    %v386 = vsel %vm385, %v384, %v382
    %s387 = scalar_lea.vmem %s0, 104
    %v388 = vld [vmem:[%s387] sm:$0x8]
    %vm389 = vcmask 1043459
    %v390 = vsel %vm389, %v388, %v386
    %391 = vrot.lane.b32.xlu0 %v390, 44
    %v392 = vpop.permute.xlu0 %391
    %vm393 = vcmask 392544
    %394 = vst.msk [vmem:[#allocation0] ss:$8 sm:$0xf] %vm393, %v392
    %s395 = scalar_lea.vmem %s0, 10
    %v396 = vld [vmem:[%s395] sm:$0x1]
    %s397 = scalar_lea.vmem %s0, 41
    %v398 = vld [vmem:[%s397] sm:$0x2]
    %vm399 = vcmask 1041409
    %v400 = vsel %vm399, %v398, %v396
    %s401 = scalar_lea.vmem %s0, 72
    %v402 = vld [vmem:[%s401] sm:$0x4]
    %vm403 = vcmask 1042434
    %v404 = vsel %vm403, %v402, %v400
    %s405 = scalar_lea.vmem %s0, 103
    %v406 = vld [vmem:[%s405] sm:$0x8]
    %vm407 = vcmask 1043459
    %v408 = vsel %vm407, %v406, %v404
    %409 = vrot.lane.b32.xlu0 %v408, 40
    %v410 = vpop.permute.xlu0 %409
    %vm411 = vcmask 359744
    %412 = vst.msk [vmem:[#allocation0] ss:$8 sm:$0xf] %vm411, %v410
    %s413 = scalar_lea.vmem %s0, 9
    %v414 = vld [vmem:[%s413] sm:$0x1]
    %s415 = scalar_lea.vmem %s0, 40
    %v416 = vld [vmem:[%s415] sm:$0x2]
    %vm417 = vcmask 1041409
    %v418 = vsel %vm417, %v416, %v414
    %s419 = scalar_lea.vmem %s0, 71
    %v420 = vld [vmem:[%s419] sm:$0x4]
    %vm421 = vcmask 1042434
    %v422 = vsel %vm421, %v420, %v418
    %s423 = scalar_lea.vmem %s0, 102
    %v424 = vld [vmem:[%s423] sm:$0x8]
    %vm425 = vcmask 1043459
    %v426 = vsel %vm425, %v424, %v422
    %427 = vrot.lane.b32.xlu0 %v426, 36
    %v428 = vpop.permute.xlu0 %427
    %vm429 = vcmask 326944
    %430 = vst.msk [vmem:[#allocation0] ss:$8 sm:$0xf] %vm429, %v428
    %s431 = scalar_lea.vmem %s0, 8
    %v432 = vld [vmem:[%s431] sm:$0x1]
    %s433 = scalar_lea.vmem %s0, 39
    %v434 = vld [vmem:[%s433] sm:$0x2]
    %vm435 = vcmask 1041409
    %v436 = vsel %vm435, %v434, %v432
    %s437 = scalar_lea.vmem %s0, 70
    %v438 = vld [vmem:[%s437] sm:$0x4]
    %vm439 = vcmask 1042434
    %v440 = vsel %vm439, %v438, %v436
    %s441 = scalar_lea.vmem %s0, 101
    %v442 = vld [vmem:[%s441] sm:$0x8]
    %vm443 = vcmask 1043459
    %v444 = vsel %vm443, %v442, %v440
    %445 = vrot.lane.b32.xlu0 %v444, 32
    %v446 = vpop.permute.xlu0 %445
    %vm447 = vcmask 294144
    %448 = vst.msk [vmem:[#allocation0] ss:$8 sm:$0xf] %vm447, %v446
    %s449 = scalar_lea.vmem %s0, 7
    %v450 = vld [vmem:[%s449] sm:$0x1]
    %s451 = scalar_lea.vmem %s0, 38
    %v452 = vld [vmem:[%s451] sm:$0x2]
    %vm453 = vcmask 1041409
    %v454 = vsel %vm453, %v452, %v450
    %s455 = scalar_lea.vmem %s0, 69
    %v456 = vld [vmem:[%s455] sm:$0x4]
    %vm457 = vcmask 1042434
    %v458 = vsel %vm457, %v456, %v454
    %s459 = scalar_lea.vmem %s0, 100
    %v460 = vld [vmem:[%s459] sm:$0x8]
    %vm461 = vcmask 1043459
    %v462 = vsel %vm461, %v460, %v458
    %463 = vrot.lane.b32.xlu0 %v462, 28
    %v464 = vpop.permute.xlu0 %463
    %vm465 = vcmask 261344
    %466 = vst.msk [vmem:[#allocation0] ss:$8 sm:$0xf] %vm465, %v464
    %s467 = scalar_lea.vmem %s0, 6
    %v468 = vld [vmem:[%s467] sm:$0x1]
    %s469 = scalar_lea.vmem %s0, 37
    %v470 = vld [vmem:[%s469] sm:$0x2]
    %vm471 = vcmask 1041409
    %v472 = vsel %vm471, %v470, %v468
    %s473 = scalar_lea.vmem %s0, 68
    %v474 = vld [vmem:[%s473] sm:$0x4]
    %vm475 = vcmask 1042434
    %v476 = vsel %vm475, %v474, %v472
    %s477 = scalar_lea.vmem %s0, 99
    %v478 = vld [vmem:[%s477] sm:$0x8]
    %vm479 = vcmask 1043459
    %v480 = vsel %vm479, %v478, %v476
    %481 = vrot.lane.b32.xlu0 %v480, 24
    %v482 = vpop.permute.xlu0 %481
    %vm483 = vcmask 228544
    %484 = vst.msk [vmem:[#allocation0] ss:$8 sm:$0xf] %vm483, %v482
    %s485 = scalar_lea.vmem %s0, 5
    %v486 = vld [vmem:[%s485] sm:$0x1]
    %s487 = scalar_lea.vmem %s0, 36
    %v488 = vld [vmem:[%s487] sm:$0x2]
    %vm489 = vcmask 1041409
    %v490 = vsel %vm489, %v488, %v486
    %s491 = scalar_lea.vmem %s0, 67
    %v492 = vld [vmem:[%s491] sm:$0x4]
    %vm493 = vcmask 1042434
    %v494 = vsel %vm493, %v492, %v490
    %s495 = scalar_lea.vmem %s0, 98
    %v496 = vld [vmem:[%s495] sm:$0x8]
    %vm497 = vcmask 1043459
    %v498 = vsel %vm497, %v496, %v494
    %499 = vrot.lane.b32.xlu0 %v498, 20
    %v500 = vpop.permute.xlu0 %499
    %vm501 = vcmask 195744
    %502 = vst.msk [vmem:[#allocation0] ss:$8 sm:$0xf] %vm501, %v500
    %s503 = scalar_lea.vmem %s0, 4
    %v504 = vld [vmem:[%s503] sm:$0x1]
    %s505 = scalar_lea.vmem %s0, 35
    %v506 = vld [vmem:[%s505] sm:$0x2]
    %vm507 = vcmask 1041409
    %v508 = vsel %vm507, %v506, %v504
    %s509 = scalar_lea.vmem %s0, 66
    %v510 = vld [vmem:[%s509] sm:$0x4]
    %vm511 = vcmask 1042434
    %v512 = vsel %vm511, %v510, %v508
    %s513 = scalar_lea.vmem %s0, 97
    %v514 = vld [vmem:[%s513] sm:$0x8]
    %vm515 = vcmask 1043459
    %v516 = vsel %vm515, %v514, %v512
    %517 = vrot.lane.b32.xlu0 %v516, 16
    %v518 = vpop.permute.xlu0 %517
    %vm519 = vcmask 162944
    %520 = vst.msk [vmem:[#allocation0] ss:$8 sm:$0xf] %vm519, %v518
    %s521 = scalar_lea.vmem %s0, 3
    %v522 = vld [vmem:[%s521] sm:$0x1]
    %s523 = scalar_lea.vmem %s0, 34
    %v524 = vld [vmem:[%s523] sm:$0x2]
    %vm525 = vcmask 1041409
    %v526 = vsel %vm525, %v524, %v522
    %s527 = scalar_lea.vmem %s0, 65
    %v528 = vld [vmem:[%s527] sm:$0x4]
    %vm529 = vcmask 1042434
    %v530 = vsel %vm529, %v528, %v526
    %s531 = scalar_lea.vmem %s0, 96
    %v532 = vld [vmem:[%s531] sm:$0x8]
    %vm533 = vcmask 1043459
    %v534 = vsel %vm533, %v532, %v530
    %535 = vrot.lane.b32.xlu0 %v534, 12
    %v536 = vpop.permute.xlu0 %535
    %vm537 = vcmask 130144
    %538 = vst.msk [vmem:[#allocation0] ss:$8 sm:$0xf] %vm537, %v536
    %s539 = scalar_lea.vmem %s0, 2
    %v540 = vld [vmem:[%s539] sm:$0x1]
    %s541 = scalar_lea.vmem %s0, 33
    %v542 = vld [vmem:[%s541] sm:$0x2]
    %vm543 = vcmask 1041409
    %v544 = vsel %vm543, %v542, %v540
    %s545 = scalar_lea.vmem %s0, 64
    %v546 = vld [vmem:[%s545] sm:$0x4]
    %vm547 = vcmask 1042434
    %v548 = vsel %vm547, %v546, %v544
    %s549 = scalar_lea.vmem %s0, 95
    %v550 = vld [vmem:[%s549] sm:$0x8]
    %vm551 = vcmask 1043459
    %v552 = vsel %vm551, %v550, %v548
    %553 = vrot.lane.b32.xlu0 %v552, 8
    %v554 = vpop.permute.xlu0 %553
    %vm555 = vcmask 97344
    %556 = vst.msk [vmem:[#allocation0] ss:$8 sm:$0xf] %vm555, %v554
    %s557 = scalar_lea.vmem %s0, 1
    %v558 = vld [vmem:[%s557] sm:$0x1]
    %s559 = scalar_lea.vmem %s0, 32
    %v560 = vld [vmem:[%s559] sm:$0x2]
    %vm561 = vcmask 1041409
    %v562 = vsel %vm561, %v560, %v558
    %s563 = scalar_lea.vmem %s0, 63
    %v564 = vld [vmem:[%s563] sm:$0x4]
    %vm565 = vcmask 1042434
    %v566 = vsel %vm565, %v564, %v562
    %s567 = scalar_lea.vmem %s0, 94
    %v568 = vld [vmem:[%s567] sm:$0x8]
    %vm569 = vcmask 1043459
    %v570 = vsel %vm569, %v568, %v566
    %571 = vrot.lane.b32.xlu0 %v570, 4
    %v572 = vpop.permute.xlu0 %571
    %vm573 = vcmask 64544
    %574 = vst.msk [vmem:[#allocation0] ss:$8 sm:$0xf] %vm573, %v572
    %s576 = sshllo.u32 0, 1
    %v578 = vld [vmem:[#allocation0] sm:%s576]
    %s579 = sshllo.u32 0, 1
    %580 = vst [vmem:[%s1] sm:%s579] %v578
    %s581 = scalar_lea.vmem [#allocation0], 8
    %v582 = vld [vmem:[%s581] sm:%s576]
    %s583 = sshllo.u32 0, 1
    %s584 = scalar_lea.vmem %s1, 1
    %585 = vst [vmem:[%s584] sm:%s583] %v582
    %s586 = scalar_lea.vmem [#allocation0], 16
    %v587 = vld [vmem:[%s586] sm:%s576]
    %s588 = sshllo.u32 0, 1
    %s589 = smul.addr 1, 2
    %s590 = scalar_lea.vmem %s1, %s589
    %591 = vst [vmem:[%s590] sm:%s588] %v587
    %s592 = scalar_lea.vmem [#allocation0], 24
    %v593 = vld [vmem:[%s592] sm:%s576]
    %s594 = sshllo.u32 0, 1
    %s595 = smul.addr 1, 3
    %s596 = scalar_lea.vmem %s1, %s595
    %597 = vst [vmem:[%s596] sm:%s594] %v593

// kernel: ublock_forward.10
$region0: #{ublock_forward.10}
  #allocation0 [shape = 'u32[]', space=smem, size = 0x4, offset = 0x4, fixed_abs, tag = 'smem constant byte address 0x4 - core index']
  #allocation1 [shape = 'u32[144,128]{1,0:T(1,128)}', space=vmem, size = 0x12000, scoped, tag = 'internal scratch']
  %s0 = inlined_call_operand.vmem [shape: bf16[2,4,128], index: 0, kind: input, shape index: {}]
  %s1 = inlined_call_operand.vmem [shape: bf16[1,128,512], index: 1, kind: input, shape index: {}]
  %s2 = inlined_call_operand.vmem [shape: f32[1,512], index: 2, kind: input, shape index: {}]
  %s3 = inlined_call_operand.vmem [shape: bf16[2,4,512], index: 3, kind: output, shape index: {}]
  %s4 = sld [smem:[#allocation0]]
  $region45: #{ublock_forward.10} parent=0
    _
  %s6 = ssub.s32 1, %s4
  %s7 = scalar_select 0, %s6, %s4
  loop: start=0, step=1, limit=4
  $region2: #{ublock_forward.10} parent=0 // loop_pre_header
    _
  $region3: #{ublock_forward.10} parent=0 // loop_header
    %s9 = sphi 0, %s13
    %p10 = scmp.ge.s32.totalorder %s9, 4
    %s19 = sphi 0, %s21
    %s22 = sphi 0, %s19
    %s23 = sphi 0, %s22
    %s39 = sphi 0, %s23
    %s43 = sphi 0, %s43
    %s45 = sphi 0, %s43
    %s46 = sphi 0, %s45
    %s60 = sphi 0, %s46
    %s64 = sphi 0, %s64
    %s66 = sphi 0, %s64
    %s67 = sphi 0, %s66
    %s81 = sphi 0, %s67
    %s87 = sphi 0, %s89
    %s90 = sphi 0, %s87
    %s91 = sphi 0, %s90
    %s107 = sphi 0, %s91
  $region4: #{ublock_forward.10} parent=0 // loop_header_branch
    %12 = sbr.rel (%p10) target = $region8
  $region5: #{ublock_forward.10} parent=0 // loop_body
    %s14 = ssub.s32 %s9, 1
    %s15 = ssub.s32 %s9, 2
    %s16 = sadd.s32 %s9, 1
    %s17 = ssub.s32 %s9, %s16
    %p18 = scmp.eq.s32.totalorder %s17, 0
    %s20 = sadd.s32 %s19, 1
    %s21 = scalar_select %p18, %s19, %s20
    %p24 = pneg %p18
    %p25 = scmp.eq.s32.totalorder %s9, 1
    %p26 = por %p24, %p25
    %p27 = scmp.ne.s32.totalorder %s19, %s22
    %p28 = scmp.eq.s32.totalorder %s9, 0
    %p29 = por %p27, %p28
    %p30 = scmp.ne.s32.totalorder %s19, %s22
    %p31 = scmp.eq.s32.totalorder %s14, 1
    %p32 = por %p30, %p31
    %p33 = scmp.ne.s32.totalorder %s22, %s23
    %p34 = scmp.eq.s32.totalorder %s14, 0
    %p35 = por %p33, %p34
    %p36 = scmp.ne.s32.totalorder %s22, %s23
    %p37 = scmp.eq.s32.totalorder %s15, 1
    %p38 = por %p36, %p37
    %p40 = scmp.ne.s32.totalorder %s23, %s39
    %p41 = scmp.eq.s32.totalorder %s15, 0
    %p42 = por %p40, %p41
    %s44 = sadd.s32 %s43, 1
    %p47 = scmp.eq.s32.totalorder %s9, 1
    %p48 = scmp.ne.s32.totalorder %s43, %s45
    %p49 = scmp.eq.s32.totalorder %s9, 0
    %p50 = por %p48, %p49
    %p51 = scmp.ne.s32.totalorder %s43, %s45
    %p52 = scmp.eq.s32.totalorder %s14, 1
    %p53 = por %p51, %p52
    %p54 = scmp.ne.s32.totalorder %s45, %s46
    %p55 = scmp.eq.s32.totalorder %s14, 0
    %p56 = por %p54, %p55
    %p57 = scmp.ne.s32.totalorder %s45, %s46
    %p58 = scmp.eq.s32.totalorder %s15, 1
    %p59 = por %p57, %p58
    %p61 = scmp.ne.s32.totalorder %s46, %s60
    %p62 = scmp.eq.s32.totalorder %s15, 0
    %p63 = por %p61, %p62
    %s65 = sadd.s32 %s64, 1
    %p68 = scmp.eq.s32.totalorder %s9, 1
    %p69 = scmp.ne.s32.totalorder %s64, %s66
    %p70 = scmp.eq.s32.totalorder %s9, 0
    %p71 = por %p69, %p70
    %p72 = scmp.ne.s32.totalorder %s64, %s66
    %p73 = scmp.eq.s32.totalorder %s14, 1
    %p74 = por %p72, %p73
    %p75 = scmp.ne.s32.totalorder %s66, %s67
    %p76 = scmp.eq.s32.totalorder %s14, 0
    %p77 = por %p75, %p76
    %p78 = scmp.ne.s32.totalorder %s66, %s67
    %p79 = scmp.eq.s32.totalorder %s15, 1
    %p80 = por %p78, %p79
    %p82 = scmp.ne.s32.totalorder %s67, %s81
    %p83 = scmp.eq.s32.totalorder %s15, 0
    %p84 = por %p82, %p83
    %s85 = ssub.s32 %s9, %s16
    %p86 = scmp.eq.s32.totalorder %s85, 0
    %s88 = sadd.s32 %s87, 1
    %s89 = scalar_select %p86, %s87, %s88
    %p92 = pneg %p86
    %p93 = scmp.eq.s32.totalorder %s9, 1
    %p94 = por %p92, %p93
    %p95 = scmp.ne.s32.totalorder %s87, %s90
    %p96 = scmp.eq.s32.totalorder %s9, 0
    %p97 = por %p95, %p96
    %p98 = scmp.ne.s32.totalorder %s87, %s90
    %p99 = scmp.eq.s32.totalorder %s14, 1
    %p100 = por %p98, %p99
    %p101 = scmp.ne.s32.totalorder %s90, %s91
    %p102 = scmp.eq.s32.totalorder %s14, 0
    %p103 = por %p101, %p102
    %p104 = scmp.ne.s32.totalorder %s90, %s91
    %p105 = scmp.eq.s32.totalorder %s15, 1
    %p106 = por %p104, %p105
    %p108 = scmp.ne.s32.totalorder %s91, %s107
    %p109 = scmp.eq.s32.totalorder %s15, 0
    %p110 = por %p108, %p109
    %p111 = scmp.le.s32.totalorder 1, %s9
    %p112 = scmp.lt.s32.totalorder %s9, 3
    %p113 = pnand %p111, %p112
    %p114 = pneg %p113
    // Predicated region
    $region9: #{ublock_forward.10} parent=5 // pred_check
      _
    $region10: #{ublock_forward.10} parent=5 // pred_check_branch
      %116 = sbr.rel (%p113) target = $region12
    $region11: #{ublock_forward.10} parent=5 // pred_region
      %s117 = ssub.s32 %s9, 1
      // Predicated region
      $region13: #{ublock_forward.10} parent=11 // pred_check
        %p118 = pneg %p56
      $region14: #{ublock_forward.10} parent=11 // pred_check_branch
        %120 = sbr.rel (%p118) target = $region16
      $region15: #{ublock_forward.10} parent=11 // pred_region
        _
      $region16: #{ublock_forward.10} parent=11 // pred_fallthru
        _
      // Predicated region
      $region17: #{ublock_forward.10} parent=11 // pred_check
        %p121 = pneg %p77
      $region18: #{ublock_forward.10} parent=11 // pred_check_branch
        %123 = sbr.rel (%p121) target = $region20
      $region19: #{ublock_forward.10} parent=11 // pred_region
        _
      $region20: #{ublock_forward.10} parent=11 // pred_fallthru
        _
    $region12: #{ublock_forward.10} parent=5 // pred_fallthru
      _
    %p124 = scmp.lt.s32.totalorder %s9, 2
    // Predicated region
    $region21: #{ublock_forward.10} parent=5 // pred_check
      %p125 = pneg %p124
    $region22: #{ublock_forward.10} parent=5 // pred_check_branch
      %127 = sbr.rel (%p125) target = $region24
    $region23: #{ublock_forward.10} parent=5 // pred_region
      // Predicated region
      $region25: #{ublock_forward.10} parent=23 // pred_check
        %p128 = pneg %p29
      $region26: #{ublock_forward.10} parent=23 // pred_check_branch
        %130 = sbr.rel (%p128) target = $region28
      $region27: #{ublock_forward.10} parent=23 // pred_region
        %p131 = scmp.lt.s32.totalorder %s9, 1
        %s132 = scalar_select %p131, %s9, 1
        %s133 = smul.addr %s132, 2
        %s134 = scalar_lea.vmem %s0, %s133
      $region28: #{ublock_forward.10} parent=23 // pred_fallthru
        _
    $region24: #{ublock_forward.10} parent=5 // pred_fallthru
      _
    %p135 = scmp.le.s32.totalorder 1, %s9
    %p136 = scmp.lt.s32.totalorder %s9, 3
    %p137 = pnand %p135, %p136
    %p138 = pneg %p137
    // Predicated region
    $region29: #{ublock_forward.10} parent=5 // pred_check
      _
    $region30: #{ublock_forward.10} parent=5 // pred_check_branch
      %140 = sbr.rel (%p137) target = $region32
    $region31: #{ublock_forward.10} parent=5 // pred_region
      %s141 = ssub.s32 %s9, 1
      %p142 = scmp.lt.s32.totalorder %s14, 1
      %s143 = scalar_select %p142, %s14, 1
      %s144 = smul.addr %s143, 2
      %s145 = scalar_lea.vmem %s0, %s144
      %p146 = pneg %p35
      %p147 = pneg %p32
      %p148 = pneg %p56
      %p149 = pneg %p53
      %p150 = pneg %p77
      %p151 = pneg %p74
      %p152 = pneg %p103
      %p153 = pneg %p100
      %p154 = scmp.lt.s32.totalorder %s14, 1
      %s155 = scalar_select %p154, %s14, 1
      %s156 = smul.addr %s155, 4
      %s157 = smul.addr %s156, 2
      %s158 = scalar_lea.vmem %s3, %s157
      %p159 = scmp.lt.s32.totalorder %s14, 1
      %s160 = scalar_select %p159, %s14, 1
      %s161 = smul.addr %s160, 2
      %s162 = scalar_lea.vmem %s0, %s161
      %p163 = scmp.lt.s32.totalorder %s14, 1
      %s164 = scalar_select %p163, %s14, 1
      %s165 = smul.addr %s164, 4
      %s166 = smul.addr %s165, 2
      %s167 = scalar_lea.vmem %s3, %s166
      %v169 = vld [vmem:[%s162] sm:$0x3]
      %v170 = vld [vmem:[%s1] sm:$0xff]
      %v171 = vld [vmem:[%s1 + $0x8] sm:$0xff]
      %v172 = vld [vmem:[%s1 + $0x10] sm:$0xff]
      %v173 = vld [vmem:[%s1 + $0x18] sm:$0xff]
      %v174 = vld [vmem:[%s1 + $0x20] sm:$0xff]
      %v175 = vld [vmem:[%s1 + $0x28] sm:$0xff]
      %v176 = vld [vmem:[%s1 + $0x30] sm:$0xff]
      %v177 = vld [vmem:[%s1 + $0x38] sm:$0xff]
      %v178 = vld [vmem:[%s1 + $0x40] sm:$0xff]
      %v179 = vld [vmem:[%s1 + $0x48] sm:$0xff]
      %v180 = vld [vmem:[%s1 + $0x50] sm:$0xff]
      %v181 = vld [vmem:[%s1 + $0x58] sm:$0xff]
      %v182 = vld [vmem:[%s1 + $0x60] sm:$0xff]
      %v183 = vld [vmem:[%s1 + $0x68] sm:$0xff]
      %v184 = vld [vmem:[%s1 + $0x70] sm:$0xff]
      %v185 = vld [vmem:[%s1 + $0x78] sm:$0xff]
      %v186 = vld [vmem:[%s1 + $0x80] sm:$0xff]
      %v187 = vld [vmem:[%s1 + $0x88] sm:$0xff]
      %v188 = vld [vmem:[%s1 + $0x90] sm:$0xff]
      %v189 = vld [vmem:[%s1 + $0x98] sm:$0xff]
      %v190 = vld [vmem:[%s1 + $0xa0] sm:$0xff]
      %v191 = vld [vmem:[%s1 + $0xa8] sm:$0xff]
      %v192 = vld [vmem:[%s1 + $0xb0] sm:$0xff]
      %v193 = vld [vmem:[%s1 + $0xb8] sm:$0xff]
      %v194 = vld [vmem:[%s1 + $0xc0] sm:$0xff]
      %v195 = vld [vmem:[%s1 + $0xc8] sm:$0xff]
      %v196 = vld [vmem:[%s1 + $0xd0] sm:$0xff]
      %v197 = vld [vmem:[%s1 + $0xd8] sm:$0xff]
      %v198 = vld [vmem:[%s1 + $0xe0] sm:$0xff]
      %v199 = vld [vmem:[%s1 + $0xe8] sm:$0xff]
      %v200 = vld [vmem:[%s1 + $0xf0] sm:$0xff]
      %v201 = vld [vmem:[%s1 + $0xf8] sm:$0xff]
      %v202 = vld [vmem:[%s2] sm:$0xf]
      %v204 = vlaneseq
      %v205 = vshrl.u32 %v204, 7
      %v206 = vsub.s32 0, %v205
      %v207 = vrot.slane %v202, %v206
      %v208 = vlaneseq
      %v209 = vshrl.u32 %v208, 7
      %v210 = vsub.s32 1, %v209
      %v211 = vrot.slane %v202, %v210
      %v212 = vlaneseq
      %v213 = vshrl.u32 %v212, 7
      %v214 = vsub.s32 2, %v213
      %v215 = vrot.slane %v202, %v214
      %v216 = vlaneseq
      %v217 = vshrl.u32 %v216, 7
      %v218 = vsub.s32 3, %v217
      %v219 = vrot.slane %v202, %v218
      %v256 = vunpack.c.l.b16 %v170
      %v257 = vunpack.c.h.b16 %v170
      %v258 = vunpack.c.l.b16 %v171
      %v259 = vunpack.c.h.b16 %v171
      %v260 = vunpack.c.l.b16 %v172
      %v261 = vunpack.c.h.b16 %v172
      %v262 = vunpack.c.l.b16 %v173
      %v263 = vunpack.c.h.b16 %v173
      %v264 = vunpack.c.l.b16 %v174
      %v265 = vunpack.c.h.b16 %v174
      %v266 = vunpack.c.l.b16 %v175
      %v267 = vunpack.c.h.b16 %v175
      %v268 = vunpack.c.l.b16 %v176
      %v269 = vunpack.c.h.b16 %v176
      %v270 = vunpack.c.l.b16 %v177
      %v271 = vunpack.c.h.b16 %v177
      %v272 = vunpack.c.l.b16 %v178
      %v273 = vunpack.c.h.b16 %v178
      %v274 = vunpack.c.l.b16 %v179
      %v275 = vunpack.c.h.b16 %v179
      %v276 = vunpack.c.l.b16 %v180
      %v277 = vunpack.c.h.b16 %v180
      %v278 = vunpack.c.l.b16 %v181
      %v279 = vunpack.c.h.b16 %v181
      %v280 = vunpack.c.l.b16 %v182
      %v281 = vunpack.c.h.b16 %v182
      %v282 = vunpack.c.l.b16 %v183
      %v283 = vunpack.c.h.b16 %v183
      %v284 = vunpack.c.l.b16 %v184
      %v285 = vunpack.c.h.b16 %v184
      %v286 = vunpack.c.l.b16 %v185
      %v287 = vunpack.c.h.b16 %v185
      %v288 = vunpack.c.l.b16 %v186
      %v289 = vunpack.c.h.b16 %v186
      %v290 = vunpack.c.l.b16 %v187
      %v291 = vunpack.c.h.b16 %v187
      %v292 = vunpack.c.l.b16 %v188
      %v293 = vunpack.c.h.b16 %v188
      %v294 = vunpack.c.l.b16 %v189
      %v295 = vunpack.c.h.b16 %v189
      %v296 = vunpack.c.l.b16 %v190
      %v297 = vunpack.c.h.b16 %v190
      %v298 = vunpack.c.l.b16 %v191
      %v299 = vunpack.c.h.b16 %v191
      %v300 = vunpack.c.l.b16 %v192
      %v301 = vunpack.c.h.b16 %v192
      %v302 = vunpack.c.l.b16 %v193
      %v303 = vunpack.c.h.b16 %v193
      %v304 = vunpack.c.l.b16 %v194
      %v305 = vunpack.c.h.b16 %v194
      %v306 = vunpack.c.l.b16 %v195
      %v307 = vunpack.c.h.b16 %v195
      %v308 = vunpack.c.l.b16 %v196
      %v309 = vunpack.c.h.b16 %v196
      %v310 = vunpack.c.l.b16 %v197
      %v311 = vunpack.c.h.b16 %v197
      %v312 = vunpack.c.l.b16 %v198
      %v313 = vunpack.c.h.b16 %v198
      %v314 = vunpack.c.l.b16 %v199
      %v315 = vunpack.c.h.b16 %v199
      %v316 = vunpack.c.l.b16 %v200
      %v317 = vunpack.c.h.b16 %v200
      %v318 = vunpack.c.l.b16 %v201
      %v319 = vunpack.c.h.b16 %v201
      %v320 = vpack.c.b16 %v260, %v256
      %v321 = vpack.c.b16 %v261, %v257
      %v322 = vpack.c.b16 %v262, %v258
      %v323 = vpack.c.b16 %v263, %v259
      %v324 = vpack.c.b16 %v268, %v264
      %v325 = vpack.c.b16 %v269, %v265
      %v326 = vpack.c.b16 %v270, %v266
      %v327 = vpack.c.b16 %v271, %v267
      %v328 = vpack.c.b16 %v276, %v272
      %v329 = vpack.c.b16 %v277, %v273
      %v330 = vpack.c.b16 %v278, %v274
      %v331 = vpack.c.b16 %v279, %v275
      %v332 = vpack.c.b16 %v284, %v280
      %v333 = vpack.c.b16 %v285, %v281
      %v334 = vpack.c.b16 %v286, %v282
      %v335 = vpack.c.b16 %v287, %v283
      %v336 = vpack.c.b16 %v292, %v288
      %v337 = vpack.c.b16 %v293, %v289
      %v338 = vpack.c.b16 %v294, %v290
      %v339 = vpack.c.b16 %v295, %v291
      %v340 = vpack.c.b16 %v300, %v296
      %v341 = vpack.c.b16 %v301, %v297
      %v342 = vpack.c.b16 %v302, %v298
      %v343 = vpack.c.b16 %v303, %v299
      %v344 = vpack.c.b16 %v308, %v304
      %v345 = vpack.c.b16 %v309, %v305
      %v346 = vpack.c.b16 %v310, %v306
      %v347 = vpack.c.b16 %v311, %v307
      %v348 = vpack.c.b16 %v316, %v312
      %v349 = vpack.c.b16 %v317, %v313
      %v350 = vpack.c.b16 %v318, %v314
      %v351 = vpack.c.b16 %v319, %v315
      %384 = vmatprep.subr.bf16.mxu0 %v321
      %385 = vmatpush1.bf16.msra.mxu0 %v320
      %386 = vmatprep.subr.bf16.mxu0 %v325
      %387 = vmatpush1.bf16.msra.mxu0 %v324
      %388 = vmatprep.subr.bf16.mxu0 %v329
      %389 = vmatpush1.bf16.msra.mxu0 %v328
      %390 = vmatprep.subr.bf16.mxu0 %v333
      %391 = vmatpush1.bf16.msra.mxu0 %v332
      %392 = vmatprep.subr.bf16.mxu0 %v337
      %393 = vmatpush1.bf16.msra.mxu0 %v336
      %394 = vmatprep.subr.bf16.mxu0 %v341
      %395 = vmatpush1.bf16.msra.mxu0 %v340
      %396 = vmatprep.subr.bf16.mxu0 %v345
      %397 = vmatpush1.bf16.msra.mxu0 %v344
      %398 = vmatprep.subr.bf16.mxu0 %v349
      %399 = vmatpush1.bf16.msra.mxu0 %v348
      %400 = vmatprep.subr.bf16.mxu0 0
      %401 = vmatpush1.bf16.msra.mxu0 0
      %402 = vmatprep.subr.bf16.mxu0 0
      %403 = vmatpush1.bf16.msra.mxu0 0
      %404 = vmatprep.subr.bf16.mxu0 0
      %405 = vmatpush1.bf16.msra.mxu0 0
      %406 = vmatprep.subr.bf16.mxu0 0
      %407 = vmatpush1.bf16.msra.mxu0 0
      %408 = vmatprep.subr.bf16.mxu0 0
      %409 = vmatpush1.bf16.msra.mxu0 0
      %410 = vmatprep.subr.bf16.mxu0 0
      %411 = vmatpush1.bf16.msra.mxu0 0
      %412 = vmatprep.subr.bf16.mxu0 0
      %413 = vmatpush1.bf16.msra.mxu0 0
      %414 = vmatprep.subr.bf16.mxu0 0
      %415 = vmatpush1.bf16.msra.mxu0 0
      %416 = vmatprep.mubr.bf16.mxu0 0
      %417 = vmatmul.mubr.bf16.gmra.mrb[0].mxu0 %v169
      %v418 = vpop.f32.mrb[0].mxu0
      %v419 = vadd.f32 %v207, %v418
      %v420 = vpop.f32.mrb[0].mxu0
      %v421 = vadd.f32 %v211, %v420
      %v422 = vpop.f32.mrb[0].mxu0
      %v423 = vpop.f32.mrb[0].mxu0
      %424 = vdwg.mxu0
      %425 = vmatprep.subr.bf16.mxu0 %v323
      %426 = vmatpush1.bf16.msra.mxu0 %v322
      %427 = vmatprep.subr.bf16.mxu0 %v327
      %428 = vmatpush1.bf16.msra.mxu0 %v326
      %429 = vmatprep.subr.bf16.mxu0 %v331
      %430 = vmatpush1.bf16.msra.mxu0 %v330
      %431 = vmatprep.subr.bf16.mxu0 %v335
      %432 = vmatpush1.bf16.msra.mxu0 %v334
      %433 = vmatprep.subr.bf16.mxu0 %v339
      %434 = vmatpush1.bf16.msra.mxu0 %v338
      %435 = vmatprep.subr.bf16.mxu0 %v343
      %436 = vmatpush1.bf16.msra.mxu0 %v342
      %437 = vmatprep.subr.bf16.mxu0 %v347
      %438 = vmatpush1.bf16.msra.mxu0 %v346
      %439 = vmatprep.subr.bf16.mxu0 %v351
      %440 = vmatpush1.bf16.msra.mxu0 %v350
      %441 = vmatprep.subr.bf16.mxu0 0
      %442 = vmatpush1.bf16.msra.mxu0 0
      %443 = vmatprep.subr.bf16.mxu0 0
      %444 = vmatpush1.bf16.msra.mxu0 0
      %445 = vmatprep.subr.bf16.mxu0 0
      %446 = vmatpush1.bf16.msra.mxu0 0
      %447 = vmatprep.subr.bf16.mxu0 0
      %448 = vmatpush1.bf16.msra.mxu0 0
      %449 = vmatprep.subr.bf16.mxu0 0
      %450 = vmatpush1.bf16.msra.mxu0 0
      %451 = vmatprep.subr.bf16.mxu0 0
      %452 = vmatpush1.bf16.msra.mxu0 0
      %453 = vmatprep.subr.bf16.mxu0 0
      %454 = vmatpush1.bf16.msra.mxu0 0
      %455 = vmatprep.subr.bf16.mxu0 0
      %456 = vmatpush1.bf16.msra.mxu0 0
      %457 = vmatprep.mubr.bf16.mxu0 0
      %458 = vmatmul.mubr.bf16.gmra.mrb[0].mxu0 %v169
      %v459 = vpop.f32.mrb[0].mxu0
      %v460 = vadd.f32 %v215, %v459
      %v461 = vpop.f32.mrb[0].mxu0
      %v462 = vadd.f32 %v219, %v461
      %v463 = vpop.f32.mrb[0].mxu0
      %v464 = vpop.f32.mrb[0].mxu0
      %465 = vdwg.mxu0
      %v466 = vpack.c.bf16 %v419, %v419
      %v467 = vpack.c.bf16 %v421, %v421
      %v468 = vpack.c.bf16 %v460, %v460
      %v469 = vpack.c.bf16 %v462, %v462
      %v474 = vcombine.low %v466, %v467
      %v475 = vcombine.low %v468, %v469
      %v477 = vunpack.c.l.s4 1983009808
      %v478 = vunpack.c.0.s8 %v477
      %v479 = vlaneseq
      %v480 = vshrl.u32 %v479, 7
      %v481 = vsub.s32 %v478, %v480
      %v482 = vrot.slane %v474, %v481
      %v484 = vunpack.c.l.s4 1983009808
      %v485 = vunpack.c.0.s8 %v484
      %v486 = vlaneseq
      %v487 = vshrl.u32 %v486, 7
      %v488 = vsub.s32 %v485, %v487
      %v489 = vrot.slane %v475, %v488
      %v490 = vcombine.low %v482, %v489
      %492 = vst [vmem:[%s167] sm:$0xff] %v490
      %p493 = scmp.lt.s32.totalorder %s14, 1
      %s494 = scalar_select %p493, %s14, 1
      %s495 = smul.addr %s494, 4
      %s496 = smul.addr %s495, 2
      %s497 = scalar_lea.vmem %s3, %s496
      // Predicated region
      $region33: #{ublock_forward.10} parent=31 // pred_check
        %p498 = pneg %p100
      $region34: #{ublock_forward.10} parent=31 // pred_check_branch
        %500 = sbr.rel (%p498) target = $region36
      $region35: #{ublock_forward.10} parent=31 // pred_region
        _
      $region36: #{ublock_forward.10} parent=31 // pred_fallthru
        _
    $region32: #{ublock_forward.10} parent=5 // pred_fallthru
      _
    %p501 = scmp.le.s32.totalorder 2, %s9
    // Predicated region
    $region37: #{ublock_forward.10} parent=5 // pred_check
      %p502 = pneg %p501
    $region38: #{ublock_forward.10} parent=5 // pred_check_branch
      %504 = sbr.rel (%p502) target = $region40
    $region39: #{ublock_forward.10} parent=5 // pred_region
      %s505 = ssub.s32 %s9, 2
      // Predicated region
      $region41: #{ublock_forward.10} parent=39 // pred_check
        %p506 = pneg %p106
      $region42: #{ublock_forward.10} parent=39 // pred_check_branch
        %508 = sbr.rel (%p506) target = $region44
      $region43: #{ublock_forward.10} parent=39 // pred_region
        %p509 = scmp.lt.s32.totalorder %s15, 1
        %s510 = scalar_select %p509, %s15, 1
        %s511 = smul.addr %s510, 4
        %s512 = smul.addr %s511, 2
        %s513 = scalar_lea.vmem %s3, %s512
      $region44: #{ublock_forward.10} parent=39 // pred_fallthru
        _
    $region40: #{ublock_forward.10} parent=5 // pred_fallthru
      _
  $region6: #{ublock_forward.10} parent=0 // loop_footer
    %s13 = sadd.s32 1, %s9
  $region7: #{ublock_forward.10} parent=0 // loop_footer_branch
    %8 = sbr.rel target = $region3
  $region8: #{ublock_forward.10} parent=0 // loop_exit
    _

// kernel: ublock_forward.12
$region0: #{ublock_forward.12}
  #allocation0 [shape = 'u32[]', space=smem, size = 0x4, offset = 0x4, fixed_abs, tag = 'smem constant byte address 0x4 - core index']
  #allocation1 [shape = 'u32[144,128]{1,0:T(1,128)}', space=vmem, size = 0x12000, scoped, tag = 'internal scratch']
  %s0 = inlined_call_operand.vmem [shape: bf16[2,10,800], index: 0, kind: input, shape index: {}]
  %s1 = inlined_call_operand.vmem [shape: bf16[3,800,256], index: 1, kind: input, shape index: {}]
  %s2 = inlined_call_operand.vmem [shape: f32[1,256], index: 2, kind: input, shape index: {}]
  %s3 = inlined_call_operand.vmem [shape: bf16[2,8,256], index: 3, kind: output, shape index: {}]
  %s4 = sld [smem:[#allocation0]]
  $region45: #{ublock_forward.12} parent=0
    _
  %s6 = ssub.s32 1, %s4
  %s7 = scalar_select 0, %s6, %s4
  loop: start=0, step=1, limit=4
  $region2: #{ublock_forward.12} parent=0 // loop_pre_header
    _
  $region3: #{ublock_forward.12} parent=0 // loop_header
    %s9 = sphi 0, %s13
    %p10 = scmp.ge.s32.totalorder %s9, 4
    %s19 = sphi 0, %s21
    %s22 = sphi 0, %s19
    %s23 = sphi 0, %s22
    %s39 = sphi 0, %s23
    %s43 = sphi 0, %s43
    %s45 = sphi 0, %s43
    %s46 = sphi 0, %s45
    %s60 = sphi 0, %s46
    %s64 = sphi 0, %s64
    %s66 = sphi 0, %s64
    %s67 = sphi 0, %s66
    %s81 = sphi 0, %s67
    %s87 = sphi 0, %s89
    %s90 = sphi 0, %s87
    %s91 = sphi 0, %s90
    %s107 = sphi 0, %s91
  $region4: #{ublock_forward.12} parent=0 // loop_header_branch
    %12 = sbr.rel (%p10) target = $region8
  $region5: #{ublock_forward.12} parent=0 // loop_body
    %s14 = ssub.s32 %s9, 1
    %s15 = ssub.s32 %s9, 2
    %s16 = sadd.s32 %s9, 1
    %s17 = ssub.s32 %s9, %s16
    %p18 = scmp.eq.s32.totalorder %s17, 0
    %s20 = sadd.s32 %s19, 1
    %s21 = scalar_select %p18, %s19, %s20
    %p24 = pneg %p18
    %p25 = scmp.eq.s32.totalorder %s9, 1
    %p26 = por %p24, %p25
    %p27 = scmp.ne.s32.totalorder %s19, %s22
    %p28 = scmp.eq.s32.totalorder %s9, 0
    %p29 = por %p27, %p28
    %p30 = scmp.ne.s32.totalorder %s19, %s22
    %p31 = scmp.eq.s32.totalorder %s14, 1
    %p32 = por %p30, %p31
    %p33 = scmp.ne.s32.totalorder %s22, %s23
    %p34 = scmp.eq.s32.totalorder %s14, 0
    %p35 = por %p33, %p34
    %p36 = scmp.ne.s32.totalorder %s22, %s23
    %p37 = scmp.eq.s32.totalorder %s15, 1
    %p38 = por %p36, %p37
    %p40 = scmp.ne.s32.totalorder %s23, %s39
    %p41 = scmp.eq.s32.totalorder %s15, 0
    %p42 = por %p40, %p41
    %s44 = sadd.s32 %s43, 1
    %p47 = scmp.eq.s32.totalorder %s9, 1
    %p48 = scmp.ne.s32.totalorder %s43, %s45
    %p49 = scmp.eq.s32.totalorder %s9, 0
    %p50 = por %p48, %p49
    %p51 = scmp.ne.s32.totalorder %s43, %s45
    %p52 = scmp.eq.s32.totalorder %s14, 1
    %p53 = por %p51, %p52
    %p54 = scmp.ne.s32.totalorder %s45, %s46
    %p55 = scmp.eq.s32.totalorder %s14, 0
    %p56 = por %p54, %p55
    %p57 = scmp.ne.s32.totalorder %s45, %s46
    %p58 = scmp.eq.s32.totalorder %s15, 1
    %p59 = por %p57, %p58
    %p61 = scmp.ne.s32.totalorder %s46, %s60
    %p62 = scmp.eq.s32.totalorder %s15, 0
    %p63 = por %p61, %p62
    %s65 = sadd.s32 %s64, 1
    %p68 = scmp.eq.s32.totalorder %s9, 1
    %p69 = scmp.ne.s32.totalorder %s64, %s66
    %p70 = scmp.eq.s32.totalorder %s9, 0
    %p71 = por %p69, %p70
    %p72 = scmp.ne.s32.totalorder %s64, %s66
    %p73 = scmp.eq.s32.totalorder %s14, 1
    %p74 = por %p72, %p73
    %p75 = scmp.ne.s32.totalorder %s66, %s67
    %p76 = scmp.eq.s32.totalorder %s14, 0
    %p77 = por %p75, %p76
    %p78 = scmp.ne.s32.totalorder %s66, %s67
    %p79 = scmp.eq.s32.totalorder %s15, 1
    %p80 = por %p78, %p79
    %p82 = scmp.ne.s32.totalorder %s67, %s81
    %p83 = scmp.eq.s32.totalorder %s15, 0
    %p84 = por %p82, %p83
    %s85 = ssub.s32 %s9, %s16
    %p86 = scmp.eq.s32.totalorder %s85, 0
    %s88 = sadd.s32 %s87, 1
    %s89 = scalar_select %p86, %s87, %s88
    %p92 = pneg %p86
    %p93 = scmp.eq.s32.totalorder %s9, 1
    %p94 = por %p92, %p93
    %p95 = scmp.ne.s32.totalorder %s87, %s90
    %p96 = scmp.eq.s32.totalorder %s9, 0
    %p97 = por %p95, %p96
    %p98 = scmp.ne.s32.totalorder %s87, %s90
    %p99 = scmp.eq.s32.totalorder %s14, 1
    %p100 = por %p98, %p99
    %p101 = scmp.ne.s32.totalorder %s90, %s91
    %p102 = scmp.eq.s32.totalorder %s14, 0
    %p103 = por %p101, %p102
    %p104 = scmp.ne.s32.totalorder %s90, %s91
    %p105 = scmp.eq.s32.totalorder %s15, 1
    %p106 = por %p104, %p105
    %p108 = scmp.ne.s32.totalorder %s91, %s107
    %p109 = scmp.eq.s32.totalorder %s15, 0
    %p110 = por %p108, %p109
    %p111 = scmp.le.s32.totalorder 1, %s9
    %p112 = scmp.lt.s32.totalorder %s9, 3
    %p113 = pnand %p111, %p112
    %p114 = pneg %p113
    // Predicated region
    $region9: #{ublock_forward.12} parent=5 // pred_check
      _
    $region10: #{ublock_forward.12} parent=5 // pred_check_branch
      %116 = sbr.rel (%p113) target = $region12
    $region11: #{ublock_forward.12} parent=5 // pred_region
      %s117 = ssub.s32 %s9, 1
      // Predicated region
      $region13: #{ublock_forward.12} parent=11 // pred_check
        %p118 = pneg %p56
      $region14: #{ublock_forward.12} parent=11 // pred_check_branch
        %120 = sbr.rel (%p118) target = $region16
      $region15: #{ublock_forward.12} parent=11 // pred_region
        _
      $region16: #{ublock_forward.12} parent=11 // pred_fallthru
        _
      // Predicated region
      $region17: #{ublock_forward.12} parent=11 // pred_check
        %p121 = pneg %p77
      $region18: #{ublock_forward.12} parent=11 // pred_check_branch
        %123 = sbr.rel (%p121) target = $region20
      $region19: #{ublock_forward.12} parent=11 // pred_region
        _
      $region20: #{ublock_forward.12} parent=11 // pred_fallthru
        _
    $region12: #{ublock_forward.12} parent=5 // pred_fallthru
      _
    %p124 = scmp.lt.s32.totalorder %s9, 2
    // Predicated region
    $region21: #{ublock_forward.12} parent=5 // pred_check
      %p125 = pneg %p124
    $region22: #{ublock_forward.12} parent=5 // pred_check_branch
      %127 = sbr.rel (%p125) target = $region24
    $region23: #{ublock_forward.12} parent=5 // pred_region
      // Predicated region
      $region25: #{ublock_forward.12} parent=23 // pred_check
        %p128 = pneg %p29
      $region26: #{ublock_forward.12} parent=23 // pred_check_branch
        %130 = sbr.rel (%p128) target = $region28
      $region27: #{ublock_forward.12} parent=23 // pred_region
        %p131 = scmp.lt.s32.totalorder %s9, 1
        %s132 = scalar_select %p131, %s9, 1
        %s133 = smul.addr %s132, 14
        %s134 = smul.addr %s133, 4
        %s135 = scalar_lea.vmem %s0, %s134
      $region28: #{ublock_forward.12} parent=23 // pred_fallthru
        _
    $region24: #{ublock_forward.12} parent=5 // pred_fallthru
      _
    %p136 = scmp.le.s32.totalorder 1, %s9
    %p137 = scmp.lt.s32.totalorder %s9, 3
    %p138 = pnand %p136, %p137
    %p139 = pneg %p138
    // Predicated region
    $region29: #{ublock_forward.12} parent=5 // pred_check
      _
    $region30: #{ublock_forward.12} parent=5 // pred_check_branch
      %141 = sbr.rel (%p138) target = $region32
    $region31: #{ublock_forward.12} parent=5 // pred_region
      %s142 = ssub.s32 %s9, 1
      %p143 = scmp.lt.s32.totalorder %s14, 1
      %s144 = scalar_select %p143, %s14, 1
      %s145 = smul.addr %s144, 14
      %s146 = smul.addr %s145, 4
      %s147 = scalar_lea.vmem %s0, %s146
      %p148 = pneg %p35
      %p149 = pneg %p32
      %p150 = pneg %p56
      %p151 = pneg %p53
      %p152 = pneg %p77
      %p153 = pneg %p74
      %p154 = pneg %p103
      %p155 = pneg %p100
      %p156 = scmp.lt.s32.totalorder %s14, 1
      %s157 = scalar_select %p156, %s14, 1
      %s158 = smul.addr %s157, 2
      %s159 = smul.addr %s158, 4
      %s160 = scalar_lea.vmem %s3, %s159
      %p161 = scmp.lt.s32.totalorder %s14, 1
      %s162 = scalar_select %p161, %s14, 1
      %s163 = smul.addr %s162, 14
      %s164 = smul.addr %s163, 4
      %s165 = scalar_lea.vmem %s0, %s164
      %p166 = scmp.lt.s32.totalorder %s14, 1
      %s167 = scalar_select %p166, %s14, 1
      %s168 = smul.addr %s167, 2
      %s169 = smul.addr %s168, 4
      %s170 = scalar_lea.vmem %s3, %s169
      %v172 = vld [vmem:[%s165] sm:$0xff]
      %v173 = vld [vmem:[%s165 + $0x8] sm:$0xff]
      %v174 = vld [vmem:[%s165 + $0x10] sm:$0xff]
      %v175 = vld [vmem:[%s165 + $0x18] sm:$0xf]
      %v176 = vld [vmem:[%s1] sm:$0xff]
      %v177 = vld [vmem:[%s1 + $0x8] sm:$0xff]
      %v178 = vld [vmem:[%s1 + $0x10] sm:$0xff]
      %v179 = vld [vmem:[%s1 + $0x18] sm:$0xff]
      %v180 = vld [vmem:[%s1 + $0x20] sm:$0xff]
      %v181 = vld [vmem:[%s1 + $0x28] sm:$0xff]
      %v182 = vld [vmem:[%s1 + $0x30] sm:$0xff]
      %v183 = vld [vmem:[%s1 + $0x38] sm:$0xff]
      %v184 = vld [vmem:[%s1 + $0x40] sm:$0xff]
      %v185 = vld [vmem:[%s1 + $0x48] sm:$0xff]
      %v186 = vld [vmem:[%s1 + $0x50] sm:$0xff]
      %v187 = vld [vmem:[%s1 + $0x58] sm:$0xff]
      %v188 = vld [vmem:[%s1 + $0x60] sm:$0xff]
      %v189 = vld [vmem:[%s1 + $0x68] sm:$0xff]
      %v190 = vld [vmem:[%s1 + $0x70] sm:$0xff]
      %v191 = vld [vmem:[%s1 + $0x78] sm:$0xff]
      %v192 = vld [vmem:[%s1 + $0x80] sm:$0xff]
      %v193 = vld [vmem:[%s1 + $0x88] sm:$0xff]
      %v194 = vld [vmem:[%s1 + $0x90] sm:$0xff]
      %v195 = vld [vmem:[%s1 + $0x98] sm:$0xff]
      %v196 = vld [vmem:[%s1 + $0xa0] sm:$0xff]
      %v197 = vld [vmem:[%s1 + $0xa8] sm:$0xff]
      %v198 = vld [vmem:[%s1 + $0xb0] sm:$0xff]
      %v199 = vld [vmem:[%s1 + $0xb8] sm:$0xff]
      %v200 = vld [vmem:[%s1 + $0xc0] sm:$0xff]
      %v201 = vld [vmem:[%s1 + $0xc8] sm:$0xff]
      %v202 = vld [vmem:[%s1 + $0xd0] sm:$0xff]
      %v203 = vld [vmem:[%s1 + $0xd8] sm:$0xff]
      %v204 = vld [vmem:[%s1 + $0xe0] sm:$0xff]
      %v205 = vld [vmem:[%s1 + $0xe8] sm:$0xff]
      %v206 = vld [vmem:[%s1 + $0xf0] sm:$0xff]
      %v207 = vld [vmem:[%s1 + $0xf8] sm:$0xff]
      %v208 = vld [vmem:[%s1 + $0x100] sm:$0xff]
      %v209 = vld [vmem:[%s1 + $0x108] sm:$0xff]
      %v210 = vld [vmem:[%s1 + $0x110] sm:$0xff]
      %v211 = vld [vmem:[%s1 + $0x118] sm:$0xff]
      %v212 = vld [vmem:[%s1 + $0x120] sm:$0xff]
      %v213 = vld [vmem:[%s1 + $0x128] sm:$0xff]
      %v214 = vld [vmem:[%s1 + $0x130] sm:$0xff]
      %v215 = vld [vmem:[%s1 + $0x138] sm:$0xff]
      %v216 = vld [vmem:[%s1 + $0x140] sm:$0xff]
      %v217 = vld [vmem:[%s1 + $0x148] sm:$0xff]
      %v218 = vld [vmem:[%s1 + $0x150] sm:$0xff]
      %v219 = vld [vmem:[%s1 + $0x158] sm:$0xff]
      %v220 = vld [vmem:[%s1 + $0x160] sm:$0xff]
      %v221 = vld [vmem:[%s1 + $0x168] sm:$0xff]
      %v222 = vld [vmem:[%s1 + $0x170] sm:$0xff]
      %v223 = vld [vmem:[%s1 + $0x178] sm:$0xff]
      %v224 = vld [vmem:[%s1 + $0x180] sm:$0xff]
      %v225 = vld [vmem:[%s1 + $0x188] sm:$0xff]
      %v226 = vld [vmem:[%s1 + $0x190] sm:$0xff]
      %v227 = vld [vmem:[%s1 + $0x198] sm:$0xff]
      %v228 = vld [vmem:[%s1 + $0x1a0] sm:$0xff]
      %v229 = vld [vmem:[%s1 + $0x1a8] sm:$0xff]
      %v230 = vld [vmem:[%s1 + $0x1b0] sm:$0xff]
      %v231 = vld [vmem:[%s1 + $0x1b8] sm:$0xff]
      %v232 = vld [vmem:[%s1 + $0x1c0] sm:$0xff]
      %v233 = vld [vmem:[%s1 + $0x1c8] sm:$0xff]
      %v234 = vld [vmem:[%s1 + $0x1d0] sm:$0xff]
      %v235 = vld [vmem:[%s1 + $0x1d8] sm:$0xff]
      %v236 = vld [vmem:[%s1 + $0x1e0] sm:$0xff]
      %v237 = vld [vmem:[%s1 + $0x1e8] sm:$0xff]
      %v238 = vld [vmem:[%s1 + $0x1f0] sm:$0xff]
      %v239 = vld [vmem:[%s1 + $0x1f8] sm:$0xff]
      %v240 = vld [vmem:[%s1 + $0x200] sm:$0xff]
      %v241 = vld [vmem:[%s1 + $0x208] sm:$0xff]
      %v242 = vld [vmem:[%s1 + $0x210] sm:$0xff]
      %v243 = vld [vmem:[%s1 + $0x218] sm:$0xff]
      %v244 = vld [vmem:[%s1 + $0x220] sm:$0xff]
      %v245 = vld [vmem:[%s1 + $0x228] sm:$0xff]
      %v246 = vld [vmem:[%s1 + $0x230] sm:$0xff]
      %v247 = vld [vmem:[%s1 + $0x238] sm:$0xff]
      %v248 = vld [vmem:[%s1 + $0x240] sm:$0xff]
      %v249 = vld [vmem:[%s1 + $0x248] sm:$0xff]
      %v250 = vld [vmem:[%s1 + $0x250] sm:$0xff]
      %v251 = vld [vmem:[%s1 + $0x258] sm:$0xff]
      %v252 = vld [vmem:[%s1 + $0x260] sm:$0xff]
      %v253 = vld [vmem:[%s1 + $0x268] sm:$0xff]
      %v254 = vld [vmem:[%s1 + $0x270] sm:$0xff]
      %v255 = vld [vmem:[%s1 + $0x278] sm:$0xff]
      %v256 = vld [vmem:[%s1 + $0x280] sm:$0xff]
      %v257 = vld [vmem:[%s1 + $0x288] sm:$0xff]
      %v258 = vld [vmem:[%s1 + $0x290] sm:$0xff]
      %v259 = vld [vmem:[%s1 + $0x298] sm:$0xff]
      %v260 = vld [vmem:[%s1 + $0x2a0] sm:$0xff]
      %v261 = vld [vmem:[%s1 + $0x2a8] sm:$0xff]
      %v262 = vld [vmem:[%s1 + $0x2b0] sm:$0xff]
      %v263 = vld [vmem:[%s1 + $0x2b8] sm:$0xff]
      %v264 = vld [vmem:[%s1 + $0x2c0] sm:$0xff]
      %v265 = vld [vmem:[%s1 + $0x2c8] sm:$0xff]
      %v266 = vld [vmem:[%s1 + $0x2d0] sm:$0xff]
      %v267 = vld [vmem:[%s1 + $0x2d8] sm:$0xff]
      %v268 = vld [vmem:[%s1 + $0x2e0] sm:$0xff]
      %v269 = vld [vmem:[%s1 + $0x2e8] sm:$0xff]
      %v270 = vld [vmem:[%s1 + $0x2f0] sm:$0xff]
      %v271 = vld [vmem:[%s1 + $0x2f8] sm:$0xff]
      %v272 = vld [vmem:[%s1 + $0x300] sm:$0xff]
      %v273 = vld [vmem:[%s1 + $0x308] sm:$0xff]
      %v274 = vld [vmem:[%s1 + $0x310] sm:$0xff]
      %v275 = vld [vmem:[%s1 + $0x318] sm:$0xff]
      %v276 = vld [vmem:[%s165 + $0x1c] sm:$0x11]
      %v277 = vld [vmem:[%s165 + $0x24] sm:$0x11]
      %v278 = vld [vmem:[%s165 + $0x2c] sm:$0x11]
      %v279 = vld [vmem:[%s165 + $0x34] sm:$0x1]
      %s280 = scalar_lea.vmem %s1, 800
      %v281 = vld [vmem:[%s280] sm:$0xff]
      %v282 = vld [vmem:[%s280 + $0x8] sm:$0xff]
      %v283 = vld [vmem:[%s280 + $0x10] sm:$0xff]
      %v284 = vld [vmem:[%s280 + $0x18] sm:$0xff]
      %v285 = vld [vmem:[%s280 + $0x20] sm:$0xff]
      %v286 = vld [vmem:[%s280 + $0x28] sm:$0xff]
      %v287 = vld [vmem:[%s280 + $0x30] sm:$0xff]
      %v288 = vld [vmem:[%s280 + $0x38] sm:$0xff]
      %v289 = vld [vmem:[%s280 + $0x40] sm:$0xff]
      %v290 = vld [vmem:[%s280 + $0x48] sm:$0xff]
      %v291 = vld [vmem:[%s280 + $0x50] sm:$0xff]
      %v292 = vld [vmem:[%s280 + $0x58] sm:$0xff]
      %v293 = vld [vmem:[%s280 + $0x60] sm:$0xff]
      %v294 = vld [vmem:[%s280 + $0x68] sm:$0xff]
      %v295 = vld [vmem:[%s280 + $0x70] sm:$0xff]
      %v296 = vld [vmem:[%s280 + $0x78] sm:$0xff]
      %v297 = vld [vmem:[%s280 + $0x80] sm:$0xff]
      %v298 = vld [vmem:[%s280 + $0x88] sm:$0xff]
      %v299 = vld [vmem:[%s280 + $0x90] sm:$0xff]
      %v300 = vld [vmem:[%s280 + $0x98] sm:$0xff]
      %v301 = vld [vmem:[%s280 + $0xa0] sm:$0xff]
      %v302 = vld [vmem:[%s280 + $0xa8] sm:$0xff]
      %v303 = vld [vmem:[%s280 + $0xb0] sm:$0xff]
      %v304 = vld [vmem:[%s280 + $0xb8] sm:$0xff]
      %v305 = vld [vmem:[%s280 + $0xc0] sm:$0xff]
      %v306 = vld [vmem:[%s280 + $0xc8] sm:$0xff]
      %v307 = vld [vmem:[%s280 + $0xd0] sm:$0xff]
      %v308 = vld [vmem:[%s280 + $0xd8] sm:$0xff]
      %v309 = vld [vmem:[%s280 + $0xe0] sm:$0xff]
      %v310 = vld [vmem:[%s280 + $0xe8] sm:$0xff]
      %v311 = vld [vmem:[%s280 + $0xf0] sm:$0xff]
      %v312 = vld [vmem:[%s280 + $0xf8] sm:$0xff]
      %v313 = vld [vmem:[%s280 + $0x100] sm:$0xff]
      %v314 = vld [vmem:[%s280 + $0x108] sm:$0xff]
      %v315 = vld [vmem:[%s280 + $0x110] sm:$0xff]
      %v316 = vld [vmem:[%s280 + $0x118] sm:$0xff]
      %v317 = vld [vmem:[%s280 + $0x120] sm:$0xff]
      %v318 = vld [vmem:[%s280 + $0x128] sm:$0xff]
      %v319 = vld [vmem:[%s280 + $0x130] sm:$0xff]
      %v320 = vld [vmem:[%s280 + $0x138] sm:$0xff]
      %v321 = vld [vmem:[%s280 + $0x140] sm:$0xff]
      %v322 = vld [vmem:[%s280 + $0x148] sm:$0xff]
      %v323 = vld [vmem:[%s280 + $0x150] sm:$0xff]
      %v324 = vld [vmem:[%s280 + $0x158] sm:$0xff]
      %v325 = vld [vmem:[%s280 + $0x160] sm:$0xff]
      %v326 = vld [vmem:[%s280 + $0x168] sm:$0xff]
      %v327 = vld [vmem:[%s280 + $0x170] sm:$0xff]
      %v328 = vld [vmem:[%s280 + $0x178] sm:$0xff]
      %v329 = vld [vmem:[%s280 + $0x180] sm:$0xff]
      %v330 = vld [vmem:[%s280 + $0x188] sm:$0xff]
      %v331 = vld [vmem:[%s280 + $0x190] sm:$0xff]
      %v332 = vld [vmem:[%s280 + $0x198] sm:$0xff]
      %v333 = vld [vmem:[%s280 + $0x1a0] sm:$0xff]
      %v334 = vld [vmem:[%s280 + $0x1a8] sm:$0xff]
      %v335 = vld [vmem:[%s280 + $0x1b0] sm:$0xff]
      %v336 = vld [vmem:[%s280 + $0x1b8] sm:$0xff]
      %v337 = vld [vmem:[%s280 + $0x1c0] sm:$0xff]
      %v338 = vld [vmem:[%s280 + $0x1c8] sm:$0xff]
      %v339 = vld [vmem:[%s280 + $0x1d0] sm:$0xff]
      %v340 = vld [vmem:[%s280 + $0x1d8] sm:$0xff]
      %v341 = vld [vmem:[%s280 + $0x1e0] sm:$0xff]
      %v342 = vld [vmem:[%s280 + $0x1e8] sm:$0xff]
      %v343 = vld [vmem:[%s280 + $0x1f0] sm:$0xff]
      %v344 = vld [vmem:[%s280 + $0x1f8] sm:$0xff]
      %v345 = vld [vmem:[%s280 + $0x200] sm:$0xff]
      %v346 = vld [vmem:[%s280 + $0x208] sm:$0xff]
      %v347 = vld [vmem:[%s280 + $0x210] sm:$0xff]
      %v348 = vld [vmem:[%s280 + $0x218] sm:$0xff]
      %v349 = vld [vmem:[%s280 + $0x220] sm:$0xff]
      %v350 = vld [vmem:[%s280 + $0x228] sm:$0xff]
      %v351 = vld [vmem:[%s280 + $0x230] sm:$0xff]
      %v352 = vld [vmem:[%s280 + $0x238] sm:$0xff]
      %v353 = vld [vmem:[%s280 + $0x240] sm:$0xff]
      %v354 = vld [vmem:[%s280 + $0x248] sm:$0xff]
      %v355 = vld [vmem:[%s280 + $0x250] sm:$0xff]
      %v356 = vld [vmem:[%s280 + $0x258] sm:$0xff]
      %v357 = vld [vmem:[%s280 + $0x260] sm:$0xff]
      %v358 = vld [vmem:[%s280 + $0x268] sm:$0xff]
      %v359 = vld [vmem:[%s280 + $0x270] sm:$0xff]
      %v360 = vld [vmem:[%s280 + $0x278] sm:$0xff]
      %v361 = vld [vmem:[%s280 + $0x280] sm:$0xff]
      %v362 = vld [vmem:[%s280 + $0x288] sm:$0xff]
      %v363 = vld [vmem:[%s280 + $0x290] sm:$0xff]
      %v364 = vld [vmem:[%s280 + $0x298] sm:$0xff]
      %v365 = vld [vmem:[%s280 + $0x2a0] sm:$0xff]
      %v366 = vld [vmem:[%s280 + $0x2a8] sm:$0xff]
      %v367 = vld [vmem:[%s280 + $0x2b0] sm:$0xff]
      %v368 = vld [vmem:[%s280 + $0x2b8] sm:$0xff]
      %v369 = vld [vmem:[%s280 + $0x2c0] sm:$0xff]
      %v370 = vld [vmem:[%s280 + $0x2c8] sm:$0xff]
      %v371 = vld [vmem:[%s280 + $0x2d0] sm:$0xff]
      %v372 = vld [vmem:[%s280 + $0x2d8] sm:$0xff]
      %v373 = vld [vmem:[%s280 + $0x2e0] sm:$0xff]
      %v374 = vld [vmem:[%s280 + $0x2e8] sm:$0xff]
      %v375 = vld [vmem:[%s280 + $0x2f0] sm:$0xff]
      %v376 = vld [vmem:[%s280 + $0x2f8] sm:$0xff]
      %v377 = vld [vmem:[%s280 + $0x300] sm:$0xff]
      %v378 = vld [vmem:[%s280 + $0x308] sm:$0xff]
      %v379 = vld [vmem:[%s280 + $0x310] sm:$0xff]
      %v380 = vld [vmem:[%s280 + $0x318] sm:$0xff]
      %v389 = vunpack.c.l.b16 %v172
      %v390 = vunpack.c.h.b16 %v172
      %v391 = vunpack.c.l.b16 %v173
      %v392 = vunpack.c.h.b16 %v173
      %v393 = vunpack.c.l.b16 %v174
      %v394 = vunpack.c.h.b16 %v174
      %v395 = vunpack.c.l.b16 %v175
      %v396 = vunpack.c.l.b16 %v276
      %v397 = vunpack.c.h.b16 %v276
      %v398 = vunpack.c.l.b16 %v277
      %v399 = vunpack.c.h.b16 %v277
      %v400 = vunpack.c.l.b16 %v278
      %v401 = vunpack.c.h.b16 %v278
      %v402 = vunpack.c.l.b16 %v279
      %v403 = vpack.c.b16 %v396, %v389
      %v404 = vpack.c.b16 %v397, %v390
      %v405 = vpack.c.b16 %v398, %v391
      %v406 = vpack.c.b16 %v399, %v392
      %v407 = vpack.c.b16 %v400, %v393
      %v408 = vpack.c.b16 %v401, %v394
      %v409 = vpack.c.b16 %v402, %v395
      %v411 = vshrl.u32 %v403, 16
      %v413 = vshll.u32 %v403, 16
      %v415 = vrot.slane %v413, 1
      %v416 = vor.u32 %v411, %v415
      %v418 = vshrl.u32 %v404, 16
      %v420 = vshll.u32 %v404, 16
      %v422 = vrot.slane %v420, 1
      %v423 = vor.u32 %v418, %v422
      %v425 = vshrl.u32 %v405, 16
      %v427 = vshll.u32 %v405, 16
      %v429 = vrot.slane %v427, 1
      %v430 = vor.u32 %v425, %v429
      %v432 = vshrl.u32 %v406, 16
      %v434 = vshll.u32 %v406, 16
      %v436 = vrot.slane %v434, 1
      %v437 = vor.u32 %v432, %v436
      %v439 = vshrl.u32 %v407, 16
      %v441 = vshll.u32 %v407, 16
      %v443 = vrot.slane %v441, 1
      %v444 = vor.u32 %v439, %v443
      %v446 = vshrl.u32 %v408, 16
      %v448 = vshll.u32 %v408, 16
      %v450 = vrot.slane %v448, 1
      %v451 = vor.u32 %v446, %v450
      %v453 = vshrl.u32 %v409, 16
      %v455 = vshll.u32 %v409, 16
      %v457 = vrot.slane %v455, 1
      %v458 = vor.u32 %v453, %v457
      %v565 = vunpack.c.l.b16 %v281
      %v566 = vunpack.c.h.b16 %v281
      %v567 = vunpack.c.l.b16 %v282
      %v568 = vunpack.c.h.b16 %v282
      %v569 = vunpack.c.l.b16 %v283
      %v570 = vunpack.c.h.b16 %v283
      %v571 = vunpack.c.l.b16 %v284
      %v572 = vunpack.c.h.b16 %v284
      %v573 = vunpack.c.l.b16 %v285
      %v574 = vunpack.c.h.b16 %v285
      %v575 = vunpack.c.l.b16 %v286
      %v576 = vunpack.c.h.b16 %v286
      %v577 = vunpack.c.l.b16 %v287
      %v578 = vunpack.c.h.b16 %v287
      %v579 = vunpack.c.l.b16 %v288
      %v580 = vunpack.c.h.b16 %v288
      %v581 = vunpack.c.l.b16 %v289
      %v582 = vunpack.c.h.b16 %v289
      %v583 = vunpack.c.l.b16 %v290
      %v584 = vunpack.c.h.b16 %v290
      %v585 = vunpack.c.l.b16 %v291
      %v586 = vunpack.c.h.b16 %v291
      %v587 = vunpack.c.l.b16 %v292
      %v588 = vunpack.c.h.b16 %v292
      %v589 = vunpack.c.l.b16 %v293
      %v590 = vunpack.c.h.b16 %v293
      %v591 = vunpack.c.l.b16 %v294
      %v592 = vunpack.c.h.b16 %v294
      %v593 = vunpack.c.l.b16 %v295
      %v594 = vunpack.c.h.b16 %v295
      %v595 = vunpack.c.l.b16 %v296
      %v596 = vunpack.c.h.b16 %v296
      %v597 = vunpack.c.l.b16 %v297
      %v598 = vunpack.c.h.b16 %v297
      %v599 = vunpack.c.l.b16 %v298
      %v600 = vunpack.c.h.b16 %v298
      %v601 = vunpack.c.l.b16 %v299
      %v602 = vunpack.c.h.b16 %v299
      %v603 = vunpack.c.l.b16 %v300
      %v604 = vunpack.c.h.b16 %v300
      %v605 = vunpack.c.l.b16 %v301
      %v606 = vunpack.c.h.b16 %v301
      %v607 = vunpack.c.l.b16 %v302
      %v608 = vunpack.c.h.b16 %v302
      %v609 = vunpack.c.l.b16 %v303
      %v610 = vunpack.c.h.b16 %v303
      %v611 = vunpack.c.l.b16 %v304
      %v612 = vunpack.c.h.b16 %v304
      %v613 = vunpack.c.l.b16 %v305
      %v614 = vunpack.c.h.b16 %v305
      %v615 = vunpack.c.l.b16 %v306
      %v616 = vunpack.c.h.b16 %v306
      %v617 = vunpack.c.l.b16 %v307
      %v618 = vunpack.c.h.b16 %v307
      %v619 = vunpack.c.l.b16 %v308
      %v620 = vunpack.c.h.b16 %v308
      %v621 = vunpack.c.l.b16 %v309
      %v622 = vunpack.c.h.b16 %v309
      %v623 = vunpack.c.l.b16 %v310
      %v624 = vunpack.c.h.b16 %v310
      %v625 = vunpack.c.l.b16 %v311
      %v626 = vunpack.c.h.b16 %v311
      %v627 = vunpack.c.l.b16 %v312
      %v628 = vunpack.c.h.b16 %v312
      %v629 = vunpack.c.l.b16 %v313
      %v630 = vunpack.c.h.b16 %v313
      %v631 = vunpack.c.l.b16 %v314
      %v632 = vunpack.c.h.b16 %v314
      %v633 = vunpack.c.l.b16 %v315
      %v634 = vunpack.c.h.b16 %v315
      %v635 = vunpack.c.l.b16 %v316
      %v636 = vunpack.c.h.b16 %v316
      %v637 = vunpack.c.l.b16 %v317
      %v638 = vunpack.c.h.b16 %v317
      %v639 = vunpack.c.l.b16 %v318
      %v640 = vunpack.c.h.b16 %v318
      %v641 = vunpack.c.l.b16 %v319
      %v642 = vunpack.c.h.b16 %v319
      %v643 = vunpack.c.l.b16 %v320
      %v644 = vunpack.c.h.b16 %v320
      %v645 = vunpack.c.l.b16 %v321
      %v646 = vunpack.c.h.b16 %v321
      %v647 = vunpack.c.l.b16 %v322
      %v648 = vunpack.c.h.b16 %v322
      %v649 = vunpack.c.l.b16 %v323
      %v650 = vunpack.c.h.b16 %v323
      %v651 = vunpack.c.l.b16 %v324
      %v652 = vunpack.c.h.b16 %v324
      %v653 = vunpack.c.l.b16 %v325
      %v654 = vunpack.c.h.b16 %v325
      %v655 = vunpack.c.l.b16 %v326
      %v656 = vunpack.c.h.b16 %v326
      %v657 = vunpack.c.l.b16 %v327
      %v658 = vunpack.c.h.b16 %v327
      %v659 = vunpack.c.l.b16 %v328
      %v660 = vunpack.c.h.b16 %v328
      %v661 = vunpack.c.l.b16 %v329
      %v662 = vunpack.c.h.b16 %v329
      %v663 = vunpack.c.l.b16 %v330
      %v664 = vunpack.c.h.b16 %v330
      %v665 = vunpack.c.l.b16 %v331
      %v666 = vunpack.c.h.b16 %v331
      %v667 = vunpack.c.l.b16 %v332
      %v668 = vunpack.c.h.b16 %v332
      %v669 = vunpack.c.l.b16 %v333
      %v670 = vunpack.c.h.b16 %v333
      %v671 = vunpack.c.l.b16 %v334
      %v672 = vunpack.c.h.b16 %v334
      %v673 = vunpack.c.l.b16 %v335
      %v674 = vunpack.c.h.b16 %v335
      %v675 = vunpack.c.l.b16 %v336
      %v676 = vunpack.c.h.b16 %v336
      %v677 = vunpack.c.l.b16 %v337
      %v678 = vunpack.c.h.b16 %v337
      %v679 = vunpack.c.l.b16 %v338
      %v680 = vunpack.c.h.b16 %v338
      %v681 = vunpack.c.l.b16 %v339
      %v682 = vunpack.c.h.b16 %v339
      %v683 = vunpack.c.l.b16 %v340
      %v684 = vunpack.c.h.b16 %v340
      %v685 = vunpack.c.l.b16 %v341
      %v686 = vunpack.c.h.b16 %v341
      %v687 = vunpack.c.l.b16 %v342
      %v688 = vunpack.c.h.b16 %v342
      %v689 = vunpack.c.l.b16 %v343
      %v690 = vunpack.c.h.b16 %v343
      %v691 = vunpack.c.l.b16 %v344
      %v692 = vunpack.c.h.b16 %v344
      %v693 = vunpack.c.l.b16 %v345
      %v694 = vunpack.c.h.b16 %v345
      %v695 = vunpack.c.l.b16 %v346
      %v696 = vunpack.c.h.b16 %v346
      %v697 = vunpack.c.l.b16 %v347
      %v698 = vunpack.c.h.b16 %v347
      %v699 = vunpack.c.l.b16 %v348
      %v700 = vunpack.c.h.b16 %v348
      %v701 = vunpack.c.l.b16 %v349
      %v702 = vunpack.c.h.b16 %v349
      %v703 = vunpack.c.l.b16 %v350
      %v704 = vunpack.c.h.b16 %v350
      %v705 = vunpack.c.l.b16 %v351
      %v706 = vunpack.c.h.b16 %v351
      %v707 = vunpack.c.l.b16 %v352
      %v708 = vunpack.c.h.b16 %v352
      %v709 = vunpack.c.l.b16 %v353
      %v710 = vunpack.c.h.b16 %v353
      %v711 = vunpack.c.l.b16 %v354
      %v712 = vunpack.c.h.b16 %v354
      %v713 = vunpack.c.l.b16 %v355
      %v714 = vunpack.c.h.b16 %v355
      %v715 = vunpack.c.l.b16 %v356
      %v716 = vunpack.c.h.b16 %v356
      %v717 = vunpack.c.l.b16 %v357
      %v718 = vunpack.c.h.b16 %v357
      %v719 = vunpack.c.l.b16 %v358
      %v720 = vunpack.c.h.b16 %v358
      %v721 = vunpack.c.l.b16 %v359
      %v722 = vunpack.c.h.b16 %v359
      %v723 = vunpack.c.l.b16 %v360
      %v724 = vunpack.c.h.b16 %v360
      %v725 = vunpack.c.l.b16 %v361
      %v726 = vunpack.c.h.b16 %v361
      %v727 = vunpack.c.l.b16 %v362
      %v728 = vunpack.c.h.b16 %v362
      %v729 = vunpack.c.l.b16 %v363
      %v730 = vunpack.c.h.b16 %v363
      %v731 = vunpack.c.l.b16 %v364
      %v732 = vunpack.c.h.b16 %v364
      %v733 = vunpack.c.l.b16 %v365
      %v734 = vunpack.c.h.b16 %v365
      %v735 = vunpack.c.l.b16 %v366
      %v736 = vunpack.c.h.b16 %v366
      %v737 = vunpack.c.l.b16 %v367
      %v738 = vunpack.c.h.b16 %v367
      %v739 = vunpack.c.l.b16 %v368
      %v740 = vunpack.c.h.b16 %v368
      %v741 = vunpack.c.l.b16 %v369
      %v742 = vunpack.c.h.b16 %v369
      %v743 = vunpack.c.l.b16 %v370
      %v744 = vunpack.c.h.b16 %v370
      %v745 = vunpack.c.l.b16 %v371
      %v746 = vunpack.c.h.b16 %v371
      %v747 = vunpack.c.l.b16 %v372
      %v748 = vunpack.c.h.b16 %v372
      %v749 = vunpack.c.l.b16 %v373
      %v750 = vunpack.c.h.b16 %v373
      %v751 = vunpack.c.l.b16 %v374
      %v752 = vunpack.c.h.b16 %v374
      %v753 = vunpack.c.l.b16 %v375
      %v754 = vunpack.c.h.b16 %v375
      %v755 = vunpack.c.l.b16 %v376
      %v756 = vunpack.c.h.b16 %v376
      %v757 = vunpack.c.l.b16 %v377
      %v758 = vunpack.c.h.b16 %v377
      %v759 = vunpack.c.l.b16 %v378
      %v760 = vunpack.c.h.b16 %v378
      %v761 = vunpack.c.l.b16 %v379
      %v762 = vunpack.c.h.b16 %v379
      %v763 = vunpack.c.l.b16 %v380
      %v764 = vunpack.c.h.b16 %v380
      %v765 = vpack.c.b16 %v567, %v565
      %v766 = vpack.c.b16 %v568, %v566
      %v767 = vpack.c.b16 %v571, %v569
      %v768 = vpack.c.b16 %v572, %v570
      %v769 = vpack.c.b16 %v575, %v573
      %v770 = vpack.c.b16 %v576, %v574
      %v771 = vpack.c.b16 %v579, %v577
      %v772 = vpack.c.b16 %v580, %v578
      %v773 = vpack.c.b16 %v583, %v581
      %v774 = vpack.c.b16 %v584, %v582
      %v775 = vpack.c.b16 %v587, %v585
      %v776 = vpack.c.b16 %v588, %v586
      %v777 = vpack.c.b16 %v591, %v589
      %v778 = vpack.c.b16 %v592, %v590
      %v779 = vpack.c.b16 %v595, %v593
      %v780 = vpack.c.b16 %v596, %v594
      %v781 = vpack.c.b16 %v599, %v597
      %v782 = vpack.c.b16 %v600, %v598
      %v783 = vpack.c.b16 %v603, %v601
      %v784 = vpack.c.b16 %v604, %v602
      %v785 = vpack.c.b16 %v607, %v605
      %v786 = vpack.c.b16 %v608, %v606
      %v787 = vpack.c.b16 %v611, %v609
      %v788 = vpack.c.b16 %v612, %v610
      %v789 = vpack.c.b16 %v615, %v613
      %v790 = vpack.c.b16 %v616, %v614
      %v791 = vpack.c.b16 %v619, %v617
      %v792 = vpack.c.b16 %v620, %v618
      %v793 = vpack.c.b16 %v623, %v621
      %v794 = vpack.c.b16 %v624, %v622
      %v795 = vpack.c.b16 %v627, %v625
      %v796 = vpack.c.b16 %v628, %v626
      %v797 = vpack.c.b16 %v631, %v629
      %v798 = vpack.c.b16 %v632, %v630
      %v799 = vpack.c.b16 %v635, %v633
      %v800 = vpack.c.b16 %v636, %v634
      %v801 = vpack.c.b16 %v639, %v637
      %v802 = vpack.c.b16 %v640, %v638
      %v803 = vpack.c.b16 %v643, %v641
      %v804 = vpack.c.b16 %v644, %v642
      %v805 = vpack.c.b16 %v647, %v645
      %v806 = vpack.c.b16 %v648, %v646
      %v807 = vpack.c.b16 %v651, %v649
      %v808 = vpack.c.b16 %v652, %v650
      %v809 = vpack.c.b16 %v655, %v653
      %v810 = vpack.c.b16 %v656, %v654
      %v811 = vpack.c.b16 %v659, %v657
      %v812 = vpack.c.b16 %v660, %v658
      %v813 = vpack.c.b16 %v663, %v661
      %v814 = vpack.c.b16 %v664, %v662
      %v815 = vpack.c.b16 %v667, %v665
      %v816 = vpack.c.b16 %v668, %v666
      %v817 = vpack.c.b16 %v671, %v669
      %v818 = vpack.c.b16 %v672, %v670
      %v819 = vpack.c.b16 %v675, %v673
      %v820 = vpack.c.b16 %v676, %v674
      %v821 = vpack.c.b16 %v679, %v677
      %v822 = vpack.c.b16 %v680, %v678
      %v823 = vpack.c.b16 %v683, %v681
      %v824 = vpack.c.b16 %v684, %v682
      %v825 = vpack.c.b16 %v687, %v685
      %v826 = vpack.c.b16 %v688, %v686
      %v827 = vpack.c.b16 %v691, %v689
      %v828 = vpack.c.b16 %v692, %v690
      %v829 = vpack.c.b16 %v695, %v693
      %v830 = vpack.c.b16 %v696, %v694
      %v831 = vpack.c.b16 %v699, %v697
      %v832 = vpack.c.b16 %v700, %v698
      %v833 = vpack.c.b16 %v703, %v701
      %v834 = vpack.c.b16 %v704, %v702
      %v835 = vpack.c.b16 %v707, %v705
      %v836 = vpack.c.b16 %v708, %v706
      %v837 = vpack.c.b16 %v711, %v709
      %v838 = vpack.c.b16 %v712, %v710
      %v839 = vpack.c.b16 %v715, %v713
      %v840 = vpack.c.b16 %v716, %v714
      %v841 = vpack.c.b16 %v719, %v717
      %v842 = vpack.c.b16 %v720, %v718
      %v843 = vpack.c.b16 %v723, %v721
      %v844 = vpack.c.b16 %v724, %v722
      %v845 = vpack.c.b16 %v727, %v725
      %v846 = vpack.c.b16 %v728, %v726
      %v847 = vpack.c.b16 %v731, %v729
      %v848 = vpack.c.b16 %v732, %v730
      %v849 = vpack.c.b16 %v735, %v733
      %v850 = vpack.c.b16 %v736, %v734
      %v851 = vpack.c.b16 %v739, %v737
      %v852 = vpack.c.b16 %v740, %v738
      %v853 = vpack.c.b16 %v743, %v741
      %v854 = vpack.c.b16 %v744, %v742
      %v855 = vpack.c.b16 %v747, %v745
      %v856 = vpack.c.b16 %v748, %v746
      %v857 = vpack.c.b16 %v751, %v749
      %v858 = vpack.c.b16 %v752, %v750
      %v859 = vpack.c.b16 %v755, %v753
      %v860 = vpack.c.b16 %v756, %v754
      %v861 = vpack.c.b16 %v759, %v757
      %v862 = vpack.c.b16 %v760, %v758
      %v863 = vpack.c.b16 %v763, %v761
      %v864 = vpack.c.b16 %v764, %v762
      %vm965 = vcmask 261120
      %v967 = vsel %vm965, %v458, 0
      %969 = vmatprep.subr.bf16.mxu0 %v766
      %970 = vmatpush1.bf16.msra.mxu0 %v765
      %971 = vmatprep.subr.bf16.mxu0 %v768
      %972 = vmatpush1.bf16.msra.mxu0 %v767
      %973 = vmatprep.subr.bf16.mxu0 %v770
      %974 = vmatpush1.bf16.msra.mxu0 %v769
      %975 = vmatprep.subr.bf16.mxu0 %v772
      %976 = vmatpush1.bf16.msra.mxu0 %v771
      %977 = vmatprep.subr.bf16.mxu0 %v774
      %978 = vmatpush1.bf16.msra.mxu0 %v773
      %979 = vmatprep.subr.bf16.mxu0 %v776
      %980 = vmatpush1.bf16.msra.mxu0 %v775
      %981 = vmatprep.subr.bf16.mxu0 %v778
      %982 = vmatpush1.bf16.msra.mxu0 %v777
      %983 = vmatprep.subr.bf16.mxu0 %v780
      %984 = vmatpush1.bf16.msra.mxu0 %v779
      %985 = vmatprep.subr.bf16.mxu0 %v782
      %986 = vmatpush1.bf16.msra.mxu0 %v781
      %987 = vmatprep.subr.bf16.mxu0 %v784
      %988 = vmatpush1.bf16.msra.mxu0 %v783
      %989 = vmatprep.subr.bf16.mxu0 %v786
      %990 = vmatpush1.bf16.msra.mxu0 %v785
      %991 = vmatprep.subr.bf16.mxu0 %v788
      %992 = vmatpush1.bf16.msra.mxu0 %v787
      %993 = vmatprep.subr.bf16.mxu0 %v790
      %994 = vmatpush1.bf16.msra.mxu0 %v789
      %995 = vmatprep.subr.bf16.mxu0 %v792
      %996 = vmatpush1.bf16.msra.mxu0 %v791
      %997 = vmatprep.subr.bf16.mxu0 %v794
      %998 = vmatpush1.bf16.msra.mxu0 %v793
      %999 = vmatprep.subr.bf16.mxu0 %v796
      %1000 = vmatpush1.bf16.msra.mxu0 %v795
      %1001 = vmatprep.mubr.bf16.mxu0 %v423
      %1002 = vmatmul.mubr.bf16.gmra.mrb[0].mxu0 %v416
      %v1003 = vpop.f32.mrb[0].mxu0
      %v1004 = vadd.f32 0.0, %v1003
      %v1005 = vpop.f32.mrb[0].mxu0
      %v1006 = vadd.f32 0.0, %v1005
      %v1007 = vpop.f32.mrb[0].mxu0
      %v1008 = vpop.f32.mrb[0].mxu0
      %1009 = vdwg.mxu0
      %1010 = vmatprep.subr.bf16.mxu0 %v798
      %1011 = vmatpush1.bf16.msra.mxu0 %v797
      %1012 = vmatprep.subr.bf16.mxu0 %v800
      %1013 = vmatpush1.bf16.msra.mxu0 %v799
      %1014 = vmatprep.subr.bf16.mxu0 %v802
      %1015 = vmatpush1.bf16.msra.mxu0 %v801
      %1016 = vmatprep.subr.bf16.mxu0 %v804
      %1017 = vmatpush1.bf16.msra.mxu0 %v803
      %1018 = vmatprep.subr.bf16.mxu0 %v806
      %1019 = vmatpush1.bf16.msra.mxu0 %v805
      %1020 = vmatprep.subr.bf16.mxu0 %v808
      %1021 = vmatpush1.bf16.msra.mxu0 %v807
      %1022 = vmatprep.subr.bf16.mxu0 %v810
      %1023 = vmatpush1.bf16.msra.mxu0 %v809
      %1024 = vmatprep.subr.bf16.mxu0 %v812
      %1025 = vmatpush1.bf16.msra.mxu0 %v811
      %1026 = vmatprep.subr.bf16.mxu0 %v814
      %1027 = vmatpush1.bf16.msra.mxu0 %v813
      %1028 = vmatprep.subr.bf16.mxu0 %v816
      %1029 = vmatpush1.bf16.msra.mxu0 %v815
      %1030 = vmatprep.subr.bf16.mxu0 %v818
      %1031 = vmatpush1.bf16.msra.mxu0 %v817
      %1032 = vmatprep.subr.bf16.mxu0 %v820
      %1033 = vmatpush1.bf16.msra.mxu0 %v819
      %1034 = vmatprep.subr.bf16.mxu0 %v822
      %1035 = vmatpush1.bf16.msra.mxu0 %v821
      %1036 = vmatprep.subr.bf16.mxu0 %v824
      %1037 = vmatpush1.bf16.msra.mxu0 %v823
      %1038 = vmatprep.subr.bf16.mxu0 %v826
      %1039 = vmatpush1.bf16.msra.mxu0 %v825
      %1040 = vmatprep.subr.bf16.mxu0 %v828
      %1041 = vmatpush1.bf16.msra.mxu0 %v827
      %1042 = vmatprep.mubr.bf16.mxu0 %v437
      %1043 = vmatmul.mubr.bf16.gmra.mrb[0].mxu0 %v430
      %v1044 = vpop.f32.mrb[0].mxu0
      %v1045 = vadd.f32 %v1004, %v1044
      %v1046 = vpop.f32.mrb[0].mxu0
      %v1047 = vadd.f32 %v1006, %v1046
      %v1048 = vpop.f32.mrb[0].mxu0
      %v1049 = vpop.f32.mrb[0].mxu0
      %1050 = vdwg.mxu0
      %1051 = vmatprep.subr.bf16.mxu0 %v830
      %1052 = vmatpush1.bf16.msra.mxu0 %v829
      %1053 = vmatprep.subr.bf16.mxu0 %v832
      %1054 = vmatpush1.bf16.msra.mxu0 %v831
      %1055 = vmatprep.subr.bf16.mxu0 %v834
      %1056 = vmatpush1.bf16.msra.mxu0 %v833
      %1057 = vmatprep.subr.bf16.mxu0 %v836
      %1058 = vmatpush1.bf16.msra.mxu0 %v835
      %1059 = vmatprep.subr.bf16.mxu0 %v838
      %1060 = vmatpush1.bf16.msra.mxu0 %v837
      %1061 = vmatprep.subr.bf16.mxu0 %v840
      %1062 = vmatpush1.bf16.msra.mxu0 %v839
      %1063 = vmatprep.subr.bf16.mxu0 %v842
      %1064 = vmatpush1.bf16.msra.mxu0 %v841
      %1065 = vmatprep.subr.bf16.mxu0 %v844
      %1066 = vmatpush1.bf16.msra.mxu0 %v843
      %1067 = vmatprep.subr.bf16.mxu0 %v846
      %1068 = vmatpush1.bf16.msra.mxu0 %v845
      %1069 = vmatprep.subr.bf16.mxu0 %v848
      %1070 = vmatpush1.bf16.msra.mxu0 %v847
      %1071 = vmatprep.subr.bf16.mxu0 %v850
      %1072 = vmatpush1.bf16.msra.mxu0 %v849
      %1073 = vmatprep.subr.bf16.mxu0 %v852
      %1074 = vmatpush1.bf16.msra.mxu0 %v851
      %1075 = vmatprep.subr.bf16.mxu0 %v854
      %1076 = vmatpush1.bf16.msra.mxu0 %v853
      %1077 = vmatprep.subr.bf16.mxu0 %v856
      %1078 = vmatpush1.bf16.msra.mxu0 %v855
      %1079 = vmatprep.subr.bf16.mxu0 %v858
      %1080 = vmatpush1.bf16.msra.mxu0 %v857
      %1081 = vmatprep.subr.bf16.mxu0 %v860
      %1082 = vmatpush1.bf16.msra.mxu0 %v859
      %1083 = vmatprep.mubr.bf16.mxu0 %v451
      %1084 = vmatmul.mubr.bf16.gmra.mrb[0].mxu0 %v444
      %v1085 = vpop.f32.mrb[0].mxu0
      %v1086 = vadd.f32 %v1045, %v1085
      %v1087 = vpop.f32.mrb[0].mxu0
      %v1088 = vadd.f32 %v1047, %v1087
      %v1089 = vpop.f32.mrb[0].mxu0
      %v1090 = vpop.f32.mrb[0].mxu0
      %1091 = vdwg.mxu0
      %1092 = vmatprep.subr.bf16.mxu0 %v862
      %1093 = vmatpush1.bf16.msra.mxu0 %v861
      %1094 = vmatprep.subr.bf16.mxu0 %v864
      %1095 = vmatpush1.bf16.msra.mxu0 %v863
      %1096 = vmatprep.subr.bf16.mxu0 0
      %1097 = vmatpush1.bf16.msra.mxu0 0
      %1098 = vmatprep.subr.bf16.mxu0 0
      %1099 = vmatpush1.bf16.msra.mxu0 0
      %1100 = vmatprep.subr.bf16.mxu0 0
      %1101 = vmatpush1.bf16.msra.mxu0 0
      %1102 = vmatprep.subr.bf16.mxu0 0
      %1103 = vmatpush1.bf16.msra.mxu0 0
      %1104 = vmatprep.subr.bf16.mxu0 0
      %1105 = vmatpush1.bf16.msra.mxu0 0
      %1106 = vmatprep.subr.bf16.mxu0 0
      %1107 = vmatpush1.bf16.msra.mxu0 0
      %1108 = vmatprep.subr.bf16.mxu0 0
      %1109 = vmatpush1.bf16.msra.mxu0 0
      %1110 = vmatprep.subr.bf16.mxu0 0
      %1111 = vmatpush1.bf16.msra.mxu0 0
      %1112 = vmatprep.subr.bf16.mxu0 0
      %1113 = vmatpush1.bf16.msra.mxu0 0
      %1114 = vmatprep.subr.bf16.mxu0 0
      %1115 = vmatpush1.bf16.msra.mxu0 0
      %1116 = vmatprep.subr.bf16.mxu0 0
      %1117 = vmatpush1.bf16.msra.mxu0 0
      %1118 = vmatprep.subr.bf16.mxu0 0
      %1119 = vmatpush1.bf16.msra.mxu0 0
      %1120 = vmatprep.subr.bf16.mxu0 0
      %1121 = vmatpush1.bf16.msra.mxu0 0
      %1122 = vmatprep.subr.bf16.mxu0 0
      %1123 = vmatpush1.bf16.msra.mxu0 0
      %1124 = vmatprep.mubr.bf16.mxu0 0
      %1125 = vmatmul.mubr.bf16.gmra.mrb[0].mxu0 %v967
      %v1126 = vpop.f32.mrb[0].mxu0
      %v1127 = vadd.f32 %v1086, %v1126
      %v1128 = vpop.f32.mrb[0].mxu0
      %v1129 = vadd.f32 %v1088, %v1128
      %v1130 = vpop.f32.mrb[0].mxu0
      %v1131 = vpop.f32.mrb[0].mxu0
      %1132 = vdwg.mxu0
      %v1133 = vpack.c.b16 %v389, %v389
      %v1134 = vpack.c.b16 %v390, %v390
      %v1135 = vpack.c.b16 %v391, %v391
      %v1136 = vpack.c.b16 %v392, %v392
      %v1137 = vpack.c.b16 %v393, %v393
      %v1138 = vpack.c.b16 %v394, %v394
      %v1139 = vpack.c.b16 %v395, %v395
      %v1246 = vunpack.c.l.b16 %v176
      %v1247 = vunpack.c.h.b16 %v176
      %v1248 = vunpack.c.l.b16 %v177
      %v1249 = vunpack.c.h.b16 %v177
      %v1250 = vunpack.c.l.b16 %v178
      %v1251 = vunpack.c.h.b16 %v178
      %v1252 = vunpack.c.l.b16 %v179
      %v1253 = vunpack.c.h.b16 %v179
      %v1254 = vunpack.c.l.b16 %v180
      %v1255 = vunpack.c.h.b16 %v180
      %v1256 = vunpack.c.l.b16 %v181
      %v1257 = vunpack.c.h.b16 %v181
      %v1258 = vunpack.c.l.b16 %v182
      %v1259 = vunpack.c.h.b16 %v182
      %v1260 = vunpack.c.l.b16 %v183
      %v1261 = vunpack.c.h.b16 %v183
      %v1262 = vunpack.c.l.b16 %v184
      %v1263 = vunpack.c.h.b16 %v184
      %v1264 = vunpack.c.l.b16 %v185
      %v1265 = vunpack.c.h.b16 %v185
      %v1266 = vunpack.c.l.b16 %v186
      %v1267 = vunpack.c.h.b16 %v186
      %v1268 = vunpack.c.l.b16 %v187
      %v1269 = vunpack.c.h.b16 %v187
      %v1270 = vunpack.c.l.b16 %v188
      %v1271 = vunpack.c.h.b16 %v188
      %v1272 = vunpack.c.l.b16 %v189
      %v1273 = vunpack.c.h.b16 %v189
      %v1274 = vunpack.c.l.b16 %v190
      %v1275 = vunpack.c.h.b16 %v190
      %v1276 = vunpack.c.l.b16 %v191
      %v1277 = vunpack.c.h.b16 %v191
      %v1278 = vunpack.c.l.b16 %v192
      %v1279 = vunpack.c.h.b16 %v192
      %v1280 = vunpack.c.l.b16 %v193
      %v1281 = vunpack.c.h.b16 %v193
      %v1282 = vunpack.c.l.b16 %v194
      %v1283 = vunpack.c.h.b16 %v194
      %v1284 = vunpack.c.l.b16 %v195
      %v1285 = vunpack.c.h.b16 %v195
      %v1286 = vunpack.c.l.b16 %v196
      %v1287 = vunpack.c.h.b16 %v196
      %v1288 = vunpack.c.l.b16 %v197
      %v1289 = vunpack.c.h.b16 %v197
      %v1290 = vunpack.c.l.b16 %v198
      %v1291 = vunpack.c.h.b16 %v198
      %v1292 = vunpack.c.l.b16 %v199
      %v1293 = vunpack.c.h.b16 %v199
      %v1294 = vunpack.c.l.b16 %v200
      %v1295 = vunpack.c.h.b16 %v200
      %v1296 = vunpack.c.l.b16 %v201
      %v1297 = vunpack.c.h.b16 %v201
      %v1298 = vunpack.c.l.b16 %v202
      %v1299 = vunpack.c.h.b16 %v202
      %v1300 = vunpack.c.l.b16 %v203
      %v1301 = vunpack.c.h.b16 %v203
      %v1302 = vunpack.c.l.b16 %v204
      %v1303 = vunpack.c.h.b16 %v204
      %v1304 = vunpack.c.l.b16 %v205
      %v1305 = vunpack.c.h.b16 %v205
      %v1306 = vunpack.c.l.b16 %v206
      %v1307 = vunpack.c.h.b16 %v206
      %v1308 = vunpack.c.l.b16 %v207
      %v1309 = vunpack.c.h.b16 %v207
      %v1310 = vunpack.c.l.b16 %v208
      %v1311 = vunpack.c.h.b16 %v208
      %v1312 = vunpack.c.l.b16 %v209
      %v1313 = vunpack.c.h.b16 %v209
      %v1314 = vunpack.c.l.b16 %v210
      %v1315 = vunpack.c.h.b16 %v210
      %v1316 = vunpack.c.l.b16 %v211
      %v1317 = vunpack.c.h.b16 %v211
      %v1318 = vunpack.c.l.b16 %v212
      %v1319 = vunpack.c.h.b16 %v212
      %v1320 = vunpack.c.l.b16 %v213
      %v1321 = vunpack.c.h.b16 %v213
      %v1322 = vunpack.c.l.b16 %v214
      %v1323 = vunpack.c.h.b16 %v214
      %v1324 = vunpack.c.l.b16 %v215
      %v1325 = vunpack.c.h.b16 %v215
      %v1326 = vunpack.c.l.b16 %v216
      %v1327 = vunpack.c.h.b16 %v216
      %v1328 = vunpack.c.l.b16 %v217
      %v1329 = vunpack.c.h.b16 %v217
      %v1330 = vunpack.c.l.b16 %v218
      %v1331 = vunpack.c.h.b16 %v218
      %v1332 = vunpack.c.l.b16 %v219
      %v1333 = vunpack.c.h.b16 %v219
      %v1334 = vunpack.c.l.b16 %v220
      %v1335 = vunpack.c.h.b16 %v220
      %v1336 = vunpack.c.l.b16 %v221
      %v1337 = vunpack.c.h.b16 %v221
      %v1338 = vunpack.c.l.b16 %v222
      %v1339 = vunpack.c.h.b16 %v222
      %v1340 = vunpack.c.l.b16 %v223
      %v1341 = vunpack.c.h.b16 %v223
      %v1342 = vunpack.c.l.b16 %v224
      %v1343 = vunpack.c.h.b16 %v224
      %v1344 = vunpack.c.l.b16 %v225
      %v1345 = vunpack.c.h.b16 %v225
      %v1346 = vunpack.c.l.b16 %v226
      %v1347 = vunpack.c.h.b16 %v226
      %v1348 = vunpack.c.l.b16 %v227
      %v1349 = vunpack.c.h.b16 %v227
      %v1350 = vunpack.c.l.b16 %v228
      %v1351 = vunpack.c.h.b16 %v228
      %v1352 = vunpack.c.l.b16 %v229
      %v1353 = vunpack.c.h.b16 %v229
      %v1354 = vunpack.c.l.b16 %v230
      %v1355 = vunpack.c.h.b16 %v230
      %v1356 = vunpack.c.l.b16 %v231
      %v1357 = vunpack.c.h.b16 %v231
      %v1358 = vunpack.c.l.b16 %v232
      %v1359 = vunpack.c.h.b16 %v232
      %v1360 = vunpack.c.l.b16 %v233
      %v1361 = vunpack.c.h.b16 %v233
      %v1362 = vunpack.c.l.b16 %v234
      %v1363 = vunpack.c.h.b16 %v234
      %v1364 = vunpack.c.l.b16 %v235
      %v1365 = vunpack.c.h.b16 %v235
      %v1366 = vunpack.c.l.b16 %v236
      %v1367 = vunpack.c.h.b16 %v236
      %v1368 = vunpack.c.l.b16 %v237
      %v1369 = vunpack.c.h.b16 %v237
      %v1370 = vunpack.c.l.b16 %v238
      %v1371 = vunpack.c.h.b16 %v238
      %v1372 = vunpack.c.l.b16 %v239
      %v1373 = vunpack.c.h.b16 %v239
      %v1374 = vunpack.c.l.b16 %v240
      %v1375 = vunpack.c.h.b16 %v240
      %v1376 = vunpack.c.l.b16 %v241
      %v1377 = vunpack.c.h.b16 %v241
      %v1378 = vunpack.c.l.b16 %v242
      %v1379 = vunpack.c.h.b16 %v242
      %v1380 = vunpack.c.l.b16 %v243
      %v1381 = vunpack.c.h.b16 %v243
      %v1382 = vunpack.c.l.b16 %v244
      %v1383 = vunpack.c.h.b16 %v244
      %v1384 = vunpack.c.l.b16 %v245
      %v1385 = vunpack.c.h.b16 %v245
      %v1386 = vunpack.c.l.b16 %v246
      %v1387 = vunpack.c.h.b16 %v246
      %v1388 = vunpack.c.l.b16 %v247
      %v1389 = vunpack.c.h.b16 %v247
      %v1390 = vunpack.c.l.b16 %v248
      %v1391 = vunpack.c.h.b16 %v248
      %v1392 = vunpack.c.l.b16 %v249
      %v1393 = vunpack.c.h.b16 %v249
      %v1394 = vunpack.c.l.b16 %v250
      %v1395 = vunpack.c.h.b16 %v250
      %v1396 = vunpack.c.l.b16 %v251
      %v1397 = vunpack.c.h.b16 %v251
      %v1398 = vunpack.c.l.b16 %v252
      %v1399 = vunpack.c.h.b16 %v252
      %v1400 = vunpack.c.l.b16 %v253
      %v1401 = vunpack.c.h.b16 %v253
      %v1402 = vunpack.c.l.b16 %v254
      %v1403 = vunpack.c.h.b16 %v254
      %v1404 = vunpack.c.l.b16 %v255
      %v1405 = vunpack.c.h.b16 %v255
      %v1406 = vunpack.c.l.b16 %v256
      %v1407 = vunpack.c.h.b16 %v256
      %v1408 = vunpack.c.l.b16 %v257
      %v1409 = vunpack.c.h.b16 %v257
      %v1410 = vunpack.c.l.b16 %v258
      %v1411 = vunpack.c.h.b16 %v258
      %v1412 = vunpack.c.l.b16 %v259
      %v1413 = vunpack.c.h.b16 %v259
      %v1414 = vunpack.c.l.b16 %v260
      %v1415 = vunpack.c.h.b16 %v260
      %v1416 = vunpack.c.l.b16 %v261
      %v1417 = vunpack.c.h.b16 %v261
      %v1418 = vunpack.c.l.b16 %v262
      %v1419 = vunpack.c.h.b16 %v262
      %v1420 = vunpack.c.l.b16 %v263
      %v1421 = vunpack.c.h.b16 %v263
      %v1422 = vunpack.c.l.b16 %v264
      %v1423 = vunpack.c.h.b16 %v264
      %v1424 = vunpack.c.l.b16 %v265
      %v1425 = vunpack.c.h.b16 %v265
      %v1426 = vunpack.c.l.b16 %v266
      %v1427 = vunpack.c.h.b16 %v266
      %v1428 = vunpack.c.l.b16 %v267
      %v1429 = vunpack.c.h.b16 %v267
      %v1430 = vunpack.c.l.b16 %v268
      %v1431 = vunpack.c.h.b16 %v268
      %v1432 = vunpack.c.l.b16 %v269
      %v1433 = vunpack.c.h.b16 %v269
      %v1434 = vunpack.c.l.b16 %v270
      %v1435 = vunpack.c.h.b16 %v270
      %v1436 = vunpack.c.l.b16 %v271
      %v1437 = vunpack.c.h.b16 %v271
      %v1438 = vunpack.c.l.b16 %v272
      %v1439 = vunpack.c.h.b16 %v272
      %v1440 = vunpack.c.l.b16 %v273
      %v1441 = vunpack.c.h.b16 %v273
      %v1442 = vunpack.c.l.b16 %v274
      %v1443 = vunpack.c.h.b16 %v274
      %v1444 = vunpack.c.l.b16 %v275
      %v1445 = vunpack.c.h.b16 %v275
      %v1446 = vpack.c.b16 %v1248, %v1246
      %v1447 = vpack.c.b16 %v1249, %v1247
      %v1448 = vpack.c.b16 %v1252, %v1250
      %v1449 = vpack.c.b16 %v1253, %v1251
      %v1450 = vpack.c.b16 %v1256, %v1254
      %v1451 = vpack.c.b16 %v1257, %v1255
      %v1452 = vpack.c.b16 %v1260, %v1258
      %v1453 = vpack.c.b16 %v1261, %v1259
      %v1454 = vpack.c.b16 %v1264, %v1262
      %v1455 = vpack.c.b16 %v1265, %v1263
      %v1456 = vpack.c.b16 %v1268, %v1266
      %v1457 = vpack.c.b16 %v1269, %v1267
      %v1458 = vpack.c.b16 %v1272, %v1270
      %v1459 = vpack.c.b16 %v1273, %v1271
      %v1460 = vpack.c.b16 %v1276, %v1274
      %v1461 = vpack.c.b16 %v1277, %v1275
      %v1462 = vpack.c.b16 %v1280, %v1278
      %v1463 = vpack.c.b16 %v1281, %v1279
      %v1464 = vpack.c.b16 %v1284, %v1282
      %v1465 = vpack.c.b16 %v1285, %v1283
      %v1466 = vpack.c.b16 %v1288, %v1286
      %v1467 = vpack.c.b16 %v1289, %v1287
      %v1468 = vpack.c.b16 %v1292, %v1290
      %v1469 = vpack.c.b16 %v1293, %v1291
      %v1470 = vpack.c.b16 %v1296, %v1294
      %v1471 = vpack.c.b16 %v1297, %v1295
      %v1472 = vpack.c.b16 %v1300, %v1298
      %v1473 = vpack.c.b16 %v1301, %v1299
      %v1474 = vpack.c.b16 %v1304, %v1302
      %v1475 = vpack.c.b16 %v1305, %v1303
      %v1476 = vpack.c.b16 %v1308, %v1306
      %v1477 = vpack.c.b16 %v1309, %v1307
      %v1478 = vpack.c.b16 %v1312, %v1310
      %v1479 = vpack.c.b16 %v1313, %v1311
      %v1480 = vpack.c.b16 %v1316, %v1314
      %v1481 = vpack.c.b16 %v1317, %v1315
      %v1482 = vpack.c.b16 %v1320, %v1318
      %v1483 = vpack.c.b16 %v1321, %v1319
      %v1484 = vpack.c.b16 %v1324, %v1322
      %v1485 = vpack.c.b16 %v1325, %v1323
      %v1486 = vpack.c.b16 %v1328, %v1326
      %v1487 = vpack.c.b16 %v1329, %v1327
      %v1488 = vpack.c.b16 %v1332, %v1330
      %v1489 = vpack.c.b16 %v1333, %v1331
      %v1490 = vpack.c.b16 %v1336, %v1334
      %v1491 = vpack.c.b16 %v1337, %v1335
      %v1492 = vpack.c.b16 %v1340, %v1338
      %v1493 = vpack.c.b16 %v1341, %v1339
      %v1494 = vpack.c.b16 %v1344, %v1342
      %v1495 = vpack.c.b16 %v1345, %v1343
      %v1496 = vpack.c.b16 %v1348, %v1346
      %v1497 = vpack.c.b16 %v1349, %v1347
      %v1498 = vpack.c.b16 %v1352, %v1350
      %v1499 = vpack.c.b16 %v1353, %v1351
      %v1500 = vpack.c.b16 %v1356, %v1354
      %v1501 = vpack.c.b16 %v1357, %v1355
      %v1502 = vpack.c.b16 %v1360, %v1358
      %v1503 = vpack.c.b16 %v1361, %v1359
      %v1504 = vpack.c.b16 %v1364, %v1362
      %v1505 = vpack.c.b16 %v1365, %v1363
      %v1506 = vpack.c.b16 %v1368, %v1366
      %v1507 = vpack.c.b16 %v1369, %v1367
      %v1508 = vpack.c.b16 %v1372, %v1370
      %v1509 = vpack.c.b16 %v1373, %v1371
      %v1510 = vpack.c.b16 %v1376, %v1374
      %v1511 = vpack.c.b16 %v1377, %v1375
      %v1512 = vpack.c.b16 %v1380, %v1378
      %v1513 = vpack.c.b16 %v1381, %v1379
      %v1514 = vpack.c.b16 %v1384, %v1382
      %v1515 = vpack.c.b16 %v1385, %v1383
      %v1516 = vpack.c.b16 %v1388, %v1386
      %v1517 = vpack.c.b16 %v1389, %v1387
      %v1518 = vpack.c.b16 %v1392, %v1390
      %v1519 = vpack.c.b16 %v1393, %v1391
      %v1520 = vpack.c.b16 %v1396, %v1394
      %v1521 = vpack.c.b16 %v1397, %v1395
      %v1522 = vpack.c.b16 %v1400, %v1398
      %v1523 = vpack.c.b16 %v1401, %v1399
      %v1524 = vpack.c.b16 %v1404, %v1402
      %v1525 = vpack.c.b16 %v1405, %v1403
      %v1526 = vpack.c.b16 %v1408, %v1406
      %v1527 = vpack.c.b16 %v1409, %v1407
      %v1528 = vpack.c.b16 %v1412, %v1410
      %v1529 = vpack.c.b16 %v1413, %v1411
      %v1530 = vpack.c.b16 %v1416, %v1414
      %v1531 = vpack.c.b16 %v1417, %v1415
      %v1532 = vpack.c.b16 %v1420, %v1418
      %v1533 = vpack.c.b16 %v1421, %v1419
      %v1534 = vpack.c.b16 %v1424, %v1422
      %v1535 = vpack.c.b16 %v1425, %v1423
      %v1536 = vpack.c.b16 %v1428, %v1426
      %v1537 = vpack.c.b16 %v1429, %v1427
      %v1538 = vpack.c.b16 %v1432, %v1430
      %v1539 = vpack.c.b16 %v1433, %v1431
      %v1540 = vpack.c.b16 %v1436, %v1434
      %v1541 = vpack.c.b16 %v1437, %v1435
      %v1542 = vpack.c.b16 %v1440, %v1438
      %v1543 = vpack.c.b16 %v1441, %v1439
      %v1544 = vpack.c.b16 %v1444, %v1442
      %v1545 = vpack.c.b16 %v1445, %v1443
      %v1647 = vsel %vm965, %v1139, 0
      %1649 = vmatprep.subr.bf16.mxu0 %v1447
      %1650 = vmatpush1.bf16.msra.mxu0 %v1446
      %1651 = vmatprep.subr.bf16.mxu0 %v1449
      %1652 = vmatpush1.bf16.msra.mxu0 %v1448
      %1653 = vmatprep.subr.bf16.mxu0 %v1451
      %1654 = vmatpush1.bf16.msra.mxu0 %v1450
      %1655 = vmatprep.subr.bf16.mxu0 %v1453
      %1656 = vmatpush1.bf16.msra.mxu0 %v1452
      %1657 = vmatprep.subr.bf16.mxu0 %v1455
      %1658 = vmatpush1.bf16.msra.mxu0 %v1454
      %1659 = vmatprep.subr.bf16.mxu0 %v1457
      %1660 = vmatpush1.bf16.msra.mxu0 %v1456
      %1661 = vmatprep.subr.bf16.mxu0 %v1459
      %1662 = vmatpush1.bf16.msra.mxu0 %v1458
      %1663 = vmatprep.subr.bf16.mxu0 %v1461
      %1664 = vmatpush1.bf16.msra.mxu0 %v1460
      %1665 = vmatprep.subr.bf16.mxu0 %v1463
      %1666 = vmatpush1.bf16.msra.mxu0 %v1462
      %1667 = vmatprep.subr.bf16.mxu0 %v1465
      %1668 = vmatpush1.bf16.msra.mxu0 %v1464
      %1669 = vmatprep.subr.bf16.mxu0 %v1467
      %1670 = vmatpush1.bf16.msra.mxu0 %v1466
      %1671 = vmatprep.subr.bf16.mxu0 %v1469
      %1672 = vmatpush1.bf16.msra.mxu0 %v1468
      %1673 = vmatprep.subr.bf16.mxu0 %v1471
      %1674 = vmatpush1.bf16.msra.mxu0 %v1470
      %1675 = vmatprep.subr.bf16.mxu0 %v1473
      %1676 = vmatpush1.bf16.msra.mxu0 %v1472
      %1677 = vmatprep.subr.bf16.mxu0 %v1475
      %1678 = vmatpush1.bf16.msra.mxu0 %v1474
      %1679 = vmatprep.subr.bf16.mxu0 %v1477
      %1680 = vmatpush1.bf16.msra.mxu0 %v1476
      %1681 = vmatprep.mubr.bf16.mxu0 %v1134
      %1682 = vmatmul.mubr.bf16.gmra.mrb[0].mxu0 %v1133
      %v1683 = vpop.f32.mrb[0].mxu0
      %v1684 = vadd.f32 %v1127, %v1683
      %v1685 = vpop.f32.mrb[0].mxu0
      %v1686 = vadd.f32 %v1129, %v1685
      %v1687 = vpop.f32.mrb[0].mxu0
      %v1688 = vpop.f32.mrb[0].mxu0
      %1689 = vdwg.mxu0
      %1690 = vmatprep.subr.bf16.mxu0 %v1479
      %1691 = vmatpush1.bf16.msra.mxu0 %v1478
      %1692 = vmatprep.subr.bf16.mxu0 %v1481
      %1693 = vmatpush1.bf16.msra.mxu0 %v1480
      %1694 = vmatprep.subr.bf16.mxu0 %v1483
      %1695 = vmatpush1.bf16.msra.mxu0 %v1482
      %1696 = vmatprep.subr.bf16.mxu0 %v1485
      %1697 = vmatpush1.bf16.msra.mxu0 %v1484
      %1698 = vmatprep.subr.bf16.mxu0 %v1487
      %1699 = vmatpush1.bf16.msra.mxu0 %v1486
      %1700 = vmatprep.subr.bf16.mxu0 %v1489
      %1701 = vmatpush1.bf16.msra.mxu0 %v1488
      %1702 = vmatprep.subr.bf16.mxu0 %v1491
      %1703 = vmatpush1.bf16.msra.mxu0 %v1490
      %1704 = vmatprep.subr.bf16.mxu0 %v1493
      %1705 = vmatpush1.bf16.msra.mxu0 %v1492
      %1706 = vmatprep.subr.bf16.mxu0 %v1495
      %1707 = vmatpush1.bf16.msra.mxu0 %v1494
      %1708 = vmatprep.subr.bf16.mxu0 %v1497
      %1709 = vmatpush1.bf16.msra.mxu0 %v1496
      %1710 = vmatprep.subr.bf16.mxu0 %v1499
      %1711 = vmatpush1.bf16.msra.mxu0 %v1498
      %1712 = vmatprep.subr.bf16.mxu0 %v1501
      %1713 = vmatpush1.bf16.msra.mxu0 %v1500
      %1714 = vmatprep.subr.bf16.mxu0 %v1503
      %1715 = vmatpush1.bf16.msra.mxu0 %v1502
      %1716 = vmatprep.subr.bf16.mxu0 %v1505
      %1717 = vmatpush1.bf16.msra.mxu0 %v1504
      %1718 = vmatprep.subr.bf16.mxu0 %v1507
      %1719 = vmatpush1.bf16.msra.mxu0 %v1506
      %1720 = vmatprep.subr.bf16.mxu0 %v1509
      %1721 = vmatpush1.bf16.msra.mxu0 %v1508
      %1722 = vmatprep.mubr.bf16.mxu0 %v1136
      %1723 = vmatmul.mubr.bf16.gmra.mrb[0].mxu0 %v1135
      %v1724 = vpop.f32.mrb[0].mxu0
      %v1725 = vadd.f32 %v1684, %v1724
      %v1726 = vpop.f32.mrb[0].mxu0
      %v1727 = vadd.f32 %v1686, %v1726
      %v1728 = vpop.f32.mrb[0].mxu0
      %v1729 = vpop.f32.mrb[0].mxu0
      %1730 = vdwg.mxu0
      %1731 = vmatprep.subr.bf16.mxu0 %v1511
      %1732 = vmatpush1.bf16.msra.mxu0 %v1510
      %1733 = vmatprep.subr.bf16.mxu0 %v1513
      %1734 = vmatpush1.bf16.msra.mxu0 %v1512
      %1735 = vmatprep.subr.bf16.mxu0 %v1515
      %1736 = vmatpush1.bf16.msra.mxu0 %v1514
      %1737 = vmatprep.subr.bf16.mxu0 %v1517
      %1738 = vmatpush1.bf16.msra.mxu0 %v1516
      %1739 = vmatprep.subr.bf16.mxu0 %v1519
      %1740 = vmatpush1.bf16.msra.mxu0 %v1518
      %1741 = vmatprep.subr.bf16.mxu0 %v1521
      %1742 = vmatpush1.bf16.msra.mxu0 %v1520
      %1743 = vmatprep.subr.bf16.mxu0 %v1523
      %1744 = vmatpush1.bf16.msra.mxu0 %v1522
      %1745 = vmatprep.subr.bf16.mxu0 %v1525
      %1746 = vmatpush1.bf16.msra.mxu0 %v1524
      %1747 = vmatprep.subr.bf16.mxu0 %v1527
      %1748 = vmatpush1.bf16.msra.mxu0 %v1526
      %1749 = vmatprep.subr.bf16.mxu0 %v1529
      %1750 = vmatpush1.bf16.msra.mxu0 %v1528
      %1751 = vmatprep.subr.bf16.mxu0 %v1531
      %1752 = vmatpush1.bf16.msra.mxu0 %v1530
      %1753 = vmatprep.subr.bf16.mxu0 %v1533
      %1754 = vmatpush1.bf16.msra.mxu0 %v1532
      %1755 = vmatprep.subr.bf16.mxu0 %v1535
      %1756 = vmatpush1.bf16.msra.mxu0 %v1534
      %1757 = vmatprep.subr.bf16.mxu0 %v1537
      %1758 = vmatpush1.bf16.msra.mxu0 %v1536
      %1759 = vmatprep.subr.bf16.mxu0 %v1539
      %1760 = vmatpush1.bf16.msra.mxu0 %v1538
      %1761 = vmatprep.subr.bf16.mxu0 %v1541
      %1762 = vmatpush1.bf16.msra.mxu0 %v1540
      %1763 = vmatprep.mubr.bf16.mxu0 %v1138
      %1764 = vmatmul.mubr.bf16.gmra.mrb[0].mxu0 %v1137
      %v1765 = vpop.f32.mrb[0].mxu0
      %v1766 = vadd.f32 %v1725, %v1765
      %v1767 = vpop.f32.mrb[0].mxu0
      %v1768 = vadd.f32 %v1727, %v1767
      %v1769 = vpop.f32.mrb[0].mxu0
      %v1770 = vpop.f32.mrb[0].mxu0
      %1771 = vdwg.mxu0
      %1772 = vmatprep.subr.bf16.mxu0 %v1543
      %1773 = vmatpush1.bf16.msra.mxu0 %v1542
      %1774 = vmatprep.subr.bf16.mxu0 %v1545
      %1775 = vmatpush1.bf16.msra.mxu0 %v1544
      %1776 = vmatprep.subr.bf16.mxu0 0
      %1777 = vmatpush1.bf16.msra.mxu0 0
      %1778 = vmatprep.subr.bf16.mxu0 0
      %1779 = vmatpush1.bf16.msra.mxu0 0
      %1780 = vmatprep.subr.bf16.mxu0 0
      %1781 = vmatpush1.bf16.msra.mxu0 0
      %1782 = vmatprep.subr.bf16.mxu0 0
      %1783 = vmatpush1.bf16.msra.mxu0 0
      %1784 = vmatprep.subr.bf16.mxu0 0
      %1785 = vmatpush1.bf16.msra.mxu0 0
      %1786 = vmatprep.subr.bf16.mxu0 0
      %1787 = vmatpush1.bf16.msra.mxu0 0
      %1788 = vmatprep.subr.bf16.mxu0 0
      %1789 = vmatpush1.bf16.msra.mxu0 0
      %1790 = vmatprep.subr.bf16.mxu0 0
      %1791 = vmatpush1.bf16.msra.mxu0 0
      %1792 = vmatprep.subr.bf16.mxu0 0
      %1793 = vmatpush1.bf16.msra.mxu0 0
      %1794 = vmatprep.subr.bf16.mxu0 0
      %1795 = vmatpush1.bf16.msra.mxu0 0
      %1796 = vmatprep.subr.bf16.mxu0 0
      %1797 = vmatpush1.bf16.msra.mxu0 0
      %1798 = vmatprep.subr.bf16.mxu0 0
      %1799 = vmatpush1.bf16.msra.mxu0 0
      %1800 = vmatprep.subr.bf16.mxu0 0
      %1801 = vmatpush1.bf16.msra.mxu0 0
      %1802 = vmatprep.subr.bf16.mxu0 0
      %1803 = vmatpush1.bf16.msra.mxu0 0
      %1804 = vmatprep.mubr.bf16.mxu0 0
      %1805 = vmatmul.mubr.bf16.gmra.mrb[0].mxu0 %v1647
      %v1806 = vpop.f32.mrb[0].mxu0
      %v1807 = vadd.f32 %v1766, %v1806
      %v1808 = vpop.f32.mrb[0].mxu0
      %v1809 = vadd.f32 %v1768, %v1808
      %v1810 = vpop.f32.mrb[0].mxu0
      %v1811 = vpop.f32.mrb[0].mxu0
      %1812 = vdwg.mxu0
      %v1813 = vld [vmem:[%s165] sm:$0xee]
      %v1814 = vld [vmem:[%s165 + $0x8] sm:$0xee]
      %v1815 = vld [vmem:[%s165 + $0x10] sm:$0xee]
      %v1816 = vld [vmem:[%s165 + $0x18] sm:$0xe]
      %s1817 = scalar_lea.vmem %s1, 1600
      %v1818 = vld [vmem:[%s1817] sm:$0xff]
      %v1819 = vld [vmem:[%s1817 + $0x8] sm:$0xff]
      %v1820 = vld [vmem:[%s1817 + $0x10] sm:$0xff]
      %v1821 = vld [vmem:[%s1817 + $0x18] sm:$0xff]
      %v1822 = vld [vmem:[%s1817 + $0x20] sm:$0xff]
      %v1823 = vld [vmem:[%s1817 + $0x28] sm:$0xff]
      %v1824 = vld [vmem:[%s1817 + $0x30] sm:$0xff]
      %v1825 = vld [vmem:[%s1817 + $0x38] sm:$0xff]
      %v1826 = vld [vmem:[%s1817 + $0x40] sm:$0xff]
      %v1827 = vld [vmem:[%s1817 + $0x48] sm:$0xff]
      %v1828 = vld [vmem:[%s1817 + $0x50] sm:$0xff]
      %v1829 = vld [vmem:[%s1817 + $0x58] sm:$0xff]
      %v1830 = vld [vmem:[%s1817 + $0x60] sm:$0xff]
      %v1831 = vld [vmem:[%s1817 + $0x68] sm:$0xff]
      %v1832 = vld [vmem:[%s1817 + $0x70] sm:$0xff]
      %v1833 = vld [vmem:[%s1817 + $0x78] sm:$0xff]
      %v1834 = vld [vmem:[%s1817 + $0x80] sm:$0xff]
      %v1835 = vld [vmem:[%s1817 + $0x88] sm:$0xff]
      %v1836 = vld [vmem:[%s1817 + $0x90] sm:$0xff]
      %v1837 = vld [vmem:[%s1817 + $0x98] sm:$0xff]
      %v1838 = vld [vmem:[%s1817 + $0xa0] sm:$0xff]
      %v1839 = vld [vmem:[%s1817 + $0xa8] sm:$0xff]
      %v1840 = vld [vmem:[%s1817 + $0xb0] sm:$0xff]
      %v1841 = vld [vmem:[%s1817 + $0xb8] sm:$0xff]
      %v1842 = vld [vmem:[%s1817 + $0xc0] sm:$0xff]
      %v1843 = vld [vmem:[%s1817 + $0xc8] sm:$0xff]
      %v1844 = vld [vmem:[%s1817 + $0xd0] sm:$0xff]
      %v1845 = vld [vmem:[%s1817 + $0xd8] sm:$0xff]
      %v1846 = vld [vmem:[%s1817 + $0xe0] sm:$0xff]
      %v1847 = vld [vmem:[%s1817 + $0xe8] sm:$0xff]
      %v1848 = vld [vmem:[%s1817 + $0xf0] sm:$0xff]
      %v1849 = vld [vmem:[%s1817 + $0xf8] sm:$0xff]
      %v1850 = vld [vmem:[%s1817 + $0x100] sm:$0xff]
      %v1851 = vld [vmem:[%s1817 + $0x108] sm:$0xff]
      %v1852 = vld [vmem:[%s1817 + $0x110] sm:$0xff]
      %v1853 = vld [vmem:[%s1817 + $0x118] sm:$0xff]
      %v1854 = vld [vmem:[%s1817 + $0x120] sm:$0xff]
      %v1855 = vld [vmem:[%s1817 + $0x128] sm:$0xff]
      %v1856 = vld [vmem:[%s1817 + $0x130] sm:$0xff]
      %v1857 = vld [vmem:[%s1817 + $0x138] sm:$0xff]
      %v1858 = vld [vmem:[%s1817 + $0x140] sm:$0xff]
      %v1859 = vld [vmem:[%s1817 + $0x148] sm:$0xff]
      %v1860 = vld [vmem:[%s1817 + $0x150] sm:$0xff]
      %v1861 = vld [vmem:[%s1817 + $0x158] sm:$0xff]
      %v1862 = vld [vmem:[%s1817 + $0x160] sm:$0xff]
      %v1863 = vld [vmem:[%s1817 + $0x168] sm:$0xff]
      %v1864 = vld [vmem:[%s1817 + $0x170] sm:$0xff]
      %v1865 = vld [vmem:[%s1817 + $0x178] sm:$0xff]
      %v1866 = vld [vmem:[%s1817 + $0x180] sm:$0xff]
      %v1867 = vld [vmem:[%s1817 + $0x188] sm:$0xff]
      %v1868 = vld [vmem:[%s1817 + $0x190] sm:$0xff]
      %v1869 = vld [vmem:[%s1817 + $0x198] sm:$0xff]
      %v1870 = vld [vmem:[%s1817 + $0x1a0] sm:$0xff]
      %v1871 = vld [vmem:[%s1817 + $0x1a8] sm:$0xff]
      %v1872 = vld [vmem:[%s1817 + $0x1b0] sm:$0xff]
      %v1873 = vld [vmem:[%s1817 + $0x1b8] sm:$0xff]
      %v1874 = vld [vmem:[%s1817 + $0x1c0] sm:$0xff]
      %v1875 = vld [vmem:[%s1817 + $0x1c8] sm:$0xff]
      %v1876 = vld [vmem:[%s1817 + $0x1d0] sm:$0xff]
      %v1877 = vld [vmem:[%s1817 + $0x1d8] sm:$0xff]
      %v1878 = vld [vmem:[%s1817 + $0x1e0] sm:$0xff]
      %v1879 = vld [vmem:[%s1817 + $0x1e8] sm:$0xff]
      %v1880 = vld [vmem:[%s1817 + $0x1f0] sm:$0xff]
      %v1881 = vld [vmem:[%s1817 + $0x1f8] sm:$0xff]
      %v1882 = vld [vmem:[%s1817 + $0x200] sm:$0xff]
      %v1883 = vld [vmem:[%s1817 + $0x208] sm:$0xff]
      %v1884 = vld [vmem:[%s1817 + $0x210] sm:$0xff]
      %v1885 = vld [vmem:[%s1817 + $0x218] sm:$0xff]
      %v1886 = vld [vmem:[%s1817 + $0x220] sm:$0xff]
      %v1887 = vld [vmem:[%s1817 + $0x228] sm:$0xff]
      %v1888 = vld [vmem:[%s1817 + $0x230] sm:$0xff]
      %v1889 = vld [vmem:[%s1817 + $0x238] sm:$0xff]
      %v1890 = vld [vmem:[%s1817 + $0x240] sm:$0xff]
      %v1891 = vld [vmem:[%s1817 + $0x248] sm:$0xff]
      %v1892 = vld [vmem:[%s1817 + $0x250] sm:$0xff]
      %v1893 = vld [vmem:[%s1817 + $0x258] sm:$0xff]
      %v1894 = vld [vmem:[%s1817 + $0x260] sm:$0xff]
      %v1895 = vld [vmem:[%s1817 + $0x268] sm:$0xff]
      %v1896 = vld [vmem:[%s1817 + $0x270] sm:$0xff]
      %v1897 = vld [vmem:[%s1817 + $0x278] sm:$0xff]
      %v1898 = vld [vmem:[%s1817 + $0x280] sm:$0xff]
      %v1899 = vld [vmem:[%s1817 + $0x288] sm:$0xff]
      %v1900 = vld [vmem:[%s1817 + $0x290] sm:$0xff]
      %v1901 = vld [vmem:[%s1817 + $0x298] sm:$0xff]
      %v1902 = vld [vmem:[%s1817 + $0x2a0] sm:$0xff]
      %v1903 = vld [vmem:[%s1817 + $0x2a8] sm:$0xff]
      %v1904 = vld [vmem:[%s1817 + $0x2b0] sm:$0xff]
      %v1905 = vld [vmem:[%s1817 + $0x2b8] sm:$0xff]
      %v1906 = vld [vmem:[%s1817 + $0x2c0] sm:$0xff]
      %v1907 = vld [vmem:[%s1817 + $0x2c8] sm:$0xff]
      %v1908 = vld [vmem:[%s1817 + $0x2d0] sm:$0xff]
      %v1909 = vld [vmem:[%s1817 + $0x2d8] sm:$0xff]
      %v1910 = vld [vmem:[%s1817 + $0x2e0] sm:$0xff]
      %v1911 = vld [vmem:[%s1817 + $0x2e8] sm:$0xff]
      %v1912 = vld [vmem:[%s1817 + $0x2f0] sm:$0xff]
      %v1913 = vld [vmem:[%s1817 + $0x2f8] sm:$0xff]
      %v1914 = vld [vmem:[%s1817 + $0x300] sm:$0xff]
      %v1915 = vld [vmem:[%s1817 + $0x308] sm:$0xff]
      %v1916 = vld [vmem:[%s1817 + $0x310] sm:$0xff]
      %v1917 = vld [vmem:[%s1817 + $0x318] sm:$0xff]
      %v1922 = vunpack.c.l.b16 %v1813
      %v1923 = vunpack.c.h.b16 %v1813
      %v1924 = vunpack.c.l.b16 %v1814
      %v1925 = vunpack.c.h.b16 %v1814
      %v1926 = vunpack.c.l.b16 %v1815
      %v1927 = vunpack.c.h.b16 %v1815
      %v1928 = vunpack.c.l.b16 %v1816
      %v1929 = vpack.c.b16 %v396, %v1922
      %v1930 = vpack.c.b16 %v397, %v1923
      %v1931 = vpack.c.b16 %v398, %v1924
      %v1932 = vpack.c.b16 %v399, %v1925
      %v1933 = vpack.c.b16 %v400, %v1926
      %v1934 = vpack.c.b16 %v401, %v1927
      %v1935 = vpack.c.b16 %v402, %v1928
      %v1936 = vrot.slane %v1929, 1
      %v1937 = vrot.slane %v1930, 1
      %v1938 = vrot.slane %v1931, 1
      %v1939 = vrot.slane %v1932, 1
      %v1940 = vrot.slane %v1933, 1
      %v1941 = vrot.slane %v1934, 1
      %v1942 = vrot.slane %v1935, 1
      %v2049 = vunpack.c.l.b16 %v1818
      %v2050 = vunpack.c.h.b16 %v1818
      %v2051 = vunpack.c.l.b16 %v1819
      %v2052 = vunpack.c.h.b16 %v1819
      %v2053 = vunpack.c.l.b16 %v1820
      %v2054 = vunpack.c.h.b16 %v1820
      %v2055 = vunpack.c.l.b16 %v1821
      %v2056 = vunpack.c.h.b16 %v1821
      %v2057 = vunpack.c.l.b16 %v1822
      %v2058 = vunpack.c.h.b16 %v1822
      %v2059 = vunpack.c.l.b16 %v1823
      %v2060 = vunpack.c.h.b16 %v1823
      %v2061 = vunpack.c.l.b16 %v1824
      %v2062 = vunpack.c.h.b16 %v1824
      %v2063 = vunpack.c.l.b16 %v1825
      %v2064 = vunpack.c.h.b16 %v1825
      %v2065 = vunpack.c.l.b16 %v1826
      %v2066 = vunpack.c.h.b16 %v1826
      %v2067 = vunpack.c.l.b16 %v1827
      %v2068 = vunpack.c.h.b16 %v1827
      %v2069 = vunpack.c.l.b16 %v1828
      %v2070 = vunpack.c.h.b16 %v1828
      %v2071 = vunpack.c.l.b16 %v1829
      %v2072 = vunpack.c.h.b16 %v1829
      %v2073 = vunpack.c.l.b16 %v1830
      %v2074 = vunpack.c.h.b16 %v1830
      %v2075 = vunpack.c.l.b16 %v1831
      %v2076 = vunpack.c.h.b16 %v1831
      %v2077 = vunpack.c.l.b16 %v1832
      %v2078 = vunpack.c.h.b16 %v1832
      %v2079 = vunpack.c.l.b16 %v1833
      %v2080 = vunpack.c.h.b16 %v1833
      %v2081 = vunpack.c.l.b16 %v1834
      %v2082 = vunpack.c.h.b16 %v1834
      %v2083 = vunpack.c.l.b16 %v1835
      %v2084 = vunpack.c.h.b16 %v1835
      %v2085 = vunpack.c.l.b16 %v1836
      %v2086 = vunpack.c.h.b16 %v1836
      %v2087 = vunpack.c.l.b16 %v1837
      %v2088 = vunpack.c.h.b16 %v1837
      %v2089 = vunpack.c.l.b16 %v1838
      %v2090 = vunpack.c.h.b16 %v1838
      %v2091 = vunpack.c.l.b16 %v1839
      %v2092 = vunpack.c.h.b16 %v1839
      %v2093 = vunpack.c.l.b16 %v1840
      %v2094 = vunpack.c.h.b16 %v1840
      %v2095 = vunpack.c.l.b16 %v1841
      %v2096 = vunpack.c.h.b16 %v1841
      %v2097 = vunpack.c.l.b16 %v1842
      %v2098 = vunpack.c.h.b16 %v1842
      %v2099 = vunpack.c.l.b16 %v1843
      %v2100 = vunpack.c.h.b16 %v1843
      %v2101 = vunpack.c.l.b16 %v1844
      %v2102 = vunpack.c.h.b16 %v1844
      %v2103 = vunpack.c.l.b16 %v1845
      %v2104 = vunpack.c.h.b16 %v1845
      %v2105 = vunpack.c.l.b16 %v1846
      %v2106 = vunpack.c.h.b16 %v1846
      %v2107 = vunpack.c.l.b16 %v1847
      %v2108 = vunpack.c.h.b16 %v1847
      %v2109 = vunpack.c.l.b16 %v1848
      %v2110 = vunpack.c.h.b16 %v1848
      %v2111 = vunpack.c.l.b16 %v1849
      %v2112 = vunpack.c.h.b16 %v1849
      %v2113 = vunpack.c.l.b16 %v1850
      %v2114 = vunpack.c.h.b16 %v1850
      %v2115 = vunpack.c.l.b16 %v1851
      %v2116 = vunpack.c.h.b16 %v1851
      %v2117 = vunpack.c.l.b16 %v1852
      %v2118 = vunpack.c.h.b16 %v1852
      %v2119 = vunpack.c.l.b16 %v1853
      %v2120 = vunpack.c.h.b16 %v1853
      %v2121 = vunpack.c.l.b16 %v1854
      %v2122 = vunpack.c.h.b16 %v1854
      %v2123 = vunpack.c.l.b16 %v1855
      %v2124 = vunpack.c.h.b16 %v1855
      %v2125 = vunpack.c.l.b16 %v1856
      %v2126 = vunpack.c.h.b16 %v1856
      %v2127 = vunpack.c.l.b16 %v1857
      %v2128 = vunpack.c.h.b16 %v1857
      %v2129 = vunpack.c.l.b16 %v1858
      %v2130 = vunpack.c.h.b16 %v1858
      %v2131 = vunpack.c.l.b16 %v1859
      %v2132 = vunpack.c.h.b16 %v1859
      %v2133 = vunpack.c.l.b16 %v1860
      %v2134 = vunpack.c.h.b16 %v1860
      %v2135 = vunpack.c.l.b16 %v1861
      %v2136 = vunpack.c.h.b16 %v1861
      %v2137 = vunpack.c.l.b16 %v1862
      %v2138 = vunpack.c.h.b16 %v1862
      %v2139 = vunpack.c.l.b16 %v1863
      %v2140 = vunpack.c.h.b16 %v1863
      %v2141 = vunpack.c.l.b16 %v1864
      %v2142 = vunpack.c.h.b16 %v1864
      %v2143 = vunpack.c.l.b16 %v1865
      %v2144 = vunpack.c.h.b16 %v1865
      %v2145 = vunpack.c.l.b16 %v1866
      %v2146 = vunpack.c.h.b16 %v1866
      %v2147 = vunpack.c.l.b16 %v1867
      %v2148 = vunpack.c.h.b16 %v1867
      %v2149 = vunpack.c.l.b16 %v1868
      %v2150 = vunpack.c.h.b16 %v1868
      %v2151 = vunpack.c.l.b16 %v1869
      %v2152 = vunpack.c.h.b16 %v1869
      %v2153 = vunpack.c.l.b16 %v1870
      %v2154 = vunpack.c.h.b16 %v1870
      %v2155 = vunpack.c.l.b16 %v1871
      %v2156 = vunpack.c.h.b16 %v1871
      %v2157 = vunpack.c.l.b16 %v1872
      %v2158 = vunpack.c.h.b16 %v1872
      %v2159 = vunpack.c.l.b16 %v1873
      %v2160 = vunpack.c.h.b16 %v1873
      %v2161 = vunpack.c.l.b16 %v1874
      %v2162 = vunpack.c.h.b16 %v1874
      %v2163 = vunpack.c.l.b16 %v1875
      %v2164 = vunpack.c.h.b16 %v1875
      %v2165 = vunpack.c.l.b16 %v1876
      %v2166 = vunpack.c.h.b16 %v1876
      %v2167 = vunpack.c.l.b16 %v1877
      %v2168 = vunpack.c.h.b16 %v1877
      %v2169 = vunpack.c.l.b16 %v1878
      %v2170 = vunpack.c.h.b16 %v1878
      %v2171 = vunpack.c.l.b16 %v1879
      %v2172 = vunpack.c.h.b16 %v1879
      %v2173 = vunpack.c.l.b16 %v1880
      %v2174 = vunpack.c.h.b16 %v1880
      %v2175 = vunpack.c.l.b16 %v1881
      %v2176 = vunpack.c.h.b16 %v1881
      %v2177 = vunpack.c.l.b16 %v1882
      %v2178 = vunpack.c.h.b16 %v1882
      %v2179 = vunpack.c.l.b16 %v1883
      %v2180 = vunpack.c.h.b16 %v1883
      %v2181 = vunpack.c.l.b16 %v1884
      %v2182 = vunpack.c.h.b16 %v1884
      %v2183 = vunpack.c.l.b16 %v1885
      %v2184 = vunpack.c.h.b16 %v1885
      %v2185 = vunpack.c.l.b16 %v1886
      %v2186 = vunpack.c.h.b16 %v1886
      %v2187 = vunpack.c.l.b16 %v1887
      %v2188 = vunpack.c.h.b16 %v1887
      %v2189 = vunpack.c.l.b16 %v1888
      %v2190 = vunpack.c.h.b16 %v1888
      %v2191 = vunpack.c.l.b16 %v1889
      %v2192 = vunpack.c.h.b16 %v1889
      %v2193 = vunpack.c.l.b16 %v1890
      %v2194 = vunpack.c.h.b16 %v1890
      %v2195 = vunpack.c.l.b16 %v1891
      %v2196 = vunpack.c.h.b16 %v1891
      %v2197 = vunpack.c.l.b16 %v1892
      %v2198 = vunpack.c.h.b16 %v1892
      %v2199 = vunpack.c.l.b16 %v1893
      %v2200 = vunpack.c.h.b16 %v1893
      %v2201 = vunpack.c.l.b16 %v1894
      %v2202 = vunpack.c.h.b16 %v1894
      %v2203 = vunpack.c.l.b16 %v1895
      %v2204 = vunpack.c.h.b16 %v1895
      %v2205 = vunpack.c.l.b16 %v1896
      %v2206 = vunpack.c.h.b16 %v1896
      %v2207 = vunpack.c.l.b16 %v1897
      %v2208 = vunpack.c.h.b16 %v1897
      %v2209 = vunpack.c.l.b16 %v1898
      %v2210 = vunpack.c.h.b16 %v1898
      %v2211 = vunpack.c.l.b16 %v1899
      %v2212 = vunpack.c.h.b16 %v1899
      %v2213 = vunpack.c.l.b16 %v1900
      %v2214 = vunpack.c.h.b16 %v1900
      %v2215 = vunpack.c.l.b16 %v1901
      %v2216 = vunpack.c.h.b16 %v1901
      %v2217 = vunpack.c.l.b16 %v1902
      %v2218 = vunpack.c.h.b16 %v1902
      %v2219 = vunpack.c.l.b16 %v1903
      %v2220 = vunpack.c.h.b16 %v1903
      %v2221 = vunpack.c.l.b16 %v1904
      %v2222 = vunpack.c.h.b16 %v1904
      %v2223 = vunpack.c.l.b16 %v1905
      %v2224 = vunpack.c.h.b16 %v1905
      %v2225 = vunpack.c.l.b16 %v1906
      %v2226 = vunpack.c.h.b16 %v1906
      %v2227 = vunpack.c.l.b16 %v1907
      %v2228 = vunpack.c.h.b16 %v1907
      %v2229 = vunpack.c.l.b16 %v1908
      %v2230 = vunpack.c.h.b16 %v1908
      %v2231 = vunpack.c.l.b16 %v1909
      %v2232 = vunpack.c.h.b16 %v1909
      %v2233 = vunpack.c.l.b16 %v1910
      %v2234 = vunpack.c.h.b16 %v1910
      %v2235 = vunpack.c.l.b16 %v1911
      %v2236 = vunpack.c.h.b16 %v1911
      %v2237 = vunpack.c.l.b16 %v1912
      %v2238 = vunpack.c.h.b16 %v1912
      %v2239 = vunpack.c.l.b16 %v1913
      %v2240 = vunpack.c.h.b16 %v1913
      %v2241 = vunpack.c.l.b16 %v1914
      %v2242 = vunpack.c.h.b16 %v1914
      %v2243 = vunpack.c.l.b16 %v1915
      %v2244 = vunpack.c.h.b16 %v1915
      %v2245 = vunpack.c.l.b16 %v1916
      %v2246 = vunpack.c.h.b16 %v1916
      %v2247 = vunpack.c.l.b16 %v1917
      %v2248 = vunpack.c.h.b16 %v1917
      %v2249 = vpack.c.b16 %v2051, %v2049
      %v2250 = vpack.c.b16 %v2052, %v2050
      %v2251 = vpack.c.b16 %v2055, %v2053
      %v2252 = vpack.c.b16 %v2056, %v2054
      %v2253 = vpack.c.b16 %v2059, %v2057
      %v2254 = vpack.c.b16 %v2060, %v2058
      %v2255 = vpack.c.b16 %v2063, %v2061
      %v2256 = vpack.c.b16 %v2064, %v2062
      %v2257 = vpack.c.b16 %v2067, %v2065
      %v2258 = vpack.c.b16 %v2068, %v2066
      %v2259 = vpack.c.b16 %v2071, %v2069
      %v2260 = vpack.c.b16 %v2072, %v2070
      %v2261 = vpack.c.b16 %v2075, %v2073
      %v2262 = vpack.c.b16 %v2076, %v2074
      %v2263 = vpack.c.b16 %v2079, %v2077
      %v2264 = vpack.c.b16 %v2080, %v2078
      %v2265 = vpack.c.b16 %v2083, %v2081
      %v2266 = vpack.c.b16 %v2084, %v2082
      %v2267 = vpack.c.b16 %v2087, %v2085
      %v2268 = vpack.c.b16 %v2088, %v2086
      %v2269 = vpack.c.b16 %v2091, %v2089
      %v2270 = vpack.c.b16 %v2092, %v2090
      %v2271 = vpack.c.b16 %v2095, %v2093
      %v2272 = vpack.c.b16 %v2096, %v2094
      %v2273 = vpack.c.b16 %v2099, %v2097
      %v2274 = vpack.c.b16 %v2100, %v2098
      %v2275 = vpack.c.b16 %v2103, %v2101
      %v2276 = vpack.c.b16 %v2104, %v2102
      %v2277 = vpack.c.b16 %v2107, %v2105
      %v2278 = vpack.c.b16 %v2108, %v2106
      %v2279 = vpack.c.b16 %v2111, %v2109
      %v2280 = vpack.c.b16 %v2112, %v2110
      %v2281 = vpack.c.b16 %v2115, %v2113
      %v2282 = vpack.c.b16 %v2116, %v2114
      %v2283 = vpack.c.b16 %v2119, %v2117
      %v2284 = vpack.c.b16 %v2120, %v2118
      %v2285 = vpack.c.b16 %v2123, %v2121
      %v2286 = vpack.c.b16 %v2124, %v2122
      %v2287 = vpack.c.b16 %v2127, %v2125
      %v2288 = vpack.c.b16 %v2128, %v2126
      %v2289 = vpack.c.b16 %v2131, %v2129
      %v2290 = vpack.c.b16 %v2132, %v2130
      %v2291 = vpack.c.b16 %v2135, %v2133
      %v2292 = vpack.c.b16 %v2136, %v2134
      %v2293 = vpack.c.b16 %v2139, %v2137
      %v2294 = vpack.c.b16 %v2140, %v2138
      %v2295 = vpack.c.b16 %v2143, %v2141
      %v2296 = vpack.c.b16 %v2144, %v2142
      %v2297 = vpack.c.b16 %v2147, %v2145
      %v2298 = vpack.c.b16 %v2148, %v2146
      %v2299 = vpack.c.b16 %v2151, %v2149
      %v2300 = vpack.c.b16 %v2152, %v2150
      %v2301 = vpack.c.b16 %v2155, %v2153
      %v2302 = vpack.c.b16 %v2156, %v2154
      %v2303 = vpack.c.b16 %v2159, %v2157
      %v2304 = vpack.c.b16 %v2160, %v2158
      %v2305 = vpack.c.b16 %v2163, %v2161
      %v2306 = vpack.c.b16 %v2164, %v2162
      %v2307 = vpack.c.b16 %v2167, %v2165
      %v2308 = vpack.c.b16 %v2168, %v2166
      %v2309 = vpack.c.b16 %v2171, %v2169
      %v2310 = vpack.c.b16 %v2172, %v2170
      %v2311 = vpack.c.b16 %v2175, %v2173
      %v2312 = vpack.c.b16 %v2176, %v2174
      %v2313 = vpack.c.b16 %v2179, %v2177
      %v2314 = vpack.c.b16 %v2180, %v2178
      %v2315 = vpack.c.b16 %v2183, %v2181
      %v2316 = vpack.c.b16 %v2184, %v2182
      %v2317 = vpack.c.b16 %v2187, %v2185
      %v2318 = vpack.c.b16 %v2188, %v2186
      %v2319 = vpack.c.b16 %v2191, %v2189
      %v2320 = vpack.c.b16 %v2192, %v2190
      %v2321 = vpack.c.b16 %v2195, %v2193
      %v2322 = vpack.c.b16 %v2196, %v2194
      %v2323 = vpack.c.b16 %v2199, %v2197
      %v2324 = vpack.c.b16 %v2200, %v2198
      %v2325 = vpack.c.b16 %v2203, %v2201
      %v2326 = vpack.c.b16 %v2204, %v2202
      %v2327 = vpack.c.b16 %v2207, %v2205
      %v2328 = vpack.c.b16 %v2208, %v2206
      %v2329 = vpack.c.b16 %v2211, %v2209
      %v2330 = vpack.c.b16 %v2212, %v2210
      %v2331 = vpack.c.b16 %v2215, %v2213
      %v2332 = vpack.c.b16 %v2216, %v2214
      %v2333 = vpack.c.b16 %v2219, %v2217
      %v2334 = vpack.c.b16 %v2220, %v2218
      %v2335 = vpack.c.b16 %v2223, %v2221
      %v2336 = vpack.c.b16 %v2224, %v2222
      %v2337 = vpack.c.b16 %v2227, %v2225
      %v2338 = vpack.c.b16 %v2228, %v2226
      %v2339 = vpack.c.b16 %v2231, %v2229
      %v2340 = vpack.c.b16 %v2232, %v2230
      %v2341 = vpack.c.b16 %v2235, %v2233
      %v2342 = vpack.c.b16 %v2236, %v2234
      %v2343 = vpack.c.b16 %v2239, %v2237
      %v2344 = vpack.c.b16 %v2240, %v2238
      %v2345 = vpack.c.b16 %v2243, %v2241
      %v2346 = vpack.c.b16 %v2244, %v2242
      %v2347 = vpack.c.b16 %v2247, %v2245
      %v2348 = vpack.c.b16 %v2248, %v2246
      %v2450 = vsel %vm965, %v1942, 0
      %2452 = vmatprep.subr.bf16.mxu0 %v2250
      %2453 = vmatpush1.bf16.msra.mxu0 %v2249
      %2454 = vmatprep.subr.bf16.mxu0 %v2252
      %2455 = vmatpush1.bf16.msra.mxu0 %v2251
      %2456 = vmatprep.subr.bf16.mxu0 %v2254
      %2457 = vmatpush1.bf16.msra.mxu0 %v2253
      %2458 = vmatprep.subr.bf16.mxu0 %v2256
      %2459 = vmatpush1.bf16.msra.mxu0 %v2255
      %2460 = vmatprep.subr.bf16.mxu0 %v2258
      %2461 = vmatpush1.bf16.msra.mxu0 %v2257
      %2462 = vmatprep.subr.bf16.mxu0 %v2260
      %2463 = vmatpush1.bf16.msra.mxu0 %v2259
      %2464 = vmatprep.subr.bf16.mxu0 %v2262
      %2465 = vmatpush1.bf16.msra.mxu0 %v2261
      %2466 = vmatprep.subr.bf16.mxu0 %v2264
      %2467 = vmatpush1.bf16.msra.mxu0 %v2263
      %2468 = vmatprep.subr.bf16.mxu0 %v2266
      %2469 = vmatpush1.bf16.msra.mxu0 %v2265
      %2470 = vmatprep.subr.bf16.mxu0 %v2268
      %2471 = vmatpush1.bf16.msra.mxu0 %v2267
      %2472 = vmatprep.subr.bf16.mxu0 %v2270
      %2473 = vmatpush1.bf16.msra.mxu0 %v2269
      %2474 = vmatprep.subr.bf16.mxu0 %v2272
      %2475 = vmatpush1.bf16.msra.mxu0 %v2271
      %2476 = vmatprep.subr.bf16.mxu0 %v2274
      %2477 = vmatpush1.bf16.msra.mxu0 %v2273
      %2478 = vmatprep.subr.bf16.mxu0 %v2276
      %2479 = vmatpush1.bf16.msra.mxu0 %v2275
      %2480 = vmatprep.subr.bf16.mxu0 %v2278
      %2481 = vmatpush1.bf16.msra.mxu0 %v2277
      %2482 = vmatprep.subr.bf16.mxu0 %v2280
      %2483 = vmatpush1.bf16.msra.mxu0 %v2279
      %2484 = vmatprep.mubr.bf16.mxu0 %v1937
      %2485 = vmatmul.mubr.bf16.gmra.mrb[0].mxu0 %v1936
      %v2486 = vpop.f32.mrb[0].mxu0
      %v2487 = vadd.f32 0.0, %v2486
      %v2488 = vpop.f32.mrb[0].mxu0
      %v2489 = vadd.f32 0.0, %v2488
      %v2490 = vpop.f32.mrb[0].mxu0
      %v2491 = vpop.f32.mrb[0].mxu0
      %2492 = vdwg.mxu0
      %2493 = vmatprep.subr.bf16.mxu0 %v2282
      %2494 = vmatpush1.bf16.msra.mxu0 %v2281
      %2495 = vmatprep.subr.bf16.mxu0 %v2284
      %2496 = vmatpush1.bf16.msra.mxu0 %v2283
      %2497 = vmatprep.subr.bf16.mxu0 %v2286
      %2498 = vmatpush1.bf16.msra.mxu0 %v2285
      %2499 = vmatprep.subr.bf16.mxu0 %v2288
      %2500 = vmatpush1.bf16.msra.mxu0 %v2287
      %2501 = vmatprep.subr.bf16.mxu0 %v2290
      %2502 = vmatpush1.bf16.msra.mxu0 %v2289
      %2503 = vmatprep.subr.bf16.mxu0 %v2292
      %2504 = vmatpush1.bf16.msra.mxu0 %v2291
      %2505 = vmatprep.subr.bf16.mxu0 %v2294
      %2506 = vmatpush1.bf16.msra.mxu0 %v2293
      %2507 = vmatprep.subr.bf16.mxu0 %v2296
      %2508 = vmatpush1.bf16.msra.mxu0 %v2295
      %2509 = vmatprep.subr.bf16.mxu0 %v2298
      %2510 = vmatpush1.bf16.msra.mxu0 %v2297
      %2511 = vmatprep.subr.bf16.mxu0 %v2300
      %2512 = vmatpush1.bf16.msra.mxu0 %v2299
      %2513 = vmatprep.subr.bf16.mxu0 %v2302
      %2514 = vmatpush1.bf16.msra.mxu0 %v2301
      %2515 = vmatprep.subr.bf16.mxu0 %v2304
      %2516 = vmatpush1.bf16.msra.mxu0 %v2303
      %2517 = vmatprep.subr.bf16.mxu0 %v2306
      %2518 = vmatpush1.bf16.msra.mxu0 %v2305
      %2519 = vmatprep.subr.bf16.mxu0 %v2308
      %2520 = vmatpush1.bf16.msra.mxu0 %v2307
      %2521 = vmatprep.subr.bf16.mxu0 %v2310
      %2522 = vmatpush1.bf16.msra.mxu0 %v2309
      %2523 = vmatprep.subr.bf16.mxu0 %v2312
      %2524 = vmatpush1.bf16.msra.mxu0 %v2311
      %2525 = vmatprep.mubr.bf16.mxu0 %v1939
      %2526 = vmatmul.mubr.bf16.gmra.mrb[0].mxu0 %v1938
      %v2527 = vpop.f32.mrb[0].mxu0
      %v2528 = vadd.f32 %v2487, %v2527
      %v2529 = vpop.f32.mrb[0].mxu0
      %v2530 = vadd.f32 %v2489, %v2529
      %v2531 = vpop.f32.mrb[0].mxu0
      %v2532 = vpop.f32.mrb[0].mxu0
      %2533 = vdwg.mxu0
      %2534 = vmatprep.subr.bf16.mxu0 %v2314
      %2535 = vmatpush1.bf16.msra.mxu0 %v2313
      %2536 = vmatprep.subr.bf16.mxu0 %v2316
      %2537 = vmatpush1.bf16.msra.mxu0 %v2315
      %2538 = vmatprep.subr.bf16.mxu0 %v2318
      %2539 = vmatpush1.bf16.msra.mxu0 %v2317
      %2540 = vmatprep.subr.bf16.mxu0 %v2320
      %2541 = vmatpush1.bf16.msra.mxu0 %v2319
      %2542 = vmatprep.subr.bf16.mxu0 %v2322
      %2543 = vmatpush1.bf16.msra.mxu0 %v2321
      %2544 = vmatprep.subr.bf16.mxu0 %v2324
      %2545 = vmatpush1.bf16.msra.mxu0 %v2323
      %2546 = vmatprep.subr.bf16.mxu0 %v2326
      %2547 = vmatpush1.bf16.msra.mxu0 %v2325
      %2548 = vmatprep.subr.bf16.mxu0 %v2328
      %2549 = vmatpush1.bf16.msra.mxu0 %v2327
      %2550 = vmatprep.subr.bf16.mxu0 %v2330
      %2551 = vmatpush1.bf16.msra.mxu0 %v2329
      %2552 = vmatprep.subr.bf16.mxu0 %v2332
      %2553 = vmatpush1.bf16.msra.mxu0 %v2331
      %2554 = vmatprep.subr.bf16.mxu0 %v2334
      %2555 = vmatpush1.bf16.msra.mxu0 %v2333
      %2556 = vmatprep.subr.bf16.mxu0 %v2336
      %2557 = vmatpush1.bf16.msra.mxu0 %v2335
      %2558 = vmatprep.subr.bf16.mxu0 %v2338
      %2559 = vmatpush1.bf16.msra.mxu0 %v2337
      %2560 = vmatprep.subr.bf16.mxu0 %v2340
      %2561 = vmatpush1.bf16.msra.mxu0 %v2339
      %2562 = vmatprep.subr.bf16.mxu0 %v2342
      %2563 = vmatpush1.bf16.msra.mxu0 %v2341
      %2564 = vmatprep.subr.bf16.mxu0 %v2344
      %2565 = vmatpush1.bf16.msra.mxu0 %v2343
      %2566 = vmatprep.mubr.bf16.mxu0 %v1941
      %2567 = vmatmul.mubr.bf16.gmra.mrb[0].mxu0 %v1940
      %v2568 = vpop.f32.mrb[0].mxu0
      %v2569 = vadd.f32 %v2528, %v2568
      %v2570 = vpop.f32.mrb[0].mxu0
      %v2571 = vadd.f32 %v2530, %v2570
      %v2572 = vpop.f32.mrb[0].mxu0
      %v2573 = vpop.f32.mrb[0].mxu0
      %2574 = vdwg.mxu0
      %2575 = vmatprep.subr.bf16.mxu0 %v2346
      %2576 = vmatpush1.bf16.msra.mxu0 %v2345
      %2577 = vmatprep.subr.bf16.mxu0 %v2348
      %2578 = vmatpush1.bf16.msra.mxu0 %v2347
      %2579 = vmatprep.subr.bf16.mxu0 0
      %2580 = vmatpush1.bf16.msra.mxu0 0
      %2581 = vmatprep.subr.bf16.mxu0 0
      %2582 = vmatpush1.bf16.msra.mxu0 0
      %2583 = vmatprep.subr.bf16.mxu0 0
      %2584 = vmatpush1.bf16.msra.mxu0 0
      %2585 = vmatprep.subr.bf16.mxu0 0
      %2586 = vmatpush1.bf16.msra.mxu0 0
      %2587 = vmatprep.subr.bf16.mxu0 0
      %2588 = vmatpush1.bf16.msra.mxu0 0
      %2589 = vmatprep.subr.bf16.mxu0 0
      %2590 = vmatpush1.bf16.msra.mxu0 0
      %2591 = vmatprep.subr.bf16.mxu0 0
      %2592 = vmatpush1.bf16.msra.mxu0 0
      %2593 = vmatprep.subr.bf16.mxu0 0
      %2594 = vmatpush1.bf16.msra.mxu0 0
      %2595 = vmatprep.subr.bf16.mxu0 0
      %2596 = vmatpush1.bf16.msra.mxu0 0
      %2597 = vmatprep.subr.bf16.mxu0 0
      %2598 = vmatpush1.bf16.msra.mxu0 0
      %2599 = vmatprep.subr.bf16.mxu0 0
      %2600 = vmatpush1.bf16.msra.mxu0 0
      %2601 = vmatprep.subr.bf16.mxu0 0
      %2602 = vmatpush1.bf16.msra.mxu0 0
      %2603 = vmatprep.subr.bf16.mxu0 0
      %2604 = vmatpush1.bf16.msra.mxu0 0
      %2605 = vmatprep.subr.bf16.mxu0 0
      %2606 = vmatpush1.bf16.msra.mxu0 0
      %2607 = vmatprep.mubr.bf16.mxu0 0
      %2608 = vmatmul.mubr.bf16.gmra.mrb[0].mxu0 %v2450
      %v2609 = vpop.f32.mrb[0].mxu0
      %v2610 = vadd.f32 %v2569, %v2609
      %v2611 = vpop.f32.mrb[0].mxu0
      %v2612 = vadd.f32 %v2571, %v2611
      %v2613 = vpop.f32.mrb[0].mxu0
      %v2614 = vpop.f32.mrb[0].mxu0
      %2615 = vdwg.mxu0
      %v2616 = vadd.f32 %v1807, %v2610
      %v2617 = vadd.f32 %v1809, %v2612
      %v2618 = vld [vmem:[%s2] sm:$0x3]
      %v2620 = vlaneseq
      %v2621 = vshrl.u32 %v2620, 7
      %v2622 = vsub.s32 0, %v2621
      %v2623 = vrot.slane %v2618, %v2622
      %v2624 = vlaneseq
      %v2625 = vshrl.u32 %v2624, 7
      %v2626 = vsub.s32 1, %v2625
      %v2627 = vrot.slane %v2618, %v2626
      %v2630 = vadd.f32 %v2616, %v2623
      %v2631 = vadd.f32 %v2617, %v2627
      %v2632 = vmax.f32 %v2630, 0.0
      %v2633 = vmax.f32 %v2631, 0.0
      %v2634 = vpack.c.bf16 %v2632, %v2632
      %v2635 = vpack.c.bf16 %v2633, %v2633
      %v2638 = vunpack.c.l.b16 %v2634
      %v2639 = vunpack.c.l.b16 %v2635
      %v2640 = vpack.c.b16 %v2639, %v2638
      %2642 = vst [vmem:[%s170] sm:$0xff] %v2640
      %p2643 = scmp.lt.s32.totalorder %s14, 1
      %s2644 = scalar_select %p2643, %s14, 1
      %s2645 = smul.addr %s2644, 2
      %s2646 = smul.addr %s2645, 4
      %s2647 = scalar_lea.vmem %s3, %s2646
      // Predicated region
      $region33: #{ublock_forward.12} parent=31 // pred_check
        %p2648 = pneg %p100
      $region34: #{ublock_forward.12} parent=31 // pred_check_branch
        %2650 = sbr.rel (%p2648) target = $region36
      $region35: #{ublock_forward.12} parent=31 // pred_region
        _
      $region36: #{ublock_forward.12} parent=31 // pred_fallthru
        _
    $region32: #{ublock_forward.12} parent=5 // pred_fallthru
      _
    %p2651 = scmp.le.s32.totalorder 2, %s9
    // Predicated region
    $region37: #{ublock_forward.12} parent=5 // pred_check
      %p2652 = pneg %p2651
    $region38: #{ublock_forward.12} parent=5 // pred_check_branch
      %2654 = sbr.rel (%p2652) target = $region40
    $region39: #{ublock_forward.12} parent=5 // pred_region
      %s2655 = ssub.s32 %s9, 2
      // Predicated region
      $region41: #{ublock_forward.12} parent=39 // pred_check
        %p2656 = pneg %p106
      $region42: #{ublock_forward.12} parent=39 // pred_check_branch
        %2658 = sbr.rel (%p2656) target = $region44
      $region43: #{ublock_forward.12} parent=39 // pred_region
        %p2659 = scmp.lt.s32.totalorder %s15, 1
        %s2660 = scalar_select %p2659, %s15, 1
        %s2661 = smul.addr %s2660, 2
        %s2662 = smul.addr %s2661, 4
        %s2663 = scalar_lea.vmem %s3, %s2662
      $region44: #{ublock_forward.12} parent=39 // pred_fallthru
        _
    $region40: #{ublock_forward.12} parent=5 // pred_fallthru
      _
  $region6: #{ublock_forward.12} parent=0 // loop_footer
    %s13 = sadd.s32 1, %s9
  $region7: #{ublock_forward.12} parent=0 // loop_footer_branch
    %8 = sbr.rel target = $region3
  $region8: #{ublock_forward.12} parent=0 // loop_exit
    _

// kernel: ublock_forward.11
$region0: #{ublock_forward.11}
  #allocation0 [shape = 'u32[]', space=smem, size = 0x4, offset = 0x4, fixed_abs, tag = 'smem constant byte address 0x4 - core index']
  #allocation1 [shape = 'u32[144,128]{1,0:T(1,128)}', space=vmem, size = 0x12000, scoped, tag = 'internal scratch']
  %s0 = inlined_call_operand.vmem [shape: bf16[2,8,512], index: 0, kind: input, shape index: {}]
  %s1 = inlined_call_operand.vmem [shape: bf16[1,512,256], index: 1, kind: input, shape index: {}]
  %s2 = inlined_call_operand.vmem [shape: f32[1,256], index: 2, kind: input, shape index: {}]
  %s3 = inlined_call_operand.vmem [shape: bf16[2,8,256], index: 3, kind: output, shape index: {}]
  %s4 = sld [smem:[#allocation0]]
  $region45: #{ublock_forward.11} parent=0
    _
  %s6 = ssub.s32 1, %s4
  %s7 = scalar_select 0, %s6, %s4
  loop: start=0, step=1, limit=4
  $region2: #{ublock_forward.11} parent=0 // loop_pre_header
    _
  $region3: #{ublock_forward.11} parent=0 // loop_header
    %s9 = sphi 0, %s13
    %p10 = scmp.ge.s32.totalorder %s9, 4
    %s19 = sphi 0, %s21
    %s22 = sphi 0, %s19
    %s23 = sphi 0, %s22
    %s39 = sphi 0, %s23
    %s43 = sphi 0, %s43
    %s45 = sphi 0, %s43
    %s46 = sphi 0, %s45
    %s60 = sphi 0, %s46
    %s64 = sphi 0, %s64
    %s66 = sphi 0, %s64
    %s67 = sphi 0, %s66
    %s81 = sphi 0, %s67
    %s87 = sphi 0, %s89
    %s90 = sphi 0, %s87
    %s91 = sphi 0, %s90
    %s107 = sphi 0, %s91
  $region4: #{ublock_forward.11} parent=0 // loop_header_branch
    %12 = sbr.rel (%p10) target = $region8
  $region5: #{ublock_forward.11} parent=0 // loop_body
    %s14 = ssub.s32 %s9, 1
    %s15 = ssub.s32 %s9, 2
    %s16 = sadd.s32 %s9, 1
    %s17 = ssub.s32 %s9, %s16
    %p18 = scmp.eq.s32.totalorder %s17, 0
    %s20 = sadd.s32 %s19, 1
    %s21 = scalar_select %p18, %s19, %s20
    %p24 = pneg %p18
    %p25 = scmp.eq.s32.totalorder %s9, 1
    %p26 = por %p24, %p25
    %p27 = scmp.ne.s32.totalorder %s19, %s22
    %p28 = scmp.eq.s32.totalorder %s9, 0
    %p29 = por %p27, %p28
    %p30 = scmp.ne.s32.totalorder %s19, %s22
    %p31 = scmp.eq.s32.totalorder %s14, 1
    %p32 = por %p30, %p31
    %p33 = scmp.ne.s32.totalorder %s22, %s23
    %p34 = scmp.eq.s32.totalorder %s14, 0
    %p35 = por %p33, %p34
    %p36 = scmp.ne.s32.totalorder %s22, %s23
    %p37 = scmp.eq.s32.totalorder %s15, 1
    %p38 = por %p36, %p37
    %p40 = scmp.ne.s32.totalorder %s23, %s39
    %p41 = scmp.eq.s32.totalorder %s15, 0
    %p42 = por %p40, %p41
    %s44 = sadd.s32 %s43, 1
    %p47 = scmp.eq.s32.totalorder %s9, 1
    %p48 = scmp.ne.s32.totalorder %s43, %s45
    %p49 = scmp.eq.s32.totalorder %s9, 0
    %p50 = por %p48, %p49
    %p51 = scmp.ne.s32.totalorder %s43, %s45
    %p52 = scmp.eq.s32.totalorder %s14, 1
    %p53 = por %p51, %p52
    %p54 = scmp.ne.s32.totalorder %s45, %s46
    %p55 = scmp.eq.s32.totalorder %s14, 0
    %p56 = por %p54, %p55
    %p57 = scmp.ne.s32.totalorder %s45, %s46
    %p58 = scmp.eq.s32.totalorder %s15, 1
    %p59 = por %p57, %p58
    %p61 = scmp.ne.s32.totalorder %s46, %s60
    %p62 = scmp.eq.s32.totalorder %s15, 0
    %p63 = por %p61, %p62
    %s65 = sadd.s32 %s64, 1
    %p68 = scmp.eq.s32.totalorder %s9, 1
    %p69 = scmp.ne.s32.totalorder %s64, %s66
    %p70 = scmp.eq.s32.totalorder %s9, 0
    %p71 = por %p69, %p70
    %p72 = scmp.ne.s32.totalorder %s64, %s66
    %p73 = scmp.eq.s32.totalorder %s14, 1
    %p74 = por %p72, %p73
    %p75 = scmp.ne.s32.totalorder %s66, %s67
    %p76 = scmp.eq.s32.totalorder %s14, 0
    %p77 = por %p75, %p76
    %p78 = scmp.ne.s32.totalorder %s66, %s67
    %p79 = scmp.eq.s32.totalorder %s15, 1
    %p80 = por %p78, %p79
    %p82 = scmp.ne.s32.totalorder %s67, %s81
    %p83 = scmp.eq.s32.totalorder %s15, 0
    %p84 = por %p82, %p83
    %s85 = ssub.s32 %s9, %s16
    %p86 = scmp.eq.s32.totalorder %s85, 0
    %s88 = sadd.s32 %s87, 1
    %s89 = scalar_select %p86, %s87, %s88
    %p92 = pneg %p86
    %p93 = scmp.eq.s32.totalorder %s9, 1
    %p94 = por %p92, %p93
    %p95 = scmp.ne.s32.totalorder %s87, %s90
    %p96 = scmp.eq.s32.totalorder %s9, 0
    %p97 = por %p95, %p96
    %p98 = scmp.ne.s32.totalorder %s87, %s90
    %p99 = scmp.eq.s32.totalorder %s14, 1
    %p100 = por %p98, %p99
    %p101 = scmp.ne.s32.totalorder %s90, %s91
    %p102 = scmp.eq.s32.totalorder %s14, 0
    %p103 = por %p101, %p102
    %p104 = scmp.ne.s32.totalorder %s90, %s91
    %p105 = scmp.eq.s32.totalorder %s15, 1
    %p106 = por %p104, %p105
    %p108 = scmp.ne.s32.totalorder %s91, %s107
    %p109 = scmp.eq.s32.totalorder %s15, 0
    %p110 = por %p108, %p109
    %p111 = scmp.le.s32.totalorder 1, %s9
    %p112 = scmp.lt.s32.totalorder %s9, 3
    %p113 = pnand %p111, %p112
    %p114 = pneg %p113
    // Predicated region
    $region9: #{ublock_forward.11} parent=5 // pred_check
      _
    $region10: #{ublock_forward.11} parent=5 // pred_check_branch
      %116 = sbr.rel (%p113) target = $region12
    $region11: #{ublock_forward.11} parent=5 // pred_region
      %s117 = ssub.s32 %s9, 1
      // Predicated region
      $region13: #{ublock_forward.11} parent=11 // pred_check
        %p118 = pneg %p56
      $region14: #{ublock_forward.11} parent=11 // pred_check_branch
        %120 = sbr.rel (%p118) target = $region16
      $region15: #{ublock_forward.11} parent=11 // pred_region
        _
      $region16: #{ublock_forward.11} parent=11 // pred_fallthru
        _
      // Predicated region
      $region17: #{ublock_forward.11} parent=11 // pred_check
        %p121 = pneg %p77
      $region18: #{ublock_forward.11} parent=11 // pred_check_branch
        %123 = sbr.rel (%p121) target = $region20
      $region19: #{ublock_forward.11} parent=11 // pred_region
        _
      $region20: #{ublock_forward.11} parent=11 // pred_fallthru
        _
    $region12: #{ublock_forward.11} parent=5 // pred_fallthru
      _
    %p124 = scmp.lt.s32.totalorder %s9, 2
    // Predicated region
    $region21: #{ublock_forward.11} parent=5 // pred_check
      %p125 = pneg %p124
    $region22: #{ublock_forward.11} parent=5 // pred_check_branch
      %127 = sbr.rel (%p125) target = $region24
    $region23: #{ublock_forward.11} parent=5 // pred_region
      // Predicated region
      $region25: #{ublock_forward.11} parent=23 // pred_check
        %p128 = pneg %p29
      $region26: #{ublock_forward.11} parent=23 // pred_check_branch
        %130 = sbr.rel (%p128) target = $region28
      $region27: #{ublock_forward.11} parent=23 // pred_region
        %p131 = scmp.lt.s32.totalorder %s9, 1
        %s132 = scalar_select %p131, %s9, 1
        %s133 = smul.addr %s132, 4
        %s134 = smul.addr %s133, 4
        %s135 = scalar_lea.vmem %s0, %s134
      $region28: #{ublock_forward.11} parent=23 // pred_fallthru
        _
    $region24: #{ublock_forward.11} parent=5 // pred_fallthru
      _
    %p136 = scmp.le.s32.totalorder 1, %s9
    %p137 = scmp.lt.s32.totalorder %s9, 3
    %p138 = pnand %p136, %p137
    %p139 = pneg %p138
    // Predicated region
    $region29: #{ublock_forward.11} parent=5 // pred_check
      _
    $region30: #{ublock_forward.11} parent=5 // pred_check_branch
      %141 = sbr.rel (%p138) target = $region32
    $region31: #{ublock_forward.11} parent=5 // pred_region
      %s142 = ssub.s32 %s9, 1
      %p143 = scmp.lt.s32.totalorder %s14, 1
      %s144 = scalar_select %p143, %s14, 1
      %s145 = smul.addr %s144, 4
      %s146 = smul.addr %s145, 4
      %s147 = scalar_lea.vmem %s0, %s146
      %p148 = pneg %p35
      %p149 = pneg %p32
      %p150 = pneg %p56
      %p151 = pneg %p53
      %p152 = pneg %p77
      %p153 = pneg %p74
      %p154 = pneg %p103
      %p155 = pneg %p100
      %p156 = scmp.lt.s32.totalorder %s14, 1
      %s157 = scalar_select %p156, %s14, 1
      %s158 = smul.addr %s157, 2
      %s159 = smul.addr %s158, 4
      %s160 = scalar_lea.vmem %s3, %s159
      %p161 = scmp.lt.s32.totalorder %s14, 1
      %s162 = scalar_select %p161, %s14, 1
      %s163 = smul.addr %s162, 4
      %s164 = smul.addr %s163, 4
      %s165 = scalar_lea.vmem %s0, %s164
      %p166 = scmp.lt.s32.totalorder %s14, 1
      %s167 = scalar_select %p166, %s14, 1
      %s168 = smul.addr %s167, 2
      %s169 = smul.addr %s168, 4
      %s170 = scalar_lea.vmem %s3, %s169
      %v171 = vld [vmem:[%s165] sm:$0xff]
      %v172 = vld [vmem:[%s165 + $0x8] sm:$0xff]
      %v173 = vld [vmem:[%s1] sm:$0xff]
      %v174 = vld [vmem:[%s1 + $0x8] sm:$0xff]
      %v175 = vld [vmem:[%s1 + $0x10] sm:$0xff]
      %v176 = vld [vmem:[%s1 + $0x18] sm:$0xff]
      %v177 = vld [vmem:[%s1 + $0x20] sm:$0xff]
      %v178 = vld [vmem:[%s1 + $0x28] sm:$0xff]
      %v179 = vld [vmem:[%s1 + $0x30] sm:$0xff]
      %v180 = vld [vmem:[%s1 + $0x38] sm:$0xff]
      %v181 = vld [vmem:[%s1 + $0x40] sm:$0xff]
      %v182 = vld [vmem:[%s1 + $0x48] sm:$0xff]
      %v183 = vld [vmem:[%s1 + $0x50] sm:$0xff]
      %v184 = vld [vmem:[%s1 + $0x58] sm:$0xff]
      %v185 = vld [vmem:[%s1 + $0x60] sm:$0xff]
      %v186 = vld [vmem:[%s1 + $0x68] sm:$0xff]
      %v187 = vld [vmem:[%s1 + $0x70] sm:$0xff]
      %v188 = vld [vmem:[%s1 + $0x78] sm:$0xff]
      %v189 = vld [vmem:[%s1 + $0x80] sm:$0xff]
      %v190 = vld [vmem:[%s1 + $0x88] sm:$0xff]
      %v191 = vld [vmem:[%s1 + $0x90] sm:$0xff]
      %v192 = vld [vmem:[%s1 + $0x98] sm:$0xff]
      %v193 = vld [vmem:[%s1 + $0xa0] sm:$0xff]
      %v194 = vld [vmem:[%s1 + $0xa8] sm:$0xff]
      %v195 = vld [vmem:[%s1 + $0xb0] sm:$0xff]
      %v196 = vld [vmem:[%s1 + $0xb8] sm:$0xff]
      %v197 = vld [vmem:[%s1 + $0xc0] sm:$0xff]
      %v198 = vld [vmem:[%s1 + $0xc8] sm:$0xff]
      %v199 = vld [vmem:[%s1 + $0xd0] sm:$0xff]
      %v200 = vld [vmem:[%s1 + $0xd8] sm:$0xff]
      %v201 = vld [vmem:[%s1 + $0xe0] sm:$0xff]
      %v202 = vld [vmem:[%s1 + $0xe8] sm:$0xff]
      %v203 = vld [vmem:[%s1 + $0xf0] sm:$0xff]
      %v204 = vld [vmem:[%s1 + $0xf8] sm:$0xff]
      %v205 = vld [vmem:[%s1 + $0x100] sm:$0xff]
      %v206 = vld [vmem:[%s1 + $0x108] sm:$0xff]
      %v207 = vld [vmem:[%s1 + $0x110] sm:$0xff]
      %v208 = vld [vmem:[%s1 + $0x118] sm:$0xff]
      %v209 = vld [vmem:[%s1 + $0x120] sm:$0xff]
      %v210 = vld [vmem:[%s1 + $0x128] sm:$0xff]
      %v211 = vld [vmem:[%s1 + $0x130] sm:$0xff]
      %v212 = vld [vmem:[%s1 + $0x138] sm:$0xff]
      %v213 = vld [vmem:[%s1 + $0x140] sm:$0xff]
      %v214 = vld [vmem:[%s1 + $0x148] sm:$0xff]
      %v215 = vld [vmem:[%s1 + $0x150] sm:$0xff]
      %v216 = vld [vmem:[%s1 + $0x158] sm:$0xff]
      %v217 = vld [vmem:[%s1 + $0x160] sm:$0xff]
      %v218 = vld [vmem:[%s1 + $0x168] sm:$0xff]
      %v219 = vld [vmem:[%s1 + $0x170] sm:$0xff]
      %v220 = vld [vmem:[%s1 + $0x178] sm:$0xff]
      %v221 = vld [vmem:[%s1 + $0x180] sm:$0xff]
      %v222 = vld [vmem:[%s1 + $0x188] sm:$0xff]
      %v223 = vld [vmem:[%s1 + $0x190] sm:$0xff]
      %v224 = vld [vmem:[%s1 + $0x198] sm:$0xff]
      %v225 = vld [vmem:[%s1 + $0x1a0] sm:$0xff]
      %v226 = vld [vmem:[%s1 + $0x1a8] sm:$0xff]
      %v227 = vld [vmem:[%s1 + $0x1b0] sm:$0xff]
      %v228 = vld [vmem:[%s1 + $0x1b8] sm:$0xff]
      %v229 = vld [vmem:[%s1 + $0x1c0] sm:$0xff]
      %v230 = vld [vmem:[%s1 + $0x1c8] sm:$0xff]
      %v231 = vld [vmem:[%s1 + $0x1d0] sm:$0xff]
      %v232 = vld [vmem:[%s1 + $0x1d8] sm:$0xff]
      %v233 = vld [vmem:[%s1 + $0x1e0] sm:$0xff]
      %v234 = vld [vmem:[%s1 + $0x1e8] sm:$0xff]
      %v235 = vld [vmem:[%s1 + $0x1f0] sm:$0xff]
      %v236 = vld [vmem:[%s1 + $0x1f8] sm:$0xff]
      %v237 = vld [vmem:[%s2] sm:$0x3]
      %v239 = vlaneseq
      %v240 = vshrl.u32 %v239, 7
      %v241 = vsub.s32 0, %v240
      %v242 = vrot.slane %v237, %v241
      %v243 = vlaneseq
      %v244 = vshrl.u32 %v243, 7
      %v245 = vsub.s32 1, %v244
      %v246 = vrot.slane %v237, %v245
      %v251 = vunpack.c.l.b16 %v171
      %v252 = vunpack.c.h.b16 %v171
      %v253 = vunpack.c.l.b16 %v172
      %v254 = vunpack.c.h.b16 %v172
      %v255 = vpack.c.b16 %v251, %v251
      %v256 = vpack.c.b16 %v252, %v252
      %v257 = vpack.c.b16 %v253, %v253
      %v258 = vpack.c.b16 %v254, %v254
      %v327 = vunpack.c.l.b16 %v173
      %v328 = vunpack.c.h.b16 %v173
      %v329 = vunpack.c.l.b16 %v174
      %v330 = vunpack.c.h.b16 %v174
      %v331 = vunpack.c.l.b16 %v175
      %v332 = vunpack.c.h.b16 %v175
      %v333 = vunpack.c.l.b16 %v176
      %v334 = vunpack.c.h.b16 %v176
      %v335 = vunpack.c.l.b16 %v177
      %v336 = vunpack.c.h.b16 %v177
      %v337 = vunpack.c.l.b16 %v178
      %v338 = vunpack.c.h.b16 %v178
      %v339 = vunpack.c.l.b16 %v179
      %v340 = vunpack.c.h.b16 %v179
      %v341 = vunpack.c.l.b16 %v180
      %v342 = vunpack.c.h.b16 %v180
      %v343 = vunpack.c.l.b16 %v181
      %v344 = vunpack.c.h.b16 %v181
      %v345 = vunpack.c.l.b16 %v182
      %v346 = vunpack.c.h.b16 %v182
      %v347 = vunpack.c.l.b16 %v183
      %v348 = vunpack.c.h.b16 %v183
      %v349 = vunpack.c.l.b16 %v184
      %v350 = vunpack.c.h.b16 %v184
      %v351 = vunpack.c.l.b16 %v185
      %v352 = vunpack.c.h.b16 %v185
      %v353 = vunpack.c.l.b16 %v186
      %v354 = vunpack.c.h.b16 %v186
      %v355 = vunpack.c.l.b16 %v187
      %v356 = vunpack.c.h.b16 %v187
      %v357 = vunpack.c.l.b16 %v188
      %v358 = vunpack.c.h.b16 %v188
      %v359 = vunpack.c.l.b16 %v189
      %v360 = vunpack.c.h.b16 %v189
      %v361 = vunpack.c.l.b16 %v190
      %v362 = vunpack.c.h.b16 %v190
      %v363 = vunpack.c.l.b16 %v191
      %v364 = vunpack.c.h.b16 %v191
      %v365 = vunpack.c.l.b16 %v192
      %v366 = vunpack.c.h.b16 %v192
      %v367 = vunpack.c.l.b16 %v193
      %v368 = vunpack.c.h.b16 %v193
      %v369 = vunpack.c.l.b16 %v194
      %v370 = vunpack.c.h.b16 %v194
      %v371 = vunpack.c.l.b16 %v195
      %v372 = vunpack.c.h.b16 %v195
      %v373 = vunpack.c.l.b16 %v196
      %v374 = vunpack.c.h.b16 %v196
      %v375 = vunpack.c.l.b16 %v197
      %v376 = vunpack.c.h.b16 %v197
      %v377 = vunpack.c.l.b16 %v198
      %v378 = vunpack.c.h.b16 %v198
      %v379 = vunpack.c.l.b16 %v199
      %v380 = vunpack.c.h.b16 %v199
      %v381 = vunpack.c.l.b16 %v200
      %v382 = vunpack.c.h.b16 %v200
      %v383 = vunpack.c.l.b16 %v201
      %v384 = vunpack.c.h.b16 %v201
      %v385 = vunpack.c.l.b16 %v202
      %v386 = vunpack.c.h.b16 %v202
      %v387 = vunpack.c.l.b16 %v203
      %v388 = vunpack.c.h.b16 %v203
      %v389 = vunpack.c.l.b16 %v204
      %v390 = vunpack.c.h.b16 %v204
      %v391 = vunpack.c.l.b16 %v205
      %v392 = vunpack.c.h.b16 %v205
      %v393 = vunpack.c.l.b16 %v206
      %v394 = vunpack.c.h.b16 %v206
      %v395 = vunpack.c.l.b16 %v207
      %v396 = vunpack.c.h.b16 %v207
      %v397 = vunpack.c.l.b16 %v208
      %v398 = vunpack.c.h.b16 %v208
      %v399 = vunpack.c.l.b16 %v209
      %v400 = vunpack.c.h.b16 %v209
      %v401 = vunpack.c.l.b16 %v210
      %v402 = vunpack.c.h.b16 %v210
      %v403 = vunpack.c.l.b16 %v211
      %v404 = vunpack.c.h.b16 %v211
      %v405 = vunpack.c.l.b16 %v212
      %v406 = vunpack.c.h.b16 %v212
      %v407 = vunpack.c.l.b16 %v213
      %v408 = vunpack.c.h.b16 %v213
      %v409 = vunpack.c.l.b16 %v214
      %v410 = vunpack.c.h.b16 %v214
      %v411 = vunpack.c.l.b16 %v215
      %v412 = vunpack.c.h.b16 %v215
      %v413 = vunpack.c.l.b16 %v216
      %v414 = vunpack.c.h.b16 %v216
      %v415 = vunpack.c.l.b16 %v217
      %v416 = vunpack.c.h.b16 %v217
      %v417 = vunpack.c.l.b16 %v218
      %v418 = vunpack.c.h.b16 %v218
      %v419 = vunpack.c.l.b16 %v219
      %v420 = vunpack.c.h.b16 %v219
      %v421 = vunpack.c.l.b16 %v220
      %v422 = vunpack.c.h.b16 %v220
      %v423 = vunpack.c.l.b16 %v221
      %v424 = vunpack.c.h.b16 %v221
      %v425 = vunpack.c.l.b16 %v222
      %v426 = vunpack.c.h.b16 %v222
      %v427 = vunpack.c.l.b16 %v223
      %v428 = vunpack.c.h.b16 %v223
      %v429 = vunpack.c.l.b16 %v224
      %v430 = vunpack.c.h.b16 %v224
      %v431 = vunpack.c.l.b16 %v225
      %v432 = vunpack.c.h.b16 %v225
      %v433 = vunpack.c.l.b16 %v226
      %v434 = vunpack.c.h.b16 %v226
      %v435 = vunpack.c.l.b16 %v227
      %v436 = vunpack.c.h.b16 %v227
      %v437 = vunpack.c.l.b16 %v228
      %v438 = vunpack.c.h.b16 %v228
      %v439 = vunpack.c.l.b16 %v229
      %v440 = vunpack.c.h.b16 %v229
      %v441 = vunpack.c.l.b16 %v230
      %v442 = vunpack.c.h.b16 %v230
      %v443 = vunpack.c.l.b16 %v231
      %v444 = vunpack.c.h.b16 %v231
      %v445 = vunpack.c.l.b16 %v232
      %v446 = vunpack.c.h.b16 %v232
      %v447 = vunpack.c.l.b16 %v233
      %v448 = vunpack.c.h.b16 %v233
      %v449 = vunpack.c.l.b16 %v234
      %v450 = vunpack.c.h.b16 %v234
      %v451 = vunpack.c.l.b16 %v235
      %v452 = vunpack.c.h.b16 %v235
      %v453 = vunpack.c.l.b16 %v236
      %v454 = vunpack.c.h.b16 %v236
      %v455 = vpack.c.b16 %v329, %v327
      %v456 = vpack.c.b16 %v330, %v328
      %v457 = vpack.c.b16 %v333, %v331
      %v458 = vpack.c.b16 %v334, %v332
      %v459 = vpack.c.b16 %v337, %v335
      %v460 = vpack.c.b16 %v338, %v336
      %v461 = vpack.c.b16 %v341, %v339
      %v462 = vpack.c.b16 %v342, %v340
      %v463 = vpack.c.b16 %v345, %v343
      %v464 = vpack.c.b16 %v346, %v344
      %v465 = vpack.c.b16 %v349, %v347
      %v466 = vpack.c.b16 %v350, %v348
      %v467 = vpack.c.b16 %v353, %v351
      %v468 = vpack.c.b16 %v354, %v352
      %v469 = vpack.c.b16 %v357, %v355
      %v470 = vpack.c.b16 %v358, %v356
      %v471 = vpack.c.b16 %v361, %v359
      %v472 = vpack.c.b16 %v362, %v360
      %v473 = vpack.c.b16 %v365, %v363
      %v474 = vpack.c.b16 %v366, %v364
      %v475 = vpack.c.b16 %v369, %v367
      %v476 = vpack.c.b16 %v370, %v368
      %v477 = vpack.c.b16 %v373, %v371
      %v478 = vpack.c.b16 %v374, %v372
      %v479 = vpack.c.b16 %v377, %v375
      %v480 = vpack.c.b16 %v378, %v376
      %v481 = vpack.c.b16 %v381, %v379
      %v482 = vpack.c.b16 %v382, %v380
      %v483 = vpack.c.b16 %v385, %v383
      %v484 = vpack.c.b16 %v386, %v384
      %v485 = vpack.c.b16 %v389, %v387
      %v486 = vpack.c.b16 %v390, %v388
      %v487 = vpack.c.b16 %v393, %v391
      %v488 = vpack.c.b16 %v394, %v392
      %v489 = vpack.c.b16 %v397, %v395
      %v490 = vpack.c.b16 %v398, %v396
      %v491 = vpack.c.b16 %v401, %v399
      %v492 = vpack.c.b16 %v402, %v400
      %v493 = vpack.c.b16 %v405, %v403
      %v494 = vpack.c.b16 %v406, %v404
      %v495 = vpack.c.b16 %v409, %v407
      %v496 = vpack.c.b16 %v410, %v408
      %v497 = vpack.c.b16 %v413, %v411
      %v498 = vpack.c.b16 %v414, %v412
      %v499 = vpack.c.b16 %v417, %v415
      %v500 = vpack.c.b16 %v418, %v416
      %v501 = vpack.c.b16 %v421, %v419
      %v502 = vpack.c.b16 %v422, %v420
      %v503 = vpack.c.b16 %v425, %v423
      %v504 = vpack.c.b16 %v426, %v424
      %v505 = vpack.c.b16 %v429, %v427
      %v506 = vpack.c.b16 %v430, %v428
      %v507 = vpack.c.b16 %v433, %v431
      %v508 = vpack.c.b16 %v434, %v432
      %v509 = vpack.c.b16 %v437, %v435
      %v510 = vpack.c.b16 %v438, %v436
      %v511 = vpack.c.b16 %v441, %v439
      %v512 = vpack.c.b16 %v442, %v440
      %v513 = vpack.c.b16 %v445, %v443
      %v514 = vpack.c.b16 %v446, %v444
      %v515 = vpack.c.b16 %v449, %v447
      %v516 = vpack.c.b16 %v450, %v448
      %v517 = vpack.c.b16 %v453, %v451
      %v518 = vpack.c.b16 %v454, %v452
      %583 = vmatprep.subr.bf16.mxu0 %v456
      %584 = vmatpush1.bf16.msra.mxu0 %v455
      %585 = vmatprep.subr.bf16.mxu0 %v458
      %586 = vmatpush1.bf16.msra.mxu0 %v457
      %587 = vmatprep.subr.bf16.mxu0 %v460
      %588 = vmatpush1.bf16.msra.mxu0 %v459
      %589 = vmatprep.subr.bf16.mxu0 %v462
      %590 = vmatpush1.bf16.msra.mxu0 %v461
      %591 = vmatprep.subr.bf16.mxu0 %v464
      %592 = vmatpush1.bf16.msra.mxu0 %v463
      %593 = vmatprep.subr.bf16.mxu0 %v466
      %594 = vmatpush1.bf16.msra.mxu0 %v465
      %595 = vmatprep.subr.bf16.mxu0 %v468
      %596 = vmatpush1.bf16.msra.mxu0 %v467
      %597 = vmatprep.subr.bf16.mxu0 %v470
      %598 = vmatpush1.bf16.msra.mxu0 %v469
      %599 = vmatprep.subr.bf16.mxu0 %v472
      %600 = vmatpush1.bf16.msra.mxu0 %v471
      %601 = vmatprep.subr.bf16.mxu0 %v474
      %602 = vmatpush1.bf16.msra.mxu0 %v473
      %603 = vmatprep.subr.bf16.mxu0 %v476
      %604 = vmatpush1.bf16.msra.mxu0 %v475
      %605 = vmatprep.subr.bf16.mxu0 %v478
      %606 = vmatpush1.bf16.msra.mxu0 %v477
      %607 = vmatprep.subr.bf16.mxu0 %v480
      %608 = vmatpush1.bf16.msra.mxu0 %v479
      %609 = vmatprep.subr.bf16.mxu0 %v482
      %610 = vmatpush1.bf16.msra.mxu0 %v481
      %611 = vmatprep.subr.bf16.mxu0 %v484
      %612 = vmatpush1.bf16.msra.mxu0 %v483
      %613 = vmatprep.subr.bf16.mxu0 %v486
      %614 = vmatpush1.bf16.msra.mxu0 %v485
      %615 = vmatprep.mubr.bf16.mxu0 %v256
      %616 = vmatmul.mubr.bf16.gmra.mrb[0].mxu0 %v255
      %v617 = vpop.f32.mrb[0].mxu0
      %v618 = vadd.f32 %v242, %v617
      %v619 = vpop.f32.mrb[0].mxu0
      %v620 = vadd.f32 %v246, %v619
      %v621 = vpop.f32.mrb[0].mxu0
      %v622 = vpop.f32.mrb[0].mxu0
      %623 = vdwg.mxu0
      %624 = vmatprep.subr.bf16.mxu0 %v488
      %625 = vmatpush1.bf16.msra.mxu0 %v487
      %626 = vmatprep.subr.bf16.mxu0 %v490
      %627 = vmatpush1.bf16.msra.mxu0 %v489
      %628 = vmatprep.subr.bf16.mxu0 %v492
      %629 = vmatpush1.bf16.msra.mxu0 %v491
      %630 = vmatprep.subr.bf16.mxu0 %v494
      %631 = vmatpush1.bf16.msra.mxu0 %v493
      %632 = vmatprep.subr.bf16.mxu0 %v496
      %633 = vmatpush1.bf16.msra.mxu0 %v495
      %634 = vmatprep.subr.bf16.mxu0 %v498
      %635 = vmatpush1.bf16.msra.mxu0 %v497
      %636 = vmatprep.subr.bf16.mxu0 %v500
      %637 = vmatpush1.bf16.msra.mxu0 %v499
      %638 = vmatprep.subr.bf16.mxu0 %v502
      %639 = vmatpush1.bf16.msra.mxu0 %v501
      %640 = vmatprep.subr.bf16.mxu0 %v504
      %641 = vmatpush1.bf16.msra.mxu0 %v503
      %642 = vmatprep.subr.bf16.mxu0 %v506
      %643 = vmatpush1.bf16.msra.mxu0 %v505
      %644 = vmatprep.subr.bf16.mxu0 %v508
      %645 = vmatpush1.bf16.msra.mxu0 %v507
      %646 = vmatprep.subr.bf16.mxu0 %v510
      %647 = vmatpush1.bf16.msra.mxu0 %v509
      %648 = vmatprep.subr.bf16.mxu0 %v512
      %649 = vmatpush1.bf16.msra.mxu0 %v511
      %650 = vmatprep.subr.bf16.mxu0 %v514
      %651 = vmatpush1.bf16.msra.mxu0 %v513
      %652 = vmatprep.subr.bf16.mxu0 %v516
      %653 = vmatpush1.bf16.msra.mxu0 %v515
      %654 = vmatprep.subr.bf16.mxu0 %v518
      %655 = vmatpush1.bf16.msra.mxu0 %v517
      %656 = vmatprep.mubr.bf16.mxu0 %v258
      %657 = vmatmul.mubr.bf16.gmra.mrb[0].mxu0 %v257
      %v658 = vpop.f32.mrb[0].mxu0
      %v659 = vadd.f32 %v618, %v658
      %v660 = vpop.f32.mrb[0].mxu0
      %v661 = vadd.f32 %v620, %v660
      %v662 = vpop.f32.mrb[0].mxu0
      %v663 = vpop.f32.mrb[0].mxu0
      %664 = vdwg.mxu0
      %v665 = vpack.c.bf16 %v659, %v659
      %v666 = vpack.c.bf16 %v661, %v661
      %v669 = vunpack.c.l.b16 %v665
      %v670 = vunpack.c.l.b16 %v666
      %v671 = vpack.c.b16 %v670, %v669
      %673 = vst [vmem:[%s170] sm:$0xff] %v671
      %p674 = scmp.lt.s32.totalorder %s14, 1
      %s675 = scalar_select %p674, %s14, 1
      %s676 = smul.addr %s675, 2
      %s677 = smul.addr %s676, 4
      %s678 = scalar_lea.vmem %s3, %s677
      // Predicated region
      $region33: #{ublock_forward.11} parent=31 // pred_check
        %p679 = pneg %p100
      $region34: #{ublock_forward.11} parent=31 // pred_check_branch
        %681 = sbr.rel (%p679) target = $region36
      $region35: #{ublock_forward.11} parent=31 // pred_region
        _
      $region36: #{ublock_forward.11} parent=31 // pred_fallthru
        _
    $region32: #{ublock_forward.11} parent=5 // pred_fallthru
      _
    %p682 = scmp.le.s32.totalorder 2, %s9
    // Predicated region
    $region37: #{ublock_forward.11} parent=5 // pred_check
      %p683 = pneg %p682
    $region38: #{ublock_forward.11} parent=5 // pred_check_branch
      %685 = sbr.rel (%p683) target = $region40
    $region39: #{ublock_forward.11} parent=5 // pred_region
      %s686 = ssub.s32 %s9, 2
      // Predicated region
      $region41: #{ublock_forward.11} parent=39 // pred_check
        %p687 = pneg %p106
      $region42: #{ublock_forward.11} parent=39 // pred_check_branch
        %689 = sbr.rel (%p687) target = $region44
      $region43: #{ublock_forward.11} parent=39 // pred_region
        %p690 = scmp.lt.s32.totalorder %s15, 1
        %s691 = scalar_select %p690, %s15, 1
        %s692 = smul.addr %s691, 2
        %s693 = smul.addr %s692, 4
        %s694 = scalar_lea.vmem %s3, %s693
      $region44: #{ublock_forward.11} parent=39 // pred_fallthru
        _
    $region40: #{ublock_forward.11} parent=5 // pred_fallthru
      _
  $region6: #{ublock_forward.11} parent=0 // loop_footer
    %s13 = sadd.s32 1, %s9
  $region7: #{ublock_forward.11} parent=0 // loop_footer_branch
    %8 = sbr.rel target = $region3
  $region8: #{ublock_forward.11} parent=0 // loop_exit
    _

// kernel: ublock_forward.13
$region0: #{ublock_forward.13}
  #allocation0 [shape = 'u32[]', space=smem, size = 0x4, offset = 0x4, fixed_abs, tag = 'smem constant byte address 0x4 - core index']
  #allocation1 [shape = 'u32[144,128]{1,0:T(1,128)}', space=vmem, size = 0x12000, scoped, tag = 'internal scratch']
  %s0 = inlined_call_operand.vmem [shape: bf16[2,10,400], index: 0, kind: input, shape index: {}]
  %s1 = inlined_call_operand.vmem [shape: bf16[3,400,256], index: 1, kind: input, shape index: {}]
  %s2 = inlined_call_operand.vmem [shape: f32[1,256], index: 2, kind: input, shape index: {}]
  %s3 = inlined_call_operand.vmem [shape: bf16[2,8,256], index: 3, kind: input, shape index: {}]
  %s4 = inlined_call_operand.vmem [shape: f32[2,8,256], index: 4, kind: output, shape index: {}]
  %s5 = sld [smem:[#allocation0]]
  $region49: #{ublock_forward.13} parent=0
    _
  %s7 = ssub.s32 1, %s5
  %s8 = scalar_select 0, %s7, %s5
  loop: start=0, step=1, limit=4
  $region2: #{ublock_forward.13} parent=0 // loop_pre_header
    _
  $region3: #{ublock_forward.13} parent=0 // loop_header
    %s10 = sphi 0, %s14
    %p11 = scmp.ge.s32.totalorder %s10, 4
    %s20 = sphi 0, %s22
    %s23 = sphi 0, %s20
    %s24 = sphi 0, %s23
    %s40 = sphi 0, %s24
    %s44 = sphi 0, %s44
    %s46 = sphi 0, %s44
    %s47 = sphi 0, %s46
    %s61 = sphi 0, %s47
    %s65 = sphi 0, %s65
    %s67 = sphi 0, %s65
    %s68 = sphi 0, %s67
    %s82 = sphi 0, %s68
    %s88 = sphi 0, %s90
    %s91 = sphi 0, %s88
    %s92 = sphi 0, %s91
    %s108 = sphi 0, %s92
    %s114 = sphi 0, %s116
    %s117 = sphi 0, %s114
    %s118 = sphi 0, %s117
    %s134 = sphi 0, %s118
  $region4: #{ublock_forward.13} parent=0 // loop_header_branch
    %13 = sbr.rel (%p11) target = $region8
  $region5: #{ublock_forward.13} parent=0 // loop_body
    %s15 = ssub.s32 %s10, 1
    %s16 = ssub.s32 %s10, 2
    %s17 = sadd.s32 %s10, 1
    %s18 = ssub.s32 %s10, %s17
    %p19 = scmp.eq.s32.totalorder %s18, 0
    %s21 = sadd.s32 %s20, 1
    %s22 = scalar_select %p19, %s20, %s21
    %p25 = pneg %p19
    %p26 = scmp.eq.s32.totalorder %s10, 1
    %p27 = por %p25, %p26
    %p28 = scmp.ne.s32.totalorder %s20, %s23
    %p29 = scmp.eq.s32.totalorder %s10, 0
    %p30 = por %p28, %p29
    %p31 = scmp.ne.s32.totalorder %s20, %s23
    %p32 = scmp.eq.s32.totalorder %s15, 1
    %p33 = por %p31, %p32
    %p34 = scmp.ne.s32.totalorder %s23, %s24
    %p35 = scmp.eq.s32.totalorder %s15, 0
    %p36 = por %p34, %p35
    %p37 = scmp.ne.s32.totalorder %s23, %s24
    %p38 = scmp.eq.s32.totalorder %s16, 1
    %p39 = por %p37, %p38
    %p41 = scmp.ne.s32.totalorder %s24, %s40
    %p42 = scmp.eq.s32.totalorder %s16, 0
    %p43 = por %p41, %p42
    %s45 = sadd.s32 %s44, 1
    %p48 = scmp.eq.s32.totalorder %s10, 1
    %p49 = scmp.ne.s32.totalorder %s44, %s46
    %p50 = scmp.eq.s32.totalorder %s10, 0
    %p51 = por %p49, %p50
    %p52 = scmp.ne.s32.totalorder %s44, %s46
    %p53 = scmp.eq.s32.totalorder %s15, 1
    %p54 = por %p52, %p53
    %p55 = scmp.ne.s32.totalorder %s46, %s47
    %p56 = scmp.eq.s32.totalorder %s15, 0
    %p57 = por %p55, %p56
    %p58 = scmp.ne.s32.totalorder %s46, %s47
    %p59 = scmp.eq.s32.totalorder %s16, 1
    %p60 = por %p58, %p59
    %p62 = scmp.ne.s32.totalorder %s47, %s61
    %p63 = scmp.eq.s32.totalorder %s16, 0
    %p64 = por %p62, %p63
    %s66 = sadd.s32 %s65, 1
    %p69 = scmp.eq.s32.totalorder %s10, 1
    %p70 = scmp.ne.s32.totalorder %s65, %s67
    %p71 = scmp.eq.s32.totalorder %s10, 0
    %p72 = por %p70, %p71
    %p73 = scmp.ne.s32.totalorder %s65, %s67
    %p74 = scmp.eq.s32.totalorder %s15, 1
    %p75 = por %p73, %p74
    %p76 = scmp.ne.s32.totalorder %s67, %s68
    %p77 = scmp.eq.s32.totalorder %s15, 0
    %p78 = por %p76, %p77
    %p79 = scmp.ne.s32.totalorder %s67, %s68
    %p80 = scmp.eq.s32.totalorder %s16, 1
    %p81 = por %p79, %p80
    %p83 = scmp.ne.s32.totalorder %s68, %s82
    %p84 = scmp.eq.s32.totalorder %s16, 0
    %p85 = por %p83, %p84
    %s86 = ssub.s32 %s10, %s17
    %p87 = scmp.eq.s32.totalorder %s86, 0
    %s89 = sadd.s32 %s88, 1
    %s90 = scalar_select %p87, %s88, %s89
    %p93 = pneg %p87
    %p94 = scmp.eq.s32.totalorder %s10, 1
    %p95 = por %p93, %p94
    %p96 = scmp.ne.s32.totalorder %s88, %s91
    %p97 = scmp.eq.s32.totalorder %s10, 0
    %p98 = por %p96, %p97
    %p99 = scmp.ne.s32.totalorder %s88, %s91
    %p100 = scmp.eq.s32.totalorder %s15, 1
    %p101 = por %p99, %p100
    %p102 = scmp.ne.s32.totalorder %s91, %s92
    %p103 = scmp.eq.s32.totalorder %s15, 0
    %p104 = por %p102, %p103
    %p105 = scmp.ne.s32.totalorder %s91, %s92
    %p106 = scmp.eq.s32.totalorder %s16, 1
    %p107 = por %p105, %p106
    %p109 = scmp.ne.s32.totalorder %s92, %s108
    %p110 = scmp.eq.s32.totalorder %s16, 0
    %p111 = por %p109, %p110
    %s112 = ssub.s32 %s10, %s17
    %p113 = scmp.eq.s32.totalorder %s112, 0
    %s115 = sadd.s32 %s114, 1
    %s116 = scalar_select %p113, %s114, %s115
    %p119 = pneg %p113
    %p120 = scmp.eq.s32.totalorder %s10, 1
    %p121 = por %p119, %p120
    %p122 = scmp.ne.s32.totalorder %s114, %s117
    %p123 = scmp.eq.s32.totalorder %s10, 0
    %p124 = por %p122, %p123
    %p125 = scmp.ne.s32.totalorder %s114, %s117
    %p126 = scmp.eq.s32.totalorder %s15, 1
    %p127 = por %p125, %p126
    %p128 = scmp.ne.s32.totalorder %s117, %s118
    %p129 = scmp.eq.s32.totalorder %s15, 0
    %p130 = por %p128, %p129
    %p131 = scmp.ne.s32.totalorder %s117, %s118
    %p132 = scmp.eq.s32.totalorder %s16, 1
    %p133 = por %p131, %p132
    %p135 = scmp.ne.s32.totalorder %s118, %s134
    %p136 = scmp.eq.s32.totalorder %s16, 0
    %p137 = por %p135, %p136
    %p138 = scmp.le.s32.totalorder 1, %s10
    %p139 = scmp.lt.s32.totalorder %s10, 3
    %p140 = pnand %p138, %p139
    %p141 = pneg %p140
    // Predicated region
    $region9: #{ublock_forward.13} parent=5 // pred_check
      _
    $region10: #{ublock_forward.13} parent=5 // pred_check_branch
      %143 = sbr.rel (%p140) target = $region12
    $region11: #{ublock_forward.13} parent=5 // pred_region
      %s144 = ssub.s32 %s10, 1
      // Predicated region
      $region13: #{ublock_forward.13} parent=11 // pred_check
        %p145 = pneg %p57
      $region14: #{ublock_forward.13} parent=11 // pred_check_branch
        %147 = sbr.rel (%p145) target = $region16
      $region15: #{ublock_forward.13} parent=11 // pred_region
        _
      $region16: #{ublock_forward.13} parent=11 // pred_fallthru
        _
      // Predicated region
      $region17: #{ublock_forward.13} parent=11 // pred_check
        %p148 = pneg %p78
      $region18: #{ublock_forward.13} parent=11 // pred_check_branch
        %150 = sbr.rel (%p148) target = $region20
      $region19: #{ublock_forward.13} parent=11 // pred_region
        _
      $region20: #{ublock_forward.13} parent=11 // pred_fallthru
        _
    $region12: #{ublock_forward.13} parent=5 // pred_fallthru
      _
    %p151 = scmp.lt.s32.totalorder %s10, 2
    // Predicated region
    $region21: #{ublock_forward.13} parent=5 // pred_check
      %p152 = pneg %p151
    $region22: #{ublock_forward.13} parent=5 // pred_check_branch
      %154 = sbr.rel (%p152) target = $region24
    $region23: #{ublock_forward.13} parent=5 // pred_region
      // Predicated region
      $region25: #{ublock_forward.13} parent=23 // pred_check
        %p155 = pneg %p30
      $region26: #{ublock_forward.13} parent=23 // pred_check_branch
        %157 = sbr.rel (%p155) target = $region28
      $region27: #{ublock_forward.13} parent=23 // pred_region
        %p158 = scmp.lt.s32.totalorder %s10, 1
        %s159 = scalar_select %p158, %s10, 1
        %s160 = smul.addr %s159, 8
        %s161 = smul.addr %s160, 4
        %s162 = scalar_lea.vmem %s0, %s161
      $region28: #{ublock_forward.13} parent=23 // pred_fallthru
        _
      // Predicated region
      $region29: #{ublock_forward.13} parent=23 // pred_check
        %p163 = pneg %p98
      $region30: #{ublock_forward.13} parent=23 // pred_check_branch
        %165 = sbr.rel (%p163) target = $region32
      $region31: #{ublock_forward.13} parent=23 // pred_region
        %p166 = scmp.lt.s32.totalorder %s10, 1
        %s167 = scalar_select %p166, %s10, 1
        %s168 = smul.addr %s167, 2
        %s169 = smul.addr %s168, 4
        %s170 = scalar_lea.vmem %s3, %s169
      $region32: #{ublock_forward.13} parent=23 // pred_fallthru
        _
    $region24: #{ublock_forward.13} parent=5 // pred_fallthru
      _
    %p171 = scmp.le.s32.totalorder 1, %s10
    %p172 = scmp.lt.s32.totalorder %s10, 3
    %p173 = pnand %p171, %p172
    %p174 = pneg %p173
    // Predicated region
    $region33: #{ublock_forward.13} parent=5 // pred_check
      _
    $region34: #{ublock_forward.13} parent=5 // pred_check_branch
      %176 = sbr.rel (%p173) target = $region36
    $region35: #{ublock_forward.13} parent=5 // pred_region
      %s177 = ssub.s32 %s10, 1
      %p178 = scmp.lt.s32.totalorder %s15, 1
      %s179 = scalar_select %p178, %s15, 1
      %s180 = smul.addr %s179, 8
      %s181 = smul.addr %s180, 4
      %s182 = scalar_lea.vmem %s0, %s181
      %p183 = pneg %p36
      %p184 = pneg %p33
      %p185 = pneg %p57
      %p186 = pneg %p54
      %p187 = pneg %p78
      %p188 = pneg %p75
      %p189 = scmp.lt.s32.totalorder %s15, 1
      %s190 = scalar_select %p189, %s15, 1
      %s191 = smul.addr %s190, 2
      %s192 = smul.addr %s191, 4
      %s193 = scalar_lea.vmem %s3, %s192
      %p194 = pneg %p104
      %p195 = pneg %p101
      %p196 = pneg %p130
      %p197 = pneg %p127
      %p198 = scmp.lt.s32.totalorder %s15, 1
      %s199 = scalar_select %p198, %s15, 1
      %s200 = smul.addr %s199, 2
      %s201 = smul.addr %s200, 8
      %s202 = scalar_lea.vmem %s4, %s201
      %p203 = scmp.lt.s32.totalorder %s15, 1
      %s204 = scalar_select %p203, %s15, 1
      %s205 = smul.addr %s204, 8
      %s206 = smul.addr %s205, 4
      %s207 = scalar_lea.vmem %s0, %s206
      %p208 = scmp.lt.s32.totalorder %s15, 1
      %s209 = scalar_select %p208, %s15, 1
      %s210 = smul.addr %s209, 2
      %s211 = smul.addr %s210, 4
      %s212 = scalar_lea.vmem %s3, %s211
      %p213 = scmp.lt.s32.totalorder %s15, 1
      %s214 = scalar_select %p213, %s15, 1
      %s215 = smul.addr %s214, 2
      %s216 = smul.addr %s215, 8
      %s217 = scalar_lea.vmem %s4, %s216
      %v219 = vld [vmem:[%s207] sm:$0xff]
      %v220 = vld [vmem:[%s207 + $0x8] sm:$0xff]
      %v221 = vld [vmem:[%s1] sm:$0xff]
      %v222 = vld [vmem:[%s1 + $0x8] sm:$0xff]
      %v223 = vld [vmem:[%s1 + $0x10] sm:$0xff]
      %v224 = vld [vmem:[%s1 + $0x18] sm:$0xff]
      %v225 = vld [vmem:[%s1 + $0x20] sm:$0xff]
      %v226 = vld [vmem:[%s1 + $0x28] sm:$0xff]
      %v227 = vld [vmem:[%s1 + $0x30] sm:$0xff]
      %v228 = vld [vmem:[%s1 + $0x38] sm:$0xff]
      %v229 = vld [vmem:[%s1 + $0x40] sm:$0xff]
      %v230 = vld [vmem:[%s1 + $0x48] sm:$0xff]
      %v231 = vld [vmem:[%s1 + $0x50] sm:$0xff]
      %v232 = vld [vmem:[%s1 + $0x58] sm:$0xff]
      %v233 = vld [vmem:[%s1 + $0x60] sm:$0xff]
      %v234 = vld [vmem:[%s1 + $0x68] sm:$0xff]
      %v235 = vld [vmem:[%s1 + $0x70] sm:$0xff]
      %v236 = vld [vmem:[%s1 + $0x78] sm:$0xff]
      %v237 = vld [vmem:[%s1 + $0x80] sm:$0xff]
      %v238 = vld [vmem:[%s1 + $0x88] sm:$0xff]
      %v239 = vld [vmem:[%s1 + $0x90] sm:$0xff]
      %v240 = vld [vmem:[%s1 + $0x98] sm:$0xff]
      %v241 = vld [vmem:[%s1 + $0xa0] sm:$0xff]
      %v242 = vld [vmem:[%s1 + $0xa8] sm:$0xff]
      %v243 = vld [vmem:[%s1 + $0xb0] sm:$0xff]
      %v244 = vld [vmem:[%s1 + $0xb8] sm:$0xff]
      %v245 = vld [vmem:[%s1 + $0xc0] sm:$0xff]
      %v246 = vld [vmem:[%s1 + $0xc8] sm:$0xff]
      %v247 = vld [vmem:[%s1 + $0xd0] sm:$0xff]
      %v248 = vld [vmem:[%s1 + $0xd8] sm:$0xff]
      %v249 = vld [vmem:[%s1 + $0xe0] sm:$0xff]
      %v250 = vld [vmem:[%s1 + $0xe8] sm:$0xff]
      %v251 = vld [vmem:[%s1 + $0xf0] sm:$0xff]
      %v252 = vld [vmem:[%s1 + $0xf8] sm:$0xff]
      %v253 = vld [vmem:[%s1 + $0x100] sm:$0xff]
      %v254 = vld [vmem:[%s1 + $0x108] sm:$0xff]
      %v255 = vld [vmem:[%s1 + $0x110] sm:$0xff]
      %v256 = vld [vmem:[%s1 + $0x118] sm:$0xff]
      %v257 = vld [vmem:[%s1 + $0x120] sm:$0xff]
      %v258 = vld [vmem:[%s1 + $0x128] sm:$0xff]
      %v259 = vld [vmem:[%s1 + $0x130] sm:$0xff]
      %v260 = vld [vmem:[%s1 + $0x138] sm:$0xff]
      %v261 = vld [vmem:[%s1 + $0x140] sm:$0xff]
      %v262 = vld [vmem:[%s1 + $0x148] sm:$0xff]
      %v263 = vld [vmem:[%s1 + $0x150] sm:$0xff]
      %v264 = vld [vmem:[%s1 + $0x158] sm:$0xff]
      %v265 = vld [vmem:[%s1 + $0x160] sm:$0xff]
      %v266 = vld [vmem:[%s1 + $0x168] sm:$0xff]
      %v267 = vld [vmem:[%s1 + $0x170] sm:$0xff]
      %v268 = vld [vmem:[%s1 + $0x178] sm:$0xff]
      %v269 = vld [vmem:[%s1 + $0x180] sm:$0xff]
      %v270 = vld [vmem:[%s1 + $0x188] sm:$0xff]
      %v271 = vld [vmem:[%s207 + $0x10] sm:$0x11]
      %v272 = vld [vmem:[%s207 + $0x18] sm:$0x11]
      %s273 = scalar_lea.vmem %s1, 400
      %v274 = vld [vmem:[%s273] sm:$0xff]
      %v275 = vld [vmem:[%s273 + $0x8] sm:$0xff]
      %v276 = vld [vmem:[%s273 + $0x10] sm:$0xff]
      %v277 = vld [vmem:[%s273 + $0x18] sm:$0xff]
      %v278 = vld [vmem:[%s273 + $0x20] sm:$0xff]
      %v279 = vld [vmem:[%s273 + $0x28] sm:$0xff]
      %v280 = vld [vmem:[%s273 + $0x30] sm:$0xff]
      %v281 = vld [vmem:[%s273 + $0x38] sm:$0xff]
      %v282 = vld [vmem:[%s273 + $0x40] sm:$0xff]
      %v283 = vld [vmem:[%s273 + $0x48] sm:$0xff]
      %v284 = vld [vmem:[%s273 + $0x50] sm:$0xff]
      %v285 = vld [vmem:[%s273 + $0x58] sm:$0xff]
      %v286 = vld [vmem:[%s273 + $0x60] sm:$0xff]
      %v287 = vld [vmem:[%s273 + $0x68] sm:$0xff]
      %v288 = vld [vmem:[%s273 + $0x70] sm:$0xff]
      %v289 = vld [vmem:[%s273 + $0x78] sm:$0xff]
      %v290 = vld [vmem:[%s273 + $0x80] sm:$0xff]
      %v291 = vld [vmem:[%s273 + $0x88] sm:$0xff]
      %v292 = vld [vmem:[%s273 + $0x90] sm:$0xff]
      %v293 = vld [vmem:[%s273 + $0x98] sm:$0xff]
      %v294 = vld [vmem:[%s273 + $0xa0] sm:$0xff]
      %v295 = vld [vmem:[%s273 + $0xa8] sm:$0xff]
      %v296 = vld [vmem:[%s273 + $0xb0] sm:$0xff]
      %v297 = vld [vmem:[%s273 + $0xb8] sm:$0xff]
      %v298 = vld [vmem:[%s273 + $0xc0] sm:$0xff]
      %v299 = vld [vmem:[%s273 + $0xc8] sm:$0xff]
      %v300 = vld [vmem:[%s273 + $0xd0] sm:$0xff]
      %v301 = vld [vmem:[%s273 + $0xd8] sm:$0xff]
      %v302 = vld [vmem:[%s273 + $0xe0] sm:$0xff]
      %v303 = vld [vmem:[%s273 + $0xe8] sm:$0xff]
      %v304 = vld [vmem:[%s273 + $0xf0] sm:$0xff]
      %v305 = vld [vmem:[%s273 + $0xf8] sm:$0xff]
      %v306 = vld [vmem:[%s273 + $0x100] sm:$0xff]
      %v307 = vld [vmem:[%s273 + $0x108] sm:$0xff]
      %v308 = vld [vmem:[%s273 + $0x110] sm:$0xff]
      %v309 = vld [vmem:[%s273 + $0x118] sm:$0xff]
      %v310 = vld [vmem:[%s273 + $0x120] sm:$0xff]
      %v311 = vld [vmem:[%s273 + $0x128] sm:$0xff]
      %v312 = vld [vmem:[%s273 + $0x130] sm:$0xff]
      %v313 = vld [vmem:[%s273 + $0x138] sm:$0xff]
      %v314 = vld [vmem:[%s273 + $0x140] sm:$0xff]
      %v315 = vld [vmem:[%s273 + $0x148] sm:$0xff]
      %v316 = vld [vmem:[%s273 + $0x150] sm:$0xff]
      %v317 = vld [vmem:[%s273 + $0x158] sm:$0xff]
      %v318 = vld [vmem:[%s273 + $0x160] sm:$0xff]
      %v319 = vld [vmem:[%s273 + $0x168] sm:$0xff]
      %v320 = vld [vmem:[%s273 + $0x170] sm:$0xff]
      %v321 = vld [vmem:[%s273 + $0x178] sm:$0xff]
      %v322 = vld [vmem:[%s273 + $0x180] sm:$0xff]
      %v323 = vld [vmem:[%s273 + $0x188] sm:$0xff]
      %v328 = vunpack.c.l.b16 %v219
      %v329 = vunpack.c.h.b16 %v219
      %v330 = vunpack.c.l.b16 %v220
      %v331 = vunpack.c.h.b16 %v220
      %v332 = vunpack.c.l.b16 %v271
      %v333 = vunpack.c.h.b16 %v271
      %v334 = vunpack.c.l.b16 %v272
      %v335 = vunpack.c.h.b16 %v272
      %v336 = vpack.c.b16 %v332, %v328
      %v337 = vpack.c.b16 %v333, %v329
      %v338 = vpack.c.b16 %v334, %v330
      %v339 = vpack.c.b16 %v335, %v331
      %v341 = vshrl.u32 %v336, 16
      %v343 = vshll.u32 %v336, 16
      %v345 = vrot.slane %v343, 1
      %v346 = vor.u32 %v341, %v345
      %v348 = vshrl.u32 %v337, 16
      %v350 = vshll.u32 %v337, 16
      %v352 = vrot.slane %v350, 1
      %v353 = vor.u32 %v348, %v352
      %v355 = vshrl.u32 %v338, 16
      %v357 = vshll.u32 %v338, 16
      %v359 = vrot.slane %v357, 1
      %v360 = vor.u32 %v355, %v359
      %v362 = vshrl.u32 %v339, 16
      %v364 = vshll.u32 %v339, 16
      %v366 = vrot.slane %v364, 1
      %v367 = vor.u32 %v362, %v366
      %v421 = vunpack.c.l.b16 %v274
      %v422 = vunpack.c.h.b16 %v274
      %v423 = vunpack.c.l.b16 %v275
      %v424 = vunpack.c.h.b16 %v275
      %v425 = vunpack.c.l.b16 %v276
      %v426 = vunpack.c.h.b16 %v276
      %v427 = vunpack.c.l.b16 %v277
      %v428 = vunpack.c.h.b16 %v277
      %v429 = vunpack.c.l.b16 %v278
      %v430 = vunpack.c.h.b16 %v278
      %v431 = vunpack.c.l.b16 %v279
      %v432 = vunpack.c.h.b16 %v279
      %v433 = vunpack.c.l.b16 %v280
      %v434 = vunpack.c.h.b16 %v280
      %v435 = vunpack.c.l.b16 %v281
      %v436 = vunpack.c.h.b16 %v281
      %v437 = vunpack.c.l.b16 %v282
      %v438 = vunpack.c.h.b16 %v282
      %v439 = vunpack.c.l.b16 %v283
      %v440 = vunpack.c.h.b16 %v283
      %v441 = vunpack.c.l.b16 %v284
      %v442 = vunpack.c.h.b16 %v284
      %v443 = vunpack.c.l.b16 %v285
      %v444 = vunpack.c.h.b16 %v285
      %v445 = vunpack.c.l.b16 %v286
      %v446 = vunpack.c.h.b16 %v286
      %v447 = vunpack.c.l.b16 %v287
      %v448 = vunpack.c.h.b16 %v287
      %v449 = vunpack.c.l.b16 %v288
      %v450 = vunpack.c.h.b16 %v288
      %v451 = vunpack.c.l.b16 %v289
      %v452 = vunpack.c.h.b16 %v289
      %v453 = vunpack.c.l.b16 %v290
      %v454 = vunpack.c.h.b16 %v290
      %v455 = vunpack.c.l.b16 %v291
      %v456 = vunpack.c.h.b16 %v291
      %v457 = vunpack.c.l.b16 %v292
      %v458 = vunpack.c.h.b16 %v292
      %v459 = vunpack.c.l.b16 %v293
      %v460 = vunpack.c.h.b16 %v293
      %v461 = vunpack.c.l.b16 %v294
      %v462 = vunpack.c.h.b16 %v294
      %v463 = vunpack.c.l.b16 %v295
      %v464 = vunpack.c.h.b16 %v295
      %v465 = vunpack.c.l.b16 %v296
      %v466 = vunpack.c.h.b16 %v296
      %v467 = vunpack.c.l.b16 %v297
      %v468 = vunpack.c.h.b16 %v297
      %v469 = vunpack.c.l.b16 %v298
      %v470 = vunpack.c.h.b16 %v298
      %v471 = vunpack.c.l.b16 %v299
      %v472 = vunpack.c.h.b16 %v299
      %v473 = vunpack.c.l.b16 %v300
      %v474 = vunpack.c.h.b16 %v300
      %v475 = vunpack.c.l.b16 %v301
      %v476 = vunpack.c.h.b16 %v301
      %v477 = vunpack.c.l.b16 %v302
      %v478 = vunpack.c.h.b16 %v302
      %v479 = vunpack.c.l.b16 %v303
      %v480 = vunpack.c.h.b16 %v303
      %v481 = vunpack.c.l.b16 %v304
      %v482 = vunpack.c.h.b16 %v304
      %v483 = vunpack.c.l.b16 %v305
      %v484 = vunpack.c.h.b16 %v305
      %v485 = vunpack.c.l.b16 %v306
      %v486 = vunpack.c.h.b16 %v306
      %v487 = vunpack.c.l.b16 %v307
      %v488 = vunpack.c.h.b16 %v307
      %v489 = vunpack.c.l.b16 %v308
      %v490 = vunpack.c.h.b16 %v308
      %v491 = vunpack.c.l.b16 %v309
      %v492 = vunpack.c.h.b16 %v309
      %v493 = vunpack.c.l.b16 %v310
      %v494 = vunpack.c.h.b16 %v310
      %v495 = vunpack.c.l.b16 %v311
      %v496 = vunpack.c.h.b16 %v311
      %v497 = vunpack.c.l.b16 %v312
      %v498 = vunpack.c.h.b16 %v312
      %v499 = vunpack.c.l.b16 %v313
      %v500 = vunpack.c.h.b16 %v313
      %v501 = vunpack.c.l.b16 %v314
      %v502 = vunpack.c.h.b16 %v314
      %v503 = vunpack.c.l.b16 %v315
      %v504 = vunpack.c.h.b16 %v315
      %v505 = vunpack.c.l.b16 %v316
      %v506 = vunpack.c.h.b16 %v316
      %v507 = vunpack.c.l.b16 %v317
      %v508 = vunpack.c.h.b16 %v317
      %v509 = vunpack.c.l.b16 %v318
      %v510 = vunpack.c.h.b16 %v318
      %v511 = vunpack.c.l.b16 %v319
      %v512 = vunpack.c.h.b16 %v319
      %v513 = vunpack.c.l.b16 %v320
      %v514 = vunpack.c.h.b16 %v320
      %v515 = vunpack.c.l.b16 %v321
      %v516 = vunpack.c.h.b16 %v321
      %v517 = vunpack.c.l.b16 %v322
      %v518 = vunpack.c.h.b16 %v322
      %v519 = vunpack.c.l.b16 %v323
      %v520 = vunpack.c.h.b16 %v323
      %v521 = vpack.c.b16 %v423, %v421
      %v522 = vpack.c.b16 %v424, %v422
      %v523 = vpack.c.b16 %v427, %v425
      %v524 = vpack.c.b16 %v428, %v426
      %v525 = vpack.c.b16 %v431, %v429
      %v526 = vpack.c.b16 %v432, %v430
      %v527 = vpack.c.b16 %v435, %v433
      %v528 = vpack.c.b16 %v436, %v434
      %v529 = vpack.c.b16 %v439, %v437
      %v530 = vpack.c.b16 %v440, %v438
      %v531 = vpack.c.b16 %v443, %v441
      %v532 = vpack.c.b16 %v444, %v442
      %v533 = vpack.c.b16 %v447, %v445
      %v534 = vpack.c.b16 %v448, %v446
      %v535 = vpack.c.b16 %v451, %v449
      %v536 = vpack.c.b16 %v452, %v450
      %v537 = vpack.c.b16 %v455, %v453
      %v538 = vpack.c.b16 %v456, %v454
      %v539 = vpack.c.b16 %v459, %v457
      %v540 = vpack.c.b16 %v460, %v458
      %v541 = vpack.c.b16 %v463, %v461
      %v542 = vpack.c.b16 %v464, %v462
      %v543 = vpack.c.b16 %v467, %v465
      %v544 = vpack.c.b16 %v468, %v466
      %v545 = vpack.c.b16 %v471, %v469
      %v546 = vpack.c.b16 %v472, %v470
      %v547 = vpack.c.b16 %v475, %v473
      %v548 = vpack.c.b16 %v476, %v474
      %v549 = vpack.c.b16 %v479, %v477
      %v550 = vpack.c.b16 %v480, %v478
      %v551 = vpack.c.b16 %v483, %v481
      %v552 = vpack.c.b16 %v484, %v482
      %v553 = vpack.c.b16 %v487, %v485
      %v554 = vpack.c.b16 %v488, %v486
      %v555 = vpack.c.b16 %v491, %v489
      %v556 = vpack.c.b16 %v492, %v490
      %v557 = vpack.c.b16 %v495, %v493
      %v558 = vpack.c.b16 %v496, %v494
      %v559 = vpack.c.b16 %v499, %v497
      %v560 = vpack.c.b16 %v500, %v498
      %v561 = vpack.c.b16 %v503, %v501
      %v562 = vpack.c.b16 %v504, %v502
      %v563 = vpack.c.b16 %v507, %v505
      %v564 = vpack.c.b16 %v508, %v506
      %v565 = vpack.c.b16 %v511, %v509
      %v566 = vpack.c.b16 %v512, %v510
      %v567 = vpack.c.b16 %v515, %v513
      %v568 = vpack.c.b16 %v516, %v514
      %v569 = vpack.c.b16 %v519, %v517
      %v570 = vpack.c.b16 %v520, %v518
      %vm621 = vcmask 130048
      %v623 = vsel %vm621, %v367, 0
      %625 = vmatprep.subr.bf16.mxu0 %v522
      %626 = vmatpush1.bf16.msra.mxu0 %v521
      %627 = vmatprep.subr.bf16.mxu0 %v524
      %628 = vmatpush1.bf16.msra.mxu0 %v523
      %629 = vmatprep.subr.bf16.mxu0 %v526
      %630 = vmatpush1.bf16.msra.mxu0 %v525
      %631 = vmatprep.subr.bf16.mxu0 %v528
      %632 = vmatpush1.bf16.msra.mxu0 %v527
      %633 = vmatprep.subr.bf16.mxu0 %v530
      %634 = vmatpush1.bf16.msra.mxu0 %v529
      %635 = vmatprep.subr.bf16.mxu0 %v532
      %636 = vmatpush1.bf16.msra.mxu0 %v531
      %637 = vmatprep.subr.bf16.mxu0 %v534
      %638 = vmatpush1.bf16.msra.mxu0 %v533
      %639 = vmatprep.subr.bf16.mxu0 %v536
      %640 = vmatpush1.bf16.msra.mxu0 %v535
      %641 = vmatprep.subr.bf16.mxu0 %v538
      %642 = vmatpush1.bf16.msra.mxu0 %v537
      %643 = vmatprep.subr.bf16.mxu0 %v540
      %644 = vmatpush1.bf16.msra.mxu0 %v539
      %645 = vmatprep.subr.bf16.mxu0 %v542
      %646 = vmatpush1.bf16.msra.mxu0 %v541
      %647 = vmatprep.subr.bf16.mxu0 %v544
      %648 = vmatpush1.bf16.msra.mxu0 %v543
      %649 = vmatprep.subr.bf16.mxu0 %v546
      %650 = vmatpush1.bf16.msra.mxu0 %v545
      %651 = vmatprep.subr.bf16.mxu0 %v548
      %652 = vmatpush1.bf16.msra.mxu0 %v547
      %653 = vmatprep.subr.bf16.mxu0 %v550
      %654 = vmatpush1.bf16.msra.mxu0 %v549
      %655 = vmatprep.subr.bf16.mxu0 %v552
      %656 = vmatpush1.bf16.msra.mxu0 %v551
      %657 = vmatprep.mubr.bf16.mxu0 %v353
      %658 = vmatmul.mubr.bf16.gmra.mrb[0].mxu0 %v346
      %v659 = vpop.f32.mrb[0].mxu0
      %v660 = vadd.f32 0.0, %v659
      %v661 = vpop.f32.mrb[0].mxu0
      %v662 = vadd.f32 0.0, %v661
      %v663 = vpop.f32.mrb[0].mxu0
      %v664 = vpop.f32.mrb[0].mxu0
      %665 = vdwg.mxu0
      %666 = vmatprep.subr.bf16.mxu0 %v554
      %667 = vmatpush1.bf16.msra.mxu0 %v553
      %668 = vmatprep.subr.bf16.mxu0 %v556
      %669 = vmatpush1.bf16.msra.mxu0 %v555
      %670 = vmatprep.subr.bf16.mxu0 %v558
      %671 = vmatpush1.bf16.msra.mxu0 %v557
      %672 = vmatprep.subr.bf16.mxu0 %v560
      %673 = vmatpush1.bf16.msra.mxu0 %v559
      %674 = vmatprep.subr.bf16.mxu0 %v562
      %675 = vmatpush1.bf16.msra.mxu0 %v561
      %676 = vmatprep.subr.bf16.mxu0 %v564
      %677 = vmatpush1.bf16.msra.mxu0 %v563
      %678 = vmatprep.subr.bf16.mxu0 %v566
      %679 = vmatpush1.bf16.msra.mxu0 %v565
      %680 = vmatprep.subr.bf16.mxu0 %v568
      %681 = vmatpush1.bf16.msra.mxu0 %v567
      %682 = vmatprep.subr.bf16.mxu0 %v570
      %683 = vmatpush1.bf16.msra.mxu0 %v569
      %684 = vmatprep.subr.bf16.mxu0 0
      %685 = vmatpush1.bf16.msra.mxu0 0
      %686 = vmatprep.subr.bf16.mxu0 0
      %687 = vmatpush1.bf16.msra.mxu0 0
      %688 = vmatprep.subr.bf16.mxu0 0
      %689 = vmatpush1.bf16.msra.mxu0 0
      %690 = vmatprep.subr.bf16.mxu0 0
      %691 = vmatpush1.bf16.msra.mxu0 0
      %692 = vmatprep.subr.bf16.mxu0 0
      %693 = vmatpush1.bf16.msra.mxu0 0
      %694 = vmatprep.subr.bf16.mxu0 0
      %695 = vmatpush1.bf16.msra.mxu0 0
      %696 = vmatprep.subr.bf16.mxu0 0
      %697 = vmatpush1.bf16.msra.mxu0 0
      %698 = vmatprep.mubr.bf16.mxu0 %v623
      %699 = vmatmul.mubr.bf16.gmra.mrb[0].mxu0 %v360
      %v700 = vpop.f32.mrb[0].mxu0
      %v701 = vadd.f32 %v660, %v700
      %v702 = vpop.f32.mrb[0].mxu0
      %v703 = vadd.f32 %v662, %v702
      %v704 = vpop.f32.mrb[0].mxu0
      %v705 = vpop.f32.mrb[0].mxu0
      %706 = vdwg.mxu0
      %v707 = vpack.c.b16 %v328, %v328
      %v708 = vpack.c.b16 %v329, %v329
      %v709 = vpack.c.b16 %v330, %v330
      %v710 = vpack.c.b16 %v331, %v331
      %v764 = vunpack.c.l.b16 %v221
      %v765 = vunpack.c.h.b16 %v221
      %v766 = vunpack.c.l.b16 %v222
      %v767 = vunpack.c.h.b16 %v222
      %v768 = vunpack.c.l.b16 %v223
      %v769 = vunpack.c.h.b16 %v223
      %v770 = vunpack.c.l.b16 %v224
      %v771 = vunpack.c.h.b16 %v224
      %v772 = vunpack.c.l.b16 %v225
      %v773 = vunpack.c.h.b16 %v225
      %v774 = vunpack.c.l.b16 %v226
      %v775 = vunpack.c.h.b16 %v226
      %v776 = vunpack.c.l.b16 %v227
      %v777 = vunpack.c.h.b16 %v227
      %v778 = vunpack.c.l.b16 %v228
      %v779 = vunpack.c.h.b16 %v228
      %v780 = vunpack.c.l.b16 %v229
      %v781 = vunpack.c.h.b16 %v229
      %v782 = vunpack.c.l.b16 %v230
      %v783 = vunpack.c.h.b16 %v230
      %v784 = vunpack.c.l.b16 %v231
      %v785 = vunpack.c.h.b16 %v231
      %v786 = vunpack.c.l.b16 %v232
      %v787 = vunpack.c.h.b16 %v232
      %v788 = vunpack.c.l.b16 %v233
      %v789 = vunpack.c.h.b16 %v233
      %v790 = vunpack.c.l.b16 %v234
      %v791 = vunpack.c.h.b16 %v234
      %v792 = vunpack.c.l.b16 %v235
      %v793 = vunpack.c.h.b16 %v235
      %v794 = vunpack.c.l.b16 %v236
      %v795 = vunpack.c.h.b16 %v236
      %v796 = vunpack.c.l.b16 %v237
      %v797 = vunpack.c.h.b16 %v237
      %v798 = vunpack.c.l.b16 %v238
      %v799 = vunpack.c.h.b16 %v238
      %v800 = vunpack.c.l.b16 %v239
      %v801 = vunpack.c.h.b16 %v239
      %v802 = vunpack.c.l.b16 %v240
      %v803 = vunpack.c.h.b16 %v240
      %v804 = vunpack.c.l.b16 %v241
      %v805 = vunpack.c.h.b16 %v241
      %v806 = vunpack.c.l.b16 %v242
      %v807 = vunpack.c.h.b16 %v242
      %v808 = vunpack.c.l.b16 %v243
      %v809 = vunpack.c.h.b16 %v243
      %v810 = vunpack.c.l.b16 %v244
      %v811 = vunpack.c.h.b16 %v244
      %v812 = vunpack.c.l.b16 %v245
      %v813 = vunpack.c.h.b16 %v245
      %v814 = vunpack.c.l.b16 %v246
      %v815 = vunpack.c.h.b16 %v246
      %v816 = vunpack.c.l.b16 %v247
      %v817 = vunpack.c.h.b16 %v247
      %v818 = vunpack.c.l.b16 %v248
      %v819 = vunpack.c.h.b16 %v248
      %v820 = vunpack.c.l.b16 %v249
      %v821 = vunpack.c.h.b16 %v249
      %v822 = vunpack.c.l.b16 %v250
      %v823 = vunpack.c.h.b16 %v250
      %v824 = vunpack.c.l.b16 %v251
      %v825 = vunpack.c.h.b16 %v251
      %v826 = vunpack.c.l.b16 %v252
      %v827 = vunpack.c.h.b16 %v252
      %v828 = vunpack.c.l.b16 %v253
      %v829 = vunpack.c.h.b16 %v253
      %v830 = vunpack.c.l.b16 %v254
      %v831 = vunpack.c.h.b16 %v254
      %v832 = vunpack.c.l.b16 %v255
      %v833 = vunpack.c.h.b16 %v255
      %v834 = vunpack.c.l.b16 %v256
      %v835 = vunpack.c.h.b16 %v256
      %v836 = vunpack.c.l.b16 %v257
      %v837 = vunpack.c.h.b16 %v257
      %v838 = vunpack.c.l.b16 %v258
      %v839 = vunpack.c.h.b16 %v258
      %v840 = vunpack.c.l.b16 %v259
      %v841 = vunpack.c.h.b16 %v259
      %v842 = vunpack.c.l.b16 %v260
      %v843 = vunpack.c.h.b16 %v260
      %v844 = vunpack.c.l.b16 %v261
      %v845 = vunpack.c.h.b16 %v261
      %v846 = vunpack.c.l.b16 %v262
      %v847 = vunpack.c.h.b16 %v262
      %v848 = vunpack.c.l.b16 %v263
      %v849 = vunpack.c.h.b16 %v263
      %v850 = vunpack.c.l.b16 %v264
      %v851 = vunpack.c.h.b16 %v264
      %v852 = vunpack.c.l.b16 %v265
      %v853 = vunpack.c.h.b16 %v265
      %v854 = vunpack.c.l.b16 %v266
      %v855 = vunpack.c.h.b16 %v266
      %v856 = vunpack.c.l.b16 %v267
      %v857 = vunpack.c.h.b16 %v267
      %v858 = vunpack.c.l.b16 %v268
      %v859 = vunpack.c.h.b16 %v268
      %v860 = vunpack.c.l.b16 %v269
      %v861 = vunpack.c.h.b16 %v269
      %v862 = vunpack.c.l.b16 %v270
      %v863 = vunpack.c.h.b16 %v270
      %v864 = vpack.c.b16 %v766, %v764
      %v865 = vpack.c.b16 %v767, %v765
      %v866 = vpack.c.b16 %v770, %v768
      %v867 = vpack.c.b16 %v771, %v769
      %v868 = vpack.c.b16 %v774, %v772
      %v869 = vpack.c.b16 %v775, %v773
      %v870 = vpack.c.b16 %v778, %v776
      %v871 = vpack.c.b16 %v779, %v777
      %v872 = vpack.c.b16 %v782, %v780
      %v873 = vpack.c.b16 %v783, %v781
      %v874 = vpack.c.b16 %v786, %v784
      %v875 = vpack.c.b16 %v787, %v785
      %v876 = vpack.c.b16 %v790, %v788
      %v877 = vpack.c.b16 %v791, %v789
      %v878 = vpack.c.b16 %v794, %v792
      %v879 = vpack.c.b16 %v795, %v793
      %v880 = vpack.c.b16 %v798, %v796
      %v881 = vpack.c.b16 %v799, %v797
      %v882 = vpack.c.b16 %v802, %v800
      %v883 = vpack.c.b16 %v803, %v801
      %v884 = vpack.c.b16 %v806, %v804
      %v885 = vpack.c.b16 %v807, %v805
      %v886 = vpack.c.b16 %v810, %v808
      %v887 = vpack.c.b16 %v811, %v809
      %v888 = vpack.c.b16 %v814, %v812
      %v889 = vpack.c.b16 %v815, %v813
      %v890 = vpack.c.b16 %v818, %v816
      %v891 = vpack.c.b16 %v819, %v817
      %v892 = vpack.c.b16 %v822, %v820
      %v893 = vpack.c.b16 %v823, %v821
      %v894 = vpack.c.b16 %v826, %v824
      %v895 = vpack.c.b16 %v827, %v825
      %v896 = vpack.c.b16 %v830, %v828
      %v897 = vpack.c.b16 %v831, %v829
      %v898 = vpack.c.b16 %v834, %v832
      %v899 = vpack.c.b16 %v835, %v833
      %v900 = vpack.c.b16 %v838, %v836
      %v901 = vpack.c.b16 %v839, %v837
      %v902 = vpack.c.b16 %v842, %v840
      %v903 = vpack.c.b16 %v843, %v841
      %v904 = vpack.c.b16 %v846, %v844
      %v905 = vpack.c.b16 %v847, %v845
      %v906 = vpack.c.b16 %v850, %v848
      %v907 = vpack.c.b16 %v851, %v849
      %v908 = vpack.c.b16 %v854, %v852
      %v909 = vpack.c.b16 %v855, %v853
      %v910 = vpack.c.b16 %v858, %v856
      %v911 = vpack.c.b16 %v859, %v857
      %v912 = vpack.c.b16 %v862, %v860
      %v913 = vpack.c.b16 %v863, %v861
      %v965 = vsel %vm621, %v710, 0
      %967 = vmatprep.subr.bf16.mxu0 %v865
      %968 = vmatpush1.bf16.msra.mxu0 %v864
      %969 = vmatprep.subr.bf16.mxu0 %v867
      %970 = vmatpush1.bf16.msra.mxu0 %v866
      %971 = vmatprep.subr.bf16.mxu0 %v869
      %972 = vmatpush1.bf16.msra.mxu0 %v868
      %973 = vmatprep.subr.bf16.mxu0 %v871
      %974 = vmatpush1.bf16.msra.mxu0 %v870
      %975 = vmatprep.subr.bf16.mxu0 %v873
      %976 = vmatpush1.bf16.msra.mxu0 %v872
      %977 = vmatprep.subr.bf16.mxu0 %v875
      %978 = vmatpush1.bf16.msra.mxu0 %v874
      %979 = vmatprep.subr.bf16.mxu0 %v877
      %980 = vmatpush1.bf16.msra.mxu0 %v876
      %981 = vmatprep.subr.bf16.mxu0 %v879
      %982 = vmatpush1.bf16.msra.mxu0 %v878
      %983 = vmatprep.subr.bf16.mxu0 %v881
      %984 = vmatpush1.bf16.msra.mxu0 %v880
      %985 = vmatprep.subr.bf16.mxu0 %v883
      %986 = vmatpush1.bf16.msra.mxu0 %v882
      %987 = vmatprep.subr.bf16.mxu0 %v885
      %988 = vmatpush1.bf16.msra.mxu0 %v884
      %989 = vmatprep.subr.bf16.mxu0 %v887
      %990 = vmatpush1.bf16.msra.mxu0 %v886
      %991 = vmatprep.subr.bf16.mxu0 %v889
      %992 = vmatpush1.bf16.msra.mxu0 %v888
      %993 = vmatprep.subr.bf16.mxu0 %v891
      %994 = vmatpush1.bf16.msra.mxu0 %v890
      %995 = vmatprep.subr.bf16.mxu0 %v893
      %996 = vmatpush1.bf16.msra.mxu0 %v892
      %997 = vmatprep.subr.bf16.mxu0 %v895
      %998 = vmatpush1.bf16.msra.mxu0 %v894
      %999 = vmatprep.mubr.bf16.mxu0 %v708
      %1000 = vmatmul.mubr.bf16.gmra.mrb[0].mxu0 %v707
      %v1001 = vpop.f32.mrb[0].mxu0
      %v1002 = vadd.f32 %v701, %v1001
      %v1003 = vpop.f32.mrb[0].mxu0
      %v1004 = vadd.f32 %v703, %v1003
      %v1005 = vpop.f32.mrb[0].mxu0
      %v1006 = vpop.f32.mrb[0].mxu0
      %1007 = vdwg.mxu0
      %1008 = vmatprep.subr.bf16.mxu0 %v897
      %1009 = vmatpush1.bf16.msra.mxu0 %v896
      %1010 = vmatprep.subr.bf16.mxu0 %v899
      %1011 = vmatpush1.bf16.msra.mxu0 %v898
      %1012 = vmatprep.subr.bf16.mxu0 %v901
      %1013 = vmatpush1.bf16.msra.mxu0 %v900
      %1014 = vmatprep.subr.bf16.mxu0 %v903
      %1015 = vmatpush1.bf16.msra.mxu0 %v902
      %1016 = vmatprep.subr.bf16.mxu0 %v905
      %1017 = vmatpush1.bf16.msra.mxu0 %v904
      %1018 = vmatprep.subr.bf16.mxu0 %v907
      %1019 = vmatpush1.bf16.msra.mxu0 %v906
      %1020 = vmatprep.subr.bf16.mxu0 %v909
      %1021 = vmatpush1.bf16.msra.mxu0 %v908
      %1022 = vmatprep.subr.bf16.mxu0 %v911
      %1023 = vmatpush1.bf16.msra.mxu0 %v910
      %1024 = vmatprep.subr.bf16.mxu0 %v913
      %1025 = vmatpush1.bf16.msra.mxu0 %v912
      %1026 = vmatprep.subr.bf16.mxu0 0
      %1027 = vmatpush1.bf16.msra.mxu0 0
      %1028 = vmatprep.subr.bf16.mxu0 0
      %1029 = vmatpush1.bf16.msra.mxu0 0
      %1030 = vmatprep.subr.bf16.mxu0 0
      %1031 = vmatpush1.bf16.msra.mxu0 0
      %1032 = vmatprep.subr.bf16.mxu0 0
      %1033 = vmatpush1.bf16.msra.mxu0 0
      %1034 = vmatprep.subr.bf16.mxu0 0
      %1035 = vmatpush1.bf16.msra.mxu0 0
      %1036 = vmatprep.subr.bf16.mxu0 0
      %1037 = vmatpush1.bf16.msra.mxu0 0
      %1038 = vmatprep.subr.bf16.mxu0 0
      %1039 = vmatpush1.bf16.msra.mxu0 0
      %1040 = vmatprep.mubr.bf16.mxu0 %v965
      %1041 = vmatmul.mubr.bf16.gmra.mrb[0].mxu0 %v709
      %v1042 = vpop.f32.mrb[0].mxu0
      %v1043 = vadd.f32 %v1002, %v1042
      %v1044 = vpop.f32.mrb[0].mxu0
      %v1045 = vadd.f32 %v1004, %v1044
      %v1046 = vpop.f32.mrb[0].mxu0
      %v1047 = vpop.f32.mrb[0].mxu0
      %1048 = vdwg.mxu0
      %v1049 = vld [vmem:[%s207] sm:$0xee]
      %v1050 = vld [vmem:[%s207 + $0x8] sm:$0xee]
      %s1051 = scalar_lea.vmem %s1, 800
      %v1052 = vld [vmem:[%s1051] sm:$0xff]
      %v1053 = vld [vmem:[%s1051 + $0x8] sm:$0xff]
      %v1054 = vld [vmem:[%s1051 + $0x10] sm:$0xff]
      %v1055 = vld [vmem:[%s1051 + $0x18] sm:$0xff]
      %v1056 = vld [vmem:[%s1051 + $0x20] sm:$0xff]
      %v1057 = vld [vmem:[%s1051 + $0x28] sm:$0xff]
      %v1058 = vld [vmem:[%s1051 + $0x30] sm:$0xff]
      %v1059 = vld [vmem:[%s1051 + $0x38] sm:$0xff]
      %v1060 = vld [vmem:[%s1051 + $0x40] sm:$0xff]
      %v1061 = vld [vmem:[%s1051 + $0x48] sm:$0xff]
      %v1062 = vld [vmem:[%s1051 + $0x50] sm:$0xff]
      %v1063 = vld [vmem:[%s1051 + $0x58] sm:$0xff]
      %v1064 = vld [vmem:[%s1051 + $0x60] sm:$0xff]
      %v1065 = vld [vmem:[%s1051 + $0x68] sm:$0xff]
      %v1066 = vld [vmem:[%s1051 + $0x70] sm:$0xff]
      %v1067 = vld [vmem:[%s1051 + $0x78] sm:$0xff]
      %v1068 = vld [vmem:[%s1051 + $0x80] sm:$0xff]
      %v1069 = vld [vmem:[%s1051 + $0x88] sm:$0xff]
      %v1070 = vld [vmem:[%s1051 + $0x90] sm:$0xff]
      %v1071 = vld [vmem:[%s1051 + $0x98] sm:$0xff]
      %v1072 = vld [vmem:[%s1051 + $0xa0] sm:$0xff]
      %v1073 = vld [vmem:[%s1051 + $0xa8] sm:$0xff]
      %v1074 = vld [vmem:[%s1051 + $0xb0] sm:$0xff]
      %v1075 = vld [vmem:[%s1051 + $0xb8] sm:$0xff]
      %v1076 = vld [vmem:[%s1051 + $0xc0] sm:$0xff]
      %v1077 = vld [vmem:[%s1051 + $0xc8] sm:$0xff]
      %v1078 = vld [vmem:[%s1051 + $0xd0] sm:$0xff]
      %v1079 = vld [vmem:[%s1051 + $0xd8] sm:$0xff]
      %v1080 = vld [vmem:[%s1051 + $0xe0] sm:$0xff]
      %v1081 = vld [vmem:[%s1051 + $0xe8] sm:$0xff]
      %v1082 = vld [vmem:[%s1051 + $0xf0] sm:$0xff]
      %v1083 = vld [vmem:[%s1051 + $0xf8] sm:$0xff]
      %v1084 = vld [vmem:[%s1051 + $0x100] sm:$0xff]
      %v1085 = vld [vmem:[%s1051 + $0x108] sm:$0xff]
      %v1086 = vld [vmem:[%s1051 + $0x110] sm:$0xff]
      %v1087 = vld [vmem:[%s1051 + $0x118] sm:$0xff]
      %v1088 = vld [vmem:[%s1051 + $0x120] sm:$0xff]
      %v1089 = vld [vmem:[%s1051 + $0x128] sm:$0xff]
      %v1090 = vld [vmem:[%s1051 + $0x130] sm:$0xff]
      %v1091 = vld [vmem:[%s1051 + $0x138] sm:$0xff]
      %v1092 = vld [vmem:[%s1051 + $0x140] sm:$0xff]
      %v1093 = vld [vmem:[%s1051 + $0x148] sm:$0xff]
      %v1094 = vld [vmem:[%s1051 + $0x150] sm:$0xff]
      %v1095 = vld [vmem:[%s1051 + $0x158] sm:$0xff]
      %v1096 = vld [vmem:[%s1051 + $0x160] sm:$0xff]
      %v1097 = vld [vmem:[%s1051 + $0x168] sm:$0xff]
      %v1098 = vld [vmem:[%s1051 + $0x170] sm:$0xff]
      %v1099 = vld [vmem:[%s1051 + $0x178] sm:$0xff]
      %v1100 = vld [vmem:[%s1051 + $0x180] sm:$0xff]
      %v1101 = vld [vmem:[%s1051 + $0x188] sm:$0xff]
      %v1104 = vunpack.c.l.b16 %v1049
      %v1105 = vunpack.c.h.b16 %v1049
      %v1106 = vunpack.c.l.b16 %v1050
      %v1107 = vunpack.c.h.b16 %v1050
      %v1108 = vpack.c.b16 %v332, %v1104
      %v1109 = vpack.c.b16 %v333, %v1105
      %v1110 = vpack.c.b16 %v334, %v1106
      %v1111 = vpack.c.b16 %v335, %v1107
      %v1112 = vrot.slane %v1108, 1
      %v1113 = vrot.slane %v1109, 1
      %v1114 = vrot.slane %v1110, 1
      %v1115 = vrot.slane %v1111, 1
      %v1169 = vunpack.c.l.b16 %v1052
      %v1170 = vunpack.c.h.b16 %v1052
      %v1171 = vunpack.c.l.b16 %v1053
      %v1172 = vunpack.c.h.b16 %v1053
      %v1173 = vunpack.c.l.b16 %v1054
      %v1174 = vunpack.c.h.b16 %v1054
      %v1175 = vunpack.c.l.b16 %v1055
      %v1176 = vunpack.c.h.b16 %v1055
      %v1177 = vunpack.c.l.b16 %v1056
      %v1178 = vunpack.c.h.b16 %v1056
      %v1179 = vunpack.c.l.b16 %v1057
      %v1180 = vunpack.c.h.b16 %v1057
      %v1181 = vunpack.c.l.b16 %v1058
      %v1182 = vunpack.c.h.b16 %v1058
      %v1183 = vunpack.c.l.b16 %v1059
      %v1184 = vunpack.c.h.b16 %v1059
      %v1185 = vunpack.c.l.b16 %v1060
      %v1186 = vunpack.c.h.b16 %v1060
      %v1187 = vunpack.c.l.b16 %v1061
      %v1188 = vunpack.c.h.b16 %v1061
      %v1189 = vunpack.c.l.b16 %v1062
      %v1190 = vunpack.c.h.b16 %v1062
      %v1191 = vunpack.c.l.b16 %v1063
      %v1192 = vunpack.c.h.b16 %v1063
      %v1193 = vunpack.c.l.b16 %v1064
      %v1194 = vunpack.c.h.b16 %v1064
      %v1195 = vunpack.c.l.b16 %v1065
      %v1196 = vunpack.c.h.b16 %v1065
      %v1197 = vunpack.c.l.b16 %v1066
      %v1198 = vunpack.c.h.b16 %v1066
      %v1199 = vunpack.c.l.b16 %v1067
      %v1200 = vunpack.c.h.b16 %v1067
      %v1201 = vunpack.c.l.b16 %v1068
      %v1202 = vunpack.c.h.b16 %v1068
      %v1203 = vunpack.c.l.b16 %v1069
      %v1204 = vunpack.c.h.b16 %v1069
      %v1205 = vunpack.c.l.b16 %v1070
      %v1206 = vunpack.c.h.b16 %v1070
      %v1207 = vunpack.c.l.b16 %v1071
      %v1208 = vunpack.c.h.b16 %v1071
      %v1209 = vunpack.c.l.b16 %v1072
      %v1210 = vunpack.c.h.b16 %v1072
      %v1211 = vunpack.c.l.b16 %v1073
      %v1212 = vunpack.c.h.b16 %v1073
      %v1213 = vunpack.c.l.b16 %v1074
      %v1214 = vunpack.c.h.b16 %v1074
      %v1215 = vunpack.c.l.b16 %v1075
      %v1216 = vunpack.c.h.b16 %v1075
      %v1217 = vunpack.c.l.b16 %v1076
      %v1218 = vunpack.c.h.b16 %v1076
      %v1219 = vunpack.c.l.b16 %v1077
      %v1220 = vunpack.c.h.b16 %v1077
      %v1221 = vunpack.c.l.b16 %v1078
      %v1222 = vunpack.c.h.b16 %v1078
      %v1223 = vunpack.c.l.b16 %v1079
      %v1224 = vunpack.c.h.b16 %v1079
      %v1225 = vunpack.c.l.b16 %v1080
      %v1226 = vunpack.c.h.b16 %v1080
      %v1227 = vunpack.c.l.b16 %v1081
      %v1228 = vunpack.c.h.b16 %v1081
      %v1229 = vunpack.c.l.b16 %v1082
      %v1230 = vunpack.c.h.b16 %v1082
      %v1231 = vunpack.c.l.b16 %v1083
      %v1232 = vunpack.c.h.b16 %v1083
      %v1233 = vunpack.c.l.b16 %v1084
      %v1234 = vunpack.c.h.b16 %v1084
      %v1235 = vunpack.c.l.b16 %v1085
      %v1236 = vunpack.c.h.b16 %v1085
      %v1237 = vunpack.c.l.b16 %v1086
      %v1238 = vunpack.c.h.b16 %v1086
      %v1239 = vunpack.c.l.b16 %v1087
      %v1240 = vunpack.c.h.b16 %v1087
      %v1241 = vunpack.c.l.b16 %v1088
      %v1242 = vunpack.c.h.b16 %v1088
      %v1243 = vunpack.c.l.b16 %v1089
      %v1244 = vunpack.c.h.b16 %v1089
      %v1245 = vunpack.c.l.b16 %v1090
      %v1246 = vunpack.c.h.b16 %v1090
      %v1247 = vunpack.c.l.b16 %v1091
      %v1248 = vunpack.c.h.b16 %v1091
      %v1249 = vunpack.c.l.b16 %v1092
      %v1250 = vunpack.c.h.b16 %v1092
      %v1251 = vunpack.c.l.b16 %v1093
      %v1252 = vunpack.c.h.b16 %v1093
      %v1253 = vunpack.c.l.b16 %v1094
      %v1254 = vunpack.c.h.b16 %v1094
      %v1255 = vunpack.c.l.b16 %v1095
      %v1256 = vunpack.c.h.b16 %v1095
      %v1257 = vunpack.c.l.b16 %v1096
      %v1258 = vunpack.c.h.b16 %v1096
      %v1259 = vunpack.c.l.b16 %v1097
      %v1260 = vunpack.c.h.b16 %v1097
      %v1261 = vunpack.c.l.b16 %v1098
      %v1262 = vunpack.c.h.b16 %v1098
      %v1263 = vunpack.c.l.b16 %v1099
      %v1264 = vunpack.c.h.b16 %v1099
      %v1265 = vunpack.c.l.b16 %v1100
      %v1266 = vunpack.c.h.b16 %v1100
      %v1267 = vunpack.c.l.b16 %v1101
      %v1268 = vunpack.c.h.b16 %v1101
      %v1269 = vpack.c.b16 %v1171, %v1169
      %v1270 = vpack.c.b16 %v1172, %v1170
      %v1271 = vpack.c.b16 %v1175, %v1173
      %v1272 = vpack.c.b16 %v1176, %v1174
      %v1273 = vpack.c.b16 %v1179, %v1177
      %v1274 = vpack.c.b16 %v1180, %v1178
      %v1275 = vpack.c.b16 %v1183, %v1181
      %v1276 = vpack.c.b16 %v1184, %v1182
      %v1277 = vpack.c.b16 %v1187, %v1185
      %v1278 = vpack.c.b16 %v1188, %v1186
      %v1279 = vpack.c.b16 %v1191, %v1189
      %v1280 = vpack.c.b16 %v1192, %v1190
      %v1281 = vpack.c.b16 %v1195, %v1193
      %v1282 = vpack.c.b16 %v1196, %v1194
      %v1283 = vpack.c.b16 %v1199, %v1197
      %v1284 = vpack.c.b16 %v1200, %v1198
      %v1285 = vpack.c.b16 %v1203, %v1201
      %v1286 = vpack.c.b16 %v1204, %v1202
      %v1287 = vpack.c.b16 %v1207, %v1205
      %v1288 = vpack.c.b16 %v1208, %v1206
      %v1289 = vpack.c.b16 %v1211, %v1209
      %v1290 = vpack.c.b16 %v1212, %v1210
      %v1291 = vpack.c.b16 %v1215, %v1213
      %v1292 = vpack.c.b16 %v1216, %v1214
      %v1293 = vpack.c.b16 %v1219, %v1217
      %v1294 = vpack.c.b16 %v1220, %v1218
      %v1295 = vpack.c.b16 %v1223, %v1221
      %v1296 = vpack.c.b16 %v1224, %v1222
      %v1297 = vpack.c.b16 %v1227, %v1225
      %v1298 = vpack.c.b16 %v1228, %v1226
      %v1299 = vpack.c.b16 %v1231, %v1229
      %v1300 = vpack.c.b16 %v1232, %v1230
      %v1301 = vpack.c.b16 %v1235, %v1233
      %v1302 = vpack.c.b16 %v1236, %v1234
      %v1303 = vpack.c.b16 %v1239, %v1237
      %v1304 = vpack.c.b16 %v1240, %v1238
      %v1305 = vpack.c.b16 %v1243, %v1241
      %v1306 = vpack.c.b16 %v1244, %v1242
      %v1307 = vpack.c.b16 %v1247, %v1245
      %v1308 = vpack.c.b16 %v1248, %v1246
      %v1309 = vpack.c.b16 %v1251, %v1249
      %v1310 = vpack.c.b16 %v1252, %v1250
      %v1311 = vpack.c.b16 %v1255, %v1253
      %v1312 = vpack.c.b16 %v1256, %v1254
      %v1313 = vpack.c.b16 %v1259, %v1257
      %v1314 = vpack.c.b16 %v1260, %v1258
      %v1315 = vpack.c.b16 %v1263, %v1261
      %v1316 = vpack.c.b16 %v1264, %v1262
      %v1317 = vpack.c.b16 %v1267, %v1265
      %v1318 = vpack.c.b16 %v1268, %v1266
      %v1370 = vsel %vm621, %v1115, 0
      %1372 = vmatprep.subr.bf16.mxu0 %v1270
      %1373 = vmatpush1.bf16.msra.mxu0 %v1269
      %1374 = vmatprep.subr.bf16.mxu0 %v1272
      %1375 = vmatpush1.bf16.msra.mxu0 %v1271
      %1376 = vmatprep.subr.bf16.mxu0 %v1274
      %1377 = vmatpush1.bf16.msra.mxu0 %v1273
      %1378 = vmatprep.subr.bf16.mxu0 %v1276
      %1379 = vmatpush1.bf16.msra.mxu0 %v1275
      %1380 = vmatprep.subr.bf16.mxu0 %v1278
      %1381 = vmatpush1.bf16.msra.mxu0 %v1277
      %1382 = vmatprep.subr.bf16.mxu0 %v1280
      %1383 = vmatpush1.bf16.msra.mxu0 %v1279
      %1384 = vmatprep.subr.bf16.mxu0 %v1282
      %1385 = vmatpush1.bf16.msra.mxu0 %v1281
      %1386 = vmatprep.subr.bf16.mxu0 %v1284
      %1387 = vmatpush1.bf16.msra.mxu0 %v1283
      %1388 = vmatprep.subr.bf16.mxu0 %v1286
      %1389 = vmatpush1.bf16.msra.mxu0 %v1285
      %1390 = vmatprep.subr.bf16.mxu0 %v1288
      %1391 = vmatpush1.bf16.msra.mxu0 %v1287
      %1392 = vmatprep.subr.bf16.mxu0 %v1290
      %1393 = vmatpush1.bf16.msra.mxu0 %v1289
      %1394 = vmatprep.subr.bf16.mxu0 %v1292
      %1395 = vmatpush1.bf16.msra.mxu0 %v1291
      %1396 = vmatprep.subr.bf16.mxu0 %v1294
      %1397 = vmatpush1.bf16.msra.mxu0 %v1293
      %1398 = vmatprep.subr.bf16.mxu0 %v1296
      %1399 = vmatpush1.bf16.msra.mxu0 %v1295
      %1400 = vmatprep.subr.bf16.mxu0 %v1298
      %1401 = vmatpush1.bf16.msra.mxu0 %v1297
      %1402 = vmatprep.subr.bf16.mxu0 %v1300
      %1403 = vmatpush1.bf16.msra.mxu0 %v1299
      %1404 = vmatprep.mubr.bf16.mxu0 %v1113
      %1405 = vmatmul.mubr.bf16.gmra.mrb[0].mxu0 %v1112
      %v1406 = vpop.f32.mrb[0].mxu0
      %v1407 = vadd.f32 0.0, %v1406
      %v1408 = vpop.f32.mrb[0].mxu0
      %v1409 = vadd.f32 0.0, %v1408
      %v1410 = vpop.f32.mrb[0].mxu0
      %v1411 = vpop.f32.mrb[0].mxu0
      %1412 = vdwg.mxu0
      %1413 = vmatprep.subr.bf16.mxu0 %v1302
      %1414 = vmatpush1.bf16.msra.mxu0 %v1301
      %1415 = vmatprep.subr.bf16.mxu0 %v1304
      %1416 = vmatpush1.bf16.msra.mxu0 %v1303
      %1417 = vmatprep.subr.bf16.mxu0 %v1306
      %1418 = vmatpush1.bf16.msra.mxu0 %v1305
      %1419 = vmatprep.subr.bf16.mxu0 %v1308
      %1420 = vmatpush1.bf16.msra.mxu0 %v1307
      %1421 = vmatprep.subr.bf16.mxu0 %v1310
      %1422 = vmatpush1.bf16.msra.mxu0 %v1309
      %1423 = vmatprep.subr.bf16.mxu0 %v1312
      %1424 = vmatpush1.bf16.msra.mxu0 %v1311
      %1425 = vmatprep.subr.bf16.mxu0 %v1314
      %1426 = vmatpush1.bf16.msra.mxu0 %v1313
      %1427 = vmatprep.subr.bf16.mxu0 %v1316
      %1428 = vmatpush1.bf16.msra.mxu0 %v1315
      %1429 = vmatprep.subr.bf16.mxu0 %v1318
      %1430 = vmatpush1.bf16.msra.mxu0 %v1317
      %1431 = vmatprep.subr.bf16.mxu0 0
      %1432 = vmatpush1.bf16.msra.mxu0 0
      %1433 = vmatprep.subr.bf16.mxu0 0
      %1434 = vmatpush1.bf16.msra.mxu0 0
      %1435 = vmatprep.subr.bf16.mxu0 0
      %1436 = vmatpush1.bf16.msra.mxu0 0
      %1437 = vmatprep.subr.bf16.mxu0 0
      %1438 = vmatpush1.bf16.msra.mxu0 0
      %1439 = vmatprep.subr.bf16.mxu0 0
      %1440 = vmatpush1.bf16.msra.mxu0 0
      %1441 = vmatprep.subr.bf16.mxu0 0
      %1442 = vmatpush1.bf16.msra.mxu0 0
      %1443 = vmatprep.subr.bf16.mxu0 0
      %1444 = vmatpush1.bf16.msra.mxu0 0
      %1445 = vmatprep.mubr.bf16.mxu0 %v1370
      %1446 = vmatmul.mubr.bf16.gmra.mrb[0].mxu0 %v1114
      %v1447 = vpop.f32.mrb[0].mxu0
      %v1448 = vadd.f32 %v1407, %v1447
      %v1449 = vpop.f32.mrb[0].mxu0
      %v1450 = vadd.f32 %v1409, %v1449
      %v1451 = vpop.f32.mrb[0].mxu0
      %v1452 = vpop.f32.mrb[0].mxu0
      %1453 = vdwg.mxu0
      %v1454 = vadd.f32 %v1043, %v1448
      %v1455 = vadd.f32 %v1045, %v1450
      %v1456 = vld [vmem:[%s2] sm:$0x3]
      %v1458 = vlaneseq
      %v1459 = vshrl.u32 %v1458, 7
      %v1460 = vsub.s32 0, %v1459
      %v1461 = vrot.slane %v1456, %v1460
      %v1462 = vlaneseq
      %v1463 = vshrl.u32 %v1462, 7
      %v1464 = vsub.s32 1, %v1463
      %v1465 = vrot.slane %v1456, %v1464
      %v1468 = vadd.f32 %v1454, %v1461
      %v1469 = vadd.f32 %v1455, %v1465
      %v1470 = vld [vmem:[%s212] sm:$0xff]
      %v1471 = vunpack.c.l.bf16 %v1470
      %v1472 = vunpack.c.h.bf16 %v1470
      %v1473 = vadd.f32 %v1468, %v1471
      %v1474 = vadd.f32 %v1469, %v1472
      %v1475 = vmax.f32 %v1473, 0.0
      %v1476 = vmax.f32 %v1474, 0.0
      %1477 = vst [vmem:[%s217] sm:$0xff] %v1475
      %1478 = vst [vmem:[%s217 + $0x8] sm:$0xff] %v1476
      %p1479 = scmp.lt.s32.totalorder %s15, 1
      %s1480 = scalar_select %p1479, %s15, 1
      %s1481 = smul.addr %s1480, 2
      %s1482 = smul.addr %s1481, 8
      %s1483 = scalar_lea.vmem %s4, %s1482
      // Predicated region
      $region37: #{ublock_forward.13} parent=35 // pred_check
        %p1484 = pneg %p127
      $region38: #{ublock_forward.13} parent=35 // pred_check_branch
        %1486 = sbr.rel (%p1484) target = $region40
      $region39: #{ublock_forward.13} parent=35 // pred_region
        _
      $region40: #{ublock_forward.13} parent=35 // pred_fallthru
        _
    $region36: #{ublock_forward.13} parent=5 // pred_fallthru
      _
    %p1487 = scmp.le.s32.totalorder 2, %s10
    // Predicated region
    $region41: #{ublock_forward.13} parent=5 // pred_check
      %p1488 = pneg %p1487
    $region42: #{ublock_forward.13} parent=5 // pred_check_branch
      %1490 = sbr.rel (%p1488) target = $region44
    $region43: #{ublock_forward.13} parent=5 // pred_region
      %s1491 = ssub.s32 %s10, 2
      // Predicated region
      $region45: #{ublock_forward.13} parent=43 // pred_check
        %p1492 = pneg %p133
      $region46: #{ublock_forward.13} parent=43 // pred_check_branch
        %1494 = sbr.rel (%p1492) target = $region48
      $region47: #{ublock_forward.13} parent=43 // pred_region
        %p1495 = scmp.lt.s32.totalorder %s16, 1
        %s1496 = scalar_select %p1495, %s16, 1
        %s1497 = smul.addr %s1496, 2
        %s1498 = smul.addr %s1497, 8
        %s1499 = scalar_lea.vmem %s4, %s1498
      $region48: #{ublock_forward.13} parent=43 // pred_fallthru
        _
    $region44: #{ublock_forward.13} parent=5 // pred_fallthru
      _
  $region6: #{ublock_forward.13} parent=0 // loop_footer
    %s14 = sadd.s32 1, %s10
  $region7: #{ublock_forward.13} parent=0 // loop_footer_branch
    %9 = sbr.rel target = $region3
  $region8: #{ublock_forward.13} parent=0 // loop_exit
    _

</llo_original>
